<compile_context>
chip_gen: v7x
topology: tpu7x:2x2x1
jax: 0.10.0
libtpu: 0.0.40
codegen_flags: <defaults>
</compile_context>

<pallas_src>
import functools
import math

import jax
import jax.numpy as jnp
from jax.experimental import pallas as pl
from jax.experimental.pallas import tpu as pltpu


# ---------------------------------------------------------------------------
# In-kernel multi-head attention on batch-major flattened rows
# ---------------------------------------------------------------------------
def _mha(q_in16, kv_in16, n_batch, seq_q, seq_kv, nhead, head_dim,
         wq, wk, wv, bq, bk, bv, wo, bo):
    """q_in16 : (n_batch*seq_q,  Dp) bf16 query-side activations (batch-major rows).
    kv_in16  : (n_batch*seq_kv, Dp) bf16 key/value-side activations.
    w*       : bf16 (Dp, Dp) pre-transposed so y = x @ w;  b*: f32 (1, Dp).
    Returns  : f32 (n_batch*seq_q, Dp)."""
    d_p = q_in16.shape[-1]
    hd_p = d_p // nhead
    scale = 1.0 / float(head_dim) ** 0.5      # PyTorch scales by the *unpadded* head dim

    # Fused large-M, N=Dp projections (bf16 operands, f32 MXU accumulation).
    # The 1/sqrt(hd) scale is folded into q (cheaper than scaling the scores).
    q = (jnp.dot(q_in16, wq, preferred_element_type=jnp.float32) + bq) * scale
    k = jnp.dot(kv_in16, wk, preferred_element_type=jnp.float32) + bk
    v = jnp.dot(kv_in16, wv, preferred_element_type=jnp.float32) + bv

    # Batched-over-batch attention.  Heads remain hd_p-aligned lane slices of the
    # fused projections: a (b,s,h,d)->(b,h,s,d) transpose would retile the sublane
    # axis in-kernel (risky to lower), so only a small static nhead loop remains;
    # the batch dim is handled by the 3-D einsum below (reference flash pattern).
    q3 = q.astype(jnp.bfloat16).reshape(n_batch, seq_q, d_p)
    k3 = k.astype(jnp.bfloat16).reshape(n_batch, seq_kv, d_p)
    v3 = v.astype(jnp.bfloat16).reshape(n_batch, seq_kv, d_p)

    heads = []
    for h in range(nhead):
        lo = h * hd_p
        s = jnp.einsum('bqd,bkd->bqk',
                       q3[:, :, lo:lo + hd_p], k3[:, :, lo:lo + hd_p],
                       preferred_element_type=jnp.float32)        # (b, Sq, Skv) f32
        s = s - jnp.max(s, axis=-1, keepdims=True)
        p = jnp.exp(s)                                            # EUP
        p = p * pl.reciprocal(jnp.sum(p, axis=-1, keepdims=True), approx=True)
        o = jnp.einsum('bqk,bkd->bqd',
                       p.astype(jnp.bfloat16), v3[:, :, lo:lo + hd_p],
                       preferred_element_type=jnp.float32)        # (b, Sq, hd_p)
        heads.append(o.astype(jnp.bfloat16).reshape(n_batch * seq_q, hd_p))

    # Head merge in registers (lane concat, no VMEM scratch round-trip) followed by
    # ONE Dp-wide output projection over all flattened rows.
    concat = jnp.concatenate(heads, axis=-1)                      # (rows, Dp) bf16
    return jnp.dot(concat, wo, preferred_element_type=jnp.float32) + bo


# ---------------------------------------------------------------------------
# Pallas kernel: one block of batch elements per grid step
# ---------------------------------------------------------------------------
def decoder_layer_kernel(
    tgt_ref, mem_ref,
    sa_wq, sa_wk, sa_wv, sa_bq, sa_bk, sa_bv, sa_wo, sa_bo,
    ca_wq, ca_wk, ca_wv, ca_bq, ca_bk, ca_bv, ca_wo, ca_bo,
    w1, b1, w2, b2,
    out_ref,
    *, nhead, n_batch, seq_q, seq_kv, head_dim,
):
    x = tgt_ref[...].astype(jnp.float32)      # (n_batch*seq_q,  Dp) f32 residual stream
    mem16 = mem_ref[...]                      # (n_batch*seq_kv, Dp) bf16

    # --- self attention + residual (dropout1 p=0 -> identity) ---
    x16 = x.astype(jnp.bfloat16)
    x = x + _mha(x16, x16, n_batch, seq_q, seq_q, nhead, head_dim,
                 sa_wq[...], sa_wk[...], sa_wv[...],
                 sa_bq[...], sa_bk[...], sa_bv[...], sa_wo[...], sa_bo[...])

    # --- cross attention + residual (dropout2 p=0 -> identity) ---
    x16 = x.astype(jnp.bfloat16)
    x = x + _mha(x16, mem16, n_batch, seq_q, seq_kv, nhead, head_dim,
                 ca_wq[...], ca_wk[...], ca_wv[...],
                 ca_bq[...], ca_bk[...], ca_bv[...], ca_wo[...], ca_bo[...])

    # --- feedforward + residual (dropout, dropout3 p=0 -> identity) ---
    h = jnp.dot(x.astype(jnp.bfloat16), w1[...],
                preferred_element_type=jnp.float32) + b1[...]
    # nn.LeakyReLU(True) -> negative_slope == 1.0, i.e. identity; the select is dropped.
    # TODO(synk): if the module author meant LeakyReLU(inplace=True) (slope 0.01),
    # reinstate h = jnp.where(h >= 0, h, 0.01 * h) here.
    ff = jnp.dot(h.astype(jnp.bfloat16), w2[...],
                 preferred_element_type=jnp.float32) + b2[...]
    out_ref[...] = (x + ff).astype(out_ref.dtype)


# ---------------------------------------------------------------------------
# Host-side helpers: padding, VMEM budget, block sizing
# ---------------------------------------------------------------------------
def _pad_dim(a, axis, size):
    if a.shape[axis] == size:
        return a
    pads = [(0, 0)] * a.ndim
    pads[axis] = (0, size - a.shape[axis])
    return jnp.pad(a, pads)


def _pad_head_dim(a, axis, nhead, hd, hd_p):
    """Zero-pad the head-concatenated axis (nhead*hd) to nhead*hd_p per head, so
    every head's columns sit at hd_p-aligned offsets of the padded dim."""
    if hd_p == hd:
        return a
    split = a.shape[:axis] + (nhead, hd) + a.shape[axis + 1:]
    a = a.reshape(split)
    a = _pad_dim(a, axis + 1, hd_p)
    merged = a.shape[:axis] + (nhead * hd_p,) + a.shape[axis + 2:]
    return a.reshape(merged)


def _pad_and_cast_params(weights, nhead, hd, hd_p, d_p, dff_p):
    (sa_wq, sa_wk, sa_wv, sa_bq, sa_bk, sa_bv, sa_wo, sa_bo,
     ca_wq, ca_wk, ca_wv, ca_bq, ca_bk, ca_bv, ca_wo, ca_bo,
     w1, b1, w2, b2) = weights

    ph = lambda a, axis: _pad_head_dim(a, axis, nhead, hd, hd_p)

    def mha(wq, wk, wv, bq, bk, bv, wo, bo):
        return [_pad_dim(ph(wq, 1), 0, d_p), _pad_dim(ph(wk, 1), 0, d_p),
                _pad_dim(ph(wv, 1), 0, d_p),
                ph(bq, 1), ph(bk, 1), ph(bv, 1),
                _pad_dim(ph(wo, 0), 1, d_p), _pad_dim(bo, 1, d_p)]

    padded = (mha(sa_wq, sa_wk, sa_wv, sa_bq, sa_bk, sa_bv, sa_wo, sa_bo)
              + mha(ca_wq, ca_wk, ca_wv, ca_bq, ca_bk, ca_bv, ca_wo, ca_bo)
              + [_pad_dim(_pad_dim(w1, 0, d_p), 1, dff_p),
                 _pad_dim(b1, 1, dff_p),
                 _pad_dim(_pad_dim(w2, 0, dff_p), 1, d_p),
                 _pad_dim(b2, 1, d_p)])

    # Matmul operands in bf16 (halves HBM/VMEM footprint, ~2x MXU); biases stay f32.
    return [p.astype(jnp.bfloat16) if p.shape[0] > 1 else p for p in padded]


def _vmem_limit_bytes():
    """VMEM budget derived from the actual part (64 MiB/TC on v7x, 128 MiB on
    v5e/v6e), leaving ~25% headroom for compiler-internal scratch."""
    cap = 64 * 1024 * 1024                       # conservative default
    try:
        cap = int(pltpu.get_tpu_info().vmem_capacity_bytes)
    except Exception:
        pass
    return (cap * 3) // 4


def _per_batch_vmem_bytes(seq_q, seq_kv, d_p, dff_p, nhead):
    """Rough per-batch-element VMEM bytes of one grid step (pipeline buffers +
    in-kernel working set); used to size the batch block per generation."""
    pipelined = (2 * seq_q * d_p * 2             # tgt block (bf16, double-buffered)
                 + 2 * seq_kv * d_p * 2          # memory block (bf16, double-buffered)
                 + 2 * seq_q * d_p * 4)          # output block (f32, double-buffered)
    working = ((4 * seq_q + 3 * seq_kv) * d_p * 4               # x, q, attn out / k, v
               + 2 * nhead * seq_q * max(seq_q, seq_kv) * 4     # scores + probs
               + seq_q * dff_p * 4)                             # FFN hidden
    return pipelined + working


def _pick_batch_block(batch, seq_q, seq_kv, per_elem_bytes, weight_bytes, vmem_limit):
    """Largest divisor of `batch` whose per-step footprint fits the VMEM budget,
    preferring >=2 grid steps (keeps both v7x TensorCores busy under
    dimension_semantics=('parallel',)) and respecting the (8,128) sublane rule on
    the flattened (rows, Dp) blocks."""
    budget = max(vmem_limit - weight_bytes, per_elem_bytes)
    vmem_cap = max(1, budget // per_elem_bytes)
    valid = [bb for bb in range(1, batch + 1)
             if batch % bb == 0
             and (((bb * seq_q) % 8 == 0 and (bb * seq_kv) % 8 == 0) or bb == batch)]
    if not valid:
        return batch
    fitting = [bb for bb in valid if bb <= vmem_cap] or valid[:1]
    multi = [bb for bb in fitting if batch // bb >= 2]
    return max(multi) if multi else max(fitting)


# ---------------------------------------------------------------------------
# Wrapper
# ---------------------------------------------------------------------------
def transformer_decoder_layer(tgt, memory, weights, nhead, *, batch_block=None):
    """tgt: (S, B, D), memory: (Sm, B, D) -- PyTorch (seq, batch, embed) layout."""
    S, B, D = tgt.shape
    Sm = memory.shape[0]
    assert D % nhead == 0
    hd = D // nhead
    dff = weights[16].shape[1]                   # linear1 weight, kernel layout (D, DFF)

    # Lane-dense padding: pad per head so Dp = nhead*hd_p is a multiple of 128.
    step = 128 // math.gcd(nhead, 128)
    hd_p = ((hd + step - 1) // step) * step
    d_p = nhead * hd_p
    dff_p = ((dff + 127) // 128) * 128

    kparams = _pad_and_cast_params(weights, nhead, hd, hd_p, d_p, dff_p)

    # Generation-aware VMEM budget and batch-block size.
    vmem_limit = _vmem_limit_bytes()
    weight_bytes = sum(math.prod(p.shape) * p.dtype.itemsize for p in kparams)
    per_elem = _per_batch_vmem_bytes(S, Sm, d_p, dff_p, nhead)
    if batch_block is None:
        batch_block = _pick_batch_block(B, S, Sm, per_elem, weight_bytes, vmem_limit)
    assert B % batch_block == 0, "batch_block must divide the batch size"
    grid = (B // batch_block,)
    rows_q = batch_block * S
    rows_kv = batch_block * Sm

    # Activations: pad + batch-major flatten + bf16 downcast in ONE fused host pass
    # (halves activation HBM traffic); the kernel output stays f32 so the residual
    # stream is only rounded once, at the input.
    # TODO(synk): fold the (S,B,D)<->(B,S,D) permutation into a 3-D BlockSpec when
    # batch_block is a multiple of 8 to remove this remaining host-side pass.
    tgt_flat = (jnp.transpose(_pad_dim(tgt, 2, d_p), (1, 0, 2))
                .reshape(B * S, d_p).astype(jnp.bfloat16))
    mem_flat = (jnp.transpose(_pad_dim(memory, 2, d_p), (1, 0, 2))
                .reshape(B * Sm, d_p).astype(jnp.bfloat16))

    kernel = functools.partial(decoder_layer_kernel, nhead=nhead,
                               n_batch=batch_block, seq_q=S, seq_kv=Sm, head_dim=hd)

    def run(single_buffer_weights):
        if single_buffer_weights:
            # Constant-index weight blocks need no double buffering: halves their
            # VMEM footprint (matters most on v7x's 64 MiB VMEM).
            wspec = lambda shp: pl.BlockSpec(shp, lambda g: (0, 0),
                                             pipeline_mode=pl.Buffered(1))
        else:
            wspec = lambda shp: pl.BlockSpec(shp, lambda g: (0, 0))
        in_specs = ([pl.BlockSpec((rows_q, d_p), lambda g: (g, 0)),
                     pl.BlockSpec((rows_kv, d_p), lambda g: (g, 0))]
                    + [wspec(p.shape) for p in kparams])
        return pl.pallas_call(
            kernel,
            out_shape=jax.ShapeDtypeStruct((B * S, d_p), tgt.dtype),
            grid=grid,
            in_specs=in_specs,
            out_specs=pl.BlockSpec((rows_q, d_p), lambda g: (g, 0)),
            compiler_params=pltpu.CompilerParams(
                dimension_semantics=("parallel",),
                vmem_limit_bytes=vmem_limit),
        )(tgt_flat, mem_flat, *kparams)

    try:
        out_flat = run(True)
    except Exception:
        # pl.Buffered(1) / BlockSpec(pipeline_mode=...) unsupported on this jax
        # version: fall back to default (double-buffered) weight specs.
        out_flat = run(False)

    out = out_flat.reshape(B, S, d_p)[:, :, :D]
    return jnp.transpose(out, (1, 0, 2))         # back to (S, B, D)


# ---------------------------------------------------------------------------
# Deterministic parameter construction (PyTorch shapes -> kernel layout, f32)
# ---------------------------------------------------------------------------
def make_params(key, d_model, nhead, dim_feedforward):
    ks = jax.random.split(key, 12)
    scale = 0.1

    def mha_params(k_w, k_b, k_ow, k_ob):
        in_proj_w = scale * jax.random.normal(k_w, (3 * d_model, d_model), jnp.float32)
        in_proj_b = scale * jax.random.normal(k_b, (3 * d_model,), jnp.float32)
        out_w = scale * jax.random.normal(k_ow, (d_model, d_model), jnp.float32)
        out_b = scale * jax.random.normal(k_ob, (d_model,), jnp.float32)
        wq = in_proj_w[:d_model].T
        wk = in_proj_w[d_model:2 * d_model].T
        wv = in_proj_w[2 * d_model:].T
        bq = in_proj_b[:d_model].reshape(1, d_model)
        bk = in_proj_b[d_model:2 * d_model].reshape(1, d_model)
        bv = in_proj_b[2 * d_model:].reshape(1, d_model)
        wo = out_w.T
        bo = out_b.reshape(1, d_model)
        return [wq, wk, wv, bq, bk, bv, wo, bo]

    sa = mha_params(ks[0], ks[1], ks[2], ks[3])
    ca = mha_params(ks[4], ks[5], ks[6], ks[7])

    l1_w = scale * jax.random.normal(ks[8], (dim_feedforward, d_model), jnp.float32)
    l1_b = scale * jax.random.normal(ks[9], (dim_feedforward,), jnp.float32)
    l2_w = scale * jax.random.normal(ks[10], (d_model, dim_feedforward), jnp.float32)
    l2_b = scale * jax.random.normal(ks[11], (d_model,), jnp.float32)
    ffn = [l1_w.T, l1_b.reshape(1, dim_feedforward),
           l2_w.T, l2_b.reshape(1, d_model)]

    return sa + ca + ffn


# ---------------------------------------------------------------------------
# Pure-JAX f32 reference (the module's math; used for the correctness check)
# ---------------------------------------------------------------------------
def reference_forward(tgt, memory, weights, nhead):
    (sa_wq, sa_wk, sa_wv, sa_bq, sa_bk, sa_bv, sa_wo, sa_bo,
     ca_wq, ca_wk, ca_wv, ca_bq, ca_bk, ca_bv, ca_wo, ca_bo,
     w1, b1, w2, b2) = weights

    def mha(q_in, kv_in, wq, wk, wv, bq, bk, bv, wo, bo):
        S, B, D = q_in.shape
        hd = D // nhead
        q = q_in @ wq + bq
        k = kv_in @ wk + bk
        v = kv_in @ wv + bv
        qh = q.reshape(S, B, nhead, hd).transpose(1, 2, 0, 3)
        kh = k.reshape(kv_in.shape[0], B, nhead, hd).transpose(1, 2, 0, 3)
        vh = v.reshape(kv_in.shape[0], B, nhead, hd).transpose(1, 2, 0, 3)
        s = jnp.einsum("bhqd,bhkd->bhqk", qh, kh) / jnp.sqrt(hd).astype(jnp.float32)
        p = jax.nn.softmax(s, axis=-1)
        o = jnp.einsum("bhqk,bhkd->bhqd", p, vh)
        o = o.transpose(2, 0, 1, 3).reshape(S, B, D)
        return o @ wo + bo

    x = tgt
    x = x + mha(x, x, sa_wq, sa_wk, sa_wv, sa_bq, sa_bk, sa_bv, sa_wo, sa_bo)
    x = x + mha(x, memory, ca_wq, ca_wk, ca_wv, ca_bq, ca_bk, ca_bv, ca_wo, ca_bo)
    h = x @ w1 + b1          # LeakyReLU(negative_slope=True == 1.0) is the identity
    x = x + (h @ w2 + b2)
    return x


if __name__ == "__main__":
    S, Sm, B, D, NHEAD, DFF = 8, 8, 2, 32, 4, 16

    key = jax.random.PRNGKey(0)
    k_tgt, k_mem, k_par = jax.random.split(key, 3)
    tgt = jax.random.normal(k_tgt, (S, B, D), jnp.float32)     # PyTorch (seq, batch, d_model)
    memory = jax.random.normal(k_mem, (Sm, B, D), jnp.float32)
    weights = make_params(k_par, D, NHEAD, DFF)

    out = transformer_decoder_layer(tgt, memory, weights, NHEAD)
    out = jax.block_until_ready(out)

    ref = reference_forward(tgt, memory, weights, NHEAD)
    assert out.shape == (S, B, D)
    # Deliberate precision trade vs the f32 reference: bf16 activations at the HBM
    # boundary, bf16 matmul operands (f32 MXU accumulation) and approx-reciprocal
    # softmax.  Use f32 I/O + exact reciprocal if tighter PyTorch parity is needed.
    max_err = float(jnp.max(jnp.abs(out - ref)))
    mean_err = float(jnp.mean(jnp.abs(out - ref)))
    assert max_err < 1e-1, f"mismatch vs reference: max abs err = {max_err}"
    assert mean_err < 1e-2, f"mismatch vs reference: mean abs err = {mean_err}"

    print("KERNEL_OK")
</pallas_src>

<mosaic_0001>
module attributes {stable_mosaic.version = 11 : i64} {
  func.func @decoder_layer_kernel(%arg0: i32, %arg1: memref<8x128xbf16, #tpu.memory_space<vmem>>, %arg2: memref<8x128xbf16, #tpu.memory_space<vmem>>, %arg3: memref<128x128xbf16, #tpu.memory_space<vmem>>, %arg4: memref<128x128xbf16, #tpu.memory_space<vmem>>, %arg5: memref<128x128xbf16, #tpu.memory_space<vmem>>, %arg6: memref<1x128xf32, #tpu.memory_space<vmem>>, %arg7: memref<1x128xf32, #tpu.memory_space<vmem>>, %arg8: memref<1x128xf32, #tpu.memory_space<vmem>>, %arg9: memref<128x128xbf16, #tpu.memory_space<vmem>>, %arg10: memref<1x128xf32, #tpu.memory_space<vmem>>, %arg11: memref<128x128xbf16, #tpu.memory_space<vmem>>, %arg12: memref<128x128xbf16, #tpu.memory_space<vmem>>, %arg13: memref<128x128xbf16, #tpu.memory_space<vmem>>, %arg14: memref<1x128xf32, #tpu.memory_space<vmem>>, %arg15: memref<1x128xf32, #tpu.memory_space<vmem>>, %arg16: memref<1x128xf32, #tpu.memory_space<vmem>>, %arg17: memref<128x128xbf16, #tpu.memory_space<vmem>>, %arg18: memref<1x128xf32, #tpu.memory_space<vmem>>, %arg19: memref<128x128xbf16, #tpu.memory_space<vmem>>, %arg20: memref<1x128xf32, #tpu.memory_space<vmem>>, %arg21: memref<128x128xbf16, #tpu.memory_space<vmem>>, %arg22: memref<1x128xf32, #tpu.memory_space<vmem>>, %arg23: memref<8x128xf32, #tpu.memory_space<vmem>>) attributes {dimension_semantics = [#tpu.dimension_semantics<parallel>], iteration_bounds = array<i64: 2>, scalar_prefetch = 0 : i64, scratch_operands = 0 : i64, tpu.core_type = #tpu.core_type<tc>, window_params = [{transform_indices = @transform_0, window_bounds = array<i64: 8, 128>}, {transform_indices = @transform_1, window_bounds = array<i64: 8, 128>}, {pipeline_mode = #tpu.pipeline_mode<synchronous>, transform_indices = @transform_2, window_bounds = array<i64: 128, 128>}, {pipeline_mode = #tpu.pipeline_mode<synchronous>, transform_indices = @transform_3, window_bounds = array<i64: 128, 128>}, {pipeline_mode = #tpu.pipeline_mode<synchronous>, transform_indices = @transform_4, window_bounds = array<i64: 128, 128>}, {pipeline_mode = #tpu.pipeline_mode<synchronous>, transform_indices = @transform_5, window_bounds = array<i64: 1, 128>}, {pipeline_mode = #tpu.pipeline_mode<synchronous>, transform_indices = @transform_6, window_bounds = array<i64: 1, 128>}, {pipeline_mode = #tpu.pipeline_mode<synchronous>, transform_indices = @transform_7, window_bounds = array<i64: 1, 128>}, {pipeline_mode = #tpu.pipeline_mode<synchronous>, transform_indices = @transform_8, window_bounds = array<i64: 128, 128>}, {pipeline_mode = #tpu.pipeline_mode<synchronous>, transform_indices = @transform_9, window_bounds = array<i64: 1, 128>}, {pipeline_mode = #tpu.pipeline_mode<synchronous>, transform_indices = @transform_10, window_bounds = array<i64: 128, 128>}, {pipeline_mode = #tpu.pipeline_mode<synchronous>, transform_indices = @transform_11, window_bounds = array<i64: 128, 128>}, {pipeline_mode = #tpu.pipeline_mode<synchronous>, transform_indices = @transform_12, window_bounds = array<i64: 128, 128>}, {pipeline_mode = #tpu.pipeline_mode<synchronous>, transform_indices = @transform_13, window_bounds = array<i64: 1, 128>}, {pipeline_mode = #tpu.pipeline_mode<synchronous>, transform_indices = @transform_14, window_bounds = array<i64: 1, 128>}, {pipeline_mode = #tpu.pipeline_mode<synchronous>, transform_indices = @transform_15, window_bounds = array<i64: 1, 128>}, {pipeline_mode = #tpu.pipeline_mode<synchronous>, transform_indices = @transform_16, window_bounds = array<i64: 128, 128>}, {pipeline_mode = #tpu.pipeline_mode<synchronous>, transform_indices = @transform_17, window_bounds = array<i64: 1, 128>}, {pipeline_mode = #tpu.pipeline_mode<synchronous>, transform_indices = @transform_18, window_bounds = array<i64: 128, 128>}, {pipeline_mode = #tpu.pipeline_mode<synchronous>, transform_indices = @transform_19, window_bounds = array<i64: 1, 128>}, {pipeline_mode = #tpu.pipeline_mode<synchronous>, transform_indices = @transform_20, window_bounds = array<i64: 128, 128>}, {pipeline_mode = #tpu.pipeline_mode<synchronous>, transform_indices = @transform_21, window_bounds = array<i64: 1, 128>}, {transform_indices = @transform_22, window_bounds = array<i64: 8, 128>}]} {
    %c0 = arith.constant 0 : index
    %c0_0 = arith.constant 0 : index
    %0 = vector.load %arg1[%c0, %c0_0] : memref<8x128xbf16, #tpu.memory_space<vmem>>, vector<8x128xbf16>
    %1 = arith.extf %0 : vector<8x128xbf16> to vector<8x128xf32>
    %c0_1 = arith.constant 0 : index
    %c0_2 = arith.constant 0 : index
    %2 = vector.load %arg2[%c0_1, %c0_2] : memref<8x128xbf16, #tpu.memory_space<vmem>>, vector<8x128xbf16>
    %3 = arith.truncf %1 : vector<8x128xf32> to vector<8x128xbf16>
    %c0_3 = arith.constant 0 : index
    %c0_4 = arith.constant 0 : index
    %4 = vector.load %arg3[%c0_3, %c0_4] : memref<128x128xbf16, #tpu.memory_space<vmem>>, vector<128x128xbf16>
    %c0_5 = arith.constant 0 : index
    %c0_6 = arith.constant 0 : index
    %5 = vector.load %arg4[%c0_5, %c0_6] : memref<128x128xbf16, #tpu.memory_space<vmem>>, vector<128x128xbf16>
    %c0_7 = arith.constant 0 : index
    %c0_8 = arith.constant 0 : index
    %6 = vector.load %arg5[%c0_7, %c0_8] : memref<128x128xbf16, #tpu.memory_space<vmem>>, vector<128x128xbf16>
    %c0_9 = arith.constant 0 : index
    %c0_10 = arith.constant 0 : index
    %7 = vector.load %arg6[%c0_9, %c0_10] : memref<1x128xf32, #tpu.memory_space<vmem>>, vector<1x128xf32>
    %c0_11 = arith.constant 0 : index
    %c0_12 = arith.constant 0 : index
    %8 = vector.load %arg7[%c0_11, %c0_12] : memref<1x128xf32, #tpu.memory_space<vmem>>, vector<1x128xf32>
    %c0_13 = arith.constant 0 : index
    %c0_14 = arith.constant 0 : index
    %9 = vector.load %arg8[%c0_13, %c0_14] : memref<1x128xf32, #tpu.memory_space<vmem>>, vector<1x128xf32>
    %c0_15 = arith.constant 0 : index
    %c0_16 = arith.constant 0 : index
    %10 = vector.load %arg9[%c0_15, %c0_16] : memref<128x128xbf16, #tpu.memory_space<vmem>>, vector<128x128xbf16>
    %c0_17 = arith.constant 0 : index
    %c0_18 = arith.constant 0 : index
    %11 = vector.load %arg10[%c0_17, %c0_18] : memref<1x128xf32, #tpu.memory_space<vmem>>, vector<1x128xf32>
    %cst = arith.constant dense<0.000000e+00> : vector<8x128xf32>
    %12 = tpu.matmul %3, %4, %cst {dimension_numbers = #tpu.dot_dimension_numbers<[1], [0], [0], [1], [0, 0, 1, 1], [], []>} : vector<8x128xbf16>, vector<128x128xbf16>, vector<8x128xf32> -> vector<8x128xf32>
    %13 = vector.broadcast %7 : vector<1x128xf32> to vector<8x128xf32>
    %14 = arith.addf %12, %13 : vector<8x128xf32>
    %cst_19 = arith.constant 0.353553385 : f32
    %15 = vector.broadcast %cst_19 : f32 to vector<8x128xf32>
    %16 = arith.mulf %14, %15 : vector<8x128xf32>
    %cst_20 = arith.constant dense<0.000000e+00> : vector<8x128xf32>
    %17 = tpu.matmul %3, %5, %cst_20 {dimension_numbers = #tpu.dot_dimension_numbers<[1], [0], [0], [1], [0, 0, 1, 1], [], []>} : vector<8x128xbf16>, vector<128x128xbf16>, vector<8x128xf32> -> vector<8x128xf32>
    %18 = vector.broadcast %8 : vector<1x128xf32> to vector<8x128xf32>
    %19 = arith.addf %17, %18 : vector<8x128xf32>
    %cst_21 = arith.constant dense<0.000000e+00> : vector<8x128xf32>
    %20 = tpu.matmul %3, %6, %cst_21 {dimension_numbers = #tpu.dot_dimension_numbers<[1], [0], [0], [1], [0, 0, 1, 1], [], []>} : vector<8x128xbf16>, vector<128x128xbf16>, vector<8x128xf32> -> vector<8x128xf32>
    %21 = vector.broadcast %9 : vector<1x128xf32> to vector<8x128xf32>
    %22 = arith.addf %20, %21 : vector<8x128xf32>
    %23 = arith.truncf %16 : vector<8x128xf32> to vector<8x128xbf16>
    %24 = vector.shape_cast %23 : vector<8x128xbf16> to vector<1x8x128xbf16>
    %25 = arith.truncf %19 : vector<8x128xf32> to vector<8x128xbf16>
    %26 = vector.shape_cast %25 : vector<8x128xbf16> to vector<1x8x128xbf16>
    %27 = arith.truncf %22 : vector<8x128xf32> to vector<8x128xbf16>
    %28 = vector.shape_cast %27 : vector<8x128xbf16> to vector<1x8x128xbf16>
    %29 = vector.extract_strided_slice %24 {offsets = [0, 0, 0], sizes = [1, 8, 32], strides = [1, 1, 1]} : vector<1x8x128xbf16> to vector<1x8x32xbf16>
    %30 = vector.extract_strided_slice %26 {offsets = [0, 0, 0], sizes = [1, 8, 32], strides = [1, 1, 1]} : vector<1x8x128xbf16> to vector<1x8x32xbf16>
    "tpu.trace_start"() <{level = 10 : i32, message = "bqd,bkd->bqk"}> : () -> ()
    %cst_22 = arith.constant dense<0.000000e+00> : vector<1x8x8xf32>
    %31 = tpu.matmul %29, %30, %cst_22 {dimension_numbers = #tpu.dot_dimension_numbers<[2], [2], [1], [1], [0, 0, 0, 1, 1, 1], [0], [0]>} : vector<1x8x32xbf16>, vector<1x8x32xbf16>, vector<1x8x8xf32> -> vector<1x8x8xf32>
    "tpu.trace_stop"() : () -> ()
    %cst_23 = arith.constant dense<0xFF800000> : vector<1x8xf32>
    %32 = vector.multi_reduction <maximumf>, %31, %cst_23 [2] : vector<1x8x8xf32> to vector<1x8xf32>
    %33 = vector.shape_cast %32 : vector<1x8xf32> to vector<1x8x1xf32>
    %34 = vector.broadcast %33 : vector<1x8x1xf32> to vector<1x8x8xf32>
    %35 = arith.subf %31, %34 : vector<1x8x8xf32>
    %36 = math.exp %35 : vector<1x8x8xf32>
    %cst_24 = arith.constant dense<0.000000e+00> : vector<1x8xf32>
    %37 = vector.multi_reduction <add>, %36, %cst_24 [2] : vector<1x8x8xf32> to vector<1x8xf32>
    %38 = vector.shape_cast %37 : vector<1x8xf32> to vector<1x8x1xf32>
    %39 = tpu.reciprocal %38 {approx = true} : vector<1x8x1xf32> -> vector<1x8x1xf32>
    %40 = vector.broadcast %39 : vector<1x8x1xf32> to vector<1x8x8xf32>
    %41 = arith.mulf %36, %40 : vector<1x8x8xf32>
    %42 = arith.truncf %41 : vector<1x8x8xf32> to vector<1x8x8xbf16>
    %43 = vector.extract_strided_slice %28 {offsets = [0, 0, 0], sizes = [1, 8, 32], strides = [1, 1, 1]} : vector<1x8x128xbf16> to vector<1x8x32xbf16>
    "tpu.trace_start"() <{level = 10 : i32, message = "bqk,bkd->bqd"}> : () -> ()
    %cst_25 = arith.constant dense<0.000000e+00> : vector<1x8x32xf32>
    %44 = tpu.matmul %42, %43, %cst_25 {dimension_numbers = #tpu.dot_dimension_numbers<[2], [1], [1], [2], [0, 0, 0, 1, 1, 2], [0], [0]>} : vector<1x8x8xbf16>, vector<1x8x32xbf16>, vector<1x8x32xf32> -> vector<1x8x32xf32>
    "tpu.trace_stop"() : () -> ()
    %45 = arith.truncf %44 : vector<1x8x32xf32> to vector<1x8x32xbf16>
    %46 = vector.shape_cast %45 : vector<1x8x32xbf16> to vector<8x32xbf16>
    %47 = vector.extract_strided_slice %24 {offsets = [0, 0, 32], sizes = [1, 8, 32], strides = [1, 1, 1]} : vector<1x8x128xbf16> to vector<1x8x32xbf16>
    %48 = vector.extract_strided_slice %26 {offsets = [0, 0, 32], sizes = [1, 8, 32], strides = [1, 1, 1]} : vector<1x8x128xbf16> to vector<1x8x32xbf16>
    "tpu.trace_start"() <{level = 10 : i32, message = "bqd,bkd->bqk"}> : () -> ()
    %cst_26 = arith.constant dense<0.000000e+00> : vector<1x8x8xf32>
    %49 = tpu.matmul %47, %48, %cst_26 {dimension_numbers = #tpu.dot_dimension_numbers<[2], [2], [1], [1], [0, 0, 0, 1, 1, 1], [0], [0]>} : vector<1x8x32xbf16>, vector<1x8x32xbf16>, vector<1x8x8xf32> -> vector<1x8x8xf32>
    "tpu.trace_stop"() : () -> ()
    %cst_27 = arith.constant dense<0xFF800000> : vector<1x8xf32>
    %50 = vector.multi_reduction <maximumf>, %49, %cst_27 [2] : vector<1x8x8xf32> to vector<1x8xf32>
    %51 = vector.shape_cast %50 : vector<1x8xf32> to vector<1x8x1xf32>
    %52 = vector.broadcast %51 : vector<1x8x1xf32> to vector<1x8x8xf32>
    %53 = arith.subf %49, %52 : vector<1x8x8xf32>
    %54 = math.exp %53 : vector<1x8x8xf32>
    %cst_28 = arith.constant dense<0.000000e+00> : vector<1x8xf32>
    %55 = vector.multi_reduction <add>, %54, %cst_28 [2] : vector<1x8x8xf32> to vector<1x8xf32>
    %56 = vector.shape_cast %55 : vector<1x8xf32> to vector<1x8x1xf32>
    %57 = tpu.reciprocal %56 {approx = true} : vector<1x8x1xf32> -> vector<1x8x1xf32>
    %58 = vector.broadcast %57 : vector<1x8x1xf32> to vector<1x8x8xf32>
    %59 = arith.mulf %54, %58 : vector<1x8x8xf32>
    %60 = arith.truncf %59 : vector<1x8x8xf32> to vector<1x8x8xbf16>
    %61 = vector.extract_strided_slice %28 {offsets = [0, 0, 32], sizes = [1, 8, 32], strides = [1, 1, 1]} : vector<1x8x128xbf16> to vector<1x8x32xbf16>
    "tpu.trace_start"() <{level = 10 : i32, message = "bqk,bkd->bqd"}> : () -> ()
    %cst_29 = arith.constant dense<0.000000e+00> : vector<1x8x32xf32>
    %62 = tpu.matmul %60, %61, %cst_29 {dimension_numbers = #tpu.dot_dimension_numbers<[2], [1], [1], [2], [0, 0, 0, 1, 1, 2], [0], [0]>} : vector<1x8x8xbf16>, vector<1x8x32xbf16>, vector<1x8x32xf32> -> vector<1x8x32xf32>
    "tpu.trace_stop"() : () -> ()
    %63 = arith.truncf %62 : vector<1x8x32xf32> to vector<1x8x32xbf16>
    %64 = vector.shape_cast %63 : vector<1x8x32xbf16> to vector<8x32xbf16>
    %65 = vector.extract_strided_slice %24 {offsets = [0, 0, 64], sizes = [1, 8, 32], strides = [1, 1, 1]} : vector<1x8x128xbf16> to vector<1x8x32xbf16>
    %66 = vector.extract_strided_slice %26 {offsets = [0, 0, 64], sizes = [1, 8, 32], strides = [1, 1, 1]} : vector<1x8x128xbf16> to vector<1x8x32xbf16>
    "tpu.trace_start"() <{level = 10 : i32, message = "bqd,bkd->bqk"}> : () -> ()
    %cst_30 = arith.constant dense<0.000000e+00> : vector<1x8x8xf32>
    %67 = tpu.matmul %65, %66, %cst_30 {dimension_numbers = #tpu.dot_dimension_numbers<[2], [2], [1], [1], [0, 0, 0, 1, 1, 1], [0], [0]>} : vector<1x8x32xbf16>, vector<1x8x32xbf16>, vector<1x8x8xf32> -> vector<1x8x8xf32>
    "tpu.trace_stop"() : () -> ()
    %cst_31 = arith.constant dense<0xFF800000> : vector<1x8xf32>
    %68 = vector.multi_reduction <maximumf>, %67, %cst_31 [2] : vector<1x8x8xf32> to vector<1x8xf32>
    %69 = vector.shape_cast %68 : vector<1x8xf32> to vector<1x8x1xf32>
    %70 = vector.broadcast %69 : vector<1x8x1xf32> to vector<1x8x8xf32>
    %71 = arith.subf %67, %70 : vector<1x8x8xf32>
    %72 = math.exp %71 : vector<1x8x8xf32>
    %cst_32 = arith.constant dense<0.000000e+00> : vector<1x8xf32>
    %73 = vector.multi_reduction <add>, %72, %cst_32 [2] : vector<1x8x8xf32> to vector<1x8xf32>
    %74 = vector.shape_cast %73 : vector<1x8xf32> to vector<1x8x1xf32>
    %75 = tpu.reciprocal %74 {approx = true} : vector<1x8x1xf32> -> vector<1x8x1xf32>
    %76 = vector.broadcast %75 : vector<1x8x1xf32> to vector<1x8x8xf32>
    %77 = arith.mulf %72, %76 : vector<1x8x8xf32>
    %78 = arith.truncf %77 : vector<1x8x8xf32> to vector<1x8x8xbf16>
    %79 = vector.extract_strided_slice %28 {offsets = [0, 0, 64], sizes = [1, 8, 32], strides = [1, 1, 1]} : vector<1x8x128xbf16> to vector<1x8x32xbf16>
    "tpu.trace_start"() <{level = 10 : i32, message = "bqk,bkd->bqd"}> : () -> ()
    %cst_33 = arith.constant dense<0.000000e+00> : vector<1x8x32xf32>
    %80 = tpu.matmul %78, %79, %cst_33 {dimension_numbers = #tpu.dot_dimension_numbers<[2], [1], [1], [2], [0, 0, 0, 1, 1, 2], [0], [0]>} : vector<1x8x8xbf16>, vector<1x8x32xbf16>, vector<1x8x32xf32> -> vector<1x8x32xf32>
    "tpu.trace_stop"() : () -> ()
    %81 = arith.truncf %80 : vector<1x8x32xf32> to vector<1x8x32xbf16>
    %82 = vector.shape_cast %81 : vector<1x8x32xbf16> to vector<8x32xbf16>
    %83 = vector.extract_strided_slice %24 {offsets = [0, 0, 96], sizes = [1, 8, 32], strides = [1, 1, 1]} : vector<1x8x128xbf16> to vector<1x8x32xbf16>
    %84 = vector.extract_strided_slice %26 {offsets = [0, 0, 96], sizes = [1, 8, 32], strides = [1, 1, 1]} : vector<1x8x128xbf16> to vector<1x8x32xbf16>
    "tpu.trace_start"() <{level = 10 : i32, message = "bqd,bkd->bqk"}> : () -> ()
    %cst_34 = arith.constant dense<0.000000e+00> : vector<1x8x8xf32>
    %85 = tpu.matmul %83, %84, %cst_34 {dimension_numbers = #tpu.dot_dimension_numbers<[2], [2], [1], [1], [0, 0, 0, 1, 1, 1], [0], [0]>} : vector<1x8x32xbf16>, vector<1x8x32xbf16>, vector<1x8x8xf32> -> vector<1x8x8xf32>
    "tpu.trace_stop"() : () -> ()
    %cst_35 = arith.constant dense<0xFF800000> : vector<1x8xf32>
    %86 = vector.multi_reduction <maximumf>, %85, %cst_35 [2] : vector<1x8x8xf32> to vector<1x8xf32>
    %87 = vector.shape_cast %86 : vector<1x8xf32> to vector<1x8x1xf32>
    %88 = vector.broadcast %87 : vector<1x8x1xf32> to vector<1x8x8xf32>
    %89 = arith.subf %85, %88 : vector<1x8x8xf32>
    %90 = math.exp %89 : vector<1x8x8xf32>
    %cst_36 = arith.constant dense<0.000000e+00> : vector<1x8xf32>
    %91 = vector.multi_reduction <add>, %90, %cst_36 [2] : vector<1x8x8xf32> to vector<1x8xf32>
    %92 = vector.shape_cast %91 : vector<1x8xf32> to vector<1x8x1xf32>
    %93 = tpu.reciprocal %92 {approx = true} : vector<1x8x1xf32> -> vector<1x8x1xf32>
    %94 = vector.broadcast %93 : vector<1x8x1xf32> to vector<1x8x8xf32>
    %95 = arith.mulf %90, %94 : vector<1x8x8xf32>
    %96 = arith.truncf %95 : vector<1x8x8xf32> to vector<1x8x8xbf16>
    %97 = vector.extract_strided_slice %28 {offsets = [0, 0, 96], sizes = [1, 8, 32], strides = [1, 1, 1]} : vector<1x8x128xbf16> to vector<1x8x32xbf16>
    "tpu.trace_start"() <{level = 10 : i32, message = "bqk,bkd->bqd"}> : () -> ()
    %cst_37 = arith.constant dense<0.000000e+00> : vector<1x8x32xf32>
    %98 = tpu.matmul %96, %97, %cst_37 {dimension_numbers = #tpu.dot_dimension_numbers<[2], [1], [1], [2], [0, 0, 0, 1, 1, 2], [0], [0]>} : vector<1x8x8xbf16>, vector<1x8x32xbf16>, vector<1x8x32xf32> -> vector<1x8x32xf32>
    "tpu.trace_stop"() : () -> ()
    %99 = arith.truncf %98 : vector<1x8x32xf32> to vector<1x8x32xbf16>
    %100 = vector.shape_cast %99 : vector<1x8x32xbf16> to vector<8x32xbf16>
    %101 = tpu.concatenate %46, %64, %82, %100 in 1 : vector<8x32xbf16>, vector<8x32xbf16>, vector<8x32xbf16>, vector<8x32xbf16> -> vector<8x128xbf16>
    %cst_38 = arith.constant dense<0.000000e+00> : vector<8x128xf32>
    %102 = tpu.matmul %101, %10, %cst_38 {dimension_numbers = #tpu.dot_dimension_numbers<[1], [0], [0], [1], [0, 0, 1, 1], [], []>} : vector<8x128xbf16>, vector<128x128xbf16>, vector<8x128xf32> -> vector<8x128xf32>
    %103 = vector.broadcast %11 : vector<1x128xf32> to vector<8x128xf32>
    %104 = arith.addf %102, %103 : vector<8x128xf32>
    %105 = arith.addf %1, %104 : vector<8x128xf32>
    %106 = arith.truncf %105 : vector<8x128xf32> to vector<8x128xbf16>
    %c0_39 = arith.constant 0 : index
    %c0_40 = arith.constant 0 : index
    %107 = vector.load %arg11[%c0_39, %c0_40] : memref<128x128xbf16, #tpu.memory_space<vmem>>, vector<128x128xbf16>
    %c0_41 = arith.constant 0 : index
    %c0_42 = arith.constant 0 : index
    %108 = vector.load %arg12[%c0_41, %c0_42] : memref<128x128xbf16, #tpu.memory_space<vmem>>, vector<128x128xbf16>
    %c0_43 = arith.constant 0 : index
    %c0_44 = arith.constant 0 : index
    %109 = vector.load %arg13[%c0_43, %c0_44] : memref<128x128xbf16, #tpu.memory_space<vmem>>, vector<128x128xbf16>
    %c0_45 = arith.constant 0 : index
    %c0_46 = arith.constant 0 : index
    %110 = vector.load %arg14[%c0_45, %c0_46] : memref<1x128xf32, #tpu.memory_space<vmem>>, vector<1x128xf32>
    %c0_47 = arith.constant 0 : index
    %c0_48 = arith.constant 0 : index
    %111 = vector.load %arg15[%c0_47, %c0_48] : memref<1x128xf32, #tpu.memory_space<vmem>>, vector<1x128xf32>
    %c0_49 = arith.constant 0 : index
    %c0_50 = arith.constant 0 : index
    %112 = vector.load %arg16[%c0_49, %c0_50] : memref<1x128xf32, #tpu.memory_space<vmem>>, vector<1x128xf32>
    %c0_51 = arith.constant 0 : index
    %c0_52 = arith.constant 0 : index
    %113 = vector.load %arg17[%c0_51, %c0_52] : memref<128x128xbf16, #tpu.memory_space<vmem>>, vector<128x128xbf16>
    %c0_53 = arith.constant 0 : index
    %c0_54 = arith.constant 0 : index
    %114 = vector.load %arg18[%c0_53, %c0_54] : memref<1x128xf32, #tpu.memory_space<vmem>>, vector<1x128xf32>
    %cst_55 = arith.constant dense<0.000000e+00> : vector<8x128xf32>
    %115 = tpu.matmul %106, %107, %cst_55 {dimension_numbers = #tpu.dot_dimension_numbers<[1], [0], [0], [1], [0, 0, 1, 1], [], []>} : vector<8x128xbf16>, vector<128x128xbf16>, vector<8x128xf32> -> vector<8x128xf32>
    %116 = vector.broadcast %110 : vector<1x128xf32> to vector<8x128xf32>
    %117 = arith.addf %115, %116 : vector<8x128xf32>
    %cst_56 = arith.constant 0.353553385 : f32
    %118 = vector.broadcast %cst_56 : f32 to vector<8x128xf32>
    %119 = arith.mulf %117, %118 : vector<8x128xf32>
    %cst_57 = arith.constant dense<0.000000e+00> : vector<8x128xf32>
    %120 = tpu.matmul %2, %108, %cst_57 {dimension_numbers = #tpu.dot_dimension_numbers<[1], [0], [0], [1], [0, 0, 1, 1], [], []>} : vector<8x128xbf16>, vector<128x128xbf16>, vector<8x128xf32> -> vector<8x128xf32>
    %121 = vector.broadcast %111 : vector<1x128xf32> to vector<8x128xf32>
    %122 = arith.addf %120, %121 : vector<8x128xf32>
    %cst_58 = arith.constant dense<0.000000e+00> : vector<8x128xf32>
    %123 = tpu.matmul %2, %109, %cst_58 {dimension_numbers = #tpu.dot_dimension_numbers<[1], [0], [0], [1], [0, 0, 1, 1], [], []>} : vector<8x128xbf16>, vector<128x128xbf16>, vector<8x128xf32> -> vector<8x128xf32>
    %124 = vector.broadcast %112 : vector<1x128xf32> to vector<8x128xf32>
    %125 = arith.addf %123, %124 : vector<8x128xf32>
    %126 = arith.truncf %119 : vector<8x128xf32> to vector<8x128xbf16>
    %127 = vector.shape_cast %126 : vector<8x128xbf16> to vector<1x8x128xbf16>
    %128 = arith.truncf %122 : vector<8x128xf32> to vector<8x128xbf16>
    %129 = vector.shape_cast %128 : vector<8x128xbf16> to vector<1x8x128xbf16>
    %130 = arith.truncf %125 : vector<8x128xf32> to vector<8x128xbf16>
    %131 = vector.shape_cast %130 : vector<8x128xbf16> to vector<1x8x128xbf16>
    %132 = vector.extract_strided_slice %127 {offsets = [0, 0, 0], sizes = [1, 8, 32], strides = [1, 1, 1]} : vector<1x8x128xbf16> to vector<1x8x32xbf16>
    %133 = vector.extract_strided_slice %129 {offsets = [0, 0, 0], sizes = [1, 8, 32], strides = [1, 1, 1]} : vector<1x8x128xbf16> to vector<1x8x32xbf16>
    "tpu.trace_start"() <{level = 10 : i32, message = "bqd,bkd->bqk"}> : () -> ()
    %cst_59 = arith.constant dense<0.000000e+00> : vector<1x8x8xf32>
    %134 = tpu.matmul %132, %133, %cst_59 {dimension_numbers = #tpu.dot_dimension_numbers<[2], [2], [1], [1], [0, 0, 0, 1, 1, 1], [0], [0]>} : vector<1x8x32xbf16>, vector<1x8x32xbf16>, vector<1x8x8xf32> -> vector<1x8x8xf32>
    "tpu.trace_stop"() : () -> ()
    %cst_60 = arith.constant dense<0xFF800000> : vector<1x8xf32>
    %135 = vector.multi_reduction <maximumf>, %134, %cst_60 [2] : vector<1x8x8xf32> to vector<1x8xf32>
    %136 = vector.shape_cast %135 : vector<1x8xf32> to vector<1x8x1xf32>
    %137 = vector.broadcast %136 : vector<1x8x1xf32> to vector<1x8x8xf32>
    %138 = arith.subf %134, %137 : vector<1x8x8xf32>
    %139 = math.exp %138 : vector<1x8x8xf32>
    %cst_61 = arith.constant dense<0.000000e+00> : vector<1x8xf32>
    %140 = vector.multi_reduction <add>, %139, %cst_61 [2] : vector<1x8x8xf32> to vector<1x8xf32>
    %141 = vector.shape_cast %140 : vector<1x8xf32> to vector<1x8x1xf32>
    %142 = tpu.reciprocal %141 {approx = true} : vector<1x8x1xf32> -> vector<1x8x1xf32>
    %143 = vector.broadcast %142 : vector<1x8x1xf32> to vector<1x8x8xf32>
    %144 = arith.mulf %139, %143 : vector<1x8x8xf32>
    %145 = arith.truncf %144 : vector<1x8x8xf32> to vector<1x8x8xbf16>
    %146 = vector.extract_strided_slice %131 {offsets = [0, 0, 0], sizes = [1, 8, 32], strides = [1, 1, 1]} : vector<1x8x128xbf16> to vector<1x8x32xbf16>
    "tpu.trace_start"() <{level = 10 : i32, message = "bqk,bkd->bqd"}> : () -> ()
    %cst_62 = arith.constant dense<0.000000e+00> : vector<1x8x32xf32>
    %147 = tpu.matmul %145, %146, %cst_62 {dimension_numbers = #tpu.dot_dimension_numbers<[2], [1], [1], [2], [0, 0, 0, 1, 1, 2], [0], [0]>} : vector<1x8x8xbf16>, vector<1x8x32xbf16>, vector<1x8x32xf32> -> vector<1x8x32xf32>
    "tpu.trace_stop"() : () -> ()
    %148 = arith.truncf %147 : vector<1x8x32xf32> to vector<1x8x32xbf16>
    %149 = vector.shape_cast %148 : vector<1x8x32xbf16> to vector<8x32xbf16>
    %150 = vector.extract_strided_slice %127 {offsets = [0, 0, 32], sizes = [1, 8, 32], strides = [1, 1, 1]} : vector<1x8x128xbf16> to vector<1x8x32xbf16>
    %151 = vector.extract_strided_slice %129 {offsets = [0, 0, 32], sizes = [1, 8, 32], strides = [1, 1, 1]} : vector<1x8x128xbf16> to vector<1x8x32xbf16>
    "tpu.trace_start"() <{level = 10 : i32, message = "bqd,bkd->bqk"}> : () -> ()
    %cst_63 = arith.constant dense<0.000000e+00> : vector<1x8x8xf32>
    %152 = tpu.matmul %150, %151, %cst_63 {dimension_numbers = #tpu.dot_dimension_numbers<[2], [2], [1], [1], [0, 0, 0, 1, 1, 1], [0], [0]>} : vector<1x8x32xbf16>, vector<1x8x32xbf16>, vector<1x8x8xf32> -> vector<1x8x8xf32>
    "tpu.trace_stop"() : () -> ()
    %cst_64 = arith.constant dense<0xFF800000> : vector<1x8xf32>
    %153 = vector.multi_reduction <maximumf>, %152, %cst_64 [2] : vector<1x8x8xf32> to vector<1x8xf32>
    %154 = vector.shape_cast %153 : vector<1x8xf32> to vector<1x8x1xf32>
    %155 = vector.broadcast %154 : vector<1x8x1xf32> to vector<1x8x8xf32>
    %156 = arith.subf %152, %155 : vector<1x8x8xf32>
    %157 = math.exp %156 : vector<1x8x8xf32>
    %cst_65 = arith.constant dense<0.000000e+00> : vector<1x8xf32>
    %158 = vector.multi_reduction <add>, %157, %cst_65 [2] : vector<1x8x8xf32> to vector<1x8xf32>
    %159 = vector.shape_cast %158 : vector<1x8xf32> to vector<1x8x1xf32>
    %160 = tpu.reciprocal %159 {approx = true} : vector<1x8x1xf32> -> vector<1x8x1xf32>
    %161 = vector.broadcast %160 : vector<1x8x1xf32> to vector<1x8x8xf32>
    %162 = arith.mulf %157, %161 : vector<1x8x8xf32>
    %163 = arith.truncf %162 : vector<1x8x8xf32> to vector<1x8x8xbf16>
    %164 = vector.extract_strided_slice %131 {offsets = [0, 0, 32], sizes = [1, 8, 32], strides = [1, 1, 1]} : vector<1x8x128xbf16> to vector<1x8x32xbf16>
    "tpu.trace_start"() <{level = 10 : i32, message = "bqk,bkd->bqd"}> : () -> ()
    %cst_66 = arith.constant dense<0.000000e+00> : vector<1x8x32xf32>
    %165 = tpu.matmul %163, %164, %cst_66 {dimension_numbers = #tpu.dot_dimension_numbers<[2], [1], [1], [2], [0, 0, 0, 1, 1, 2], [0], [0]>} : vector<1x8x8xbf16>, vector<1x8x32xbf16>, vector<1x8x32xf32> -> vector<1x8x32xf32>
    "tpu.trace_stop"() : () -> ()
    %166 = arith.truncf %165 : vector<1x8x32xf32> to vector<1x8x32xbf16>
    %167 = vector.shape_cast %166 : vector<1x8x32xbf16> to vector<8x32xbf16>
    %168 = vector.extract_strided_slice %127 {offsets = [0, 0, 64], sizes = [1, 8, 32], strides = [1, 1, 1]} : vector<1x8x128xbf16> to vector<1x8x32xbf16>
    %169 = vector.extract_strided_slice %129 {offsets = [0, 0, 64], sizes = [1, 8, 32], strides = [1, 1, 1]} : vector<1x8x128xbf16> to vector<1x8x32xbf16>
    "tpu.trace_start"() <{level = 10 : i32, message = "bqd,bkd->bqk"}> : () -> ()
    %cst_67 = arith.constant dense<0.000000e+00> : vector<1x8x8xf32>
    %170 = tpu.matmul %168, %169, %cst_67 {dimension_numbers = #tpu.dot_dimension_numbers<[2], [2], [1], [1], [0, 0, 0, 1, 1, 1], [0], [0]>} : vector<1x8x32xbf16>, vector<1x8x32xbf16>, vector<1x8x8xf32> -> vector<1x8x8xf32>
    "tpu.trace_stop"() : () -> ()
    %cst_68 = arith.constant dense<0xFF800000> : vector<1x8xf32>
    %171 = vector.multi_reduction <maximumf>, %170, %cst_68 [2] : vector<1x8x8xf32> to vector<1x8xf32>
    %172 = vector.shape_cast %171 : vector<1x8xf32> to vector<1x8x1xf32>
    %173 = vector.broadcast %172 : vector<1x8x1xf32> to vector<1x8x8xf32>
    %174 = arith.subf %170, %173 : vector<1x8x8xf32>
    %175 = math.exp %174 : vector<1x8x8xf32>
    %cst_69 = arith.constant dense<0.000000e+00> : vector<1x8xf32>
    %176 = vector.multi_reduction <add>, %175, %cst_69 [2] : vector<1x8x8xf32> to vector<1x8xf32>
    %177 = vector.shape_cast %176 : vector<1x8xf32> to vector<1x8x1xf32>
    %178 = tpu.reciprocal %177 {approx = true} : vector<1x8x1xf32> -> vector<1x8x1xf32>
    %179 = vector.broadcast %178 : vector<1x8x1xf32> to vector<1x8x8xf32>
    %180 = arith.mulf %175, %179 : vector<1x8x8xf32>
    %181 = arith.truncf %180 : vector<1x8x8xf32> to vector<1x8x8xbf16>
    %182 = vector.extract_strided_slice %131 {offsets = [0, 0, 64], sizes = [1, 8, 32], strides = [1, 1, 1]} : vector<1x8x128xbf16> to vector<1x8x32xbf16>
    "tpu.trace_start"() <{level = 10 : i32, message = "bqk,bkd->bqd"}> : () -> ()
    %cst_70 = arith.constant dense<0.000000e+00> : vector<1x8x32xf32>
    %183 = tpu.matmul %181, %182, %cst_70 {dimension_numbers = #tpu.dot_dimension_numbers<[2], [1], [1], [2], [0, 0, 0, 1, 1, 2], [0], [0]>} : vector<1x8x8xbf16>, vector<1x8x32xbf16>, vector<1x8x32xf32> -> vector<1x8x32xf32>
    "tpu.trace_stop"() : () -> ()
    %184 = arith.truncf %183 : vector<1x8x32xf32> to vector<1x8x32xbf16>
    %185 = vector.shape_cast %184 : vector<1x8x32xbf16> to vector<8x32xbf16>
    %186 = vector.extract_strided_slice %127 {offsets = [0, 0, 96], sizes = [1, 8, 32], strides = [1, 1, 1]} : vector<1x8x128xbf16> to vector<1x8x32xbf16>
    %187 = vector.extract_strided_slice %129 {offsets = [0, 0, 96], sizes = [1, 8, 32], strides = [1, 1, 1]} : vector<1x8x128xbf16> to vector<1x8x32xbf16>
    "tpu.trace_start"() <{level = 10 : i32, message = "bqd,bkd->bqk"}> : () -> ()
    %cst_71 = arith.constant dense<0.000000e+00> : vector<1x8x8xf32>
    %188 = tpu.matmul %186, %187, %cst_71 {dimension_numbers = #tpu.dot_dimension_numbers<[2], [2], [1], [1], [0, 0, 0, 1, 1, 1], [0], [0]>} : vector<1x8x32xbf16>, vector<1x8x32xbf16>, vector<1x8x8xf32> -> vector<1x8x8xf32>
    "tpu.trace_stop"() : () -> ()
    %cst_72 = arith.constant dense<0xFF800000> : vector<1x8xf32>
    %189 = vector.multi_reduction <maximumf>, %188, %cst_72 [2] : vector<1x8x8xf32> to vector<1x8xf32>
    %190 = vector.shape_cast %189 : vector<1x8xf32> to vector<1x8x1xf32>
    %191 = vector.broadcast %190 : vector<1x8x1xf32> to vector<1x8x8xf32>
    %192 = arith.subf %188, %191 : vector<1x8x8xf32>
    %193 = math.exp %192 : vector<1x8x8xf32>
    %cst_73 = arith.constant dense<0.000000e+00> : vector<1x8xf32>
    %194 = vector.multi_reduction <add>, %193, %cst_73 [2] : vector<1x8x8xf32> to vector<1x8xf32>
    %195 = vector.shape_cast %194 : vector<1x8xf32> to vector<1x8x1xf32>
    %196 = tpu.reciprocal %195 {approx = true} : vector<1x8x1xf32> -> vector<1x8x1xf32>
    %197 = vector.broadcast %196 : vector<1x8x1xf32> to vector<1x8x8xf32>
    %198 = arith.mulf %193, %197 : vector<1x8x8xf32>
    %199 = arith.truncf %198 : vector<1x8x8xf32> to vector<1x8x8xbf16>
    %200 = vector.extract_strided_slice %131 {offsets = [0, 0, 96], sizes = [1, 8, 32], strides = [1, 1, 1]} : vector<1x8x128xbf16> to vector<1x8x32xbf16>
    "tpu.trace_start"() <{level = 10 : i32, message = "bqk,bkd->bqd"}> : () -> ()
    %cst_74 = arith.constant dense<0.000000e+00> : vector<1x8x32xf32>
    %201 = tpu.matmul %199, %200, %cst_74 {dimension_numbers = #tpu.dot_dimension_numbers<[2], [1], [1], [2], [0, 0, 0, 1, 1, 2], [0], [0]>} : vector<1x8x8xbf16>, vector<1x8x32xbf16>, vector<1x8x32xf32> -> vector<1x8x32xf32>
    "tpu.trace_stop"() : () -> ()
    %202 = arith.truncf %201 : vector<1x8x32xf32> to vector<1x8x32xbf16>
    %203 = vector.shape_cast %202 : vector<1x8x32xbf16> to vector<8x32xbf16>
    %204 = tpu.concatenate %149, %167, %185, %203 in 1 : vector<8x32xbf16>, vector<8x32xbf16>, vector<8x32xbf16>, vector<8x32xbf16> -> vector<8x128xbf16>
    %cst_75 = arith.constant dense<0.000000e+00> : vector<8x128xf32>
    %205 = tpu.matmul %204, %113, %cst_75 {dimension_numbers = #tpu.dot_dimension_numbers<[1], [0], [0], [1], [0, 0, 1, 1], [], []>} : vector<8x128xbf16>, vector<128x128xbf16>, vector<8x128xf32> -> vector<8x128xf32>
    %206 = vector.broadcast %114 : vector<1x128xf32> to vector<8x128xf32>
    %207 = arith.addf %205, %206 : vector<8x128xf32>
    %208 = arith.addf %105, %207 : vector<8x128xf32>
    %209 = arith.truncf %208 : vector<8x128xf32> to vector<8x128xbf16>
    %c0_76 = arith.constant 0 : index
    %c0_77 = arith.constant 0 : index
    %210 = vector.load %arg19[%c0_76, %c0_77] : memref<128x128xbf16, #tpu.memory_space<vmem>>, vector<128x128xbf16>
    %cst_78 = arith.constant dense<0.000000e+00> : vector<8x128xf32>
    %211 = tpu.matmul %209, %210, %cst_78 {dimension_numbers = #tpu.dot_dimension_numbers<[1], [0], [0], [1], [0, 0, 1, 1], [], []>} : vector<8x128xbf16>, vector<128x128xbf16>, vector<8x128xf32> -> vector<8x128xf32>
    %c0_79 = arith.constant 0 : index
    %c0_80 = arith.constant 0 : index
    %212 = vector.load %arg20[%c0_79, %c0_80] : memref<1x128xf32, #tpu.memory_space<vmem>>, vector<1x128xf32>
    %213 = vector.broadcast %212 : vector<1x128xf32> to vector<8x128xf32>
    %214 = arith.addf %211, %213 : vector<8x128xf32>
    %215 = arith.truncf %214 : vector<8x128xf32> to vector<8x128xbf16>
    %c0_81 = arith.constant 0 : index
    %c0_82 = arith.constant 0 : index
    %216 = vector.load %arg21[%c0_81, %c0_82] : memref<128x128xbf16, #tpu.memory_space<vmem>>, vector<128x128xbf16>
    %cst_83 = arith.constant dense<0.000000e+00> : vector<8x128xf32>
    %217 = tpu.matmul %215, %216, %cst_83 {dimension_numbers = #tpu.dot_dimension_numbers<[1], [0], [0], [1], [0, 0, 1, 1], [], []>} : vector<8x128xbf16>, vector<128x128xbf16>, vector<8x128xf32> -> vector<8x128xf32>
    %c0_84 = arith.constant 0 : index
    %c0_85 = arith.constant 0 : index
    %218 = vector.load %arg22[%c0_84, %c0_85] : memref<1x128xf32, #tpu.memory_space<vmem>>, vector<1x128xf32>
    %219 = vector.broadcast %218 : vector<1x128xf32> to vector<8x128xf32>
    %220 = arith.addf %217, %219 : vector<8x128xf32>
    %221 = arith.addf %208, %220 : vector<8x128xf32>
    %c0_86 = arith.constant 0 : index
    %c0_87 = arith.constant 0 : index
    %222 = vector.load %arg23[%c0_86, %c0_87] : memref<8x128xf32, #tpu.memory_space<vmem>>, vector<8x128xf32>
    tpu.vector_store %arg23[%c0_86, %c0_87], %221 {strides = array<i32>} : memref<8x128xf32, #tpu.memory_space<vmem>>, vector<8x128xf32>,
    return
  }
  func.func @transform_0(%arg0: i32) -> (i32, i32) {
    %c0_i32 = arith.constant 0 : i32
    %c0_i32_0 = arith.constant 0 : i32
    return %arg0, %c0_i32 : i32, i32
  }
  func.func @transform_1(%arg0: i32) -> (i32, i32) {
    %c0_i32 = arith.constant 0 : i32
    %c0_i32_0 = arith.constant 0 : i32
    return %arg0, %c0_i32 : i32, i32
  }
  func.func @transform_2(%arg0: i32) -> (i32, i32) {
    %c0_i32 = arith.constant 0 : i32
    %c0_i32_0 = arith.constant 0 : i32
    %c0_i32_1 = arith.constant 0 : i32
    return %c0_i32, %c0_i32_0 : i32, i32
  }
  func.func @transform_3(%arg0: i32) -> (i32, i32) {
    %c0_i32 = arith.constant 0 : i32
    %c0_i32_0 = arith.constant 0 : i32
    %c0_i32_1 = arith.constant 0 : i32
    return %c0_i32, %c0_i32_0 : i32, i32
  }
  func.func @transform_4(%arg0: i32) -> (i32, i32) {
    %c0_i32 = arith.constant 0 : i32
    %c0_i32_0 = arith.constant 0 : i32
    %c0_i32_1 = arith.constant 0 : i32
    return %c0_i32, %c0_i32_0 : i32, i32
  }
  func.func @transform_5(%arg0: i32) -> (i32, i32) {
    %c0_i32 = arith.constant 0 : i32
    %c0_i32_0 = arith.constant 0 : i32
    %c0_i32_1 = arith.constant 0 : i32
    return %c0_i32, %c0_i32_0 : i32, i32
  }
  func.func @transform_6(%arg0: i32) -> (i32, i32) {
    %c0_i32 = arith.constant 0 : i32
    %c0_i32_0 = arith.constant 0 : i32
    %c0_i32_1 = arith.constant 0 : i32
    return %c0_i32, %c0_i32_0 : i32, i32
  }
  func.func @transform_7(%arg0: i32) -> (i32, i32) {
    %c0_i32 = arith.constant 0 : i32
    %c0_i32_0 = arith.constant 0 : i32
    %c0_i32_1 = arith.constant 0 : i32
    return %c0_i32, %c0_i32_0 : i32, i32
  }
  func.func @transform_8(%arg0: i32) -> (i32, i32) {
    %c0_i32 = arith.constant 0 : i32
    %c0_i32_0 = arith.constant 0 : i32
    %c0_i32_1 = arith.constant 0 : i32
    return %c0_i32, %c0_i32_0 : i32, i32
  }
  func.func @transform_9(%arg0: i32) -> (i32, i32) {
    %c0_i32 = arith.constant 0 : i32
    %c0_i32_0 = arith.constant 0 : i32
    %c0_i32_1 = arith.constant 0 : i32
    return %c0_i32, %c0_i32_0 : i32, i32
  }
  func.func @transform_10(%arg0: i32) -> (i32, i32) {
    %c0_i32 = arith.constant 0 : i32
    %c0_i32_0 = arith.constant 0 : i32
    %c0_i32_1 = arith.constant 0 : i32
    return %c0_i32, %c0_i32_0 : i32, i32
  }
  func.func @transform_11(%arg0: i32) -> (i32, i32) {
    %c0_i32 = arith.constant 0 : i32
    %c0_i32_0 = arith.constant 0 : i32
    %c0_i32_1 = arith.constant 0 : i32
    return %c0_i32, %c0_i32_0 : i32, i32
  }
  func.func @transform_12(%arg0: i32) -> (i32, i32) {
    %c0_i32 = arith.constant 0 : i32
    %c0_i32_0 = arith.constant 0 : i32
    %c0_i32_1 = arith.constant 0 : i32
    return %c0_i32, %c0_i32_0 : i32, i32
  }
  func.func @transform_13(%arg0: i32) -> (i32, i32) {
    %c0_i32 = arith.constant 0 : i32
    %c0_i32_0 = arith.constant 0 : i32
    %c0_i32_1 = arith.constant 0 : i32
    return %c0_i32, %c0_i32_0 : i32, i32
  }
  func.func @transform_14(%arg0: i32) -> (i32, i32) {
    %c0_i32 = arith.constant 0 : i32
    %c0_i32_0 = arith.constant 0 : i32
    %c0_i32_1 = arith.constant 0 : i32
    return %c0_i32, %c0_i32_0 : i32, i32
  }
  func.func @transform_15(%arg0: i32) -> (i32, i32) {
    %c0_i32 = arith.constant 0 : i32
    %c0_i32_0 = arith.constant 0 : i32
    %c0_i32_1 = arith.constant 0 : i32
    return %c0_i32, %c0_i32_0 : i32, i32
  }
  func.func @transform_16(%arg0: i32) -> (i32, i32) {
    %c0_i32 = arith.constant 0 : i32
    %c0_i32_0 = arith.constant 0 : i32
    %c0_i32_1 = arith.constant 0 : i32
    return %c0_i32, %c0_i32_0 : i32, i32
  }
  func.func @transform_17(%arg0: i32) -> (i32, i32) {
    %c0_i32 = arith.constant 0 : i32
    %c0_i32_0 = arith.constant 0 : i32
    %c0_i32_1 = arith.constant 0 : i32
    return %c0_i32, %c0_i32_0 : i32, i32
  }
  func.func @transform_18(%arg0: i32) -> (i32, i32) {
    %c0_i32 = arith.constant 0 : i32
    %c0_i32_0 = arith.constant 0 : i32
    %c0_i32_1 = arith.constant 0 : i32
    return %c0_i32, %c0_i32_0 : i32, i32
  }
  func.func @transform_19(%arg0: i32) -> (i32, i32) {
    %c0_i32 = arith.constant 0 : i32
    %c0_i32_0 = arith.constant 0 : i32
    %c0_i32_1 = arith.constant 0 : i32
    return %c0_i32, %c0_i32_0 : i32, i32
  }
  func.func @transform_20(%arg0: i32) -> (i32, i32) {
    %c0_i32 = arith.constant 0 : i32
    %c0_i32_0 = arith.constant 0 : i32
    %c0_i32_1 = arith.constant 0 : i32
    return %c0_i32, %c0_i32_0 : i32, i32
  }
  func.func @transform_21(%arg0: i32) -> (i32, i32) {
    %c0_i32 = arith.constant 0 : i32
    %c0_i32_0 = arith.constant 0 : i32
    %c0_i32_1 = arith.constant 0 : i32
    return %c0_i32, %c0_i32_0 : i32, i32
  }
  func.func @transform_22(%arg0: i32) -> (i32, i32) {
    %c0_i32 = arith.constant 0 : i32
    %c0_i32_0 = arith.constant 0 : i32
    return %arg0, %c0_i32 : i32, i32
  }
}

module attributes {stable_mosaic.version = 11 : i64} {
  func.func @decoder_layer_kernel(%arg0: i32, %arg1: memref<8x128xbf16, #tpu.memory_space<vmem>>, %arg2: memref<8x128xbf16, #tpu.memory_space<vmem>>, %arg3: memref<128x128xbf16, #tpu.memory_space<vmem>>, %arg4: memref<128x128xbf16, #tpu.memory_space<vmem>>, %arg5: memref<128x128xbf16, #tpu.memory_space<vmem>>, %arg6: memref<1x128xf32, #tpu.memory_space<vmem>>, %arg7: memref<1x128xf32, #tpu.memory_space<vmem>>, %arg8: memref<1x128xf32, #tpu.memory_space<vmem>>, %arg9: memref<128x128xbf16, #tpu.memory_space<vmem>>, %arg10: memref<1x128xf32, #tpu.memory_space<vmem>>, %arg11: memref<128x128xbf16, #tpu.memory_space<vmem>>, %arg12: memref<128x128xbf16, #tpu.memory_space<vmem>>, %arg13: memref<128x128xbf16, #tpu.memory_space<vmem>>, %arg14: memref<1x128xf32, #tpu.memory_space<vmem>>, %arg15: memref<1x128xf32, #tpu.memory_space<vmem>>, %arg16: memref<1x128xf32, #tpu.memory_space<vmem>>, %arg17: memref<128x128xbf16, #tpu.memory_space<vmem>>, %arg18: memref<1x128xf32, #tpu.memory_space<vmem>>, %arg19: memref<128x128xbf16, #tpu.memory_space<vmem>>, %arg20: memref<1x128xf32, #tpu.memory_space<vmem>>, %arg21: memref<128x128xbf16, #tpu.memory_space<vmem>>, %arg22: memref<1x128xf32, #tpu.memory_space<vmem>>, %arg23: memref<8x128xf32, #tpu.memory_space<vmem>>) attributes {dimension_semantics = [#tpu.dimension_semantics<parallel>], iteration_bounds = array<i64: 2>, scalar_prefetch = 0 : i64, scratch_operands = 0 : i64, tpu.core_type = #tpu.core_type<tc>, window_params = [{transform_indices = @transform_0, window_bounds = array<i64: 8, 128>}, {transform_indices = @transform_1, window_bounds = array<i64: 8, 128>}, {pipeline_mode = #tpu.pipeline_mode<synchronous>, transform_indices = @transform_2, window_bounds = array<i64: 128, 128>}, {pipeline_mode = #tpu.pipeline_mode<synchronous>, transform_indices = @transform_3, window_bounds = array<i64: 128, 128>}, {pipeline_mode = #tpu.pipeline_mode<synchronous>, transform_indices = @transform_4, window_bounds = array<i64: 128, 128>}, {pipeline_mode = #tpu.pipeline_mode<synchronous>, transform_indices = @transform_5, window_bounds = array<i64: 1, 128>}, {pipeline_mode = #tpu.pipeline_mode<synchronous>, transform_indices = @transform_6, window_bounds = array<i64: 1, 128>}, {pipeline_mode = #tpu.pipeline_mode<synchronous>, transform_indices = @transform_7, window_bounds = array<i64: 1, 128>}, {pipeline_mode = #tpu.pipeline_mode<synchronous>, transform_indices = @transform_8, window_bounds = array<i64: 128, 128>}, {pipeline_mode = #tpu.pipeline_mode<synchronous>, transform_indices = @transform_9, window_bounds = array<i64: 1, 128>}, {pipeline_mode = #tpu.pipeline_mode<synchronous>, transform_indices = @transform_10, window_bounds = array<i64: 128, 128>}, {pipeline_mode = #tpu.pipeline_mode<synchronous>, transform_indices = @transform_11, window_bounds = array<i64: 128, 128>}, {pipeline_mode = #tpu.pipeline_mode<synchronous>, transform_indices = @transform_12, window_bounds = array<i64: 128, 128>}, {pipeline_mode = #tpu.pipeline_mode<synchronous>, transform_indices = @transform_13, window_bounds = array<i64: 1, 128>}, {pipeline_mode = #tpu.pipeline_mode<synchronous>, transform_indices = @transform_14, window_bounds = array<i64: 1, 128>}, {pipeline_mode = #tpu.pipeline_mode<synchronous>, transform_indices = @transform_15, window_bounds = array<i64: 1, 128>}, {pipeline_mode = #tpu.pipeline_mode<synchronous>, transform_indices = @transform_16, window_bounds = array<i64: 128, 128>}, {pipeline_mode = #tpu.pipeline_mode<synchronous>, transform_indices = @transform_17, window_bounds = array<i64: 1, 128>}, {pipeline_mode = #tpu.pipeline_mode<synchronous>, transform_indices = @transform_18, window_bounds = array<i64: 128, 128>}, {pipeline_mode = #tpu.pipeline_mode<synchronous>, transform_indices = @transform_19, window_bounds = array<i64: 1, 128>}, {pipeline_mode = #tpu.pipeline_mode<synchronous>, transform_indices = @transform_20, window_bounds = array<i64: 128, 128>}, {pipeline_mode = #tpu.pipeline_mode<synchronous>, transform_indices = @transform_21, window_bounds = array<i64: 1, 128>}, {transform_indices = @transform_22, window_bounds = array<i64: 8, 128>}]} {
    %c0 = arith.constant 0 : index
    %c0_0 = arith.constant 0 : index
    %0 = vector.load %arg1[%c0, %c0_0] : memref<8x128xbf16, #tpu.memory_space<vmem>>, vector<8x128xbf16>
    %1 = arith.extf %0 : vector<8x128xbf16> to vector<8x128xf32>
    %c0_1 = arith.constant 0 : index
    %c0_2 = arith.constant 0 : index
    %2 = vector.load %arg2[%c0_1, %c0_2] : memref<8x128xbf16, #tpu.memory_space<vmem>>, vector<8x128xbf16>
    %3 = arith.truncf %1 : vector<8x128xf32> to vector<8x128xbf16>
    %c0_3 = arith.constant 0 : index
    %c0_4 = arith.constant 0 : index
    %4 = vector.load %arg3[%c0_3, %c0_4] : memref<128x128xbf16, #tpu.memory_space<vmem>>, vector<128x128xbf16>
    %c0_5 = arith.constant 0 : index
    %c0_6 = arith.constant 0 : index
    %5 = vector.load %arg4[%c0_5, %c0_6] : memref<128x128xbf16, #tpu.memory_space<vmem>>, vector<128x128xbf16>
    %c0_7 = arith.constant 0 : index
    %c0_8 = arith.constant 0 : index
    %6 = vector.load %arg5[%c0_7, %c0_8] : memref<128x128xbf16, #tpu.memory_space<vmem>>, vector<128x128xbf16>
    %c0_9 = arith.constant 0 : index
    %c0_10 = arith.constant 0 : index
    %7 = vector.load %arg6[%c0_9, %c0_10] : memref<1x128xf32, #tpu.memory_space<vmem>>, vector<1x128xf32>
    %c0_11 = arith.constant 0 : index
    %c0_12 = arith.constant 0 : index
    %8 = vector.load %arg7[%c0_11, %c0_12] : memref<1x128xf32, #tpu.memory_space<vmem>>, vector<1x128xf32>
    %c0_13 = arith.constant 0 : index
    %c0_14 = arith.constant 0 : index
    %9 = vector.load %arg8[%c0_13, %c0_14] : memref<1x128xf32, #tpu.memory_space<vmem>>, vector<1x128xf32>
    %c0_15 = arith.constant 0 : index
    %c0_16 = arith.constant 0 : index
    %10 = vector.load %arg9[%c0_15, %c0_16] : memref<128x128xbf16, #tpu.memory_space<vmem>>, vector<128x128xbf16>
    %c0_17 = arith.constant 0 : index
    %c0_18 = arith.constant 0 : index
    %11 = vector.load %arg10[%c0_17, %c0_18] : memref<1x128xf32, #tpu.memory_space<vmem>>, vector<1x128xf32>
    %cst = arith.constant dense<0.000000e+00> : vector<8x128xf32>
    %12 = tpu.matmul %3, %4, %cst {dimension_numbers = #tpu.dot_dimension_numbers<[1], [0], [0], [1], [0, 0, 1, 1], [], []>} : vector<8x128xbf16>, vector<128x128xbf16>, vector<8x128xf32> -> vector<8x128xf32>
    %13 = vector.broadcast %7 : vector<1x128xf32> to vector<8x128xf32>
    %14 = arith.addf %12, %13 : vector<8x128xf32>
    %cst_19 = arith.constant 0.353553385 : f32
    %15 = vector.broadcast %cst_19 : f32 to vector<8x128xf32>
    %16 = arith.mulf %14, %15 : vector<8x128xf32>
    %cst_20 = arith.constant dense<0.000000e+00> : vector<8x128xf32>
    %17 = tpu.matmul %3, %5, %cst_20 {dimension_numbers = #tpu.dot_dimension_numbers<[1], [0], [0], [1], [0, 0, 1, 1], [], []>} : vector<8x128xbf16>, vector<128x128xbf16>, vector<8x128xf32> -> vector<8x128xf32>
    %18 = vector.broadcast %8 : vector<1x128xf32> to vector<8x128xf32>
    %19 = arith.addf %17, %18 : vector<8x128xf32>
    %cst_21 = arith.constant dense<0.000000e+00> : vector<8x128xf32>
    %20 = tpu.matmul %3, %6, %cst_21 {dimension_numbers = #tpu.dot_dimension_numbers<[1], [0], [0], [1], [0, 0, 1, 1], [], []>} : vector<8x128xbf16>, vector<128x128xbf16>, vector<8x128xf32> -> vector<8x128xf32>
    %21 = vector.broadcast %9 : vector<1x128xf32> to vector<8x128xf32>
    %22 = arith.addf %20, %21 : vector<8x128xf32>
    %23 = arith.truncf %16 : vector<8x128xf32> to vector<8x128xbf16>
    %24 = vector.shape_cast %23 : vector<8x128xbf16> to vector<1x8x128xbf16>
    %25 = arith.truncf %19 : vector<8x128xf32> to vector<8x128xbf16>
    %26 = vector.shape_cast %25 : vector<8x128xbf16> to vector<1x8x128xbf16>
    %27 = arith.truncf %22 : vector<8x128xf32> to vector<8x128xbf16>
    %28 = vector.shape_cast %27 : vector<8x128xbf16> to vector<1x8x128xbf16>
    %29 = vector.extract_strided_slice %24 {offsets = [0, 0, 0], sizes = [1, 8, 32], strides = [1, 1, 1]} : vector<1x8x128xbf16> to vector<1x8x32xbf16>
    %30 = vector.extract_strided_slice %26 {offsets = [0, 0, 0], sizes = [1, 8, 32], strides = [1, 1, 1]} : vector<1x8x128xbf16> to vector<1x8x32xbf16>
    "tpu.trace_start"() <{level = 10 : i32, message = "bqd,bkd->bqk"}> : () -> ()
    %cst_22 = arith.constant dense<0.000000e+00> : vector<1x8x8xf32>
    %31 = tpu.matmul %29, %30, %cst_22 {dimension_numbers = #tpu.dot_dimension_numbers<[2], [2], [1], [1], [0, 0, 0, 1, 1, 1], [0], [0]>} : vector<1x8x32xbf16>, vector<1x8x32xbf16>, vector<1x8x8xf32> -> vector<1x8x8xf32>
    "tpu.trace_stop"() : () -> ()
    %cst_23 = arith.constant dense<0xFF800000> : vector<1x8xf32>
    %32 = vector.multi_reduction <maximumf>, %31, %cst_23 [2] : vector<1x8x8xf32> to vector<1x8xf32>
    %33 = vector.shape_cast %32 : vector<1x8xf32> to vector<1x8x1xf32>
    %34 = vector.broadcast %33 : vector<1x8x1xf32> to vector<1x8x8xf32>
    %35 = arith.subf %31, %34 : vector<1x8x8xf32>
    %36 = math.exp %35 : vector<1x8x8xf32>
    %cst_24 = arith.constant dense<0.000000e+00> : vector<1x8xf32>
    %37 = vector.multi_reduction <add>, %36, %cst_24 [2] : vector<1x8x8xf32> to vector<1x8xf32>
    %38 = vector.shape_cast %37 : vector<1x8xf32> to vector<1x8x1xf32>
    %39 = tpu.reciprocal %38 {approx = true} : vector<1x8x1xf32> -> vector<1x8x1xf32>
    %40 = vector.broadcast %39 : vector<1x8x1xf32> to vector<1x8x8xf32>
    %41 = arith.mulf %36, %40 : vector<1x8x8xf32>
    %42 = arith.truncf %41 : vector<1x8x8xf32> to vector<1x8x8xbf16>
    %43 = vector.extract_strided_slice %28 {offsets = [0, 0, 0], sizes = [1, 8, 32], strides = [1, 1, 1]} : vector<1x8x128xbf16> to vector<1x8x32xbf16>
    "tpu.trace_start"() <{level = 10 : i32, message = "bqk,bkd->bqd"}> : () -> ()
    %cst_25 = arith.constant dense<0.000000e+00> : vector<1x8x32xf32>
    %44 = tpu.matmul %42, %43, %cst_25 {dimension_numbers = #tpu.dot_dimension_numbers<[2], [1], [1], [2], [0, 0, 0, 1, 1, 2], [0], [0]>} : vector<1x8x8xbf16>, vector<1x8x32xbf16>, vector<1x8x32xf32> -> vector<1x8x32xf32>
    "tpu.trace_stop"() : () -> ()
    %45 = arith.truncf %44 : vector<1x8x32xf32> to vector<1x8x32xbf16>
    %46 = vector.shape_cast %45 : vector<1x8x32xbf16> to vector<8x32xbf16>
    %47 = vector.extract_strided_slice %24 {offsets = [0, 0, 32], sizes = [1, 8, 32], strides = [1, 1, 1]} : vector<1x8x128xbf16> to vector<1x8x32xbf16>
    %48 = vector.extract_strided_slice %26 {offsets = [0, 0, 32], sizes = [1, 8, 32], strides = [1, 1, 1]} : vector<1x8x128xbf16> to vector<1x8x32xbf16>
    "tpu.trace_start"() <{level = 10 : i32, message = "bqd,bkd->bqk"}> : () -> ()
    %cst_26 = arith.constant dense<0.000000e+00> : vector<1x8x8xf32>
    %49 = tpu.matmul %47, %48, %cst_26 {dimension_numbers = #tpu.dot_dimension_numbers<[2], [2], [1], [1], [0, 0, 0, 1, 1, 1], [0], [0]>} : vector<1x8x32xbf16>, vector<1x8x32xbf16>, vector<1x8x8xf32> -> vector<1x8x8xf32>
    "tpu.trace_stop"() : () -> ()
    %cst_27 = arith.constant dense<0xFF800000> : vector<1x8xf32>
    %50 = vector.multi_reduction <maximumf>, %49, %cst_27 [2] : vector<1x8x8xf32> to vector<1x8xf32>
    %51 = vector.shape_cast %50 : vector<1x8xf32> to vector<1x8x1xf32>
    %52 = vector.broadcast %51 : vector<1x8x1xf32> to vector<1x8x8xf32>
    %53 = arith.subf %49, %52 : vector<1x8x8xf32>
    %54 = math.exp %53 : vector<1x8x8xf32>
    %cst_28 = arith.constant dense<0.000000e+00> : vector<1x8xf32>
    %55 = vector.multi_reduction <add>, %54, %cst_28 [2] : vector<1x8x8xf32> to vector<1x8xf32>
    %56 = vector.shape_cast %55 : vector<1x8xf32> to vector<1x8x1xf32>
    %57 = tpu.reciprocal %56 {approx = true} : vector<1x8x1xf32> -> vector<1x8x1xf32>
    %58 = vector.broadcast %57 : vector<1x8x1xf32> to vector<1x8x8xf32>
    %59 = arith.mulf %54, %58 : vector<1x8x8xf32>
    %60 = arith.truncf %59 : vector<1x8x8xf32> to vector<1x8x8xbf16>
    %61 = vector.extract_strided_slice %28 {offsets = [0, 0, 32], sizes = [1, 8, 32], strides = [1, 1, 1]} : vector<1x8x128xbf16> to vector<1x8x32xbf16>
    "tpu.trace_start"() <{level = 10 : i32, message = "bqk,bkd->bqd"}> : () -> ()
    %cst_29 = arith.constant dense<0.000000e+00> : vector<1x8x32xf32>
    %62 = tpu.matmul %60, %61, %cst_29 {dimension_numbers = #tpu.dot_dimension_numbers<[2], [1], [1], [2], [0, 0, 0, 1, 1, 2], [0], [0]>} : vector<1x8x8xbf16>, vector<1x8x32xbf16>, vector<1x8x32xf32> -> vector<1x8x32xf32>
    "tpu.trace_stop"() : () -> ()
    %63 = arith.truncf %62 : vector<1x8x32xf32> to vector<1x8x32xbf16>
    %64 = vector.shape_cast %63 : vector<1x8x32xbf16> to vector<8x32xbf16>
    %65 = vector.extract_strided_slice %24 {offsets = [0, 0, 64], sizes = [1, 8, 32], strides = [1, 1, 1]} : vector<1x8x128xbf16> to vector<1x8x32xbf16>
    %66 = vector.extract_strided_slice %26 {offsets = [0, 0, 64], sizes = [1, 8, 32], strides = [1, 1, 1]} : vector<1x8x128xbf16> to vector<1x8x32xbf16>
    "tpu.trace_start"() <{level = 10 : i32, message = "bqd,bkd->bqk"}> : () -> ()
    %cst_30 = arith.constant dense<0.000000e+00> : vector<1x8x8xf32>
    %67 = tpu.matmul %65, %66, %cst_30 {dimension_numbers = #tpu.dot_dimension_numbers<[2], [2], [1], [1], [0, 0, 0, 1, 1, 1], [0], [0]>} : vector<1x8x32xbf16>, vector<1x8x32xbf16>, vector<1x8x8xf32> -> vector<1x8x8xf32>
    "tpu.trace_stop"() : () -> ()
    %cst_31 = arith.constant dense<0xFF800000> : vector<1x8xf32>
    %68 = vector.multi_reduction <maximumf>, %67, %cst_31 [2] : vector<1x8x8xf32> to vector<1x8xf32>
    %69 = vector.shape_cast %68 : vector<1x8xf32> to vector<1x8x1xf32>
    %70 = vector.broadcast %69 : vector<1x8x1xf32> to vector<1x8x8xf32>
    %71 = arith.subf %67, %70 : vector<1x8x8xf32>
    %72 = math.exp %71 : vector<1x8x8xf32>
    %cst_32 = arith.constant dense<0.000000e+00> : vector<1x8xf32>
    %73 = vector.multi_reduction <add>, %72, %cst_32 [2] : vector<1x8x8xf32> to vector<1x8xf32>
    %74 = vector.shape_cast %73 : vector<1x8xf32> to vector<1x8x1xf32>
    %75 = tpu.reciprocal %74 {approx = true} : vector<1x8x1xf32> -> vector<1x8x1xf32>
    %76 = vector.broadcast %75 : vector<1x8x1xf32> to vector<1x8x8xf32>
    %77 = arith.mulf %72, %76 : vector<1x8x8xf32>
    %78 = arith.truncf %77 : vector<1x8x8xf32> to vector<1x8x8xbf16>
    %79 = vector.extract_strided_slice %28 {offsets = [0, 0, 64], sizes = [1, 8, 32], strides = [1, 1, 1]} : vector<1x8x128xbf16> to vector<1x8x32xbf16>
    "tpu.trace_start"() <{level = 10 : i32, message = "bqk,bkd->bqd"}> : () -> ()
    %cst_33 = arith.constant dense<0.000000e+00> : vector<1x8x32xf32>
    %80 = tpu.matmul %78, %79, %cst_33 {dimension_numbers = #tpu.dot_dimension_numbers<[2], [1], [1], [2], [0, 0, 0, 1, 1, 2], [0], [0]>} : vector<1x8x8xbf16>, vector<1x8x32xbf16>, vector<1x8x32xf32> -> vector<1x8x32xf32>
    "tpu.trace_stop"() : () -> ()
    %81 = arith.truncf %80 : vector<1x8x32xf32> to vector<1x8x32xbf16>
    %82 = vector.shape_cast %81 : vector<1x8x32xbf16> to vector<8x32xbf16>
    %83 = vector.extract_strided_slice %24 {offsets = [0, 0, 96], sizes = [1, 8, 32], strides = [1, 1, 1]} : vector<1x8x128xbf16> to vector<1x8x32xbf16>
    %84 = vector.extract_strided_slice %26 {offsets = [0, 0, 96], sizes = [1, 8, 32], strides = [1, 1, 1]} : vector<1x8x128xbf16> to vector<1x8x32xbf16>
    "tpu.trace_start"() <{level = 10 : i32, message = "bqd,bkd->bqk"}> : () -> ()
    %cst_34 = arith.constant dense<0.000000e+00> : vector<1x8x8xf32>
    %85 = tpu.matmul %83, %84, %cst_34 {dimension_numbers = #tpu.dot_dimension_numbers<[2], [2], [1], [1], [0, 0, 0, 1, 1, 1], [0], [0]>} : vector<1x8x32xbf16>, vector<1x8x32xbf16>, vector<1x8x8xf32> -> vector<1x8x8xf32>
    "tpu.trace_stop"() : () -> ()
    %cst_35 = arith.constant dense<0xFF800000> : vector<1x8xf32>
    %86 = vector.multi_reduction <maximumf>, %85, %cst_35 [2] : vector<1x8x8xf32> to vector<1x8xf32>
    %87 = vector.shape_cast %86 : vector<1x8xf32> to vector<1x8x1xf32>
    %88 = vector.broadcast %87 : vector<1x8x1xf32> to vector<1x8x8xf32>
    %89 = arith.subf %85, %88 : vector<1x8x8xf32>
    %90 = math.exp %89 : vector<1x8x8xf32>
    %cst_36 = arith.constant dense<0.000000e+00> : vector<1x8xf32>
    %91 = vector.multi_reduction <add>, %90, %cst_36 [2] : vector<1x8x8xf32> to vector<1x8xf32>
    %92 = vector.shape_cast %91 : vector<1x8xf32> to vector<1x8x1xf32>
    %93 = tpu.reciprocal %92 {approx = true} : vector<1x8x1xf32> -> vector<1x8x1xf32>
    %94 = vector.broadcast %93 : vector<1x8x1xf32> to vector<1x8x8xf32>
    %95 = arith.mulf %90, %94 : vector<1x8x8xf32>
    %96 = arith.truncf %95 : vector<1x8x8xf32> to vector<1x8x8xbf16>
    %97 = vector.extract_strided_slice %28 {offsets = [0, 0, 96], sizes = [1, 8, 32], strides = [1, 1, 1]} : vector<1x8x128xbf16> to vector<1x8x32xbf16>
    "tpu.trace_start"() <{level = 10 : i32, message = "bqk,bkd->bqd"}> : () -> ()
    %cst_37 = arith.constant dense<0.000000e+00> : vector<1x8x32xf32>
    %98 = tpu.matmul %96, %97, %cst_37 {dimension_numbers = #tpu.dot_dimension_numbers<[2], [1], [1], [2], [0, 0, 0, 1, 1, 2], [0], [0]>} : vector<1x8x8xbf16>, vector<1x8x32xbf16>, vector<1x8x32xf32> -> vector<1x8x32xf32>
    "tpu.trace_stop"() : () -> ()
    %99 = arith.truncf %98 : vector<1x8x32xf32> to vector<1x8x32xbf16>
    %100 = vector.shape_cast %99 : vector<1x8x32xbf16> to vector<8x32xbf16>
    %101 = tpu.concatenate %46, %64, %82, %100 in 1 : vector<8x32xbf16>, vector<8x32xbf16>, vector<8x32xbf16>, vector<8x32xbf16> -> vector<8x128xbf16>
    %cst_38 = arith.constant dense<0.000000e+00> : vector<8x128xf32>
    %102 = tpu.matmul %101, %10, %cst_38 {dimension_numbers = #tpu.dot_dimension_numbers<[1], [0], [0], [1], [0, 0, 1, 1], [], []>} : vector<8x128xbf16>, vector<128x128xbf16>, vector<8x128xf32> -> vector<8x128xf32>
    %103 = vector.broadcast %11 : vector<1x128xf32> to vector<8x128xf32>
    %104 = arith.addf %102, %103 : vector<8x128xf32>
    %105 = arith.addf %1, %104 : vector<8x128xf32>
    %106 = arith.truncf %105 : vector<8x128xf32> to vector<8x128xbf16>
    %c0_39 = arith.constant 0 : index
    %c0_40 = arith.constant 0 : index
    %107 = vector.load %arg11[%c0_39, %c0_40] : memref<128x128xbf16, #tpu.memory_space<vmem>>, vector<128x128xbf16>
    %c0_41 = arith.constant 0 : index
    %c0_42 = arith.constant 0 : index
    %108 = vector.load %arg12[%c0_41, %c0_42] : memref<128x128xbf16, #tpu.memory_space<vmem>>, vector<128x128xbf16>
    %c0_43 = arith.constant 0 : index
    %c0_44 = arith.constant 0 : index
    %109 = vector.load %arg13[%c0_43, %c0_44] : memref<128x128xbf16, #tpu.memory_space<vmem>>, vector<128x128xbf16>
    %c0_45 = arith.constant 0 : index
    %c0_46 = arith.constant 0 : index
    %110 = vector.load %arg14[%c0_45, %c0_46] : memref<1x128xf32, #tpu.memory_space<vmem>>, vector<1x128xf32>
    %c0_47 = arith.constant 0 : index
    %c0_48 = arith.constant 0 : index
    %111 = vector.load %arg15[%c0_47, %c0_48] : memref<1x128xf32, #tpu.memory_space<vmem>>, vector<1x128xf32>
    %c0_49 = arith.constant 0 : index
    %c0_50 = arith.constant 0 : index
    %112 = vector.load %arg16[%c0_49, %c0_50] : memref<1x128xf32, #tpu.memory_space<vmem>>, vector<1x128xf32>
    %c0_51 = arith.constant 0 : index
    %c0_52 = arith.constant 0 : index
    %113 = vector.load %arg17[%c0_51, %c0_52] : memref<128x128xbf16, #tpu.memory_space<vmem>>, vector<128x128xbf16>
    %c0_53 = arith.constant 0 : index
    %c0_54 = arith.constant 0 : index
    %114 = vector.load %arg18[%c0_53, %c0_54] : memref<1x128xf32, #tpu.memory_space<vmem>>, vector<1x128xf32>
    %cst_55 = arith.constant dense<0.000000e+00> : vector<8x128xf32>
    %115 = tpu.matmul %106, %107, %cst_55 {dimension_numbers = #tpu.dot_dimension_numbers<[1], [0], [0], [1], [0, 0, 1, 1], [], []>} : vector<8x128xbf16>, vector<128x128xbf16>, vector<8x128xf32> -> vector<8x128xf32>
    %116 = vector.broadcast %110 : vector<1x128xf32> to vector<8x128xf32>
    %117 = arith.addf %115, %116 : vector<8x128xf32>
    %cst_56 = arith.constant 0.353553385 : f32
    %118 = vector.broadcast %cst_56 : f32 to vector<8x128xf32>
    %119 = arith.mulf %117, %118 : vector<8x128xf32>
    %cst_57 = arith.constant dense<0.000000e+00> : vector<8x128xf32>
    %120 = tpu.matmul %2, %108, %cst_57 {dimension_numbers = #tpu.dot_dimension_numbers<[1], [0], [0], [1], [0, 0, 1, 1], [], []>} : vector<8x128xbf16>, vector<128x128xbf16>, vector<8x128xf32> -> vector<8x128xf32>
    %121 = vector.broadcast %111 : vector<1x128xf32> to vector<8x128xf32>
    %122 = arith.addf %120, %121 : vector<8x128xf32>
    %cst_58 = arith.constant dense<0.000000e+00> : vector<8x128xf32>
    %123 = tpu.matmul %2, %109, %cst_58 {dimension_numbers = #tpu.dot_dimension_numbers<[1], [0], [0], [1], [0, 0, 1, 1], [], []>} : vector<8x128xbf16>, vector<128x128xbf16>, vector<8x128xf32> -> vector<8x128xf32>
    %124 = vector.broadcast %112 : vector<1x128xf32> to vector<8x128xf32>
    %125 = arith.addf %123, %124 : vector<8x128xf32>
    %126 = arith.truncf %119 : vector<8x128xf32> to vector<8x128xbf16>
    %127 = vector.shape_cast %126 : vector<8x128xbf16> to vector<1x8x128xbf16>
    %128 = arith.truncf %122 : vector<8x128xf32> to vector<8x128xbf16>
    %129 = vector.shape_cast %128 : vector<8x128xbf16> to vector<1x8x128xbf16>
    %130 = arith.truncf %125 : vector<8x128xf32> to vector<8x128xbf16>
    %131 = vector.shape_cast %130 : vector<8x128xbf16> to vector<1x8x128xbf16>
    %132 = vector.extract_strided_slice %127 {offsets = [0, 0, 0], sizes = [1, 8, 32], strides = [1, 1, 1]} : vector<1x8x128xbf16> to vector<1x8x32xbf16>
    %133 = vector.extract_strided_slice %129 {offsets = [0, 0, 0], sizes = [1, 8, 32], strides = [1, 1, 1]} : vector<1x8x128xbf16> to vector<1x8x32xbf16>
    "tpu.trace_start"() <{level = 10 : i32, message = "bqd,bkd->bqk"}> : () -> ()
    %cst_59 = arith.constant dense<0.000000e+00> : vector<1x8x8xf32>
    %134 = tpu.matmul %132, %133, %cst_59 {dimension_numbers = #tpu.dot_dimension_numbers<[2], [2], [1], [1], [0, 0, 0, 1, 1, 1], [0], [0]>} : vector<1x8x32xbf16>, vector<1x8x32xbf16>, vector<1x8x8xf32> -> vector<1x8x8xf32>
    "tpu.trace_stop"() : () -> ()
    %cst_60 = arith.constant dense<0xFF800000> : vector<1x8xf32>
    %135 = vector.multi_reduction <maximumf>, %134, %cst_60 [2] : vector<1x8x8xf32> to vector<1x8xf32>
    %136 = vector.shape_cast %135 : vector<1x8xf32> to vector<1x8x1xf32>
    %137 = vector.broadcast %136 : vector<1x8x1xf32> to vector<1x8x8xf32>
    %138 = arith.subf %134, %137 : vector<1x8x8xf32>
    %139 = math.exp %138 : vector<1x8x8xf32>
    %cst_61 = arith.constant dense<0.000000e+00> : vector<1x8xf32>
    %140 = vector.multi_reduction <add>, %139, %cst_61 [2] : vector<1x8x8xf32> to vector<1x8xf32>
    %141 = vector.shape_cast %140 : vector<1x8xf32> to vector<1x8x1xf32>
    %142 = tpu.reciprocal %141 {approx = true} : vector<1x8x1xf32> -> vector<1x8x1xf32>
    %143 = vector.broadcast %142 : vector<1x8x1xf32> to vector<1x8x8xf32>
    %144 = arith.mulf %139, %143 : vector<1x8x8xf32>
    %145 = arith.truncf %144 : vector<1x8x8xf32> to vector<1x8x8xbf16>
    %146 = vector.extract_strided_slice %131 {offsets = [0, 0, 0], sizes = [1, 8, 32], strides = [1, 1, 1]} : vector<1x8x128xbf16> to vector<1x8x32xbf16>
    "tpu.trace_start"() <{level = 10 : i32, message = "bqk,bkd->bqd"}> : () -> ()
    %cst_62 = arith.constant dense<0.000000e+00> : vector<1x8x32xf32>
    %147 = tpu.matmul %145, %146, %cst_62 {dimension_numbers = #tpu.dot_dimension_numbers<[2], [1], [1], [2], [0, 0, 0, 1, 1, 2], [0], [0]>} : vector<1x8x8xbf16>, vector<1x8x32xbf16>, vector<1x8x32xf32> -> vector<1x8x32xf32>
    "tpu.trace_stop"() : () -> ()
    %148 = arith.truncf %147 : vector<1x8x32xf32> to vector<1x8x32xbf16>
    %149 = vector.shape_cast %148 : vector<1x8x32xbf16> to vector<8x32xbf16>
    %150 = vector.extract_strided_slice %127 {offsets = [0, 0, 32], sizes = [1, 8, 32], strides = [1, 1, 1]} : vector<1x8x128xbf16> to vector<1x8x32xbf16>
    %151 = vector.extract_strided_slice %129 {offsets = [0, 0, 32], sizes = [1, 8, 32], strides = [1, 1, 1]} : vector<1x8x128xbf16> to vector<1x8x32xbf16>
    "tpu.trace_start"() <{level = 10 : i32, message = "bqd,bkd->bqk"}> : () -> ()
    %cst_63 = arith.constant dense<0.000000e+00> : vector<1x8x8xf32>
    %152 = tpu.matmul %150, %151, %cst_63 {dimension_numbers = #tpu.dot_dimension_numbers<[2], [2], [1], [1], [0, 0, 0, 1, 1, 1], [0], [0]>} : vector<1x8x32xbf16>, vector<1x8x32xbf16>, vector<1x8x8xf32> -> vector<1x8x8xf32>
    "tpu.trace_stop"() : () -> ()
    %cst_64 = arith.constant dense<0xFF800000> : vector<1x8xf32>
    %153 = vector.multi_reduction <maximumf>, %152, %cst_64 [2] : vector<1x8x8xf32> to vector<1x8xf32>
    %154 = vector.shape_cast %153 : vector<1x8xf32> to vector<1x8x1xf32>
    %155 = vector.broadcast %154 : vector<1x8x1xf32> to vector<1x8x8xf32>
    %156 = arith.subf %152, %155 : vector<1x8x8xf32>
    %157 = math.exp %156 : vector<1x8x8xf32>
    %cst_65 = arith.constant dense<0.000000e+00> : vector<1x8xf32>
    %158 = vector.multi_reduction <add>, %157, %cst_65 [2] : vector<1x8x8xf32> to vector<1x8xf32>
    %159 = vector.shape_cast %158 : vector<1x8xf32> to vector<1x8x1xf32>
    %160 = tpu.reciprocal %159 {approx = true} : vector<1x8x1xf32> -> vector<1x8x1xf32>
    %161 = vector.broadcast %160 : vector<1x8x1xf32> to vector<1x8x8xf32>
    %162 = arith.mulf %157, %161 : vector<1x8x8xf32>
    %163 = arith.truncf %162 : vector<1x8x8xf32> to vector<1x8x8xbf16>
    %164 = vector.extract_strided_slice %131 {offsets = [0, 0, 32], sizes = [1, 8, 32], strides = [1, 1, 1]} : vector<1x8x128xbf16> to vector<1x8x32xbf16>
    "tpu.trace_start"() <{level = 10 : i32, message = "bqk,bkd->bqd"}> : () -> ()
    %cst_66 = arith.constant dense<0.000000e+00> : vector<1x8x32xf32>
    %165 = tpu.matmul %163, %164, %cst_66 {dimension_numbers = #tpu.dot_dimension_numbers<[2], [1], [1], [2], [0, 0, 0, 1, 1, 2], [0], [0]>} : vector<1x8x8xbf16>, vector<1x8x32xbf16>, vector<1x8x32xf32> -> vector<1x8x32xf32>
    "tpu.trace_stop"() : () -> ()
    %166 = arith.truncf %165 : vector<1x8x32xf32> to vector<1x8x32xbf16>
    %167 = vector.shape_cast %166 : vector<1x8x32xbf16> to vector<8x32xbf16>
    %168 = vector.extract_strided_slice %127 {offsets = [0, 0, 64], sizes = [1, 8, 32], strides = [1, 1, 1]} : vector<1x8x128xbf16> to vector<1x8x32xbf16>
    %169 = vector.extract_strided_slice %129 {offsets = [0, 0, 64], sizes = [1, 8, 32], strides = [1, 1, 1]} : vector<1x8x128xbf16> to vector<1x8x32xbf16>
    "tpu.trace_start"() <{level = 10 : i32, message = "bqd,bkd->bqk"}> : () -> ()
    %cst_67 = arith.constant dense<0.000000e+00> : vector<1x8x8xf32>
    %170 = tpu.matmul %168, %169, %cst_67 {dimension_numbers = #tpu.dot_dimension_numbers<[2], [2], [1], [1], [0, 0, 0, 1, 1, 1], [0], [0]>} : vector<1x8x32xbf16>, vector<1x8x32xbf16>, vector<1x8x8xf32> -> vector<1x8x8xf32>
    "tpu.trace_stop"() : () -> ()
    %cst_68 = arith.constant dense<0xFF800000> : vector<1x8xf32>
    %171 = vector.multi_reduction <maximumf>, %170, %cst_68 [2] : vector<1x8x8xf32> to vector<1x8xf32>
    %172 = vector.shape_cast %171 : vector<1x8xf32> to vector<1x8x1xf32>
    %173 = vector.broadcast %172 : vector<1x8x1xf32> to vector<1x8x8xf32>
    %174 = arith.subf %170, %173 : vector<1x8x8xf32>
    %175 = math.exp %174 : vector<1x8x8xf32>
    %cst_69 = arith.constant dense<0.000000e+00> : vector<1x8xf32>
    %176 = vector.multi_reduction <add>, %175, %cst_69 [2] : vector<1x8x8xf32> to vector<1x8xf32>
    %177 = vector.shape_cast %176 : vector<1x8xf32> to vector<1x8x1xf32>
    %178 = tpu.reciprocal %177 {approx = true} : vector<1x8x1xf32> -> vector<1x8x1xf32>
    %179 = vector.broadcast %178 : vector<1x8x1xf32> to vector<1x8x8xf32>
    %180 = arith.mulf %175, %179 : vector<1x8x8xf32>
    %181 = arith.truncf %180 : vector<1x8x8xf32> to vector<1x8x8xbf16>
    %182 = vector.extract_strided_slice %131 {offsets = [0, 0, 64], sizes = [1, 8, 32], strides = [1, 1, 1]} : vector<1x8x128xbf16> to vector<1x8x32xbf16>
    "tpu.trace_start"() <{level = 10 : i32, message = "bqk,bkd->bqd"}> : () -> ()
    %cst_70 = arith.constant dense<0.000000e+00> : vector<1x8x32xf32>
    %183 = tpu.matmul %181, %182, %cst_70 {dimension_numbers = #tpu.dot_dimension_numbers<[2], [1], [1], [2], [0, 0, 0, 1, 1, 2], [0], [0]>} : vector<1x8x8xbf16>, vector<1x8x32xbf16>, vector<1x8x32xf32> -> vector<1x8x32xf32>
    "tpu.trace_stop"() : () -> ()
    %184 = arith.truncf %183 : vector<1x8x32xf32> to vector<1x8x32xbf16>
    %185 = vector.shape_cast %184 : vector<1x8x32xbf16> to vector<8x32xbf16>
    %186 = vector.extract_strided_slice %127 {offsets = [0, 0, 96], sizes = [1, 8, 32], strides = [1, 1, 1]} : vector<1x8x128xbf16> to vector<1x8x32xbf16>
    %187 = vector.extract_strided_slice %129 {offsets = [0, 0, 96], sizes = [1, 8, 32], strides = [1, 1, 1]} : vector<1x8x128xbf16> to vector<1x8x32xbf16>
    "tpu.trace_start"() <{level = 10 : i32, message = "bqd,bkd->bqk"}> : () -> ()
    %cst_71 = arith.constant dense<0.000000e+00> : vector<1x8x8xf32>
    %188 = tpu.matmul %186, %187, %cst_71 {dimension_numbers = #tpu.dot_dimension_numbers<[2], [2], [1], [1], [0, 0, 0, 1, 1, 1], [0], [0]>} : vector<1x8x32xbf16>, vector<1x8x32xbf16>, vector<1x8x8xf32> -> vector<1x8x8xf32>
    "tpu.trace_stop"() : () -> ()
    %cst_72 = arith.constant dense<0xFF800000> : vector<1x8xf32>
    %189 = vector.multi_reduction <maximumf>, %188, %cst_72 [2] : vector<1x8x8xf32> to vector<1x8xf32>
    %190 = vector.shape_cast %189 : vector<1x8xf32> to vector<1x8x1xf32>
    %191 = vector.broadcast %190 : vector<1x8x1xf32> to vector<1x8x8xf32>
    %192 = arith.subf %188, %191 : vector<1x8x8xf32>
    %193 = math.exp %192 : vector<1x8x8xf32>
    %cst_73 = arith.constant dense<0.000000e+00> : vector<1x8xf32>
    %194 = vector.multi_reduction <add>, %193, %cst_73 [2] : vector<1x8x8xf32> to vector<1x8xf32>
    %195 = vector.shape_cast %194 : vector<1x8xf32> to vector<1x8x1xf32>
    %196 = tpu.reciprocal %195 {approx = true} : vector<1x8x1xf32> -> vector<1x8x1xf32>
    %197 = vector.broadcast %196 : vector<1x8x1xf32> to vector<1x8x8xf32>
    %198 = arith.mulf %193, %197 : vector<1x8x8xf32>
    %199 = arith.truncf %198 : vector<1x8x8xf32> to vector<1x8x8xbf16>
    %200 = vector.extract_strided_slice %131 {offsets = [0, 0, 96], sizes = [1, 8, 32], strides = [1, 1, 1]} : vector<1x8x128xbf16> to vector<1x8x32xbf16>
    "tpu.trace_start"() <{level = 10 : i32, message = "bqk,bkd->bqd"}> : () -> ()
    %cst_74 = arith.constant dense<0.000000e+00> : vector<1x8x32xf32>
    %201 = tpu.matmul %199, %200, %cst_74 {dimension_numbers = #tpu.dot_dimension_numbers<[2], [1], [1], [2], [0, 0, 0, 1, 1, 2], [0], [0]>} : vector<1x8x8xbf16>, vector<1x8x32xbf16>, vector<1x8x32xf32> -> vector<1x8x32xf32>
    "tpu.trace_stop"() : () -> ()
    %202 = arith.truncf %201 : vector<1x8x32xf32> to vector<1x8x32xbf16>
    %203 = vector.shape_cast %202 : vector<1x8x32xbf16> to vector<8x32xbf16>
    %204 = tpu.concatenate %149, %167, %185, %203 in 1 : vector<8x32xbf16>, vector<8x32xbf16>, vector<8x32xbf16>, vector<8x32xbf16> -> vector<8x128xbf16>
    %cst_75 = arith.constant dense<0.000000e+00> : vector<8x128xf32>
    %205 = tpu.matmul %204, %113, %cst_75 {dimension_numbers = #tpu.dot_dimension_numbers<[1], [0], [0], [1], [0, 0, 1, 1], [], []>} : vector<8x128xbf16>, vector<128x128xbf16>, vector<8x128xf32> -> vector<8x128xf32>
    %206 = vector.broadcast %114 : vector<1x128xf32> to vector<8x128xf32>
    %207 = arith.addf %205, %206 : vector<8x128xf32>
    %208 = arith.addf %105, %207 : vector<8x128xf32>
    %209 = arith.truncf %208 : vector<8x128xf32> to vector<8x128xbf16>
    %c0_76 = arith.constant 0 : index
    %c0_77 = arith.constant 0 : index
    %210 = vector.load %arg19[%c0_76, %c0_77] : memref<128x128xbf16, #tpu.memory_space<vmem>>, vector<128x128xbf16>
    %cst_78 = arith.constant dense<0.000000e+00> : vector<8x128xf32>
    %211 = tpu.matmul %209, %210, %cst_78 {dimension_numbers = #tpu.dot_dimension_numbers<[1], [0], [0], [1], [0, 0, 1, 1], [], []>} : vector<8x128xbf16>, vector<128x128xbf16>, vector<8x128xf32> -> vector<8x128xf32>
    %c0_79 = arith.constant 0 : index
    %c0_80 = arith.constant 0 : index
    %212 = vector.load %arg20[%c0_79, %c0_80] : memref<1x128xf32, #tpu.memory_space<vmem>>, vector<1x128xf32>
    %213 = vector.broadcast %212 : vector<1x128xf32> to vector<8x128xf32>
    %214 = arith.addf %211, %213 : vector<8x128xf32>
    %215 = arith.truncf %214 : vector<8x128xf32> to vector<8x128xbf16>
    %c0_81 = arith.constant 0 : index
    %c0_82 = arith.constant 0 : index
    %216 = vector.load %arg21[%c0_81, %c0_82] : memref<128x128xbf16, #tpu.memory_space<vmem>>, vector<128x128xbf16>
    %cst_83 = arith.constant dense<0.000000e+00> : vector<8x128xf32>
    %217 = tpu.matmul %215, %216, %cst_83 {dimension_numbers = #tpu.dot_dimension_numbers<[1], [0], [0], [1], [0, 0, 1, 1], [], []>} : vector<8x128xbf16>, vector<128x128xbf16>, vector<8x128xf32> -> vector<8x128xf32>
    %c0_84 = arith.constant 0 : index
    %c0_85 = arith.constant 0 : index
    %218 = vector.load %arg22[%c0_84, %c0_85] : memref<1x128xf32, #tpu.memory_space<vmem>>, vector<1x128xf32>
    %219 = vector.broadcast %218 : vector<1x128xf32> to vector<8x128xf32>
    %220 = arith.addf %217, %219 : vector<8x128xf32>
    %221 = arith.addf %208, %220 : vector<8x128xf32>
    %c0_86 = arith.constant 0 : index
    %c0_87 = arith.constant 0 : index
    %222 = vector.load %arg23[%c0_86, %c0_87] : memref<8x128xf32, #tpu.memory_space<vmem>>, vector<8x128xf32>
    tpu.vector_store %arg23[%c0_86, %c0_87], %221 {strides = array<i32>} : memref<8x128xf32, #tpu.memory_space<vmem>>, vector<8x128xf32>,
    return
  }
  func.func @transform_0(%arg0: i32) -> (i32, i32) {
    %c0_i32 = arith.constant 0 : i32
    %c0_i32_0 = arith.constant 0 : i32
    return %arg0, %c0_i32 : i32, i32
  }
  func.func @transform_1(%arg0: i32) -> (i32, i32) {
    %c0_i32 = arith.constant 0 : i32
    %c0_i32_0 = arith.constant 0 : i32
    return %arg0, %c0_i32 : i32, i32
  }
  func.func @transform_2(%arg0: i32) -> (i32, i32) {
    %c0_i32 = arith.constant 0 : i32
    %c0_i32_0 = arith.constant 0 : i32
    %c0_i32_1 = arith.constant 0 : i32
    return %c0_i32, %c0_i32_0 : i32, i32
  }
  func.func @transform_3(%arg0: i32) -> (i32, i32) {
    %c0_i32 = arith.constant 0 : i32
    %c0_i32_0 = arith.constant 0 : i32
    %c0_i32_1 = arith.constant 0 : i32
    return %c0_i32, %c0_i32_0 : i32, i32
  }
  func.func @transform_4(%arg0: i32) -> (i32, i32) {
    %c0_i32 = arith.constant 0 : i32
    %c0_i32_0 = arith.constant 0 : i32
    %c0_i32_1 = arith.constant 0 : i32
    return %c0_i32, %c0_i32_0 : i32, i32
  }
  func.func @transform_5(%arg0: i32) -> (i32, i32) {
    %c0_i32 = arith.constant 0 : i32
    %c0_i32_0 = arith.constant 0 : i32
    %c0_i32_1 = arith.constant 0 : i32
    return %c0_i32, %c0_i32_0 : i32, i32
  }
  func.func @transform_6(%arg0: i32) -> (i32, i32) {
    %c0_i32 = arith.constant 0 : i32
    %c0_i32_0 = arith.constant 0 : i32
    %c0_i32_1 = arith.constant 0 : i32
    return %c0_i32, %c0_i32_0 : i32, i32
  }
  func.func @transform_7(%arg0: i32) -> (i32, i32) {
    %c0_i32 = arith.constant 0 : i32
    %c0_i32_0 = arith.constant 0 : i32
    %c0_i32_1 = arith.constant 0 : i32
    return %c0_i32, %c0_i32_0 : i32, i32
  }
  func.func @transform_8(%arg0: i32) -> (i32, i32) {
    %c0_i32 = arith.constant 0 : i32
    %c0_i32_0 = arith.constant 0 : i32
    %c0_i32_1 = arith.constant 0 : i32
    return %c0_i32, %c0_i32_0 : i32, i32
  }
  func.func @transform_9(%arg0: i32) -> (i32, i32) {
    %c0_i32 = arith.constant 0 : i32
    %c0_i32_0 = arith.constant 0 : i32
    %c0_i32_1 = arith.constant 0 : i32
    return %c0_i32, %c0_i32_0 : i32, i32
  }
  func.func @transform_10(%arg0: i32) -> (i32, i32) {
    %c0_i32 = arith.constant 0 : i32
    %c0_i32_0 = arith.constant 0 : i32
    %c0_i32_1 = arith.constant 0 : i32
    return %c0_i32, %c0_i32_0 : i32, i32
  }
  func.func @transform_11(%arg0: i32) -> (i32, i32) {
    %c0_i32 = arith.constant 0 : i32
    %c0_i32_0 = arith.constant 0 : i32
    %c0_i32_1 = arith.constant 0 : i32
    return %c0_i32, %c0_i32_0 : i32, i32
  }
  func.func @transform_12(%arg0: i32) -> (i32, i32) {
    %c0_i32 = arith.constant 0 : i32
    %c0_i32_0 = arith.constant 0 : i32
    %c0_i32_1 = arith.constant 0 : i32
    return %c0_i32, %c0_i32_0 : i32, i32
  }
  func.func @transform_13(%arg0: i32) -> (i32, i32) {
    %c0_i32 = arith.constant 0 : i32
    %c0_i32_0 = arith.constant 0 : i32
    %c0_i32_1 = arith.constant 0 : i32
    return %c0_i32, %c0_i32_0 : i32, i32
  }
  func.func @transform_14(%arg0: i32) -> (i32, i32) {
    %c0_i32 = arith.constant 0 : i32
    %c0_i32_0 = arith.constant 0 : i32
    %c0_i32_1 = arith.constant 0 : i32
    return %c0_i32, %c0_i32_0 : i32, i32
  }
  func.func @transform_15(%arg0: i32) -> (i32, i32) {
    %c0_i32 = arith.constant 0 : i32
    %c0_i32_0 = arith.constant 0 : i32
    %c0_i32_1 = arith.constant 0 : i32
    return %c0_i32, %c0_i32_0 : i32, i32
  }
  func.func @transform_16(%arg0: i32) -> (i32, i32) {
    %c0_i32 = arith.constant 0 : i32
    %c0_i32_0 = arith.constant 0 : i32
    %c0_i32_1 = arith.constant 0 : i32
    return %c0_i32, %c0_i32_0 : i32, i32
  }
  func.func @transform_17(%arg0: i32) -> (i32, i32) {
    %c0_i32 = arith.constant 0 : i32
    %c0_i32_0 = arith.constant 0 : i32
    %c0_i32_1 = arith.constant 0 : i32
    return %c0_i32, %c0_i32_0 : i32, i32
  }
  func.func @transform_18(%arg0: i32) -> (i32, i32) {
    %c0_i32 = arith.constant 0 : i32
    %c0_i32_0 = arith.constant 0 : i32
    %c0_i32_1 = arith.constant 0 : i32
    return %c0_i32, %c0_i32_0 : i32, i32
  }
  func.func @transform_19(%arg0: i32) -> (i32, i32) {
    %c0_i32 = arith.constant 0 : i32
    %c0_i32_0 = arith.constant 0 : i32
    %c0_i32_1 = arith.constant 0 : i32
    return %c0_i32, %c0_i32_0 : i32, i32
  }
  func.func @transform_20(%arg0: i32) -> (i32, i32) {
    %c0_i32 = arith.constant 0 : i32
    %c0_i32_0 = arith.constant 0 : i32
    %c0_i32_1 = arith.constant 0 : i32
    return %c0_i32, %c0_i32_0 : i32, i32
  }
  func.func @transform_21(%arg0: i32) -> (i32, i32) {
    %c0_i32 = arith.constant 0 : i32
    %c0_i32_0 = arith.constant 0 : i32
    %c0_i32_1 = arith.constant 0 : i32
    return %c0_i32, %c0_i32_0 : i32, i32
  }
  func.func @transform_22(%arg0: i32) -> (i32, i32) {
    %c0_i32 = arith.constant 0 : i32
    %c0_i32_0 = arith.constant 0 : i32
    return %arg0, %c0_i32 : i32, i32
  }
}

</mosaic_0001>

<llo_original>
// kernel: tpu_custom_call.1
$region0: #{tpu_custom_call.1}
  #allocation0 [shape = 'u32[]', space=smem, size = 0x4, offset = 0x4, fixed_abs, tag = 'smem constant byte address 0x4 - core index']
  #allocation1 [shape = 'u32[144,128]{1,0:T(1,128)}', space=vmem, size = 0x12000, scoped, tag = 'internal scratch']
  %s0 = inlined_call_operand.hbm [shape: bf16[16,128], index: 0, kind: input, shape index: {}]
  %s1 = inlined_call_operand.hbm [shape: bf16[16,128], index: 1, kind: input, shape index: {}]
  %s2 = inlined_call_operand.hbm [shape: bf16[128,128], index: 2, kind: input, shape index: {}]
  %s3 = inlined_call_operand.hbm [shape: bf16[128,128], index: 3, kind: input, shape index: {}]
  %s4 = inlined_call_operand.hbm [shape: bf16[128,128], index: 4, kind: input, shape index: {}]
  %s5 = inlined_call_operand.vmem [shape: f32[1,128], index: 5, kind: input, shape index: {}]
  %s6 = inlined_call_operand.vmem [shape: f32[1,128], index: 6, kind: input, shape index: {}]
  %s7 = inlined_call_operand.vmem [shape: f32[1,128], index: 7, kind: input, shape index: {}]
  %s8 = inlined_call_operand.hbm [shape: bf16[128,128], index: 8, kind: input, shape index: {}]
  %s9 = inlined_call_operand.vmem [shape: f32[1,128], index: 9, kind: input, shape index: {}]
  %s10 = inlined_call_operand.hbm [shape: bf16[128,128], index: 10, kind: input, shape index: {}]
  %s11 = inlined_call_operand.hbm [shape: bf16[128,128], index: 11, kind: input, shape index: {}]
  %s12 = inlined_call_operand.hbm [shape: bf16[128,128], index: 12, kind: input, shape index: {}]
  %s13 = inlined_call_operand.hbm [shape: f32[1,128], index: 13, kind: input, shape index: {}]
  %s14 = inlined_call_operand.hbm [shape: f32[1,128], index: 14, kind: input, shape index: {}]
  %s15 = inlined_call_operand.hbm [shape: f32[1,128], index: 15, kind: input, shape index: {}]
  %s16 = inlined_call_operand.hbm [shape: bf16[128,128], index: 16, kind: input, shape index: {}]
  %s17 = inlined_call_operand.hbm [shape: f32[1,128], index: 17, kind: input, shape index: {}]
  %s18 = inlined_call_operand.vmem [shape: bf16[128,128], index: 18, kind: input, shape index: {}]
  %s19 = inlined_call_operand.vmem [shape: f32[1,128], index: 19, kind: input, shape index: {}]
  %s20 = inlined_call_operand.hbm [shape: bf16[128,128], index: 20, kind: input, shape index: {}]
  %s21 = inlined_call_operand.vmem [shape: f32[1,128], index: 21, kind: input, shape index: {}]
  %s22 = inlined_call_operand.hbm [shape: f32[16,128], index: 22, kind: output, shape index: {}]
  %s23 = sld [smem:[#allocation0]]
  $region181: #{tpu_custom_call.1} parent=0
    _
  %s25 = ssub.s32 1, %s23
  %s26 = scalar_select 0, %s25, %s23
  $region1: #{tpu_custom_call.1} parent=0
    #allocation2 [shape = 'u8[4096]{0}', space=vmem, size = 0x1000, scoped, tag = 'input window, operand 0']
    #allocation3 [shape = 's32[2]{0}', space=sflag, size = 0x8, scoped, tag = 'scoped memory for tpu_custom_call.1']
    #allocation4 [shape = 's32[2]{0}', space=sflag, size = 0x8, scoped, tag = 'scoped memory for tpu_custom_call.1']
    #allocation5 [shape = 'u8[4096]{0}', space=vmem, size = 0x1000, scoped, tag = 'input window, operand 1']
    #allocation6 [shape = 's32[2]{0}', space=sflag, size = 0x8, scoped, tag = 'scoped memory for tpu_custom_call.1']
    #allocation7 [shape = 'u8[32768]{0}', space=vmem, size = 0x8000, scoped, tag = 'input window, operand 2, single buffered']
    #allocation8 [shape = 'u8[32768]{0}', space=vmem, size = 0x8000, scoped, tag = 'input window, operand 3, single buffered']
    #allocation9 [shape = 's32[1]{0}', space=sflag, size = 0x4, scoped, tag = 'scoped memory for tpu_custom_call.1']
    #allocation10 [shape = 'u8[32768]{0}', space=vmem, size = 0x8000, scoped, tag = 'input window, operand 4, single buffered']
    #allocation11 [shape = 'u8[32768]{0}', space=vmem, size = 0x8000, scoped, tag = 'input window, operand 8, single buffered']
    #allocation12 [shape = 's32[1]{0}', space=sflag, size = 0x4, scoped, tag = 'scoped memory for tpu_custom_call.1']
    #allocation13 [shape = 'u8[32768]{0}', space=vmem, size = 0x8000, scoped, tag = 'input window, operand 10, single buffered']
    #allocation14 [shape = 'u8[32768]{0}', space=vmem, size = 0x8000, scoped, tag = 'input window, operand 11, single buffered']
    #allocation15 [shape = 's32[1]{0}', space=sflag, size = 0x4, scoped, tag = 'scoped memory for tpu_custom_call.1']
    #allocation16 [shape = 'u8[32768]{0}', space=vmem, size = 0x8000, scoped, tag = 'input window, operand 12, single buffered']
    #allocation17 [shape = 'u8[512]{0}', space=vmem, size = 0x400, scoped, tag = 'input window, operand 13, single buffered']
    #allocation18 [shape = 's32[1]{0}', space=sflag, size = 0x4, scoped, tag = 'scoped memory for tpu_custom_call.1']
    #allocation19 [shape = 'u8[512]{0}', space=vmem, size = 0x400, scoped, tag = 'input window, operand 14, single buffered']
    #allocation20 [shape = 'u8[512]{0}', space=vmem, size = 0x400, scoped, tag = 'input window, operand 15, single buffered']
    #allocation21 [shape = 's32[1]{0}', space=sflag, size = 0x4, scoped, tag = 'scoped memory for tpu_custom_call.1']
    #allocation22 [shape = 'u8[32768]{0}', space=vmem, size = 0x8000, scoped, tag = 'input window, operand 16, single buffered']
    #allocation23 [shape = 'u8[512]{0}', space=vmem, size = 0x400, scoped, tag = 'input window, operand 17, single buffered']
    #allocation24 [shape = 's32[1]{0}', space=sflag, size = 0x4, scoped, tag = 'scoped memory for tpu_custom_call.1']
    #allocation25 [shape = 'u8[32768]{0}', space=vmem, size = 0x8000, scoped, tag = 'input window, operand 20, single buffered']
    #allocation26 [shape = 'u8[8192]{0}', space=vmem, size = 0x2000, scoped, tag = 'output window, operand 0']
    %27 = vsyncpa [#allocation3], 0
    %s28 = scalar_lea.sflag [#allocation3], 1
    %29 = vsyncpa %s28, 0
    %30 = vsyncpa [#allocation6], 0
    %s31 = scalar_lea.sflag [#allocation6], 1
    %32 = vsyncpa %s31, 0
    %33 = vsyncpa [#allocation9], 0
    %34 = vsyncpa [#allocation12], 0
    %35 = vsyncpa [#allocation15], 0
    %36 = vsyncpa [#allocation18], 0
    %37 = vsyncpa [#allocation21], 0
    %38 = vsyncpa [#allocation24], 0
    %39 = vsyncpa [#allocation4], 0
    %s40 = scalar_lea.sflag [#allocation4], 1
    %41 = vsyncpa %s40, 0
    loop: start=0, step=1, limit=4
    $region2: #{tpu_custom_call.1} parent=1 // loop_pre_header
      _
    $region3: #{tpu_custom_call.1} parent=1 // loop_header
      %s43 = sphi 0, %s47
      %p44 = scmp.ge.s32.totalorder %s43, 4
      %s53 = sphi 0, %s55
      %s56 = sphi 0, %s53
      %s57 = sphi 0, %s56
      %s73 = sphi 0, %s57
      %s79 = sphi 0, %s81
      %s82 = sphi 0, %s79
      %s83 = sphi 0, %s82
      %s99 = sphi 0, %s83
      %s103 = sphi 0, %s103
      %s105 = sphi 0, %s103
      %s106 = sphi 0, %s105
      %s120 = sphi 0, %s106
      %s124 = sphi 0, %s124
      %s126 = sphi 0, %s124
      %s127 = sphi 0, %s126
      %s141 = sphi 0, %s127
      %s145 = sphi 0, %s145
      %s147 = sphi 0, %s145
      %s148 = sphi 0, %s147
      %s162 = sphi 0, %s148
      %s166 = sphi 0, %s166
      %s168 = sphi 0, %s166
      %s169 = sphi 0, %s168
      %s183 = sphi 0, %s169
      %s187 = sphi 0, %s187
      %s189 = sphi 0, %s187
      %s190 = sphi 0, %s189
      %s204 = sphi 0, %s190
      %s208 = sphi 0, %s208
      %s210 = sphi 0, %s208
      %s211 = sphi 0, %s210
      %s225 = sphi 0, %s211
      %s229 = sphi 0, %s229
      %s231 = sphi 0, %s229
      %s232 = sphi 0, %s231
      %s246 = sphi 0, %s232
      %s250 = sphi 0, %s250
      %s252 = sphi 0, %s250
      %s253 = sphi 0, %s252
      %s267 = sphi 0, %s253
      %s271 = sphi 0, %s271
      %s273 = sphi 0, %s271
      %s274 = sphi 0, %s273
      %s288 = sphi 0, %s274
      %s292 = sphi 0, %s292
      %s294 = sphi 0, %s292
      %s295 = sphi 0, %s294
      %s309 = sphi 0, %s295
      %s313 = sphi 0, %s313
      %s315 = sphi 0, %s313
      %s316 = sphi 0, %s315
      %s330 = sphi 0, %s316
      %s334 = sphi 0, %s334
      %s336 = sphi 0, %s334
      %s337 = sphi 0, %s336
      %s351 = sphi 0, %s337
      %s355 = sphi 0, %s355
      %s357 = sphi 0, %s355
      %s358 = sphi 0, %s357
      %s372 = sphi 0, %s358
      %s376 = sphi 0, %s376
      %s378 = sphi 0, %s376
      %s379 = sphi 0, %s378
      %s393 = sphi 0, %s379
      %s397 = sphi 0, %s397
      %s399 = sphi 0, %s397
      %s400 = sphi 0, %s399
      %s414 = sphi 0, %s400
      %s418 = sphi 0, %s418
      %s420 = sphi 0, %s418
      %s421 = sphi 0, %s420
      %s435 = sphi 0, %s421
      %s439 = sphi 0, %s439
      %s441 = sphi 0, %s439
      %s442 = sphi 0, %s441
      %s456 = sphi 0, %s442
      %s460 = sphi 0, %s460
      %s462 = sphi 0, %s460
      %s463 = sphi 0, %s462
      %s477 = sphi 0, %s463
      %s481 = sphi 0, %s481
      %s483 = sphi 0, %s481
      %s484 = sphi 0, %s483
      %s498 = sphi 0, %s484
      %s502 = sphi 0, %s502
      %s504 = sphi 0, %s502
      %s505 = sphi 0, %s504
      %s519 = sphi 0, %s505
      %s525 = sphi 0, %s527
      %s528 = sphi 0, %s525
      %s529 = sphi 0, %s528
      %s545 = sphi 0, %s529
    $region4: #{tpu_custom_call.1} parent=1 // loop_header_branch
      %46 = sbr.rel (%p44) target = $region8
    $region5: #{tpu_custom_call.1} parent=1 // loop_body
      %s48 = ssub.s32 %s43, 1
      %s49 = ssub.s32 %s43, 2
      %s50 = sadd.s32 %s43, 1
      %s51 = ssub.s32 %s43, %s50
      %p52 = scmp.eq.s32.totalorder %s51, 0
      %s54 = sadd.s32 %s53, 1
      %s55 = scalar_select %p52, %s53, %s54
      %p58 = pneg %p52
      %p59 = scmp.eq.s32.totalorder %s43, 1
      %p60 = por %p58, %p59
      %p61 = scmp.ne.s32.totalorder %s53, %s56
      %p62 = scmp.eq.s32.totalorder %s43, 0
      %p63 = por %p61, %p62
      %p64 = scmp.ne.s32.totalorder %s53, %s56
      %p65 = scmp.eq.s32.totalorder %s48, 1
      %p66 = por %p64, %p65
      %p67 = scmp.ne.s32.totalorder %s56, %s57
      %p68 = scmp.eq.s32.totalorder %s48, 0
      %p69 = por %p67, %p68
      %p70 = scmp.ne.s32.totalorder %s56, %s57
      %p71 = scmp.eq.s32.totalorder %s49, 1
      %p72 = por %p70, %p71
      %p74 = scmp.ne.s32.totalorder %s57, %s73
      %p75 = scmp.eq.s32.totalorder %s49, 0
      %p76 = por %p74, %p75
      %s77 = ssub.s32 %s43, %s50
      %p78 = scmp.eq.s32.totalorder %s77, 0
      %s80 = sadd.s32 %s79, 1
      %s81 = scalar_select %p78, %s79, %s80
      %p84 = pneg %p78
      %p85 = scmp.eq.s32.totalorder %s43, 1
      %p86 = por %p84, %p85
      %p87 = scmp.ne.s32.totalorder %s79, %s82
      %p88 = scmp.eq.s32.totalorder %s43, 0
      %p89 = por %p87, %p88
      %p90 = scmp.ne.s32.totalorder %s79, %s82
      %p91 = scmp.eq.s32.totalorder %s48, 1
      %p92 = por %p90, %p91
      %p93 = scmp.ne.s32.totalorder %s82, %s83
      %p94 = scmp.eq.s32.totalorder %s48, 0
      %p95 = por %p93, %p94
      %p96 = scmp.ne.s32.totalorder %s82, %s83
      %p97 = scmp.eq.s32.totalorder %s49, 1
      %p98 = por %p96, %p97
      %p100 = scmp.ne.s32.totalorder %s83, %s99
      %p101 = scmp.eq.s32.totalorder %s49, 0
      %p102 = por %p100, %p101
      %s104 = sadd.s32 %s103, 1
      %p107 = scmp.eq.s32.totalorder %s43, 1
      %p108 = scmp.ne.s32.totalorder %s103, %s105
      %p109 = scmp.eq.s32.totalorder %s43, 0
      %p110 = por %p108, %p109
      %p111 = scmp.ne.s32.totalorder %s103, %s105
      %p112 = scmp.eq.s32.totalorder %s48, 1
      %p113 = por %p111, %p112
      %p114 = scmp.ne.s32.totalorder %s105, %s106
      %p115 = scmp.eq.s32.totalorder %s48, 0
      %p116 = por %p114, %p115
      %p117 = scmp.ne.s32.totalorder %s105, %s106
      %p118 = scmp.eq.s32.totalorder %s49, 1
      %p119 = por %p117, %p118
      %p121 = scmp.ne.s32.totalorder %s106, %s120
      %p122 = scmp.eq.s32.totalorder %s49, 0
      %p123 = por %p121, %p122
      %s125 = sadd.s32 %s124, 1
      %p128 = scmp.eq.s32.totalorder %s43, 1
      %p129 = scmp.ne.s32.totalorder %s124, %s126
      %p130 = scmp.eq.s32.totalorder %s43, 0
      %p131 = por %p129, %p130
      %p132 = scmp.ne.s32.totalorder %s124, %s126
      %p133 = scmp.eq.s32.totalorder %s48, 1
      %p134 = por %p132, %p133
      %p135 = scmp.ne.s32.totalorder %s126, %s127
      %p136 = scmp.eq.s32.totalorder %s48, 0
      %p137 = por %p135, %p136
      %p138 = scmp.ne.s32.totalorder %s126, %s127
      %p139 = scmp.eq.s32.totalorder %s49, 1
      %p140 = por %p138, %p139
      %p142 = scmp.ne.s32.totalorder %s127, %s141
      %p143 = scmp.eq.s32.totalorder %s49, 0
      %p144 = por %p142, %p143
      %s146 = sadd.s32 %s145, 1
      %p149 = scmp.eq.s32.totalorder %s43, 1
      %p150 = scmp.ne.s32.totalorder %s145, %s147
      %p151 = scmp.eq.s32.totalorder %s43, 0
      %p152 = por %p150, %p151
      %p153 = scmp.ne.s32.totalorder %s145, %s147
      %p154 = scmp.eq.s32.totalorder %s48, 1
      %p155 = por %p153, %p154
      %p156 = scmp.ne.s32.totalorder %s147, %s148
      %p157 = scmp.eq.s32.totalorder %s48, 0
      %p158 = por %p156, %p157
      %p159 = scmp.ne.s32.totalorder %s147, %s148
      %p160 = scmp.eq.s32.totalorder %s49, 1
      %p161 = por %p159, %p160
      %p163 = scmp.ne.s32.totalorder %s148, %s162
      %p164 = scmp.eq.s32.totalorder %s49, 0
      %p165 = por %p163, %p164
      %s167 = sadd.s32 %s166, 1
      %p170 = scmp.eq.s32.totalorder %s43, 1
      %p171 = scmp.ne.s32.totalorder %s166, %s168
      %p172 = scmp.eq.s32.totalorder %s43, 0
      %p173 = por %p171, %p172
      %p174 = scmp.ne.s32.totalorder %s166, %s168
      %p175 = scmp.eq.s32.totalorder %s48, 1
      %p176 = por %p174, %p175
      %p177 = scmp.ne.s32.totalorder %s168, %s169
      %p178 = scmp.eq.s32.totalorder %s48, 0
      %p179 = por %p177, %p178
      %p180 = scmp.ne.s32.totalorder %s168, %s169
      %p181 = scmp.eq.s32.totalorder %s49, 1
      %p182 = por %p180, %p181
      %p184 = scmp.ne.s32.totalorder %s169, %s183
      %p185 = scmp.eq.s32.totalorder %s49, 0
      %p186 = por %p184, %p185
      %s188 = sadd.s32 %s187, 1
      %p191 = scmp.eq.s32.totalorder %s43, 1
      %p192 = scmp.ne.s32.totalorder %s187, %s189
      %p193 = scmp.eq.s32.totalorder %s43, 0
      %p194 = por %p192, %p193
      %p195 = scmp.ne.s32.totalorder %s187, %s189
      %p196 = scmp.eq.s32.totalorder %s48, 1
      %p197 = por %p195, %p196
      %p198 = scmp.ne.s32.totalorder %s189, %s190
      %p199 = scmp.eq.s32.totalorder %s48, 0
      %p200 = por %p198, %p199
      %p201 = scmp.ne.s32.totalorder %s189, %s190
      %p202 = scmp.eq.s32.totalorder %s49, 1
      %p203 = por %p201, %p202
      %p205 = scmp.ne.s32.totalorder %s190, %s204
      %p206 = scmp.eq.s32.totalorder %s49, 0
      %p207 = por %p205, %p206
      %s209 = sadd.s32 %s208, 1
      %p212 = scmp.eq.s32.totalorder %s43, 1
      %p213 = scmp.ne.s32.totalorder %s208, %s210
      %p214 = scmp.eq.s32.totalorder %s43, 0
      %p215 = por %p213, %p214
      %p216 = scmp.ne.s32.totalorder %s208, %s210
      %p217 = scmp.eq.s32.totalorder %s48, 1
      %p218 = por %p216, %p217
      %p219 = scmp.ne.s32.totalorder %s210, %s211
      %p220 = scmp.eq.s32.totalorder %s48, 0
      %p221 = por %p219, %p220
      %p222 = scmp.ne.s32.totalorder %s210, %s211
      %p223 = scmp.eq.s32.totalorder %s49, 1
      %p224 = por %p222, %p223
      %p226 = scmp.ne.s32.totalorder %s211, %s225
      %p227 = scmp.eq.s32.totalorder %s49, 0
      %p228 = por %p226, %p227
      %s230 = sadd.s32 %s229, 1
      %p233 = scmp.eq.s32.totalorder %s43, 1
      %p234 = scmp.ne.s32.totalorder %s229, %s231
      %p235 = scmp.eq.s32.totalorder %s43, 0
      %p236 = por %p234, %p235
      %p237 = scmp.ne.s32.totalorder %s229, %s231
      %p238 = scmp.eq.s32.totalorder %s48, 1
      %p239 = por %p237, %p238
      %p240 = scmp.ne.s32.totalorder %s231, %s232
      %p241 = scmp.eq.s32.totalorder %s48, 0
      %p242 = por %p240, %p241
      %p243 = scmp.ne.s32.totalorder %s231, %s232
      %p244 = scmp.eq.s32.totalorder %s49, 1
      %p245 = por %p243, %p244
      %p247 = scmp.ne.s32.totalorder %s232, %s246
      %p248 = scmp.eq.s32.totalorder %s49, 0
      %p249 = por %p247, %p248
      %s251 = sadd.s32 %s250, 1
      %p254 = scmp.eq.s32.totalorder %s43, 1
      %p255 = scmp.ne.s32.totalorder %s250, %s252
      %p256 = scmp.eq.s32.totalorder %s43, 0
      %p257 = por %p255, %p256
      %p258 = scmp.ne.s32.totalorder %s250, %s252
      %p259 = scmp.eq.s32.totalorder %s48, 1
      %p260 = por %p258, %p259
      %p261 = scmp.ne.s32.totalorder %s252, %s253
      %p262 = scmp.eq.s32.totalorder %s48, 0
      %p263 = por %p261, %p262
      %p264 = scmp.ne.s32.totalorder %s252, %s253
      %p265 = scmp.eq.s32.totalorder %s49, 1
      %p266 = por %p264, %p265
      %p268 = scmp.ne.s32.totalorder %s253, %s267
      %p269 = scmp.eq.s32.totalorder %s49, 0
      %p270 = por %p268, %p269
      %s272 = sadd.s32 %s271, 1
      %p275 = scmp.eq.s32.totalorder %s43, 1
      %p276 = scmp.ne.s32.totalorder %s271, %s273
      %p277 = scmp.eq.s32.totalorder %s43, 0
      %p278 = por %p276, %p277
      %p279 = scmp.ne.s32.totalorder %s271, %s273
      %p280 = scmp.eq.s32.totalorder %s48, 1
      %p281 = por %p279, %p280
      %p282 = scmp.ne.s32.totalorder %s273, %s274
      %p283 = scmp.eq.s32.totalorder %s48, 0
      %p284 = por %p282, %p283
      %p285 = scmp.ne.s32.totalorder %s273, %s274
      %p286 = scmp.eq.s32.totalorder %s49, 1
      %p287 = por %p285, %p286
      %p289 = scmp.ne.s32.totalorder %s274, %s288
      %p290 = scmp.eq.s32.totalorder %s49, 0
      %p291 = por %p289, %p290
      %s293 = sadd.s32 %s292, 1
      %p296 = scmp.eq.s32.totalorder %s43, 1
      %p297 = scmp.ne.s32.totalorder %s292, %s294
      %p298 = scmp.eq.s32.totalorder %s43, 0
      %p299 = por %p297, %p298
      %p300 = scmp.ne.s32.totalorder %s292, %s294
      %p301 = scmp.eq.s32.totalorder %s48, 1
      %p302 = por %p300, %p301
      %p303 = scmp.ne.s32.totalorder %s294, %s295
      %p304 = scmp.eq.s32.totalorder %s48, 0
      %p305 = por %p303, %p304
      %p306 = scmp.ne.s32.totalorder %s294, %s295
      %p307 = scmp.eq.s32.totalorder %s49, 1
      %p308 = por %p306, %p307
      %p310 = scmp.ne.s32.totalorder %s295, %s309
      %p311 = scmp.eq.s32.totalorder %s49, 0
      %p312 = por %p310, %p311
      %s314 = sadd.s32 %s313, 1
      %p317 = scmp.eq.s32.totalorder %s43, 1
      %p318 = scmp.ne.s32.totalorder %s313, %s315
      %p319 = scmp.eq.s32.totalorder %s43, 0
      %p320 = por %p318, %p319
      %p321 = scmp.ne.s32.totalorder %s313, %s315
      %p322 = scmp.eq.s32.totalorder %s48, 1
      %p323 = por %p321, %p322
      %p324 = scmp.ne.s32.totalorder %s315, %s316
      %p325 = scmp.eq.s32.totalorder %s48, 0
      %p326 = por %p324, %p325
      %p327 = scmp.ne.s32.totalorder %s315, %s316
      %p328 = scmp.eq.s32.totalorder %s49, 1
      %p329 = por %p327, %p328
      %p331 = scmp.ne.s32.totalorder %s316, %s330
      %p332 = scmp.eq.s32.totalorder %s49, 0
      %p333 = por %p331, %p332
      %s335 = sadd.s32 %s334, 1
      %p338 = scmp.eq.s32.totalorder %s43, 1
      %p339 = scmp.ne.s32.totalorder %s334, %s336
      %p340 = scmp.eq.s32.totalorder %s43, 0
      %p341 = por %p339, %p340
      %p342 = scmp.ne.s32.totalorder %s334, %s336
      %p343 = scmp.eq.s32.totalorder %s48, 1
      %p344 = por %p342, %p343
      %p345 = scmp.ne.s32.totalorder %s336, %s337
      %p346 = scmp.eq.s32.totalorder %s48, 0
      %p347 = por %p345, %p346
      %p348 = scmp.ne.s32.totalorder %s336, %s337
      %p349 = scmp.eq.s32.totalorder %s49, 1
      %p350 = por %p348, %p349
      %p352 = scmp.ne.s32.totalorder %s337, %s351
      %p353 = scmp.eq.s32.totalorder %s49, 0
      %p354 = por %p352, %p353
      %s356 = sadd.s32 %s355, 1
      %p359 = scmp.eq.s32.totalorder %s43, 1
      %p360 = scmp.ne.s32.totalorder %s355, %s357
      %p361 = scmp.eq.s32.totalorder %s43, 0
      %p362 = por %p360, %p361
      %p363 = scmp.ne.s32.totalorder %s355, %s357
      %p364 = scmp.eq.s32.totalorder %s48, 1
      %p365 = por %p363, %p364
      %p366 = scmp.ne.s32.totalorder %s357, %s358
      %p367 = scmp.eq.s32.totalorder %s48, 0
      %p368 = por %p366, %p367
      %p369 = scmp.ne.s32.totalorder %s357, %s358
      %p370 = scmp.eq.s32.totalorder %s49, 1
      %p371 = por %p369, %p370
      %p373 = scmp.ne.s32.totalorder %s358, %s372
      %p374 = scmp.eq.s32.totalorder %s49, 0
      %p375 = por %p373, %p374
      %s377 = sadd.s32 %s376, 1
      %p380 = scmp.eq.s32.totalorder %s43, 1
      %p381 = scmp.ne.s32.totalorder %s376, %s378
      %p382 = scmp.eq.s32.totalorder %s43, 0
      %p383 = por %p381, %p382
      %p384 = scmp.ne.s32.totalorder %s376, %s378
      %p385 = scmp.eq.s32.totalorder %s48, 1
      %p386 = por %p384, %p385
      %p387 = scmp.ne.s32.totalorder %s378, %s379
      %p388 = scmp.eq.s32.totalorder %s48, 0
      %p389 = por %p387, %p388
      %p390 = scmp.ne.s32.totalorder %s378, %s379
      %p391 = scmp.eq.s32.totalorder %s49, 1
      %p392 = por %p390, %p391
      %p394 = scmp.ne.s32.totalorder %s379, %s393
      %p395 = scmp.eq.s32.totalorder %s49, 0
      %p396 = por %p394, %p395
      %s398 = sadd.s32 %s397, 1
      %p401 = scmp.eq.s32.totalorder %s43, 1
      %p402 = scmp.ne.s32.totalorder %s397, %s399
      %p403 = scmp.eq.s32.totalorder %s43, 0
      %p404 = por %p402, %p403
      %p405 = scmp.ne.s32.totalorder %s397, %s399
      %p406 = scmp.eq.s32.totalorder %s48, 1
      %p407 = por %p405, %p406
      %p408 = scmp.ne.s32.totalorder %s399, %s400
      %p409 = scmp.eq.s32.totalorder %s48, 0
      %p410 = por %p408, %p409
      %p411 = scmp.ne.s32.totalorder %s399, %s400
      %p412 = scmp.eq.s32.totalorder %s49, 1
      %p413 = por %p411, %p412
      %p415 = scmp.ne.s32.totalorder %s400, %s414
      %p416 = scmp.eq.s32.totalorder %s49, 0
      %p417 = por %p415, %p416
      %s419 = sadd.s32 %s418, 1
      %p422 = scmp.eq.s32.totalorder %s43, 1
      %p423 = scmp.ne.s32.totalorder %s418, %s420
      %p424 = scmp.eq.s32.totalorder %s43, 0
      %p425 = por %p423, %p424
      %p426 = scmp.ne.s32.totalorder %s418, %s420
      %p427 = scmp.eq.s32.totalorder %s48, 1
      %p428 = por %p426, %p427
      %p429 = scmp.ne.s32.totalorder %s420, %s421
      %p430 = scmp.eq.s32.totalorder %s48, 0
      %p431 = por %p429, %p430
      %p432 = scmp.ne.s32.totalorder %s420, %s421
      %p433 = scmp.eq.s32.totalorder %s49, 1
      %p434 = por %p432, %p433
      %p436 = scmp.ne.s32.totalorder %s421, %s435
      %p437 = scmp.eq.s32.totalorder %s49, 0
      %p438 = por %p436, %p437
      %s440 = sadd.s32 %s439, 1
      %p443 = scmp.eq.s32.totalorder %s43, 1
      %p444 = scmp.ne.s32.totalorder %s439, %s441
      %p445 = scmp.eq.s32.totalorder %s43, 0
      %p446 = por %p444, %p445
      %p447 = scmp.ne.s32.totalorder %s439, %s441
      %p448 = scmp.eq.s32.totalorder %s48, 1
      %p449 = por %p447, %p448
      %p450 = scmp.ne.s32.totalorder %s441, %s442
      %p451 = scmp.eq.s32.totalorder %s48, 0
      %p452 = por %p450, %p451
      %p453 = scmp.ne.s32.totalorder %s441, %s442
      %p454 = scmp.eq.s32.totalorder %s49, 1
      %p455 = por %p453, %p454
      %p457 = scmp.ne.s32.totalorder %s442, %s456
      %p458 = scmp.eq.s32.totalorder %s49, 0
      %p459 = por %p457, %p458
      %s461 = sadd.s32 %s460, 1
      %p464 = scmp.eq.s32.totalorder %s43, 1
      %p465 = scmp.ne.s32.totalorder %s460, %s462
      %p466 = scmp.eq.s32.totalorder %s43, 0
      %p467 = por %p465, %p466
      %p468 = scmp.ne.s32.totalorder %s460, %s462
      %p469 = scmp.eq.s32.totalorder %s48, 1
      %p470 = por %p468, %p469
      %p471 = scmp.ne.s32.totalorder %s462, %s463
      %p472 = scmp.eq.s32.totalorder %s48, 0
      %p473 = por %p471, %p472
      %p474 = scmp.ne.s32.totalorder %s462, %s463
      %p475 = scmp.eq.s32.totalorder %s49, 1
      %p476 = por %p474, %p475
      %p478 = scmp.ne.s32.totalorder %s463, %s477
      %p479 = scmp.eq.s32.totalorder %s49, 0
      %p480 = por %p478, %p479
      %s482 = sadd.s32 %s481, 1
      %p485 = scmp.eq.s32.totalorder %s43, 1
      %p486 = scmp.ne.s32.totalorder %s481, %s483
      %p487 = scmp.eq.s32.totalorder %s43, 0
      %p488 = por %p486, %p487
      %p489 = scmp.ne.s32.totalorder %s481, %s483
      %p490 = scmp.eq.s32.totalorder %s48, 1
      %p491 = por %p489, %p490
      %p492 = scmp.ne.s32.totalorder %s483, %s484
      %p493 = scmp.eq.s32.totalorder %s48, 0
      %p494 = por %p492, %p493
      %p495 = scmp.ne.s32.totalorder %s483, %s484
      %p496 = scmp.eq.s32.totalorder %s49, 1
      %p497 = por %p495, %p496
      %p499 = scmp.ne.s32.totalorder %s484, %s498
      %p500 = scmp.eq.s32.totalorder %s49, 0
      %p501 = por %p499, %p500
      %s503 = sadd.s32 %s502, 1
      %p506 = scmp.eq.s32.totalorder %s43, 1
      %p507 = scmp.ne.s32.totalorder %s502, %s504
      %p508 = scmp.eq.s32.totalorder %s43, 0
      %p509 = por %p507, %p508
      %p510 = scmp.ne.s32.totalorder %s502, %s504
      %p511 = scmp.eq.s32.totalorder %s48, 1
      %p512 = por %p510, %p511
      %p513 = scmp.ne.s32.totalorder %s504, %s505
      %p514 = scmp.eq.s32.totalorder %s48, 0
      %p515 = por %p513, %p514
      %p516 = scmp.ne.s32.totalorder %s504, %s505
      %p517 = scmp.eq.s32.totalorder %s49, 1
      %p518 = por %p516, %p517
      %p520 = scmp.ne.s32.totalorder %s505, %s519
      %p521 = scmp.eq.s32.totalorder %s49, 0
      %p522 = por %p520, %p521
      %s523 = ssub.s32 %s43, %s50
      %p524 = scmp.eq.s32.totalorder %s523, 0
      %s526 = sadd.s32 %s525, 1
      %s527 = scalar_select %p524, %s525, %s526
      %p530 = pneg %p524
      %p531 = scmp.eq.s32.totalorder %s43, 1
      %p532 = por %p530, %p531
      %p533 = scmp.ne.s32.totalorder %s525, %s528
      %p534 = scmp.eq.s32.totalorder %s43, 0
      %p535 = por %p533, %p534
      %p536 = scmp.ne.s32.totalorder %s525, %s528
      %p537 = scmp.eq.s32.totalorder %s48, 1
      %p538 = por %p536, %p537
      %p539 = scmp.ne.s32.totalorder %s528, %s529
      %p540 = scmp.eq.s32.totalorder %s48, 0
      %p541 = por %p539, %p540
      %p542 = scmp.ne.s32.totalorder %s528, %s529
      %p543 = scmp.eq.s32.totalorder %s49, 1
      %p544 = por %p542, %p543
      %p546 = scmp.ne.s32.totalorder %s529, %s545
      %p547 = scmp.eq.s32.totalorder %s49, 0
      %p548 = por %p546, %p547
      %p549 = scmp.le.s32.totalorder 1, %s43
      %p550 = scmp.lt.s32.totalorder %s43, 3
      %p551 = pnand %p549, %p550
      %p552 = pneg %p551
      // Predicated region
      $region9: #{tpu_custom_call.1} parent=5 // pred_check
        _
      $region10: #{tpu_custom_call.1} parent=5 // pred_check_branch
        %554 = sbr.rel (%p551) target = $region12
      $region11: #{tpu_custom_call.1} parent=5 // pred_region
        %s555 = ssub.s32 %s43, 1
        // Predicated region
        $region13: #{tpu_custom_call.1} parent=11 // pred_check
          %p556 = pneg %p116
        $region14: #{tpu_custom_call.1} parent=11 // pred_check_branch
          %558 = sbr.rel (%p556) target = $region16
        $region15: #{tpu_custom_call.1} parent=11 // pred_region
          %s560 = ssub.s32 1024, 1024
          %561 = vsyncadd [#allocation6], %s560
          %s562 = sshll.u32 [#allocation7], 4
          %s563 = int_to_ptr.vmem [resolvable:$true] %s562
          %568 = dma.hbm_to_vmem [thread:$0]  %s2, 1024, %s563, [#allocation6], 64, 64, 4
        $region16: #{tpu_custom_call.1} parent=11 // pred_fallthru
          _
        // Predicated region
        $region17: #{tpu_custom_call.1} parent=11 // pred_check
          %p569 = pneg %p137
        $region18: #{tpu_custom_call.1} parent=11 // pred_check_branch
          %571 = sbr.rel (%p569) target = $region20
        $region19: #{tpu_custom_call.1} parent=11 // pred_region
          %s573 = ssub.s32 1024, 1024
          %574 = vsyncadd [#allocation9], %s573
          %s575 = sshll.u32 [#allocation8], 4
          %s576 = int_to_ptr.vmem [resolvable:$true] %s575
          %581 = dma.hbm_to_vmem [thread:$0]  %s3, 1024, %s576, [#allocation9], 64, 64, 4
        $region20: #{tpu_custom_call.1} parent=11 // pred_fallthru
          _
        // Predicated region
        $region21: #{tpu_custom_call.1} parent=11 // pred_check
          %p582 = pneg %p158
        $region22: #{tpu_custom_call.1} parent=11 // pred_check_branch
          %584 = sbr.rel (%p582) target = $region24
        $region23: #{tpu_custom_call.1} parent=11 // pred_region
          %s586 = ssub.s32 1024, 1024
          %587 = vsyncadd [#allocation9], %s586
          %s588 = sshll.u32 [#allocation10], 4
          %s589 = int_to_ptr.vmem [resolvable:$true] %s588
          %594 = dma.hbm_to_vmem [thread:$0]  %s4, 1024, %s589, [#allocation9], 64, 64, 4
        $region24: #{tpu_custom_call.1} parent=11 // pred_fallthru
          _
        // Predicated region
        $region25: #{tpu_custom_call.1} parent=11 // pred_check
          %p595 = pneg %p179
        $region26: #{tpu_custom_call.1} parent=11 // pred_check_branch
          %597 = sbr.rel (%p595) target = $region28
        $region27: #{tpu_custom_call.1} parent=11 // pred_region
          _
        $region28: #{tpu_custom_call.1} parent=11 // pred_fallthru
          _
        // Predicated region
        $region29: #{tpu_custom_call.1} parent=11 // pred_check
          %p598 = pneg %p200
        $region30: #{tpu_custom_call.1} parent=11 // pred_check_branch
          %600 = sbr.rel (%p598) target = $region32
        $region31: #{tpu_custom_call.1} parent=11 // pred_region
          _
        $region32: #{tpu_custom_call.1} parent=11 // pred_fallthru
          _
        // Predicated region
        $region33: #{tpu_custom_call.1} parent=11 // pred_check
          %p601 = pneg %p221
        $region34: #{tpu_custom_call.1} parent=11 // pred_check_branch
          %603 = sbr.rel (%p601) target = $region36
        $region35: #{tpu_custom_call.1} parent=11 // pred_region
          _
        $region36: #{tpu_custom_call.1} parent=11 // pred_fallthru
          _
        // Predicated region
        $region37: #{tpu_custom_call.1} parent=11 // pred_check
          %p604 = pneg %p242
        $region38: #{tpu_custom_call.1} parent=11 // pred_check_branch
          %606 = sbr.rel (%p604) target = $region40
        $region39: #{tpu_custom_call.1} parent=11 // pred_region
          %s608 = ssub.s32 1024, 1024
          %609 = vsyncadd [#allocation12], %s608
          %s610 = sshll.u32 [#allocation11], 4
          %s611 = int_to_ptr.vmem [resolvable:$true] %s610
          %616 = dma.hbm_to_vmem [thread:$0]  %s8, 1024, %s611, [#allocation12], 64, 64, 4
        $region40: #{tpu_custom_call.1} parent=11 // pred_fallthru
          _
        // Predicated region
        $region41: #{tpu_custom_call.1} parent=11 // pred_check
          %p617 = pneg %p263
        $region42: #{tpu_custom_call.1} parent=11 // pred_check_branch
          %619 = sbr.rel (%p617) target = $region44
        $region43: #{tpu_custom_call.1} parent=11 // pred_region
          _
        $region44: #{tpu_custom_call.1} parent=11 // pred_fallthru
          _
        // Predicated region
        $region45: #{tpu_custom_call.1} parent=11 // pred_check
          %p620 = pneg %p284
        $region46: #{tpu_custom_call.1} parent=11 // pred_check_branch
          %622 = sbr.rel (%p620) target = $region48
        $region47: #{tpu_custom_call.1} parent=11 // pred_region
          %s624 = ssub.s32 1024, 1024
          %625 = vsyncadd [#allocation12], %s624
          %s626 = sshll.u32 [#allocation13], 4
          %s627 = int_to_ptr.vmem [resolvable:$true] %s626
          %632 = dma.hbm_to_vmem [thread:$0]  %s10, 1024, %s627, [#allocation12], 64, 64, 4
        $region48: #{tpu_custom_call.1} parent=11 // pred_fallthru
          _
        // Predicated region
        $region49: #{tpu_custom_call.1} parent=11 // pred_check
          %p633 = pneg %p305
        $region50: #{tpu_custom_call.1} parent=11 // pred_check_branch
          %635 = sbr.rel (%p633) target = $region52
        $region51: #{tpu_custom_call.1} parent=11 // pred_region
          %s637 = ssub.s32 1024, 1024
          %638 = vsyncadd [#allocation15], %s637
          %s639 = sshll.u32 [#allocation14], 4
          %s640 = int_to_ptr.vmem [resolvable:$true] %s639
          %645 = dma.hbm_to_vmem [thread:$0]  %s11, 1024, %s640, [#allocation15], 64, 64, 4
        $region52: #{tpu_custom_call.1} parent=11 // pred_fallthru
          _
        // Predicated region
        $region53: #{tpu_custom_call.1} parent=11 // pred_check
          %p646 = pneg %p326
        $region54: #{tpu_custom_call.1} parent=11 // pred_check_branch
          %648 = sbr.rel (%p646) target = $region56
        $region55: #{tpu_custom_call.1} parent=11 // pred_region
          %s650 = ssub.s32 1024, 1024
          %651 = vsyncadd [#allocation15], %s650
          %s652 = sshll.u32 [#allocation16], 4
          %s653 = int_to_ptr.vmem [resolvable:$true] %s652
          %658 = dma.hbm_to_vmem [thread:$0]  %s12, 1024, %s653, [#allocation15], 64, 64, 4
        $region56: #{tpu_custom_call.1} parent=11 // pred_fallthru
          _
        // Predicated region
        $region57: #{tpu_custom_call.1} parent=11 // pred_check
          %p659 = pneg %p347
        $region58: #{tpu_custom_call.1} parent=11 // pred_check_branch
          %661 = sbr.rel (%p659) target = $region60
        $region59: #{tpu_custom_call.1} parent=11 // pred_region
          %s663 = ssub.s32 16, 16
          %664 = vsyncadd [#allocation18], %s663
          %s666 = sshll.u32 [#allocation17], 4
          %s667 = int_to_ptr.vmem [resolvable:$true] %s666
          %669 = dma.hbm_to_vmem [thread:$0]  %s13, 16, %s667, [#allocation18]
        $region60: #{tpu_custom_call.1} parent=11 // pred_fallthru
          _
        // Predicated region
        $region61: #{tpu_custom_call.1} parent=11 // pred_check
          %p670 = pneg %p368
        $region62: #{tpu_custom_call.1} parent=11 // pred_check_branch
          %672 = sbr.rel (%p670) target = $region64
        $region63: #{tpu_custom_call.1} parent=11 // pred_region
          %s674 = ssub.s32 16, 16
          %675 = vsyncadd [#allocation18], %s674
          %s677 = sshll.u32 [#allocation19], 4
          %s678 = int_to_ptr.vmem [resolvable:$true] %s677
          %680 = dma.hbm_to_vmem [thread:$0]  %s14, 16, %s678, [#allocation18]
        $region64: #{tpu_custom_call.1} parent=11 // pred_fallthru
          _
        // Predicated region
        $region65: #{tpu_custom_call.1} parent=11 // pred_check
          %p681 = pneg %p389
        $region66: #{tpu_custom_call.1} parent=11 // pred_check_branch
          %683 = sbr.rel (%p681) target = $region68
        $region67: #{tpu_custom_call.1} parent=11 // pred_region
          %s685 = ssub.s32 16, 16
          %686 = vsyncadd [#allocation21], %s685
          %s688 = sshll.u32 [#allocation20], 4
          %s689 = int_to_ptr.vmem [resolvable:$true] %s688
          %691 = dma.hbm_to_vmem [thread:$0]  %s15, 16, %s689, [#allocation21]
        $region68: #{tpu_custom_call.1} parent=11 // pred_fallthru
          _
        // Predicated region
        $region69: #{tpu_custom_call.1} parent=11 // pred_check
          %p692 = pneg %p410
        $region70: #{tpu_custom_call.1} parent=11 // pred_check_branch
          %694 = sbr.rel (%p692) target = $region72
        $region71: #{tpu_custom_call.1} parent=11 // pred_region
          %s696 = ssub.s32 1024, 1024
          %697 = vsyncadd [#allocation21], %s696
          %s698 = sshll.u32 [#allocation22], 4
          %s699 = int_to_ptr.vmem [resolvable:$true] %s698
          %704 = dma.hbm_to_vmem [thread:$0]  %s16, 1024, %s699, [#allocation21], 64, 64, 4
        $region72: #{tpu_custom_call.1} parent=11 // pred_fallthru
          _
        // Predicated region
        $region73: #{tpu_custom_call.1} parent=11 // pred_check
          %p705 = pneg %p431
        $region74: #{tpu_custom_call.1} parent=11 // pred_check_branch
          %707 = sbr.rel (%p705) target = $region76
        $region75: #{tpu_custom_call.1} parent=11 // pred_region
          %s709 = ssub.s32 16, 16
          %710 = vsyncadd [#allocation24], %s709
          %s712 = sshll.u32 [#allocation23], 4
          %s713 = int_to_ptr.vmem [resolvable:$true] %s712
          %715 = dma.hbm_to_vmem [thread:$0]  %s17, 16, %s713, [#allocation24]
        $region76: #{tpu_custom_call.1} parent=11 // pred_fallthru
          _
        // Predicated region
        $region77: #{tpu_custom_call.1} parent=11 // pred_check
          %p716 = pneg %p452
        $region78: #{tpu_custom_call.1} parent=11 // pred_check_branch
          %718 = sbr.rel (%p716) target = $region80
        $region79: #{tpu_custom_call.1} parent=11 // pred_region
          _
        $region80: #{tpu_custom_call.1} parent=11 // pred_fallthru
          _
        // Predicated region
        $region81: #{tpu_custom_call.1} parent=11 // pred_check
          %p719 = pneg %p473
        $region82: #{tpu_custom_call.1} parent=11 // pred_check_branch
          %721 = sbr.rel (%p719) target = $region84
        $region83: #{tpu_custom_call.1} parent=11 // pred_region
          _
        $region84: #{tpu_custom_call.1} parent=11 // pred_fallthru
          _
        // Predicated region
        $region85: #{tpu_custom_call.1} parent=11 // pred_check
          %p722 = pneg %p494
        $region86: #{tpu_custom_call.1} parent=11 // pred_check_branch
          %724 = sbr.rel (%p722) target = $region88
        $region87: #{tpu_custom_call.1} parent=11 // pred_region
          %s726 = ssub.s32 1024, 1024
          %727 = vsyncadd [#allocation24], %s726
          %s728 = sshll.u32 [#allocation25], 4
          %s729 = int_to_ptr.vmem [resolvable:$true] %s728
          %734 = dma.hbm_to_vmem [thread:$0]  %s20, 1024, %s729, [#allocation24], 64, 64, 4
        $region88: #{tpu_custom_call.1} parent=11 // pred_fallthru
          _
        // Predicated region
        $region89: #{tpu_custom_call.1} parent=11 // pred_check
          %p735 = pneg %p515
        $region90: #{tpu_custom_call.1} parent=11 // pred_check_branch
          %737 = sbr.rel (%p735) target = $region92
        $region91: #{tpu_custom_call.1} parent=11 // pred_region
          _
        $region92: #{tpu_custom_call.1} parent=11 // pred_fallthru
          _
      $region12: #{tpu_custom_call.1} parent=5 // pred_fallthru
        _
      %p738 = scmp.lt.s32.totalorder %s43, 2
      // Predicated region
      $region93: #{tpu_custom_call.1} parent=5 // pred_check
        %p739 = pneg %p738
      $region94: #{tpu_custom_call.1} parent=5 // pred_check_branch
        %741 = sbr.rel (%p739) target = $region96
      $region95: #{tpu_custom_call.1} parent=5 // pred_region
        // Predicated region
        $region97: #{tpu_custom_call.1} parent=95 // pred_check
          %p742 = pneg %p63
        $region98: #{tpu_custom_call.1} parent=95 // pred_check_branch
          %744 = sbr.rel (%p742) target = $region100
        $region99: #{tpu_custom_call.1} parent=95 // pred_region
          %s745 = sand.u32 %s53, 1
          %s746 = scalar_lea.sflag [#allocation3], %s745
          %s747 = sand.u32 %s53, 1
          %s748 = smul.addr %s747, 4
          %s749 = scalar_lea.vmem [#allocation2], %s748
          %s751 = ssub.s32 64, 64
          %752 = vsyncadd %s746, %s751
          %s753 = smul.addr %s43, 64
          %s754 = scalar_lea.hbm %s0, %s753
          %s756 = sshll.u32 %s749, 4
          %s757 = int_to_ptr.vmem [resolvable:$true] %s756
          %759 = dma.hbm_to_vmem [thread:$0]  %s754, 64, %s757, %s746
        $region100: #{tpu_custom_call.1} parent=95 // pred_fallthru
          _
        // Predicated region
        $region101: #{tpu_custom_call.1} parent=95 // pred_check
          %p760 = pneg %p89
        $region102: #{tpu_custom_call.1} parent=95 // pred_check_branch
          %762 = sbr.rel (%p760) target = $region104
        $region103: #{tpu_custom_call.1} parent=95 // pred_region
          %s763 = sand.u32 %s43, 1
          %s764 = scalar_lea.sflag [#allocation6], %s763
          %s765 = sand.u32 %s79, 1
          %s766 = smul.addr %s765, 4
          %s767 = scalar_lea.vmem [#allocation5], %s766
          %s769 = ssub.s32 64, 64
          %770 = vsyncadd %s764, %s769
          %s771 = smul.addr %s43, 64
          %s772 = scalar_lea.hbm %s1, %s771
          %s774 = sshll.u32 %s767, 4
          %s775 = int_to_ptr.vmem [resolvable:$true] %s774
          %777 = dma.hbm_to_vmem [thread:$0]  %s772, 64, %s775, %s764
        $region104: #{tpu_custom_call.1} parent=95 // pred_fallthru
          _
      $region96: #{tpu_custom_call.1} parent=5 // pred_fallthru
        _
      %p778 = scmp.le.s32.totalorder 1, %s43
      %p779 = scmp.lt.s32.totalorder %s43, 3
      %p780 = pnand %p778, %p779
      %p781 = pneg %p780
      // Predicated region
      $region105: #{tpu_custom_call.1} parent=5 // pred_check
        _
      $region106: #{tpu_custom_call.1} parent=5 // pred_check_branch
        %783 = sbr.rel (%p780) target = $region108
      $region107: #{tpu_custom_call.1} parent=5 // pred_region
        %s784 = ssub.s32 %s43, 1
        %s785 = sand.u32 %s56, 1
        %s786 = scalar_lea.sflag [#allocation3], %s785
        %s787 = sand.u32 %s56, 1
        %s788 = smul.addr %s787, 4
        %s789 = scalar_lea.vmem [#allocation2], %s788
        // Predicated region
        $region109: #{tpu_custom_call.1} parent=107 // pred_check
          %p790 = pneg %p69
        $region110: #{tpu_custom_call.1} parent=107 // pred_check_branch
          %792 = sbr.rel (%p790) target = $region112
        $region111: #{tpu_custom_call.1} parent=107 // pred_region
          %793 = dma.done %s786, 64
        $region112: #{tpu_custom_call.1} parent=107 // pred_fallthru
          _
        %s794 = sand.u32 %s48, 1
        %s795 = scalar_lea.sflag [#allocation6], %s794
        %s796 = sand.u32 %s82, 1
        %s797 = smul.addr %s796, 4
        %s798 = scalar_lea.vmem [#allocation5], %s797
        // Predicated region
        $region113: #{tpu_custom_call.1} parent=107 // pred_check
          %p799 = pneg %p95
        $region114: #{tpu_custom_call.1} parent=107 // pred_check_branch
          %801 = sbr.rel (%p799) target = $region116
        $region115: #{tpu_custom_call.1} parent=107 // pred_region
          %802 = dma.done %s795, 64
        $region116: #{tpu_custom_call.1} parent=107 // pred_fallthru
          _
        // Predicated region
        $region117: #{tpu_custom_call.1} parent=107 // pred_check
          %p803 = pneg %p116
        $region118: #{tpu_custom_call.1} parent=107 // pred_check_branch
          %805 = sbr.rel (%p803) target = $region120
        $region119: #{tpu_custom_call.1} parent=107 // pred_region
          %806 = dma.done [#allocation6], 1024
        $region120: #{tpu_custom_call.1} parent=107 // pred_fallthru
          _
        // Predicated region
        $region121: #{tpu_custom_call.1} parent=107 // pred_check
          %p807 = pneg %p137
        $region122: #{tpu_custom_call.1} parent=107 // pred_check_branch
          %809 = sbr.rel (%p807) target = $region124
        $region123: #{tpu_custom_call.1} parent=107 // pred_region
          %810 = dma.done [#allocation9], 1024
        $region124: #{tpu_custom_call.1} parent=107 // pred_fallthru
          _
        // Predicated region
        $region125: #{tpu_custom_call.1} parent=107 // pred_check
          %p811 = pneg %p158
        $region126: #{tpu_custom_call.1} parent=107 // pred_check_branch
          %813 = sbr.rel (%p811) target = $region128
        $region127: #{tpu_custom_call.1} parent=107 // pred_region
          %814 = dma.done [#allocation9], 1024
        $region128: #{tpu_custom_call.1} parent=107 // pred_fallthru
          _
        // Predicated region
        $region129: #{tpu_custom_call.1} parent=107 // pred_check
          %p815 = pneg %p242
        $region130: #{tpu_custom_call.1} parent=107 // pred_check_branch
          %817 = sbr.rel (%p815) target = $region132
        $region131: #{tpu_custom_call.1} parent=107 // pred_region
          %818 = dma.done [#allocation12], 1024
        $region132: #{tpu_custom_call.1} parent=107 // pred_fallthru
          _
        // Predicated region
        $region133: #{tpu_custom_call.1} parent=107 // pred_check
          %p819 = pneg %p284
        $region134: #{tpu_custom_call.1} parent=107 // pred_check_branch
          %821 = sbr.rel (%p819) target = $region136
        $region135: #{tpu_custom_call.1} parent=107 // pred_region
          %822 = dma.done [#allocation12], 1024
        $region136: #{tpu_custom_call.1} parent=107 // pred_fallthru
          _
        // Predicated region
        $region137: #{tpu_custom_call.1} parent=107 // pred_check
          %p823 = pneg %p305
        $region138: #{tpu_custom_call.1} parent=107 // pred_check_branch
          %825 = sbr.rel (%p823) target = $region140
        $region139: #{tpu_custom_call.1} parent=107 // pred_region
          %826 = dma.done [#allocation15], 1024
        $region140: #{tpu_custom_call.1} parent=107 // pred_fallthru
          _
        // Predicated region
        $region141: #{tpu_custom_call.1} parent=107 // pred_check
          %p827 = pneg %p326
        $region142: #{tpu_custom_call.1} parent=107 // pred_check_branch
          %829 = sbr.rel (%p827) target = $region144
        $region143: #{tpu_custom_call.1} parent=107 // pred_region
          %830 = dma.done [#allocation15], 1024
        $region144: #{tpu_custom_call.1} parent=107 // pred_fallthru
          _
        // Predicated region
        $region145: #{tpu_custom_call.1} parent=107 // pred_check
          %p831 = pneg %p347
        $region146: #{tpu_custom_call.1} parent=107 // pred_check_branch
          %833 = sbr.rel (%p831) target = $region148
        $region147: #{tpu_custom_call.1} parent=107 // pred_region
          %834 = dma.done [#allocation18], 16
        $region148: #{tpu_custom_call.1} parent=107 // pred_fallthru
          _
        // Predicated region
        $region149: #{tpu_custom_call.1} parent=107 // pred_check
          %p835 = pneg %p368
        $region150: #{tpu_custom_call.1} parent=107 // pred_check_branch
          %837 = sbr.rel (%p835) target = $region152
        $region151: #{tpu_custom_call.1} parent=107 // pred_region
          %838 = dma.done [#allocation18], 16
        $region152: #{tpu_custom_call.1} parent=107 // pred_fallthru
          _
        // Predicated region
        $region153: #{tpu_custom_call.1} parent=107 // pred_check
          %p839 = pneg %p389
        $region154: #{tpu_custom_call.1} parent=107 // pred_check_branch
          %841 = sbr.rel (%p839) target = $region156
        $region155: #{tpu_custom_call.1} parent=107 // pred_region
          %842 = dma.done [#allocation21], 16
        $region156: #{tpu_custom_call.1} parent=107 // pred_fallthru
          _
        // Predicated region
        $region157: #{tpu_custom_call.1} parent=107 // pred_check
          %p843 = pneg %p410
        $region158: #{tpu_custom_call.1} parent=107 // pred_check_branch
          %845 = sbr.rel (%p843) target = $region160
        $region159: #{tpu_custom_call.1} parent=107 // pred_region
          %846 = dma.done [#allocation21], 1024
        $region160: #{tpu_custom_call.1} parent=107 // pred_fallthru
          _
        // Predicated region
        $region161: #{tpu_custom_call.1} parent=107 // pred_check
          %p847 = pneg %p431
        $region162: #{tpu_custom_call.1} parent=107 // pred_check_branch
          %849 = sbr.rel (%p847) target = $region164
        $region163: #{tpu_custom_call.1} parent=107 // pred_region
          %850 = dma.done [#allocation24], 16
        $region164: #{tpu_custom_call.1} parent=107 // pred_fallthru
          _
        // Predicated region
        $region165: #{tpu_custom_call.1} parent=107 // pred_check
          %p851 = pneg %p494
        $region166: #{tpu_custom_call.1} parent=107 // pred_check_branch
          %853 = sbr.rel (%p851) target = $region168
        $region167: #{tpu_custom_call.1} parent=107 // pred_region
          %854 = dma.done [#allocation24], 1024
        $region168: #{tpu_custom_call.1} parent=107 // pred_fallthru
          _
        %s855 = sand.u32 %s56, 1
        %s856 = scalar_lea.sflag [#allocation3], %s855
        %s857 = sand.u32 %s56, 1
        %s858 = smul.addr %s857, 4
        %s859 = scalar_lea.vmem [#allocation2], %s858
        %p860 = pneg %p69
        %p861 = pneg %p66
        %s862 = sand.u32 %s48, 1
        %s863 = scalar_lea.sflag [#allocation6], %s862
        %s864 = sand.u32 %s82, 1
        %s865 = smul.addr %s864, 4
        %s866 = scalar_lea.vmem [#allocation5], %s865
        %p867 = pneg %p95
        %p868 = pneg %p92
        %p869 = pneg %p116
        %p870 = pneg %p113
        %p871 = pneg %p137
        %p872 = pneg %p134
        %p873 = pneg %p158
        %p874 = pneg %p155
        %p875 = pneg %p179
        %p876 = pneg %p176
        %p877 = pneg %p200
        %p878 = pneg %p197
        %p879 = pneg %p221
        %p880 = pneg %p218
        %p881 = pneg %p242
        %p882 = pneg %p239
        %p883 = pneg %p263
        %p884 = pneg %p260
        %p885 = pneg %p284
        %p886 = pneg %p281
        %p887 = pneg %p305
        %p888 = pneg %p302
        %p889 = pneg %p326
        %p890 = pneg %p323
        %p891 = pneg %p347
        %p892 = pneg %p344
        %p893 = pneg %p368
        %p894 = pneg %p365
        %p895 = pneg %p389
        %p896 = pneg %p386
        %p897 = pneg %p410
        %p898 = pneg %p407
        %p899 = pneg %p431
        %p900 = pneg %p428
        %p901 = pneg %p452
        %p902 = pneg %p449
        %p903 = pneg %p473
        %p904 = pneg %p470
        %p905 = pneg %p494
        %p906 = pneg %p491
        %p907 = pneg %p515
        %p908 = pneg %p512
        %p909 = pneg %p541
        %p910 = pneg %p538
        %s911 = sand.u32 %s528, 1
        %s912 = scalar_lea.sflag [#allocation4], %s911
        %s913 = sand.u32 %s528, 1
        %s914 = smul.addr %s913, 8
        %s915 = scalar_lea.vmem [#allocation26], %s914
        %v917 = vld [vmem:[%s789] sm:$0xf]
        %v918 = vunpack.c.l.bf16 %v917
        %v919 = vld [vmem:[%s798] sm:$0xf]
        %v920 = vld [vmem:[#allocation7] sm:$0xf]
        %v921 = vld [vmem:[#allocation7 + $0x4] sm:$0xf]
        %v922 = vld [vmem:[#allocation7 + $0x8] sm:$0xf]
        %v923 = vld [vmem:[#allocation7 + $0xc] sm:$0xf]
        %v924 = vld [vmem:[#allocation7 + $0x10] sm:$0xf]
        %v925 = vld [vmem:[#allocation7 + $0x14] sm:$0xf]
        %v926 = vld [vmem:[#allocation7 + $0x18] sm:$0xf]
        %v927 = vld [vmem:[#allocation7 + $0x1c] sm:$0xf]
        %v928 = vld [vmem:[#allocation7 + $0x20] sm:$0xf]
        %v929 = vld [vmem:[#allocation7 + $0x24] sm:$0xf]
        %v930 = vld [vmem:[#allocation7 + $0x28] sm:$0xf]
        %v931 = vld [vmem:[#allocation7 + $0x2c] sm:$0xf]
        %v932 = vld [vmem:[#allocation7 + $0x30] sm:$0xf]
        %v933 = vld [vmem:[#allocation7 + $0x34] sm:$0xf]
        %v934 = vld [vmem:[#allocation7 + $0x38] sm:$0xf]
        %v935 = vld [vmem:[#allocation7 + $0x3c] sm:$0xf]
        %v936 = vld [vmem:[#allocation8] sm:$0xf]
        %v937 = vld [vmem:[#allocation8 + $0x4] sm:$0xf]
        %v938 = vld [vmem:[#allocation8 + $0x8] sm:$0xf]
        %v939 = vld [vmem:[#allocation8 + $0xc] sm:$0xf]
        %v940 = vld [vmem:[#allocation8 + $0x10] sm:$0xf]
        %v941 = vld [vmem:[#allocation8 + $0x14] sm:$0xf]
        %v942 = vld [vmem:[#allocation8 + $0x18] sm:$0xf]
        %v943 = vld [vmem:[#allocation8 + $0x1c] sm:$0xf]
        %v944 = vld [vmem:[#allocation8 + $0x20] sm:$0xf]
        %v945 = vld [vmem:[#allocation8 + $0x24] sm:$0xf]
        %v946 = vld [vmem:[#allocation8 + $0x28] sm:$0xf]
        %v947 = vld [vmem:[#allocation8 + $0x2c] sm:$0xf]
        %v948 = vld [vmem:[#allocation8 + $0x30] sm:$0xf]
        %v949 = vld [vmem:[#allocation8 + $0x34] sm:$0xf]
        %v950 = vld [vmem:[#allocation8 + $0x38] sm:$0xf]
        %v951 = vld [vmem:[#allocation8 + $0x3c] sm:$0xf]
        %v952 = vld [vmem:[#allocation10] sm:$0xf]
        %v953 = vld [vmem:[#allocation10 + $0x4] sm:$0xf]
        %v954 = vld [vmem:[#allocation10 + $0x8] sm:$0xf]
        %v955 = vld [vmem:[#allocation10 + $0xc] sm:$0xf]
        %v956 = vld [vmem:[#allocation10 + $0x10] sm:$0xf]
        %v957 = vld [vmem:[#allocation10 + $0x14] sm:$0xf]
        %v958 = vld [vmem:[#allocation10 + $0x18] sm:$0xf]
        %v959 = vld [vmem:[#allocation10 + $0x1c] sm:$0xf]
        %v960 = vld [vmem:[#allocation10 + $0x20] sm:$0xf]
        %v961 = vld [vmem:[#allocation10 + $0x24] sm:$0xf]
        %v962 = vld [vmem:[#allocation10 + $0x28] sm:$0xf]
        %v963 = vld [vmem:[#allocation10 + $0x2c] sm:$0xf]
        %v964 = vld [vmem:[#allocation10 + $0x30] sm:$0xf]
        %v965 = vld [vmem:[#allocation10 + $0x34] sm:$0xf]
        %v966 = vld [vmem:[#allocation10 + $0x38] sm:$0xf]
        %v967 = vld [vmem:[#allocation10 + $0x3c] sm:$0xf]
        %v968 = vld [vmem:[%s5] sm:$0x1]
        %v969 = vld [vmem:[%s6] sm:$0x1]
        %v970 = vld [vmem:[%s7] sm:$0x1]
        %v971 = vld [vmem:[#allocation11] sm:$0xf]
        %v972 = vld [vmem:[#allocation11 + $0x4] sm:$0xf]
        %v973 = vld [vmem:[#allocation11 + $0x8] sm:$0xf]
        %v974 = vld [vmem:[#allocation11 + $0xc] sm:$0xf]
        %v975 = vld [vmem:[#allocation11 + $0x10] sm:$0xf]
        %v976 = vld [vmem:[#allocation11 + $0x14] sm:$0xf]
        %v977 = vld [vmem:[#allocation11 + $0x18] sm:$0xf]
        %v978 = vld [vmem:[#allocation11 + $0x1c] sm:$0xf]
        %v979 = vld [vmem:[#allocation11 + $0x20] sm:$0xf]
        %v980 = vld [vmem:[#allocation11 + $0x24] sm:$0xf]
        %v981 = vld [vmem:[#allocation11 + $0x28] sm:$0xf]
        %v982 = vld [vmem:[#allocation11 + $0x2c] sm:$0xf]
        %v983 = vld [vmem:[#allocation11 + $0x30] sm:$0xf]
        %v984 = vld [vmem:[#allocation11 + $0x34] sm:$0xf]
        %v985 = vld [vmem:[#allocation11 + $0x38] sm:$0xf]
        %v986 = vld [vmem:[#allocation11 + $0x3c] sm:$0xf]
        %v987 = vld [vmem:[%s9] sm:$0x1]
        %v989 = vlaneseq
        %v990 = vshrl.u32 %v989, 7
        %v991 = vsub.s32 0, %v990
        %v992 = vrot.slane %v968, %v991
        %v1010 = vunpack.c.l.b16 %v920
        %v1011 = vunpack.c.l.b16 %v921
        %v1012 = vunpack.c.l.b16 %v922
        %v1013 = vunpack.c.l.b16 %v923
        %v1014 = vunpack.c.l.b16 %v924
        %v1015 = vunpack.c.l.b16 %v925
        %v1016 = vunpack.c.l.b16 %v926
        %v1017 = vunpack.c.l.b16 %v927
        %v1018 = vunpack.c.l.b16 %v928
        %v1019 = vunpack.c.l.b16 %v929
        %v1020 = vunpack.c.l.b16 %v930
        %v1021 = vunpack.c.l.b16 %v931
        %v1022 = vunpack.c.l.b16 %v932
        %v1023 = vunpack.c.l.b16 %v933
        %v1024 = vunpack.c.l.b16 %v934
        %v1025 = vunpack.c.l.b16 %v935
        %v1026 = vpack.c.b16 %v1011, %v1010
        %v1027 = vpack.c.b16 %v1013, %v1012
        %v1028 = vpack.c.b16 %v1015, %v1014
        %v1029 = vpack.c.b16 %v1017, %v1016
        %v1030 = vpack.c.b16 %v1019, %v1018
        %v1031 = vpack.c.b16 %v1021, %v1020
        %v1032 = vpack.c.b16 %v1023, %v1022
        %v1033 = vpack.c.b16 %v1025, %v1024
        %1042 = vmatprep.subr.bf16.mxu0 0
        %1043 = vmatpush1.bf16.msra.mxu0 %v1026
        %1044 = vmatprep.subr.bf16.mxu0 0
        %1045 = vmatpush1.bf16.msra.mxu0 %v1027
        %1046 = vmatprep.subr.bf16.mxu0 0
        %1047 = vmatpush1.bf16.msra.mxu0 %v1028
        %1048 = vmatprep.subr.bf16.mxu0 0
        %1049 = vmatpush1.bf16.msra.mxu0 %v1029
        %1050 = vmatprep.subr.bf16.mxu0 0
        %1051 = vmatpush1.bf16.msra.mxu0 %v1030
        %1052 = vmatprep.subr.bf16.mxu0 0
        %1053 = vmatpush1.bf16.msra.mxu0 %v1031
        %1054 = vmatprep.subr.bf16.mxu0 0
        %1055 = vmatpush1.bf16.msra.mxu0 %v1032
        %1056 = vmatprep.subr.bf16.mxu0 0
        %1057 = vmatpush1.bf16.msra.mxu0 %v1033
        %1058 = vmatprep.subr.bf16.mxu0 0
        %1059 = vmatpush1.bf16.msra.mxu0 0
        %1060 = vmatprep.subr.bf16.mxu0 0
        %1061 = vmatpush1.bf16.msra.mxu0 0
        %1062 = vmatprep.subr.bf16.mxu0 0
        %1063 = vmatpush1.bf16.msra.mxu0 0
        %1064 = vmatprep.subr.bf16.mxu0 0
        %1065 = vmatpush1.bf16.msra.mxu0 0
        %1066 = vmatprep.subr.bf16.mxu0 0
        %1067 = vmatpush1.bf16.msra.mxu0 0
        %1068 = vmatprep.subr.bf16.mxu0 0
        %1069 = vmatpush1.bf16.msra.mxu0 0
        %1070 = vmatprep.subr.bf16.mxu0 0
        %1071 = vmatpush1.bf16.msra.mxu0 0
        %1072 = vmatprep.subr.bf16.mxu0 0
        %1073 = vmatpush1.bf16.msra.mxu0 0
        %1074 = vmatprep.mubr.bf16.mxu0 0
        %1075 = vmatmul.mubr.bf16.gmra.mrb[0].mxu0 %v917
        %v1076 = vpop.f32.mrb[0].mxu0
        %v1077 = vadd.f32 %v992, %v1076
        %v1078 = vpop.f32.mrb[0].mxu0
        %v1079 = vpop.f32.mrb[0].mxu0
        %v1080 = vpop.f32.mrb[0].mxu0
        %1081 = vdwg.mxu0
        %v1082 = vmul.f32 %v1077, 0.35355338
        %v1084 = vlaneseq
        %v1085 = vshrl.u32 %v1084, 7
        %v1086 = vsub.s32 0, %v1085
        %v1087 = vrot.slane %v969, %v1086
        %v1105 = vunpack.c.l.b16 %v936
        %v1106 = vunpack.c.l.b16 %v937
        %v1107 = vunpack.c.l.b16 %v938
        %v1108 = vunpack.c.l.b16 %v939
        %v1109 = vunpack.c.l.b16 %v940
        %v1110 = vunpack.c.l.b16 %v941
        %v1111 = vunpack.c.l.b16 %v942
        %v1112 = vunpack.c.l.b16 %v943
        %v1113 = vunpack.c.l.b16 %v944
        %v1114 = vunpack.c.l.b16 %v945
        %v1115 = vunpack.c.l.b16 %v946
        %v1116 = vunpack.c.l.b16 %v947
        %v1117 = vunpack.c.l.b16 %v948
        %v1118 = vunpack.c.l.b16 %v949
        %v1119 = vunpack.c.l.b16 %v950
        %v1120 = vunpack.c.l.b16 %v951
        %v1121 = vpack.c.b16 %v1106, %v1105
        %v1122 = vpack.c.b16 %v1108, %v1107
        %v1123 = vpack.c.b16 %v1110, %v1109
        %v1124 = vpack.c.b16 %v1112, %v1111
        %v1125 = vpack.c.b16 %v1114, %v1113
        %v1126 = vpack.c.b16 %v1116, %v1115
        %v1127 = vpack.c.b16 %v1118, %v1117
        %v1128 = vpack.c.b16 %v1120, %v1119
        %1137 = vmatprep.subr.bf16.mxu0 0
        %1138 = vmatpush1.bf16.msra.mxu0 %v1121
        %1139 = vmatprep.subr.bf16.mxu0 0
        %1140 = vmatpush1.bf16.msra.mxu0 %v1122
        %1141 = vmatprep.subr.bf16.mxu0 0
        %1142 = vmatpush1.bf16.msra.mxu0 %v1123
        %1143 = vmatprep.subr.bf16.mxu0 0
        %1144 = vmatpush1.bf16.msra.mxu0 %v1124
        %1145 = vmatprep.subr.bf16.mxu0 0
        %1146 = vmatpush1.bf16.msra.mxu0 %v1125
        %1147 = vmatprep.subr.bf16.mxu0 0
        %1148 = vmatpush1.bf16.msra.mxu0 %v1126
        %1149 = vmatprep.subr.bf16.mxu0 0
        %1150 = vmatpush1.bf16.msra.mxu0 %v1127
        %1151 = vmatprep.subr.bf16.mxu0 0
        %1152 = vmatpush1.bf16.msra.mxu0 %v1128
        %1153 = vmatprep.subr.bf16.mxu0 0
        %1154 = vmatpush1.bf16.msra.mxu0 0
        %1155 = vmatprep.subr.bf16.mxu0 0
        %1156 = vmatpush1.bf16.msra.mxu0 0
        %1157 = vmatprep.subr.bf16.mxu0 0
        %1158 = vmatpush1.bf16.msra.mxu0 0
        %1159 = vmatprep.subr.bf16.mxu0 0
        %1160 = vmatpush1.bf16.msra.mxu0 0
        %1161 = vmatprep.subr.bf16.mxu0 0
        %1162 = vmatpush1.bf16.msra.mxu0 0
        %1163 = vmatprep.subr.bf16.mxu0 0
        %1164 = vmatpush1.bf16.msra.mxu0 0
        %1165 = vmatprep.subr.bf16.mxu0 0
        %1166 = vmatpush1.bf16.msra.mxu0 0
        %1167 = vmatprep.subr.bf16.mxu0 0
        %1168 = vmatpush1.bf16.msra.mxu0 0
        %1169 = vmatprep.mubr.bf16.mxu0 0
        %1170 = vmatmul.mubr.bf16.gmra.mrb[0].mxu0 %v917
        %v1171 = vpop.f32.mrb[0].mxu0
        %v1172 = vadd.f32 %v1087, %v1171
        %v1173 = vpop.f32.mrb[0].mxu0
        %v1174 = vpop.f32.mrb[0].mxu0
        %v1175 = vpop.f32.mrb[0].mxu0
        %1176 = vdwg.mxu0
        %v1178 = vlaneseq
        %v1179 = vshrl.u32 %v1178, 7
        %v1180 = vsub.s32 0, %v1179
        %v1181 = vrot.slane %v970, %v1180
        %v1199 = vunpack.c.l.b16 %v952
        %v1200 = vunpack.c.l.b16 %v953
        %v1201 = vunpack.c.l.b16 %v954
        %v1202 = vunpack.c.l.b16 %v955
        %v1203 = vunpack.c.l.b16 %v956
        %v1204 = vunpack.c.l.b16 %v957
        %v1205 = vunpack.c.l.b16 %v958
        %v1206 = vunpack.c.l.b16 %v959
        %v1207 = vunpack.c.l.b16 %v960
        %v1208 = vunpack.c.l.b16 %v961
        %v1209 = vunpack.c.l.b16 %v962
        %v1210 = vunpack.c.l.b16 %v963
        %v1211 = vunpack.c.l.b16 %v964
        %v1212 = vunpack.c.l.b16 %v965
        %v1213 = vunpack.c.l.b16 %v966
        %v1214 = vunpack.c.l.b16 %v967
        %v1215 = vpack.c.b16 %v1200, %v1199
        %v1216 = vpack.c.b16 %v1202, %v1201
        %v1217 = vpack.c.b16 %v1204, %v1203
        %v1218 = vpack.c.b16 %v1206, %v1205
        %v1219 = vpack.c.b16 %v1208, %v1207
        %v1220 = vpack.c.b16 %v1210, %v1209
        %v1221 = vpack.c.b16 %v1212, %v1211
        %v1222 = vpack.c.b16 %v1214, %v1213
        %1231 = vmatprep.subr.bf16.mxu0 0
        %1232 = vmatpush1.bf16.msra.mxu0 %v1215
        %1233 = vmatprep.subr.bf16.mxu0 0
        %1234 = vmatpush1.bf16.msra.mxu0 %v1216
        %1235 = vmatprep.subr.bf16.mxu0 0
        %1236 = vmatpush1.bf16.msra.mxu0 %v1217
        %1237 = vmatprep.subr.bf16.mxu0 0
        %1238 = vmatpush1.bf16.msra.mxu0 %v1218
        %1239 = vmatprep.subr.bf16.mxu0 0
        %1240 = vmatpush1.bf16.msra.mxu0 %v1219
        %1241 = vmatprep.subr.bf16.mxu0 0
        %1242 = vmatpush1.bf16.msra.mxu0 %v1220
        %1243 = vmatprep.subr.bf16.mxu0 0
        %1244 = vmatpush1.bf16.msra.mxu0 %v1221
        %1245 = vmatprep.subr.bf16.mxu0 0
        %1246 = vmatpush1.bf16.msra.mxu0 %v1222
        %1247 = vmatprep.subr.bf16.mxu0 0
        %1248 = vmatpush1.bf16.msra.mxu0 0
        %1249 = vmatprep.subr.bf16.mxu0 0
        %1250 = vmatpush1.bf16.msra.mxu0 0
        %1251 = vmatprep.subr.bf16.mxu0 0
        %1252 = vmatpush1.bf16.msra.mxu0 0
        %1253 = vmatprep.subr.bf16.mxu0 0
        %1254 = vmatpush1.bf16.msra.mxu0 0
        %1255 = vmatprep.subr.bf16.mxu0 0
        %1256 = vmatpush1.bf16.msra.mxu0 0
        %1257 = vmatprep.subr.bf16.mxu0 0
        %1258 = vmatpush1.bf16.msra.mxu0 0
        %1259 = vmatprep.subr.bf16.mxu0 0
        %1260 = vmatpush1.bf16.msra.mxu0 0
        %1261 = vmatprep.subr.bf16.mxu0 0
        %1262 = vmatpush1.bf16.msra.mxu0 0
        %1263 = vmatprep.mubr.bf16.mxu0 0
        %1264 = vmatmul.mubr.bf16.gmra.mrb[0].mxu0 %v917
        %v1265 = vpop.f32.mrb[0].mxu0
        %v1266 = vadd.f32 %v1181, %v1265
        %v1267 = vpop.f32.mrb[0].mxu0
        %v1268 = vpop.f32.mrb[0].mxu0
        %v1269 = vpop.f32.mrb[0].mxu0
        %1270 = vdwg.mxu0
        %v1271 = vpack.c.bf16 %v1082, %v1082
        %v1272 = vpack.c.bf16 %v1172, %v1172
        %v1273 = vpack.c.bf16 %v1266, %v1266
        %vm1274 = vcmask 261120
        %v1276 = vsel %vm1274, %v1271, 0
        %v1279 = vsel %vm1274, %v1272, 0
        %1281 = vmatprep.subr.bf16.mxu0 0
        %1282 = vmatpush1.bf16.xpose.msra.mxu0 %v1279
        %1283 = vmatprep.subr.bf16.mxu0 0
        %1284 = vmatpush1.bf16.xpose.msra.mxu0 0
        %1285 = vmatprep.subr.bf16.mxu0 0
        %1286 = vmatpush1.bf16.xpose.msra.mxu0 0
        %1287 = vmatprep.subr.bf16.mxu0 0
        %1288 = vmatpush1.bf16.xpose.msra.mxu0 0
        %1289 = vmatprep.subr.bf16.mxu0 0
        %1290 = vmatpush1.bf16.xpose.msra.mxu0 0
        %1291 = vmatprep.subr.bf16.mxu0 0
        %1292 = vmatpush1.bf16.xpose.msra.mxu0 0
        %1293 = vmatprep.subr.bf16.mxu0 0
        %1294 = vmatpush1.bf16.xpose.msra.mxu0 0
        %1295 = vmatprep.subr.bf16.mxu0 0
        %1296 = vmatpush1.bf16.xpose.msra.mxu0 0
        %1297 = vmatprep.subr.bf16.mxu0 0
        %1298 = vmatpush1.bf16.xpose.msra.mxu0 0
        %1299 = vmatprep.subr.bf16.mxu0 0
        %1300 = vmatpush1.bf16.xpose.msra.mxu0 0
        %1301 = vmatprep.subr.bf16.mxu0 0
        %1302 = vmatpush1.bf16.xpose.msra.mxu0 0
        %1303 = vmatprep.subr.bf16.mxu0 0
        %1304 = vmatpush1.bf16.xpose.msra.mxu0 0
        %1305 = vmatprep.subr.bf16.mxu0 0
        %1306 = vmatpush1.bf16.xpose.msra.mxu0 0
        %1307 = vmatprep.subr.bf16.mxu0 0
        %1308 = vmatpush1.bf16.xpose.msra.mxu0 0
        %1309 = vmatprep.subr.bf16.mxu0 0
        %1310 = vmatpush1.bf16.xpose.msra.mxu0 0
        %1311 = vmatprep.subr.bf16.mxu0 0
        %1312 = vmatpush1.bf16.xpose.msra.mxu0 0
        %1313 = vmatprep.mubr.bf16.mxu0 0
        %1314 = vmatmul.mubr.bf16.gmra.mrb[0].mxu0 %v1276
        %v1315 = vpop.f32.mrb[0].mxu0
        %v1316 = vadd.f32 0.0, %v1315
        %v1317 = vpop.f32.mrb[0].mxu0
        %v1318 = vpop.f32.mrb[0].mxu0
        %v1319 = vpop.f32.mrb[0].mxu0
        %1320 = vdwg.mxu0
        %vm1321 = vcmask 64512
        %v1322 = vsel %vm1321, %v1316, -inf
        %1323 = vmax.xlane.f32.xlu0 %v1322
        %v1324 = vpop.xlane.xlu0 %1323
        %v1325 = vsub.f32 %v1316, %v1324
        %v1326 = vmul.f32 %v1325, 1.442695
        %v1327 = vpow.pop %v1326
        %v1328 = vsel %vm1321, %v1327, 0.0
        %1329 = vadd.xlane.f32.xlu0 %v1328
        %v1330 = vpop.xlane.xlu0 %1329
        %v1331 = vrcp.pop %v1330
        %v1332 = vmul.f32 %v1327, %v1331
        %v1333 = vpack.c.bf16 %v1332, %v1332
        %v1335 = vsel %vm1321, %v1333, 0
        %vm1337 = vcmask 1043456
        %v1339 = vsel %vm1337, %v1273, 0
        %1341 = vmatprep.subr.bf16.mxu0 0
        %1342 = vmatpush1.bf16.msra.mxu0 %v1339
        %1343 = vmatprep.subr.bf16.mxu0 0
        %1344 = vmatpush1.bf16.msra.mxu0 0
        %1345 = vmatprep.subr.bf16.mxu0 0
        %1346 = vmatpush1.bf16.msra.mxu0 0
        %1347 = vmatprep.subr.bf16.mxu0 0
        %1348 = vmatpush1.bf16.msra.mxu0 0
        %1349 = vmatprep.subr.bf16.mxu0 0
        %1350 = vmatpush1.bf16.msra.mxu0 0
        %1351 = vmatprep.subr.bf16.mxu0 0
        %1352 = vmatpush1.bf16.msra.mxu0 0
        %1353 = vmatprep.subr.bf16.mxu0 0
        %1354 = vmatpush1.bf16.msra.mxu0 0
        %1355 = vmatprep.subr.bf16.mxu0 0
        %1356 = vmatpush1.bf16.msra.mxu0 0
        %1357 = vmatprep.subr.bf16.mxu0 0
        %1358 = vmatpush1.bf16.msra.mxu0 0
        %1359 = vmatprep.subr.bf16.mxu0 0
        %1360 = vmatpush1.bf16.msra.mxu0 0
        %1361 = vmatprep.subr.bf16.mxu0 0
        %1362 = vmatpush1.bf16.msra.mxu0 0
        %1363 = vmatprep.subr.bf16.mxu0 0
        %1364 = vmatpush1.bf16.msra.mxu0 0
        %1365 = vmatprep.subr.bf16.mxu0 0
        %1366 = vmatpush1.bf16.msra.mxu0 0
        %1367 = vmatprep.subr.bf16.mxu0 0
        %1368 = vmatpush1.bf16.msra.mxu0 0
        %1369 = vmatprep.subr.bf16.mxu0 0
        %1370 = vmatpush1.bf16.msra.mxu0 0
        %1371 = vmatprep.subr.bf16.mxu0 0
        %1372 = vmatpush1.bf16.msra.mxu0 0
        %1373 = vmatprep.mubr.bf16.mxu0 0
        %1374 = vmatmul.mubr.bf16.gmra.mrb[0].mxu0 %v1335
        %v1375 = vpop.f32.mrb[0].mxu0
        %v1376 = vadd.f32 0.0, %v1375
        %v1377 = vpop.f32.mrb[0].mxu0
        %v1378 = vpop.f32.mrb[0].mxu0
        %v1379 = vpop.f32.mrb[0].mxu0
        %1380 = vdwg.mxu0
        %v1381 = vpack.c.bf16 %v1376, %v1376
        %1383 = vrot.lane.b32.xlu0 %v1271, 96
        %v1384 = vpop.permute.xlu0 %1383
        %1386 = vrot.lane.b32.xlu0 %v1272, 96
        %v1387 = vpop.permute.xlu0 %1386
        %v1389 = vsel %vm1274, %v1384, 0
        %v1392 = vsel %vm1274, %v1387, 0
        %1394 = vmatprep.subr.bf16.mxu0 0
        %1395 = vmatpush1.bf16.xpose.msra.mxu0 %v1392
        %1396 = vmatprep.subr.bf16.mxu0 0
        %1397 = vmatpush1.bf16.xpose.msra.mxu0 0
        %1398 = vmatprep.subr.bf16.mxu0 0
        %1399 = vmatpush1.bf16.xpose.msra.mxu0 0
        %1400 = vmatprep.subr.bf16.mxu0 0
        %1401 = vmatpush1.bf16.xpose.msra.mxu0 0
        %1402 = vmatprep.subr.bf16.mxu0 0
        %1403 = vmatpush1.bf16.xpose.msra.mxu0 0
        %1404 = vmatprep.subr.bf16.mxu0 0
        %1405 = vmatpush1.bf16.xpose.msra.mxu0 0
        %1406 = vmatprep.subr.bf16.mxu0 0
        %1407 = vmatpush1.bf16.xpose.msra.mxu0 0
        %1408 = vmatprep.subr.bf16.mxu0 0
        %1409 = vmatpush1.bf16.xpose.msra.mxu0 0
        %1410 = vmatprep.subr.bf16.mxu0 0
        %1411 = vmatpush1.bf16.xpose.msra.mxu0 0
        %1412 = vmatprep.subr.bf16.mxu0 0
        %1413 = vmatpush1.bf16.xpose.msra.mxu0 0
        %1414 = vmatprep.subr.bf16.mxu0 0
        %1415 = vmatpush1.bf16.xpose.msra.mxu0 0
        %1416 = vmatprep.subr.bf16.mxu0 0
        %1417 = vmatpush1.bf16.xpose.msra.mxu0 0
        %1418 = vmatprep.subr.bf16.mxu0 0
        %1419 = vmatpush1.bf16.xpose.msra.mxu0 0
        %1420 = vmatprep.subr.bf16.mxu0 0
        %1421 = vmatpush1.bf16.xpose.msra.mxu0 0
        %1422 = vmatprep.subr.bf16.mxu0 0
        %1423 = vmatpush1.bf16.xpose.msra.mxu0 0
        %1424 = vmatprep.subr.bf16.mxu0 0
        %1425 = vmatpush1.bf16.xpose.msra.mxu0 0
        %1426 = vmatprep.mubr.bf16.mxu0 0
        %1427 = vmatmul.mubr.bf16.gmra.mrb[0].mxu0 %v1389
        %v1428 = vpop.f32.mrb[0].mxu0
        %v1429 = vadd.f32 0.0, %v1428
        %v1430 = vpop.f32.mrb[0].mxu0
        %v1431 = vpop.f32.mrb[0].mxu0
        %v1432 = vpop.f32.mrb[0].mxu0
        %1433 = vdwg.mxu0
        %v1434 = vsel %vm1321, %v1429, -inf
        %1435 = vmax.xlane.f32.xlu0 %v1434
        %v1436 = vpop.xlane.xlu0 %1435
        %v1437 = vsub.f32 %v1429, %v1436
        %v1438 = vmul.f32 %v1437, 1.442695
        %v1439 = vpow.pop %v1438
        %v1440 = vsel %vm1321, %v1439, 0.0
        %1441 = vadd.xlane.f32.xlu0 %v1440
        %v1442 = vpop.xlane.xlu0 %1441
        %v1443 = vrcp.pop %v1442
        %v1444 = vmul.f32 %v1439, %v1443
        %v1445 = vpack.c.bf16 %v1444, %v1444
        %1447 = vrot.lane.b32.xlu0 %v1273, 96
        %v1448 = vpop.permute.xlu0 %1447
        %v1450 = vsel %vm1321, %v1445, 0
        %v1453 = vsel %vm1337, %v1448, 0
        %1455 = vmatprep.subr.bf16.mxu0 0
        %1456 = vmatpush1.bf16.msra.mxu0 %v1453
        %1457 = vmatprep.subr.bf16.mxu0 0
        %1458 = vmatpush1.bf16.msra.mxu0 0
        %1459 = vmatprep.subr.bf16.mxu0 0
        %1460 = vmatpush1.bf16.msra.mxu0 0
        %1461 = vmatprep.subr.bf16.mxu0 0
        %1462 = vmatpush1.bf16.msra.mxu0 0
        %1463 = vmatprep.subr.bf16.mxu0 0
        %1464 = vmatpush1.bf16.msra.mxu0 0
        %1465 = vmatprep.subr.bf16.mxu0 0
        %1466 = vmatpush1.bf16.msra.mxu0 0
        %1467 = vmatprep.subr.bf16.mxu0 0
        %1468 = vmatpush1.bf16.msra.mxu0 0
        %1469 = vmatprep.subr.bf16.mxu0 0
        %1470 = vmatpush1.bf16.msra.mxu0 0
        %1471 = vmatprep.subr.bf16.mxu0 0
        %1472 = vmatpush1.bf16.msra.mxu0 0
        %1473 = vmatprep.subr.bf16.mxu0 0
        %1474 = vmatpush1.bf16.msra.mxu0 0
        %1475 = vmatprep.subr.bf16.mxu0 0
        %1476 = vmatpush1.bf16.msra.mxu0 0
        %1477 = vmatprep.subr.bf16.mxu0 0
        %1478 = vmatpush1.bf16.msra.mxu0 0
        %1479 = vmatprep.subr.bf16.mxu0 0
        %1480 = vmatpush1.bf16.msra.mxu0 0
        %1481 = vmatprep.subr.bf16.mxu0 0
        %1482 = vmatpush1.bf16.msra.mxu0 0
        %1483 = vmatprep.subr.bf16.mxu0 0
        %1484 = vmatpush1.bf16.msra.mxu0 0
        %1485 = vmatprep.subr.bf16.mxu0 0
        %1486 = vmatpush1.bf16.msra.mxu0 0
        %1487 = vmatprep.mubr.bf16.mxu0 0
        %1488 = vmatmul.mubr.bf16.gmra.mrb[0].mxu0 %v1450
        %v1489 = vpop.f32.mrb[0].mxu0
        %v1490 = vadd.f32 0.0, %v1489
        %v1491 = vpop.f32.mrb[0].mxu0
        %v1492 = vpop.f32.mrb[0].mxu0
        %v1493 = vpop.f32.mrb[0].mxu0
        %1494 = vdwg.mxu0
        %v1495 = vpack.c.bf16 %v1490, %v1490
        %1496 = vrot.lane.b32.xlu0 %v1271, 64
        %v1497 = vpop.permute.xlu0 %1496
        %1498 = vrot.lane.b32.xlu0 %v1272, 64
        %v1499 = vpop.permute.xlu0 %1498
        %v1501 = vsel %vm1274, %v1497, 0
        %v1504 = vsel %vm1274, %v1499, 0
        %1506 = vmatprep.subr.bf16.mxu0 0
        %1507 = vmatpush1.bf16.xpose.msra.mxu0 %v1504
        %1508 = vmatprep.subr.bf16.mxu0 0
        %1509 = vmatpush1.bf16.xpose.msra.mxu0 0
        %1510 = vmatprep.subr.bf16.mxu0 0
        %1511 = vmatpush1.bf16.xpose.msra.mxu0 0
        %1512 = vmatprep.subr.bf16.mxu0 0
        %1513 = vmatpush1.bf16.xpose.msra.mxu0 0
        %1514 = vmatprep.subr.bf16.mxu0 0
        %1515 = vmatpush1.bf16.xpose.msra.mxu0 0
        %1516 = vmatprep.subr.bf16.mxu0 0
        %1517 = vmatpush1.bf16.xpose.msra.mxu0 0
        %1518 = vmatprep.subr.bf16.mxu0 0
        %1519 = vmatpush1.bf16.xpose.msra.mxu0 0
        %1520 = vmatprep.subr.bf16.mxu0 0
        %1521 = vmatpush1.bf16.xpose.msra.mxu0 0
        %1522 = vmatprep.subr.bf16.mxu0 0
        %1523 = vmatpush1.bf16.xpose.msra.mxu0 0
        %1524 = vmatprep.subr.bf16.mxu0 0
        %1525 = vmatpush1.bf16.xpose.msra.mxu0 0
        %1526 = vmatprep.subr.bf16.mxu0 0
        %1527 = vmatpush1.bf16.xpose.msra.mxu0 0
        %1528 = vmatprep.subr.bf16.mxu0 0
        %1529 = vmatpush1.bf16.xpose.msra.mxu0 0
        %1530 = vmatprep.subr.bf16.mxu0 0
        %1531 = vmatpush1.bf16.xpose.msra.mxu0 0
        %1532 = vmatprep.subr.bf16.mxu0 0
        %1533 = vmatpush1.bf16.xpose.msra.mxu0 0
        %1534 = vmatprep.subr.bf16.mxu0 0
        %1535 = vmatpush1.bf16.xpose.msra.mxu0 0
        %1536 = vmatprep.subr.bf16.mxu0 0
        %1537 = vmatpush1.bf16.xpose.msra.mxu0 0
        %1538 = vmatprep.mubr.bf16.mxu0 0
        %1539 = vmatmul.mubr.bf16.gmra.mrb[0].mxu0 %v1501
        %v1540 = vpop.f32.mrb[0].mxu0
        %v1541 = vadd.f32 0.0, %v1540
        %v1542 = vpop.f32.mrb[0].mxu0
        %v1543 = vpop.f32.mrb[0].mxu0
        %v1544 = vpop.f32.mrb[0].mxu0
        %1545 = vdwg.mxu0
        %v1546 = vsel %vm1321, %v1541, -inf
        %1547 = vmax.xlane.f32.xlu0 %v1546
        %v1548 = vpop.xlane.xlu0 %1547
        %v1549 = vsub.f32 %v1541, %v1548
        %v1550 = vmul.f32 %v1549, 1.442695
        %v1551 = vpow.pop %v1550
        %v1552 = vsel %vm1321, %v1551, 0.0
        %1553 = vadd.xlane.f32.xlu0 %v1552
        %v1554 = vpop.xlane.xlu0 %1553
        %v1555 = vrcp.pop %v1554
        %v1556 = vmul.f32 %v1551, %v1555
        %v1557 = vpack.c.bf16 %v1556, %v1556
        %1558 = vrot.lane.b32.xlu0 %v1273, 64
        %v1559 = vpop.permute.xlu0 %1558
        %v1561 = vsel %vm1321, %v1557, 0
        %v1564 = vsel %vm1337, %v1559, 0
        %1566 = vmatprep.subr.bf16.mxu0 0
        %1567 = vmatpush1.bf16.msra.mxu0 %v1564
        %1568 = vmatprep.subr.bf16.mxu0 0
        %1569 = vmatpush1.bf16.msra.mxu0 0
        %1570 = vmatprep.subr.bf16.mxu0 0
        %1571 = vmatpush1.bf16.msra.mxu0 0
        %1572 = vmatprep.subr.bf16.mxu0 0
        %1573 = vmatpush1.bf16.msra.mxu0 0
        %1574 = vmatprep.subr.bf16.mxu0 0
        %1575 = vmatpush1.bf16.msra.mxu0 0
        %1576 = vmatprep.subr.bf16.mxu0 0
        %1577 = vmatpush1.bf16.msra.mxu0 0
        %1578 = vmatprep.subr.bf16.mxu0 0
        %1579 = vmatpush1.bf16.msra.mxu0 0
        %1580 = vmatprep.subr.bf16.mxu0 0
        %1581 = vmatpush1.bf16.msra.mxu0 0
        %1582 = vmatprep.subr.bf16.mxu0 0
        %1583 = vmatpush1.bf16.msra.mxu0 0
        %1584 = vmatprep.subr.bf16.mxu0 0
        %1585 = vmatpush1.bf16.msra.mxu0 0
        %1586 = vmatprep.subr.bf16.mxu0 0
        %1587 = vmatpush1.bf16.msra.mxu0 0
        %1588 = vmatprep.subr.bf16.mxu0 0
        %1589 = vmatpush1.bf16.msra.mxu0 0
        %1590 = vmatprep.subr.bf16.mxu0 0
        %1591 = vmatpush1.bf16.msra.mxu0 0
        %1592 = vmatprep.subr.bf16.mxu0 0
        %1593 = vmatpush1.bf16.msra.mxu0 0
        %1594 = vmatprep.subr.bf16.mxu0 0
        %1595 = vmatpush1.bf16.msra.mxu0 0
        %1596 = vmatprep.subr.bf16.mxu0 0
        %1597 = vmatpush1.bf16.msra.mxu0 0
        %1598 = vmatprep.mubr.bf16.mxu0 0
        %1599 = vmatmul.mubr.bf16.gmra.mrb[0].mxu0 %v1561
        %v1600 = vpop.f32.mrb[0].mxu0
        %v1601 = vadd.f32 0.0, %v1600
        %v1602 = vpop.f32.mrb[0].mxu0
        %v1603 = vpop.f32.mrb[0].mxu0
        %v1604 = vpop.f32.mrb[0].mxu0
        %1605 = vdwg.mxu0
        %v1606 = vpack.c.bf16 %v1601, %v1601
        %1607 = vrot.lane.b32.xlu0 %v1271, 32
        %v1608 = vpop.permute.xlu0 %1607
        %1609 = vrot.lane.b32.xlu0 %v1272, 32
        %v1610 = vpop.permute.xlu0 %1609
        %v1612 = vsel %vm1274, %v1608, 0
        %v1615 = vsel %vm1274, %v1610, 0
        %1617 = vmatprep.subr.bf16.mxu0 0
        %1618 = vmatpush1.bf16.xpose.msra.mxu0 %v1615
        %1619 = vmatprep.subr.bf16.mxu0 0
        %1620 = vmatpush1.bf16.xpose.msra.mxu0 0
        %1621 = vmatprep.subr.bf16.mxu0 0
        %1622 = vmatpush1.bf16.xpose.msra.mxu0 0
        %1623 = vmatprep.subr.bf16.mxu0 0
        %1624 = vmatpush1.bf16.xpose.msra.mxu0 0
        %1625 = vmatprep.subr.bf16.mxu0 0
        %1626 = vmatpush1.bf16.xpose.msra.mxu0 0
        %1627 = vmatprep.subr.bf16.mxu0 0
        %1628 = vmatpush1.bf16.xpose.msra.mxu0 0
        %1629 = vmatprep.subr.bf16.mxu0 0
        %1630 = vmatpush1.bf16.xpose.msra.mxu0 0
        %1631 = vmatprep.subr.bf16.mxu0 0
        %1632 = vmatpush1.bf16.xpose.msra.mxu0 0
        %1633 = vmatprep.subr.bf16.mxu0 0
        %1634 = vmatpush1.bf16.xpose.msra.mxu0 0
        %1635 = vmatprep.subr.bf16.mxu0 0
        %1636 = vmatpush1.bf16.xpose.msra.mxu0 0
        %1637 = vmatprep.subr.bf16.mxu0 0
        %1638 = vmatpush1.bf16.xpose.msra.mxu0 0
        %1639 = vmatprep.subr.bf16.mxu0 0
        %1640 = vmatpush1.bf16.xpose.msra.mxu0 0
        %1641 = vmatprep.subr.bf16.mxu0 0
        %1642 = vmatpush1.bf16.xpose.msra.mxu0 0
        %1643 = vmatprep.subr.bf16.mxu0 0
        %1644 = vmatpush1.bf16.xpose.msra.mxu0 0
        %1645 = vmatprep.subr.bf16.mxu0 0
        %1646 = vmatpush1.bf16.xpose.msra.mxu0 0
        %1647 = vmatprep.subr.bf16.mxu0 0
        %1648 = vmatpush1.bf16.xpose.msra.mxu0 0
        %1649 = vmatprep.mubr.bf16.mxu0 0
        %1650 = vmatmul.mubr.bf16.gmra.mrb[0].mxu0 %v1612
        %v1651 = vpop.f32.mrb[0].mxu0
        %v1652 = vadd.f32 0.0, %v1651
        %v1653 = vpop.f32.mrb[0].mxu0
        %v1654 = vpop.f32.mrb[0].mxu0
        %v1655 = vpop.f32.mrb[0].mxu0
        %1656 = vdwg.mxu0
        %v1657 = vsel %vm1321, %v1652, -inf
        %1658 = vmax.xlane.f32.xlu0 %v1657
        %v1659 = vpop.xlane.xlu0 %1658
        %v1660 = vsub.f32 %v1652, %v1659
        %v1661 = vmul.f32 %v1660, 1.442695
        %v1662 = vpow.pop %v1661
        %v1663 = vsel %vm1321, %v1662, 0.0
        %1664 = vadd.xlane.f32.xlu0 %v1663
        %v1665 = vpop.xlane.xlu0 %1664
        %v1666 = vrcp.pop %v1665
        %v1667 = vmul.f32 %v1662, %v1666
        %v1668 = vpack.c.bf16 %v1667, %v1667
        %1669 = vrot.lane.b32.xlu0 %v1273, 32
        %v1670 = vpop.permute.xlu0 %1669
        %v1672 = vsel %vm1321, %v1668, 0
        %v1675 = vsel %vm1337, %v1670, 0
        %1677 = vmatprep.subr.bf16.mxu0 0
        %1678 = vmatpush1.bf16.msra.mxu0 %v1675
        %1679 = vmatprep.subr.bf16.mxu0 0
        %1680 = vmatpush1.bf16.msra.mxu0 0
        %1681 = vmatprep.subr.bf16.mxu0 0
        %1682 = vmatpush1.bf16.msra.mxu0 0
        %1683 = vmatprep.subr.bf16.mxu0 0
        %1684 = vmatpush1.bf16.msra.mxu0 0
        %1685 = vmatprep.subr.bf16.mxu0 0
        %1686 = vmatpush1.bf16.msra.mxu0 0
        %1687 = vmatprep.subr.bf16.mxu0 0
        %1688 = vmatpush1.bf16.msra.mxu0 0
        %1689 = vmatprep.subr.bf16.mxu0 0
        %1690 = vmatpush1.bf16.msra.mxu0 0
        %1691 = vmatprep.subr.bf16.mxu0 0
        %1692 = vmatpush1.bf16.msra.mxu0 0
        %1693 = vmatprep.subr.bf16.mxu0 0
        %1694 = vmatpush1.bf16.msra.mxu0 0
        %1695 = vmatprep.subr.bf16.mxu0 0
        %1696 = vmatpush1.bf16.msra.mxu0 0
        %1697 = vmatprep.subr.bf16.mxu0 0
        %1698 = vmatpush1.bf16.msra.mxu0 0
        %1699 = vmatprep.subr.bf16.mxu0 0
        %1700 = vmatpush1.bf16.msra.mxu0 0
        %1701 = vmatprep.subr.bf16.mxu0 0
        %1702 = vmatpush1.bf16.msra.mxu0 0
        %1703 = vmatprep.subr.bf16.mxu0 0
        %1704 = vmatpush1.bf16.msra.mxu0 0
        %1705 = vmatprep.subr.bf16.mxu0 0
        %1706 = vmatpush1.bf16.msra.mxu0 0
        %1707 = vmatprep.subr.bf16.mxu0 0
        %1708 = vmatpush1.bf16.msra.mxu0 0
        %1709 = vmatprep.mubr.bf16.mxu0 0
        %1710 = vmatmul.mubr.bf16.gmra.mrb[0].mxu0 %v1672
        %v1711 = vpop.f32.mrb[0].mxu0
        %v1712 = vadd.f32 0.0, %v1711
        %v1713 = vpop.f32.mrb[0].mxu0
        %v1714 = vpop.f32.mrb[0].mxu0
        %v1715 = vpop.f32.mrb[0].mxu0
        %1716 = vdwg.mxu0
        %v1717 = vpack.c.bf16 %v1712, %v1712
        %1719 = vrot.lane.b32.xlu0 %v1495, 32
        %v1720 = vpop.permute.xlu0 %1719
        %1722 = vrot.lane.b32.xlu0 %v1606, 64
        %v1723 = vpop.permute.xlu0 %1722
        %1725 = vrot.lane.b32.xlu0 %v1717, 96
        %v1726 = vpop.permute.xlu0 %1725
        %v1729 = vsel %vm1274, %v1381, %v1720
        %vm1730 = vcmask 523264
        %v1732 = vsel %vm1730, %v1729, %v1723
        %vm1733 = vcmask 785408
        %v1735 = vsel %vm1733, %v1732, %v1726
        %v1738 = vlaneseq
        %v1739 = vshrl.u32 %v1738, 7
        %v1740 = vsub.s32 0, %v1739
        %v1741 = vrot.slane %v987, %v1740
        %v1759 = vunpack.c.l.b16 %v971
        %v1760 = vunpack.c.l.b16 %v972
        %v1761 = vunpack.c.l.b16 %v973
        %v1762 = vunpack.c.l.b16 %v974
        %v1763 = vunpack.c.l.b16 %v975
        %v1764 = vunpack.c.l.b16 %v976
        %v1765 = vunpack.c.l.b16 %v977
        %v1766 = vunpack.c.l.b16 %v978
        %v1767 = vunpack.c.l.b16 %v979
        %v1768 = vunpack.c.l.b16 %v980
        %v1769 = vunpack.c.l.b16 %v981
        %v1770 = vunpack.c.l.b16 %v982
        %v1771 = vunpack.c.l.b16 %v983
        %v1772 = vunpack.c.l.b16 %v984
        %v1773 = vunpack.c.l.b16 %v985
        %v1774 = vunpack.c.l.b16 %v986
        %v1775 = vpack.c.b16 %v1760, %v1759
        %v1776 = vpack.c.b16 %v1762, %v1761
        %v1777 = vpack.c.b16 %v1764, %v1763
        %v1778 = vpack.c.b16 %v1766, %v1765
        %v1779 = vpack.c.b16 %v1768, %v1767
        %v1780 = vpack.c.b16 %v1770, %v1769
        %v1781 = vpack.c.b16 %v1772, %v1771
        %v1782 = vpack.c.b16 %v1774, %v1773
        %1791 = vmatprep.subr.bf16.mxu0 0
        %1792 = vmatpush1.bf16.msra.mxu0 %v1775
        %1793 = vmatprep.subr.bf16.mxu0 0
        %1794 = vmatpush1.bf16.msra.mxu0 %v1776
        %1795 = vmatprep.subr.bf16.mxu0 0
        %1796 = vmatpush1.bf16.msra.mxu0 %v1777
        %1797 = vmatprep.subr.bf16.mxu0 0
        %1798 = vmatpush1.bf16.msra.mxu0 %v1778
        %1799 = vmatprep.subr.bf16.mxu0 0
        %1800 = vmatpush1.bf16.msra.mxu0 %v1779
        %1801 = vmatprep.subr.bf16.mxu0 0
        %1802 = vmatpush1.bf16.msra.mxu0 %v1780
        %1803 = vmatprep.subr.bf16.mxu0 0
        %1804 = vmatpush1.bf16.msra.mxu0 %v1781
        %1805 = vmatprep.subr.bf16.mxu0 0
        %1806 = vmatpush1.bf16.msra.mxu0 %v1782
        %1807 = vmatprep.subr.bf16.mxu0 0
        %1808 = vmatpush1.bf16.msra.mxu0 0
        %1809 = vmatprep.subr.bf16.mxu0 0
        %1810 = vmatpush1.bf16.msra.mxu0 0
        %1811 = vmatprep.subr.bf16.mxu0 0
        %1812 = vmatpush1.bf16.msra.mxu0 0
        %1813 = vmatprep.subr.bf16.mxu0 0
        %1814 = vmatpush1.bf16.msra.mxu0 0
        %1815 = vmatprep.subr.bf16.mxu0 0
        %1816 = vmatpush1.bf16.msra.mxu0 0
        %1817 = vmatprep.subr.bf16.mxu0 0
        %1818 = vmatpush1.bf16.msra.mxu0 0
        %1819 = vmatprep.subr.bf16.mxu0 0
        %1820 = vmatpush1.bf16.msra.mxu0 0
        %1821 = vmatprep.subr.bf16.mxu0 0
        %1822 = vmatpush1.bf16.msra.mxu0 0
        %1823 = vmatprep.mubr.bf16.mxu0 0
        %1824 = vmatmul.mubr.bf16.gmra.mrb[0].mxu0 %v1735
        %v1825 = vpop.f32.mrb[0].mxu0
        %v1826 = vadd.f32 %v1741, %v1825
        %v1827 = vpop.f32.mrb[0].mxu0
        %v1828 = vpop.f32.mrb[0].mxu0
        %v1829 = vpop.f32.mrb[0].mxu0
        %1830 = vdwg.mxu0
        %v1831 = vadd.f32 %v918, %v1826
        %v1832 = vpack.c.bf16 %v1831, %v1831
        %v1833 = vld [vmem:[#allocation13] sm:$0xf]
        %v1834 = vld [vmem:[#allocation13 + $0x4] sm:$0xf]
        %v1835 = vld [vmem:[#allocation13 + $0x8] sm:$0xf]
        %v1836 = vld [vmem:[#allocation13 + $0xc] sm:$0xf]
        %v1837 = vld [vmem:[#allocation13 + $0x10] sm:$0xf]
        %v1838 = vld [vmem:[#allocation13 + $0x14] sm:$0xf]
        %v1839 = vld [vmem:[#allocation13 + $0x18] sm:$0xf]
        %v1840 = vld [vmem:[#allocation13 + $0x1c] sm:$0xf]
        %v1841 = vld [vmem:[#allocation13 + $0x20] sm:$0xf]
        %v1842 = vld [vmem:[#allocation13 + $0x24] sm:$0xf]
        %v1843 = vld [vmem:[#allocation13 + $0x28] sm:$0xf]
        %v1844 = vld [vmem:[#allocation13 + $0x2c] sm:$0xf]
        %v1845 = vld [vmem:[#allocation13 + $0x30] sm:$0xf]
        %v1846 = vld [vmem:[#allocation13 + $0x34] sm:$0xf]
        %v1847 = vld [vmem:[#allocation13 + $0x38] sm:$0xf]
        %v1848 = vld [vmem:[#allocation13 + $0x3c] sm:$0xf]
        %v1849 = vld [vmem:[#allocation14] sm:$0xf]
        %v1850 = vld [vmem:[#allocation14 + $0x4] sm:$0xf]
        %v1851 = vld [vmem:[#allocation14 + $0x8] sm:$0xf]
        %v1852 = vld [vmem:[#allocation14 + $0xc] sm:$0xf]
        %v1853 = vld [vmem:[#allocation14 + $0x10] sm:$0xf]
        %v1854 = vld [vmem:[#allocation14 + $0x14] sm:$0xf]
        %v1855 = vld [vmem:[#allocation14 + $0x18] sm:$0xf]
        %v1856 = vld [vmem:[#allocation14 + $0x1c] sm:$0xf]
        %v1857 = vld [vmem:[#allocation14 + $0x20] sm:$0xf]
        %v1858 = vld [vmem:[#allocation14 + $0x24] sm:$0xf]
        %v1859 = vld [vmem:[#allocation14 + $0x28] sm:$0xf]
        %v1860 = vld [vmem:[#allocation14 + $0x2c] sm:$0xf]
        %v1861 = vld [vmem:[#allocation14 + $0x30] sm:$0xf]
        %v1862 = vld [vmem:[#allocation14 + $0x34] sm:$0xf]
        %v1863 = vld [vmem:[#allocation14 + $0x38] sm:$0xf]
        %v1864 = vld [vmem:[#allocation14 + $0x3c] sm:$0xf]
        %v1865 = vld [vmem:[#allocation16] sm:$0xf]
        %v1866 = vld [vmem:[#allocation16 + $0x4] sm:$0xf]
        %v1867 = vld [vmem:[#allocation16 + $0x8] sm:$0xf]
        %v1868 = vld [vmem:[#allocation16 + $0xc] sm:$0xf]
        %v1869 = vld [vmem:[#allocation16 + $0x10] sm:$0xf]
        %v1870 = vld [vmem:[#allocation16 + $0x14] sm:$0xf]
        %v1871 = vld [vmem:[#allocation16 + $0x18] sm:$0xf]
        %v1872 = vld [vmem:[#allocation16 + $0x1c] sm:$0xf]
        %v1873 = vld [vmem:[#allocation16 + $0x20] sm:$0xf]
        %v1874 = vld [vmem:[#allocation16 + $0x24] sm:$0xf]
        %v1875 = vld [vmem:[#allocation16 + $0x28] sm:$0xf]
        %v1876 = vld [vmem:[#allocation16 + $0x2c] sm:$0xf]
        %v1877 = vld [vmem:[#allocation16 + $0x30] sm:$0xf]
        %v1878 = vld [vmem:[#allocation16 + $0x34] sm:$0xf]
        %v1879 = vld [vmem:[#allocation16 + $0x38] sm:$0xf]
        %v1880 = vld [vmem:[#allocation16 + $0x3c] sm:$0xf]
        %v1881 = vld [vmem:[#allocation17] sm:$0x1]
        %v1882 = vld [vmem:[#allocation19] sm:$0x1]
        %v1883 = vld [vmem:[#allocation20] sm:$0x1]
        %v1884 = vld [vmem:[#allocation22] sm:$0xf]
        %v1885 = vld [vmem:[#allocation22 + $0x4] sm:$0xf]
        %v1886 = vld [vmem:[#allocation22 + $0x8] sm:$0xf]
        %v1887 = vld [vmem:[#allocation22 + $0xc] sm:$0xf]
        %v1888 = vld [vmem:[#allocation22 + $0x10] sm:$0xf]
        %v1889 = vld [vmem:[#allocation22 + $0x14] sm:$0xf]
        %v1890 = vld [vmem:[#allocation22 + $0x18] sm:$0xf]
        %v1891 = vld [vmem:[#allocation22 + $0x1c] sm:$0xf]
        %v1892 = vld [vmem:[#allocation22 + $0x20] sm:$0xf]
        %v1893 = vld [vmem:[#allocation22 + $0x24] sm:$0xf]
        %v1894 = vld [vmem:[#allocation22 + $0x28] sm:$0xf]
        %v1895 = vld [vmem:[#allocation22 + $0x2c] sm:$0xf]
        %v1896 = vld [vmem:[#allocation22 + $0x30] sm:$0xf]
        %v1897 = vld [vmem:[#allocation22 + $0x34] sm:$0xf]
        %v1898 = vld [vmem:[#allocation22 + $0x38] sm:$0xf]
        %v1899 = vld [vmem:[#allocation22 + $0x3c] sm:$0xf]
        %v1900 = vld [vmem:[#allocation23] sm:$0x1]
        %v1902 = vlaneseq
        %v1903 = vshrl.u32 %v1902, 7
        %v1904 = vsub.s32 0, %v1903
        %v1905 = vrot.slane %v1881, %v1904
        %v1923 = vunpack.c.l.b16 %v1833
        %v1924 = vunpack.c.l.b16 %v1834
        %v1925 = vunpack.c.l.b16 %v1835
        %v1926 = vunpack.c.l.b16 %v1836
        %v1927 = vunpack.c.l.b16 %v1837
        %v1928 = vunpack.c.l.b16 %v1838
        %v1929 = vunpack.c.l.b16 %v1839
        %v1930 = vunpack.c.l.b16 %v1840
        %v1931 = vunpack.c.l.b16 %v1841
        %v1932 = vunpack.c.l.b16 %v1842
        %v1933 = vunpack.c.l.b16 %v1843
        %v1934 = vunpack.c.l.b16 %v1844
        %v1935 = vunpack.c.l.b16 %v1845
        %v1936 = vunpack.c.l.b16 %v1846
        %v1937 = vunpack.c.l.b16 %v1847
        %v1938 = vunpack.c.l.b16 %v1848
        %v1939 = vpack.c.b16 %v1924, %v1923
        %v1940 = vpack.c.b16 %v1926, %v1925
        %v1941 = vpack.c.b16 %v1928, %v1927
        %v1942 = vpack.c.b16 %v1930, %v1929
        %v1943 = vpack.c.b16 %v1932, %v1931
        %v1944 = vpack.c.b16 %v1934, %v1933
        %v1945 = vpack.c.b16 %v1936, %v1935
        %v1946 = vpack.c.b16 %v1938, %v1937
        %1955 = vmatprep.subr.bf16.mxu0 0
        %1956 = vmatpush1.bf16.msra.mxu0 %v1939
        %1957 = vmatprep.subr.bf16.mxu0 0
        %1958 = vmatpush1.bf16.msra.mxu0 %v1940
        %1959 = vmatprep.subr.bf16.mxu0 0
        %1960 = vmatpush1.bf16.msra.mxu0 %v1941
        %1961 = vmatprep.subr.bf16.mxu0 0
        %1962 = vmatpush1.bf16.msra.mxu0 %v1942
        %1963 = vmatprep.subr.bf16.mxu0 0
        %1964 = vmatpush1.bf16.msra.mxu0 %v1943
        %1965 = vmatprep.subr.bf16.mxu0 0
        %1966 = vmatpush1.bf16.msra.mxu0 %v1944
        %1967 = vmatprep.subr.bf16.mxu0 0
        %1968 = vmatpush1.bf16.msra.mxu0 %v1945
        %1969 = vmatprep.subr.bf16.mxu0 0
        %1970 = vmatpush1.bf16.msra.mxu0 %v1946
        %1971 = vmatprep.subr.bf16.mxu0 0
        %1972 = vmatpush1.bf16.msra.mxu0 0
        %1973 = vmatprep.subr.bf16.mxu0 0
        %1974 = vmatpush1.bf16.msra.mxu0 0
        %1975 = vmatprep.subr.bf16.mxu0 0
        %1976 = vmatpush1.bf16.msra.mxu0 0
        %1977 = vmatprep.subr.bf16.mxu0 0
        %1978 = vmatpush1.bf16.msra.mxu0 0
        %1979 = vmatprep.subr.bf16.mxu0 0
        %1980 = vmatpush1.bf16.msra.mxu0 0
        %1981 = vmatprep.subr.bf16.mxu0 0
        %1982 = vmatpush1.bf16.msra.mxu0 0
        %1983 = vmatprep.subr.bf16.mxu0 0
        %1984 = vmatpush1.bf16.msra.mxu0 0
        %1985 = vmatprep.subr.bf16.mxu0 0
        %1986 = vmatpush1.bf16.msra.mxu0 0
        %1987 = vmatprep.mubr.bf16.mxu0 0
        %1988 = vmatmul.mubr.bf16.gmra.mrb[0].mxu0 %v1832
        %v1989 = vpop.f32.mrb[0].mxu0
        %v1990 = vadd.f32 %v1905, %v1989
        %v1991 = vpop.f32.mrb[0].mxu0
        %v1992 = vpop.f32.mrb[0].mxu0
        %v1993 = vpop.f32.mrb[0].mxu0
        %1994 = vdwg.mxu0
        %v1995 = vmul.f32 %v1990, 0.35355338
        %v1997 = vlaneseq
        %v1998 = vshrl.u32 %v1997, 7
        %v1999 = vsub.s32 0, %v1998
        %v2000 = vrot.slane %v1882, %v1999
        %v2018 = vunpack.c.l.b16 %v1849
        %v2019 = vunpack.c.l.b16 %v1850
        %v2020 = vunpack.c.l.b16 %v1851
        %v2021 = vunpack.c.l.b16 %v1852
        %v2022 = vunpack.c.l.b16 %v1853
        %v2023 = vunpack.c.l.b16 %v1854
        %v2024 = vunpack.c.l.b16 %v1855
        %v2025 = vunpack.c.l.b16 %v1856
        %v2026 = vunpack.c.l.b16 %v1857
        %v2027 = vunpack.c.l.b16 %v1858
        %v2028 = vunpack.c.l.b16 %v1859
        %v2029 = vunpack.c.l.b16 %v1860
        %v2030 = vunpack.c.l.b16 %v1861
        %v2031 = vunpack.c.l.b16 %v1862
        %v2032 = vunpack.c.l.b16 %v1863
        %v2033 = vunpack.c.l.b16 %v1864
        %v2034 = vpack.c.b16 %v2019, %v2018
        %v2035 = vpack.c.b16 %v2021, %v2020
        %v2036 = vpack.c.b16 %v2023, %v2022
        %v2037 = vpack.c.b16 %v2025, %v2024
        %v2038 = vpack.c.b16 %v2027, %v2026
        %v2039 = vpack.c.b16 %v2029, %v2028
        %v2040 = vpack.c.b16 %v2031, %v2030
        %v2041 = vpack.c.b16 %v2033, %v2032
        %2050 = vmatprep.subr.bf16.mxu0 0
        %2051 = vmatpush1.bf16.msra.mxu0 %v2034
        %2052 = vmatprep.subr.bf16.mxu0 0
        %2053 = vmatpush1.bf16.msra.mxu0 %v2035
        %2054 = vmatprep.subr.bf16.mxu0 0
        %2055 = vmatpush1.bf16.msra.mxu0 %v2036
        %2056 = vmatprep.subr.bf16.mxu0 0
        %2057 = vmatpush1.bf16.msra.mxu0 %v2037
        %2058 = vmatprep.subr.bf16.mxu0 0
        %2059 = vmatpush1.bf16.msra.mxu0 %v2038
        %2060 = vmatprep.subr.bf16.mxu0 0
        %2061 = vmatpush1.bf16.msra.mxu0 %v2039
        %2062 = vmatprep.subr.bf16.mxu0 0
        %2063 = vmatpush1.bf16.msra.mxu0 %v2040
        %2064 = vmatprep.subr.bf16.mxu0 0
        %2065 = vmatpush1.bf16.msra.mxu0 %v2041
        %2066 = vmatprep.subr.bf16.mxu0 0
        %2067 = vmatpush1.bf16.msra.mxu0 0
        %2068 = vmatprep.subr.bf16.mxu0 0
        %2069 = vmatpush1.bf16.msra.mxu0 0
        %2070 = vmatprep.subr.bf16.mxu0 0
        %2071 = vmatpush1.bf16.msra.mxu0 0
        %2072 = vmatprep.subr.bf16.mxu0 0
        %2073 = vmatpush1.bf16.msra.mxu0 0
        %2074 = vmatprep.subr.bf16.mxu0 0
        %2075 = vmatpush1.bf16.msra.mxu0 0
        %2076 = vmatprep.subr.bf16.mxu0 0
        %2077 = vmatpush1.bf16.msra.mxu0 0
        %2078 = vmatprep.subr.bf16.mxu0 0
        %2079 = vmatpush1.bf16.msra.mxu0 0
        %2080 = vmatprep.subr.bf16.mxu0 0
        %2081 = vmatpush1.bf16.msra.mxu0 0
        %2082 = vmatprep.mubr.bf16.mxu0 0
        %2083 = vmatmul.mubr.bf16.gmra.mrb[0].mxu0 %v919
        %v2084 = vpop.f32.mrb[0].mxu0
        %v2085 = vadd.f32 %v2000, %v2084
        %v2086 = vpop.f32.mrb[0].mxu0
        %v2087 = vpop.f32.mrb[0].mxu0
        %v2088 = vpop.f32.mrb[0].mxu0
        %2089 = vdwg.mxu0
        %v2091 = vlaneseq
        %v2092 = vshrl.u32 %v2091, 7
        %v2093 = vsub.s32 0, %v2092
        %v2094 = vrot.slane %v1883, %v2093
        %v2112 = vunpack.c.l.b16 %v1865
        %v2113 = vunpack.c.l.b16 %v1866
        %v2114 = vunpack.c.l.b16 %v1867
        %v2115 = vunpack.c.l.b16 %v1868
        %v2116 = vunpack.c.l.b16 %v1869
        %v2117 = vunpack.c.l.b16 %v1870
        %v2118 = vunpack.c.l.b16 %v1871
        %v2119 = vunpack.c.l.b16 %v1872
        %v2120 = vunpack.c.l.b16 %v1873
        %v2121 = vunpack.c.l.b16 %v1874
        %v2122 = vunpack.c.l.b16 %v1875
        %v2123 = vunpack.c.l.b16 %v1876
        %v2124 = vunpack.c.l.b16 %v1877
        %v2125 = vunpack.c.l.b16 %v1878
        %v2126 = vunpack.c.l.b16 %v1879
        %v2127 = vunpack.c.l.b16 %v1880
        %v2128 = vpack.c.b16 %v2113, %v2112
        %v2129 = vpack.c.b16 %v2115, %v2114
        %v2130 = vpack.c.b16 %v2117, %v2116
        %v2131 = vpack.c.b16 %v2119, %v2118
        %v2132 = vpack.c.b16 %v2121, %v2120
        %v2133 = vpack.c.b16 %v2123, %v2122
        %v2134 = vpack.c.b16 %v2125, %v2124
        %v2135 = vpack.c.b16 %v2127, %v2126
        %2144 = vmatprep.subr.bf16.mxu0 0
        %2145 = vmatpush1.bf16.msra.mxu0 %v2128
        %2146 = vmatprep.subr.bf16.mxu0 0
        %2147 = vmatpush1.bf16.msra.mxu0 %v2129
        %2148 = vmatprep.subr.bf16.mxu0 0
        %2149 = vmatpush1.bf16.msra.mxu0 %v2130
        %2150 = vmatprep.subr.bf16.mxu0 0
        %2151 = vmatpush1.bf16.msra.mxu0 %v2131
        %2152 = vmatprep.subr.bf16.mxu0 0
        %2153 = vmatpush1.bf16.msra.mxu0 %v2132
        %2154 = vmatprep.subr.bf16.mxu0 0
        %2155 = vmatpush1.bf16.msra.mxu0 %v2133
        %2156 = vmatprep.subr.bf16.mxu0 0
        %2157 = vmatpush1.bf16.msra.mxu0 %v2134
        %2158 = vmatprep.subr.bf16.mxu0 0
        %2159 = vmatpush1.bf16.msra.mxu0 %v2135
        %2160 = vmatprep.subr.bf16.mxu0 0
        %2161 = vmatpush1.bf16.msra.mxu0 0
        %2162 = vmatprep.subr.bf16.mxu0 0
        %2163 = vmatpush1.bf16.msra.mxu0 0
        %2164 = vmatprep.subr.bf16.mxu0 0
        %2165 = vmatpush1.bf16.msra.mxu0 0
        %2166 = vmatprep.subr.bf16.mxu0 0
        %2167 = vmatpush1.bf16.msra.mxu0 0
        %2168 = vmatprep.subr.bf16.mxu0 0
        %2169 = vmatpush1.bf16.msra.mxu0 0
        %2170 = vmatprep.subr.bf16.mxu0 0
        %2171 = vmatpush1.bf16.msra.mxu0 0
        %2172 = vmatprep.subr.bf16.mxu0 0
        %2173 = vmatpush1.bf16.msra.mxu0 0
        %2174 = vmatprep.subr.bf16.mxu0 0
        %2175 = vmatpush1.bf16.msra.mxu0 0
        %2176 = vmatprep.mubr.bf16.mxu0 0
        %2177 = vmatmul.mubr.bf16.gmra.mrb[0].mxu0 %v919
        %v2178 = vpop.f32.mrb[0].mxu0
        %v2179 = vadd.f32 %v2094, %v2178
        %v2180 = vpop.f32.mrb[0].mxu0
        %v2181 = vpop.f32.mrb[0].mxu0
        %v2182 = vpop.f32.mrb[0].mxu0
        %2183 = vdwg.mxu0
        %v2184 = vpack.c.bf16 %v1995, %v1995
        %v2185 = vpack.c.bf16 %v2085, %v2085
        %v2186 = vpack.c.bf16 %v2179, %v2179
        %v2188 = vsel %vm1274, %v2184, 0
        %v2191 = vsel %vm1274, %v2185, 0
        %2193 = vmatprep.subr.bf16.mxu0 0
        %2194 = vmatpush1.bf16.xpose.msra.mxu0 %v2191
        %2195 = vmatprep.subr.bf16.mxu0 0
        %2196 = vmatpush1.bf16.xpose.msra.mxu0 0
        %2197 = vmatprep.subr.bf16.mxu0 0
        %2198 = vmatpush1.bf16.xpose.msra.mxu0 0
        %2199 = vmatprep.subr.bf16.mxu0 0
        %2200 = vmatpush1.bf16.xpose.msra.mxu0 0
        %2201 = vmatprep.subr.bf16.mxu0 0
        %2202 = vmatpush1.bf16.xpose.msra.mxu0 0
        %2203 = vmatprep.subr.bf16.mxu0 0
        %2204 = vmatpush1.bf16.xpose.msra.mxu0 0
        %2205 = vmatprep.subr.bf16.mxu0 0
        %2206 = vmatpush1.bf16.xpose.msra.mxu0 0
        %2207 = vmatprep.subr.bf16.mxu0 0
        %2208 = vmatpush1.bf16.xpose.msra.mxu0 0
        %2209 = vmatprep.subr.bf16.mxu0 0
        %2210 = vmatpush1.bf16.xpose.msra.mxu0 0
        %2211 = vmatprep.subr.bf16.mxu0 0
        %2212 = vmatpush1.bf16.xpose.msra.mxu0 0
        %2213 = vmatprep.subr.bf16.mxu0 0
        %2214 = vmatpush1.bf16.xpose.msra.mxu0 0
        %2215 = vmatprep.subr.bf16.mxu0 0
        %2216 = vmatpush1.bf16.xpose.msra.mxu0 0
        %2217 = vmatprep.subr.bf16.mxu0 0
        %2218 = vmatpush1.bf16.xpose.msra.mxu0 0
        %2219 = vmatprep.subr.bf16.mxu0 0
        %2220 = vmatpush1.bf16.xpose.msra.mxu0 0
        %2221 = vmatprep.subr.bf16.mxu0 0
        %2222 = vmatpush1.bf16.xpose.msra.mxu0 0
        %2223 = vmatprep.subr.bf16.mxu0 0
        %2224 = vmatpush1.bf16.xpose.msra.mxu0 0
        %2225 = vmatprep.mubr.bf16.mxu0 0
        %2226 = vmatmul.mubr.bf16.gmra.mrb[0].mxu0 %v2188
        %v2227 = vpop.f32.mrb[0].mxu0
        %v2228 = vadd.f32 0.0, %v2227
        %v2229 = vpop.f32.mrb[0].mxu0
        %v2230 = vpop.f32.mrb[0].mxu0
        %v2231 = vpop.f32.mrb[0].mxu0
        %2232 = vdwg.mxu0
        %v2233 = vsel %vm1321, %v2228, -inf
        %2234 = vmax.xlane.f32.xlu0 %v2233
        %v2235 = vpop.xlane.xlu0 %2234
        %v2236 = vsub.f32 %v2228, %v2235
        %v2237 = vmul.f32 %v2236, 1.442695
        %v2238 = vpow.pop %v2237
        %v2239 = vsel %vm1321, %v2238, 0.0
        %2240 = vadd.xlane.f32.xlu0 %v2239
        %v2241 = vpop.xlane.xlu0 %2240
        %v2242 = vrcp.pop %v2241
        %v2243 = vmul.f32 %v2238, %v2242
        %v2244 = vpack.c.bf16 %v2243, %v2243
        %v2246 = vsel %vm1321, %v2244, 0
        %v2249 = vsel %vm1337, %v2186, 0
        %2251 = vmatprep.subr.bf16.mxu0 0
        %2252 = vmatpush1.bf16.msra.mxu0 %v2249
        %2253 = vmatprep.subr.bf16.mxu0 0
        %2254 = vmatpush1.bf16.msra.mxu0 0
        %2255 = vmatprep.subr.bf16.mxu0 0
        %2256 = vmatpush1.bf16.msra.mxu0 0
        %2257 = vmatprep.subr.bf16.mxu0 0
        %2258 = vmatpush1.bf16.msra.mxu0 0
        %2259 = vmatprep.subr.bf16.mxu0 0
        %2260 = vmatpush1.bf16.msra.mxu0 0
        %2261 = vmatprep.subr.bf16.mxu0 0
        %2262 = vmatpush1.bf16.msra.mxu0 0
        %2263 = vmatprep.subr.bf16.mxu0 0
        %2264 = vmatpush1.bf16.msra.mxu0 0
        %2265 = vmatprep.subr.bf16.mxu0 0
        %2266 = vmatpush1.bf16.msra.mxu0 0
        %2267 = vmatprep.subr.bf16.mxu0 0
        %2268 = vmatpush1.bf16.msra.mxu0 0
        %2269 = vmatprep.subr.bf16.mxu0 0
        %2270 = vmatpush1.bf16.msra.mxu0 0
        %2271 = vmatprep.subr.bf16.mxu0 0
        %2272 = vmatpush1.bf16.msra.mxu0 0
        %2273 = vmatprep.subr.bf16.mxu0 0
        %2274 = vmatpush1.bf16.msra.mxu0 0
        %2275 = vmatprep.subr.bf16.mxu0 0
        %2276 = vmatpush1.bf16.msra.mxu0 0
        %2277 = vmatprep.subr.bf16.mxu0 0
        %2278 = vmatpush1.bf16.msra.mxu0 0
        %2279 = vmatprep.subr.bf16.mxu0 0
        %2280 = vmatpush1.bf16.msra.mxu0 0
        %2281 = vmatprep.subr.bf16.mxu0 0
        %2282 = vmatpush1.bf16.msra.mxu0 0
        %2283 = vmatprep.mubr.bf16.mxu0 0
        %2284 = vmatmul.mubr.bf16.gmra.mrb[0].mxu0 %v2246
        %v2285 = vpop.f32.mrb[0].mxu0
        %v2286 = vadd.f32 0.0, %v2285
        %v2287 = vpop.f32.mrb[0].mxu0
        %v2288 = vpop.f32.mrb[0].mxu0
        %v2289 = vpop.f32.mrb[0].mxu0
        %2290 = vdwg.mxu0
        %v2291 = vpack.c.bf16 %v2286, %v2286
        %2293 = vrot.lane.b32.xlu0 %v2184, 96
        %v2294 = vpop.permute.xlu0 %2293
        %2296 = vrot.lane.b32.xlu0 %v2185, 96
        %v2297 = vpop.permute.xlu0 %2296
        %v2299 = vsel %vm1274, %v2294, 0
        %v2302 = vsel %vm1274, %v2297, 0
        %2304 = vmatprep.subr.bf16.mxu0 0
        %2305 = vmatpush1.bf16.xpose.msra.mxu0 %v2302
        %2306 = vmatprep.subr.bf16.mxu0 0
        %2307 = vmatpush1.bf16.xpose.msra.mxu0 0
        %2308 = vmatprep.subr.bf16.mxu0 0
        %2309 = vmatpush1.bf16.xpose.msra.mxu0 0
        %2310 = vmatprep.subr.bf16.mxu0 0
        %2311 = vmatpush1.bf16.xpose.msra.mxu0 0
        %2312 = vmatprep.subr.bf16.mxu0 0
        %2313 = vmatpush1.bf16.xpose.msra.mxu0 0
        %2314 = vmatprep.subr.bf16.mxu0 0
        %2315 = vmatpush1.bf16.xpose.msra.mxu0 0
        %2316 = vmatprep.subr.bf16.mxu0 0
        %2317 = vmatpush1.bf16.xpose.msra.mxu0 0
        %2318 = vmatprep.subr.bf16.mxu0 0
        %2319 = vmatpush1.bf16.xpose.msra.mxu0 0
        %2320 = vmatprep.subr.bf16.mxu0 0
        %2321 = vmatpush1.bf16.xpose.msra.mxu0 0
        %2322 = vmatprep.subr.bf16.mxu0 0
        %2323 = vmatpush1.bf16.xpose.msra.mxu0 0
        %2324 = vmatprep.subr.bf16.mxu0 0
        %2325 = vmatpush1.bf16.xpose.msra.mxu0 0
        %2326 = vmatprep.subr.bf16.mxu0 0
        %2327 = vmatpush1.bf16.xpose.msra.mxu0 0
        %2328 = vmatprep.subr.bf16.mxu0 0
        %2329 = vmatpush1.bf16.xpose.msra.mxu0 0
        %2330 = vmatprep.subr.bf16.mxu0 0
        %2331 = vmatpush1.bf16.xpose.msra.mxu0 0
        %2332 = vmatprep.subr.bf16.mxu0 0
        %2333 = vmatpush1.bf16.xpose.msra.mxu0 0
        %2334 = vmatprep.subr.bf16.mxu0 0
        %2335 = vmatpush1.bf16.xpose.msra.mxu0 0
        %2336 = vmatprep.mubr.bf16.mxu0 0
        %2337 = vmatmul.mubr.bf16.gmra.mrb[0].mxu0 %v2299
        %v2338 = vpop.f32.mrb[0].mxu0
        %v2339 = vadd.f32 0.0, %v2338
        %v2340 = vpop.f32.mrb[0].mxu0
        %v2341 = vpop.f32.mrb[0].mxu0
        %v2342 = vpop.f32.mrb[0].mxu0
        %2343 = vdwg.mxu0
        %v2344 = vsel %vm1321, %v2339, -inf
        %2345 = vmax.xlane.f32.xlu0 %v2344
        %v2346 = vpop.xlane.xlu0 %2345
        %v2347 = vsub.f32 %v2339, %v2346
        %v2348 = vmul.f32 %v2347, 1.442695
        %v2349 = vpow.pop %v2348
        %v2350 = vsel %vm1321, %v2349, 0.0
        %2351 = vadd.xlane.f32.xlu0 %v2350
        %v2352 = vpop.xlane.xlu0 %2351
        %v2353 = vrcp.pop %v2352
        %v2354 = vmul.f32 %v2349, %v2353
        %v2355 = vpack.c.bf16 %v2354, %v2354
        %2357 = vrot.lane.b32.xlu0 %v2186, 96
        %v2358 = vpop.permute.xlu0 %2357
        %v2360 = vsel %vm1321, %v2355, 0
        %v2363 = vsel %vm1337, %v2358, 0
        %2365 = vmatprep.subr.bf16.mxu0 0
        %2366 = vmatpush1.bf16.msra.mxu0 %v2363
        %2367 = vmatprep.subr.bf16.mxu0 0
        %2368 = vmatpush1.bf16.msra.mxu0 0
        %2369 = vmatprep.subr.bf16.mxu0 0
        %2370 = vmatpush1.bf16.msra.mxu0 0
        %2371 = vmatprep.subr.bf16.mxu0 0
        %2372 = vmatpush1.bf16.msra.mxu0 0
        %2373 = vmatprep.subr.bf16.mxu0 0
        %2374 = vmatpush1.bf16.msra.mxu0 0
        %2375 = vmatprep.subr.bf16.mxu0 0
        %2376 = vmatpush1.bf16.msra.mxu0 0
        %2377 = vmatprep.subr.bf16.mxu0 0
        %2378 = vmatpush1.bf16.msra.mxu0 0
        %2379 = vmatprep.subr.bf16.mxu0 0
        %2380 = vmatpush1.bf16.msra.mxu0 0
        %2381 = vmatprep.subr.bf16.mxu0 0
        %2382 = vmatpush1.bf16.msra.mxu0 0
        %2383 = vmatprep.subr.bf16.mxu0 0
        %2384 = vmatpush1.bf16.msra.mxu0 0
        %2385 = vmatprep.subr.bf16.mxu0 0
        %2386 = vmatpush1.bf16.msra.mxu0 0
        %2387 = vmatprep.subr.bf16.mxu0 0
        %2388 = vmatpush1.bf16.msra.mxu0 0
        %2389 = vmatprep.subr.bf16.mxu0 0
        %2390 = vmatpush1.bf16.msra.mxu0 0
        %2391 = vmatprep.subr.bf16.mxu0 0
        %2392 = vmatpush1.bf16.msra.mxu0 0
        %2393 = vmatprep.subr.bf16.mxu0 0
        %2394 = vmatpush1.bf16.msra.mxu0 0
        %2395 = vmatprep.subr.bf16.mxu0 0
        %2396 = vmatpush1.bf16.msra.mxu0 0
        %2397 = vmatprep.mubr.bf16.mxu0 0
        %2398 = vmatmul.mubr.bf16.gmra.mrb[0].mxu0 %v2360
        %v2399 = vpop.f32.mrb[0].mxu0
        %v2400 = vadd.f32 0.0, %v2399
        %v2401 = vpop.f32.mrb[0].mxu0
        %v2402 = vpop.f32.mrb[0].mxu0
        %v2403 = vpop.f32.mrb[0].mxu0
        %2404 = vdwg.mxu0
        %v2405 = vpack.c.bf16 %v2400, %v2400
        %2406 = vrot.lane.b32.xlu0 %v2184, 64
        %v2407 = vpop.permute.xlu0 %2406
        %2408 = vrot.lane.b32.xlu0 %v2185, 64
        %v2409 = vpop.permute.xlu0 %2408
        %v2411 = vsel %vm1274, %v2407, 0
        %v2414 = vsel %vm1274, %v2409, 0
        %2416 = vmatprep.subr.bf16.mxu0 0
        %2417 = vmatpush1.bf16.xpose.msra.mxu0 %v2414
        %2418 = vmatprep.subr.bf16.mxu0 0
        %2419 = vmatpush1.bf16.xpose.msra.mxu0 0
        %2420 = vmatprep.subr.bf16.mxu0 0
        %2421 = vmatpush1.bf16.xpose.msra.mxu0 0
        %2422 = vmatprep.subr.bf16.mxu0 0
        %2423 = vmatpush1.bf16.xpose.msra.mxu0 0
        %2424 = vmatprep.subr.bf16.mxu0 0
        %2425 = vmatpush1.bf16.xpose.msra.mxu0 0
        %2426 = vmatprep.subr.bf16.mxu0 0
        %2427 = vmatpush1.bf16.xpose.msra.mxu0 0
        %2428 = vmatprep.subr.bf16.mxu0 0
        %2429 = vmatpush1.bf16.xpose.msra.mxu0 0
        %2430 = vmatprep.subr.bf16.mxu0 0
        %2431 = vmatpush1.bf16.xpose.msra.mxu0 0
        %2432 = vmatprep.subr.bf16.mxu0 0
        %2433 = vmatpush1.bf16.xpose.msra.mxu0 0
        %2434 = vmatprep.subr.bf16.mxu0 0
        %2435 = vmatpush1.bf16.xpose.msra.mxu0 0
        %2436 = vmatprep.subr.bf16.mxu0 0
        %2437 = vmatpush1.bf16.xpose.msra.mxu0 0
        %2438 = vmatprep.subr.bf16.mxu0 0
        %2439 = vmatpush1.bf16.xpose.msra.mxu0 0
        %2440 = vmatprep.subr.bf16.mxu0 0
        %2441 = vmatpush1.bf16.xpose.msra.mxu0 0
        %2442 = vmatprep.subr.bf16.mxu0 0
        %2443 = vmatpush1.bf16.xpose.msra.mxu0 0
        %2444 = vmatprep.subr.bf16.mxu0 0
        %2445 = vmatpush1.bf16.xpose.msra.mxu0 0
        %2446 = vmatprep.subr.bf16.mxu0 0
        %2447 = vmatpush1.bf16.xpose.msra.mxu0 0
        %2448 = vmatprep.mubr.bf16.mxu0 0
        %2449 = vmatmul.mubr.bf16.gmra.mrb[0].mxu0 %v2411
        %v2450 = vpop.f32.mrb[0].mxu0
        %v2451 = vadd.f32 0.0, %v2450
        %v2452 = vpop.f32.mrb[0].mxu0
        %v2453 = vpop.f32.mrb[0].mxu0
        %v2454 = vpop.f32.mrb[0].mxu0
        %2455 = vdwg.mxu0
        %v2456 = vsel %vm1321, %v2451, -inf
        %2457 = vmax.xlane.f32.xlu0 %v2456
        %v2458 = vpop.xlane.xlu0 %2457
        %v2459 = vsub.f32 %v2451, %v2458
        %v2460 = vmul.f32 %v2459, 1.442695
        %v2461 = vpow.pop %v2460
        %v2462 = vsel %vm1321, %v2461, 0.0
        %2463 = vadd.xlane.f32.xlu0 %v2462
        %v2464 = vpop.xlane.xlu0 %2463
        %v2465 = vrcp.pop %v2464
        %v2466 = vmul.f32 %v2461, %v2465
        %v2467 = vpack.c.bf16 %v2466, %v2466
        %2468 = vrot.lane.b32.xlu0 %v2186, 64
        %v2469 = vpop.permute.xlu0 %2468
        %v2471 = vsel %vm1321, %v2467, 0
        %v2474 = vsel %vm1337, %v2469, 0
        %2476 = vmatprep.subr.bf16.mxu0 0
        %2477 = vmatpush1.bf16.msra.mxu0 %v2474
        %2478 = vmatprep.subr.bf16.mxu0 0
        %2479 = vmatpush1.bf16.msra.mxu0 0
        %2480 = vmatprep.subr.bf16.mxu0 0
        %2481 = vmatpush1.bf16.msra.mxu0 0
        %2482 = vmatprep.subr.bf16.mxu0 0
        %2483 = vmatpush1.bf16.msra.mxu0 0
        %2484 = vmatprep.subr.bf16.mxu0 0
        %2485 = vmatpush1.bf16.msra.mxu0 0
        %2486 = vmatprep.subr.bf16.mxu0 0
        %2487 = vmatpush1.bf16.msra.mxu0 0
        %2488 = vmatprep.subr.bf16.mxu0 0
        %2489 = vmatpush1.bf16.msra.mxu0 0
        %2490 = vmatprep.subr.bf16.mxu0 0
        %2491 = vmatpush1.bf16.msra.mxu0 0
        %2492 = vmatprep.subr.bf16.mxu0 0
        %2493 = vmatpush1.bf16.msra.mxu0 0
        %2494 = vmatprep.subr.bf16.mxu0 0
        %2495 = vmatpush1.bf16.msra.mxu0 0
        %2496 = vmatprep.subr.bf16.mxu0 0
        %2497 = vmatpush1.bf16.msra.mxu0 0
        %2498 = vmatprep.subr.bf16.mxu0 0
        %2499 = vmatpush1.bf16.msra.mxu0 0
        %2500 = vmatprep.subr.bf16.mxu0 0
        %2501 = vmatpush1.bf16.msra.mxu0 0
        %2502 = vmatprep.subr.bf16.mxu0 0
        %2503 = vmatpush1.bf16.msra.mxu0 0
        %2504 = vmatprep.subr.bf16.mxu0 0
        %2505 = vmatpush1.bf16.msra.mxu0 0
        %2506 = vmatprep.subr.bf16.mxu0 0
        %2507 = vmatpush1.bf16.msra.mxu0 0
        %2508 = vmatprep.mubr.bf16.mxu0 0
        %2509 = vmatmul.mubr.bf16.gmra.mrb[0].mxu0 %v2471
        %v2510 = vpop.f32.mrb[0].mxu0
        %v2511 = vadd.f32 0.0, %v2510
        %v2512 = vpop.f32.mrb[0].mxu0
        %v2513 = vpop.f32.mrb[0].mxu0
        %v2514 = vpop.f32.mrb[0].mxu0
        %2515 = vdwg.mxu0
        %v2516 = vpack.c.bf16 %v2511, %v2511
        %2517 = vrot.lane.b32.xlu0 %v2184, 32
        %v2518 = vpop.permute.xlu0 %2517
        %2519 = vrot.lane.b32.xlu0 %v2185, 32
        %v2520 = vpop.permute.xlu0 %2519
        %v2522 = vsel %vm1274, %v2518, 0
        %v2525 = vsel %vm1274, %v2520, 0
        %2527 = vmatprep.subr.bf16.mxu0 0
        %2528 = vmatpush1.bf16.xpose.msra.mxu0 %v2525
        %2529 = vmatprep.subr.bf16.mxu0 0
        %2530 = vmatpush1.bf16.xpose.msra.mxu0 0
        %2531 = vmatprep.subr.bf16.mxu0 0
        %2532 = vmatpush1.bf16.xpose.msra.mxu0 0
        %2533 = vmatprep.subr.bf16.mxu0 0
        %2534 = vmatpush1.bf16.xpose.msra.mxu0 0
        %2535 = vmatprep.subr.bf16.mxu0 0
        %2536 = vmatpush1.bf16.xpose.msra.mxu0 0
        %2537 = vmatprep.subr.bf16.mxu0 0
        %2538 = vmatpush1.bf16.xpose.msra.mxu0 0
        %2539 = vmatprep.subr.bf16.mxu0 0
        %2540 = vmatpush1.bf16.xpose.msra.mxu0 0
        %2541 = vmatprep.subr.bf16.mxu0 0
        %2542 = vmatpush1.bf16.xpose.msra.mxu0 0
        %2543 = vmatprep.subr.bf16.mxu0 0
        %2544 = vmatpush1.bf16.xpose.msra.mxu0 0
        %2545 = vmatprep.subr.bf16.mxu0 0
        %2546 = vmatpush1.bf16.xpose.msra.mxu0 0
        %2547 = vmatprep.subr.bf16.mxu0 0
        %2548 = vmatpush1.bf16.xpose.msra.mxu0 0
        %2549 = vmatprep.subr.bf16.mxu0 0
        %2550 = vmatpush1.bf16.xpose.msra.mxu0 0
        %2551 = vmatprep.subr.bf16.mxu0 0
        %2552 = vmatpush1.bf16.xpose.msra.mxu0 0
        %2553 = vmatprep.subr.bf16.mxu0 0
        %2554 = vmatpush1.bf16.xpose.msra.mxu0 0
        %2555 = vmatprep.subr.bf16.mxu0 0
        %2556 = vmatpush1.bf16.xpose.msra.mxu0 0
        %2557 = vmatprep.subr.bf16.mxu0 0
        %2558 = vmatpush1.bf16.xpose.msra.mxu0 0
        %2559 = vmatprep.mubr.bf16.mxu0 0
        %2560 = vmatmul.mubr.bf16.gmra.mrb[0].mxu0 %v2522
        %v2561 = vpop.f32.mrb[0].mxu0
        %v2562 = vadd.f32 0.0, %v2561
        %v2563 = vpop.f32.mrb[0].mxu0
        %v2564 = vpop.f32.mrb[0].mxu0
        %v2565 = vpop.f32.mrb[0].mxu0
        %2566 = vdwg.mxu0
        %v2567 = vsel %vm1321, %v2562, -inf
        %2568 = vmax.xlane.f32.xlu0 %v2567
        %v2569 = vpop.xlane.xlu0 %2568
        %v2570 = vsub.f32 %v2562, %v2569
        %v2571 = vmul.f32 %v2570, 1.442695
        %v2572 = vpow.pop %v2571
        %v2573 = vsel %vm1321, %v2572, 0.0
        %2574 = vadd.xlane.f32.xlu0 %v2573
        %v2575 = vpop.xlane.xlu0 %2574
        %v2576 = vrcp.pop %v2575
        %v2577 = vmul.f32 %v2572, %v2576
        %v2578 = vpack.c.bf16 %v2577, %v2577
        %2579 = vrot.lane.b32.xlu0 %v2186, 32
        %v2580 = vpop.permute.xlu0 %2579
        %v2582 = vsel %vm1321, %v2578, 0
        %v2585 = vsel %vm1337, %v2580, 0
        %2587 = vmatprep.subr.bf16.mxu0 0
        %2588 = vmatpush1.bf16.msra.mxu0 %v2585
        %2589 = vmatprep.subr.bf16.mxu0 0
        %2590 = vmatpush1.bf16.msra.mxu0 0
        %2591 = vmatprep.subr.bf16.mxu0 0
        %2592 = vmatpush1.bf16.msra.mxu0 0
        %2593 = vmatprep.subr.bf16.mxu0 0
        %2594 = vmatpush1.bf16.msra.mxu0 0
        %2595 = vmatprep.subr.bf16.mxu0 0
        %2596 = vmatpush1.bf16.msra.mxu0 0
        %2597 = vmatprep.subr.bf16.mxu0 0
        %2598 = vmatpush1.bf16.msra.mxu0 0
        %2599 = vmatprep.subr.bf16.mxu0 0
        %2600 = vmatpush1.bf16.msra.mxu0 0
        %2601 = vmatprep.subr.bf16.mxu0 0
        %2602 = vmatpush1.bf16.msra.mxu0 0
        %2603 = vmatprep.subr.bf16.mxu0 0
        %2604 = vmatpush1.bf16.msra.mxu0 0
        %2605 = vmatprep.subr.bf16.mxu0 0
        %2606 = vmatpush1.bf16.msra.mxu0 0
        %2607 = vmatprep.subr.bf16.mxu0 0
        %2608 = vmatpush1.bf16.msra.mxu0 0
        %2609 = vmatprep.subr.bf16.mxu0 0
        %2610 = vmatpush1.bf16.msra.mxu0 0
        %2611 = vmatprep.subr.bf16.mxu0 0
        %2612 = vmatpush1.bf16.msra.mxu0 0
        %2613 = vmatprep.subr.bf16.mxu0 0
        %2614 = vmatpush1.bf16.msra.mxu0 0
        %2615 = vmatprep.subr.bf16.mxu0 0
        %2616 = vmatpush1.bf16.msra.mxu0 0
        %2617 = vmatprep.subr.bf16.mxu0 0
        %2618 = vmatpush1.bf16.msra.mxu0 0
        %2619 = vmatprep.mubr.bf16.mxu0 0
        %2620 = vmatmul.mubr.bf16.gmra.mrb[0].mxu0 %v2582
        %v2621 = vpop.f32.mrb[0].mxu0
        %v2622 = vadd.f32 0.0, %v2621
        %v2623 = vpop.f32.mrb[0].mxu0
        %v2624 = vpop.f32.mrb[0].mxu0
        %v2625 = vpop.f32.mrb[0].mxu0
        %2626 = vdwg.mxu0
        %v2627 = vpack.c.bf16 %v2622, %v2622
        %2629 = vrot.lane.b32.xlu0 %v2405, 32
        %v2630 = vpop.permute.xlu0 %2629
        %2632 = vrot.lane.b32.xlu0 %v2516, 64
        %v2633 = vpop.permute.xlu0 %2632
        %2635 = vrot.lane.b32.xlu0 %v2627, 96
        %v2636 = vpop.permute.xlu0 %2635
        %v2639 = vsel %vm1274, %v2291, %v2630
        %v2641 = vsel %vm1730, %v2639, %v2633
        %v2643 = vsel %vm1733, %v2641, %v2636
        %v2646 = vlaneseq
        %v2647 = vshrl.u32 %v2646, 7
        %v2648 = vsub.s32 0, %v2647
        %v2649 = vrot.slane %v1900, %v2648
        %v2667 = vunpack.c.l.b16 %v1884
        %v2668 = vunpack.c.l.b16 %v1885
        %v2669 = vunpack.c.l.b16 %v1886
        %v2670 = vunpack.c.l.b16 %v1887
        %v2671 = vunpack.c.l.b16 %v1888
        %v2672 = vunpack.c.l.b16 %v1889
        %v2673 = vunpack.c.l.b16 %v1890
        %v2674 = vunpack.c.l.b16 %v1891
        %v2675 = vunpack.c.l.b16 %v1892
        %v2676 = vunpack.c.l.b16 %v1893
        %v2677 = vunpack.c.l.b16 %v1894
        %v2678 = vunpack.c.l.b16 %v1895
        %v2679 = vunpack.c.l.b16 %v1896
        %v2680 = vunpack.c.l.b16 %v1897
        %v2681 = vunpack.c.l.b16 %v1898
        %v2682 = vunpack.c.l.b16 %v1899
        %v2683 = vpack.c.b16 %v2668, %v2667
        %v2684 = vpack.c.b16 %v2670, %v2669
        %v2685 = vpack.c.b16 %v2672, %v2671
        %v2686 = vpack.c.b16 %v2674, %v2673
        %v2687 = vpack.c.b16 %v2676, %v2675
        %v2688 = vpack.c.b16 %v2678, %v2677
        %v2689 = vpack.c.b16 %v2680, %v2679
        %v2690 = vpack.c.b16 %v2682, %v2681
        %2699 = vmatprep.subr.bf16.mxu0 0
        %2700 = vmatpush1.bf16.msra.mxu0 %v2683
        %2701 = vmatprep.subr.bf16.mxu0 0
        %2702 = vmatpush1.bf16.msra.mxu0 %v2684
        %2703 = vmatprep.subr.bf16.mxu0 0
        %2704 = vmatpush1.bf16.msra.mxu0 %v2685
        %2705 = vmatprep.subr.bf16.mxu0 0
        %2706 = vmatpush1.bf16.msra.mxu0 %v2686
        %2707 = vmatprep.subr.bf16.mxu0 0
        %2708 = vmatpush1.bf16.msra.mxu0 %v2687
        %2709 = vmatprep.subr.bf16.mxu0 0
        %2710 = vmatpush1.bf16.msra.mxu0 %v2688
        %2711 = vmatprep.subr.bf16.mxu0 0
        %2712 = vmatpush1.bf16.msra.mxu0 %v2689
        %2713 = vmatprep.subr.bf16.mxu0 0
        %2714 = vmatpush1.bf16.msra.mxu0 %v2690
        %2715 = vmatprep.subr.bf16.mxu0 0
        %2716 = vmatpush1.bf16.msra.mxu0 0
        %2717 = vmatprep.subr.bf16.mxu0 0
        %2718 = vmatpush1.bf16.msra.mxu0 0
        %2719 = vmatprep.subr.bf16.mxu0 0
        %2720 = vmatpush1.bf16.msra.mxu0 0
        %2721 = vmatprep.subr.bf16.mxu0 0
        %2722 = vmatpush1.bf16.msra.mxu0 0
        %2723 = vmatprep.subr.bf16.mxu0 0
        %2724 = vmatpush1.bf16.msra.mxu0 0
        %2725 = vmatprep.subr.bf16.mxu0 0
        %2726 = vmatpush1.bf16.msra.mxu0 0
        %2727 = vmatprep.subr.bf16.mxu0 0
        %2728 = vmatpush1.bf16.msra.mxu0 0
        %2729 = vmatprep.subr.bf16.mxu0 0
        %2730 = vmatpush1.bf16.msra.mxu0 0
        %2731 = vmatprep.mubr.bf16.mxu0 0
        %2732 = vmatmul.mubr.bf16.gmra.mrb[0].mxu0 %v2643
        %v2733 = vpop.f32.mrb[0].mxu0
        %v2734 = vadd.f32 %v2649, %v2733
        %v2735 = vpop.f32.mrb[0].mxu0
        %v2736 = vpop.f32.mrb[0].mxu0
        %v2737 = vpop.f32.mrb[0].mxu0
        %2738 = vdwg.mxu0
        %v2739 = vadd.f32 %v1831, %v2734
        %v2740 = vpack.c.bf16 %v2739, %v2739
        %v2741 = vld [vmem:[%s18] sm:$0xf]
        %v2742 = vld [vmem:[%s18 + $0x4] sm:$0xf]
        %v2743 = vld [vmem:[%s18 + $0x8] sm:$0xf]
        %v2744 = vld [vmem:[%s18 + $0xc] sm:$0xf]
        %v2745 = vld [vmem:[%s18 + $0x10] sm:$0xf]
        %v2746 = vld [vmem:[%s18 + $0x14] sm:$0xf]
        %v2747 = vld [vmem:[%s18 + $0x18] sm:$0xf]
        %v2748 = vld [vmem:[%s18 + $0x1c] sm:$0xf]
        %v2749 = vld [vmem:[%s18 + $0x20] sm:$0xf]
        %v2750 = vld [vmem:[%s18 + $0x24] sm:$0xf]
        %v2751 = vld [vmem:[%s18 + $0x28] sm:$0xf]
        %v2752 = vld [vmem:[%s18 + $0x2c] sm:$0xf]
        %v2753 = vld [vmem:[%s18 + $0x30] sm:$0xf]
        %v2754 = vld [vmem:[%s18 + $0x34] sm:$0xf]
        %v2755 = vld [vmem:[%s18 + $0x38] sm:$0xf]
        %v2756 = vld [vmem:[%s18 + $0x3c] sm:$0xf]
        %v2757 = vld [vmem:[%s19] sm:$0x1]
        %v2759 = vlaneseq
        %v2760 = vshrl.u32 %v2759, 7
        %v2761 = vsub.s32 0, %v2760
        %v2762 = vrot.slane %v2757, %v2761
        %v2780 = vunpack.c.l.b16 %v2741
        %v2781 = vunpack.c.l.b16 %v2742
        %v2782 = vunpack.c.l.b16 %v2743
        %v2783 = vunpack.c.l.b16 %v2744
        %v2784 = vunpack.c.l.b16 %v2745
        %v2785 = vunpack.c.l.b16 %v2746
        %v2786 = vunpack.c.l.b16 %v2747
        %v2787 = vunpack.c.l.b16 %v2748
        %v2788 = vunpack.c.l.b16 %v2749
        %v2789 = vunpack.c.l.b16 %v2750
        %v2790 = vunpack.c.l.b16 %v2751
        %v2791 = vunpack.c.l.b16 %v2752
        %v2792 = vunpack.c.l.b16 %v2753
        %v2793 = vunpack.c.l.b16 %v2754
        %v2794 = vunpack.c.l.b16 %v2755
        %v2795 = vunpack.c.l.b16 %v2756
        %v2796 = vpack.c.b16 %v2781, %v2780
        %v2797 = vpack.c.b16 %v2783, %v2782
        %v2798 = vpack.c.b16 %v2785, %v2784
        %v2799 = vpack.c.b16 %v2787, %v2786
        %v2800 = vpack.c.b16 %v2789, %v2788
        %v2801 = vpack.c.b16 %v2791, %v2790
        %v2802 = vpack.c.b16 %v2793, %v2792
        %v2803 = vpack.c.b16 %v2795, %v2794
        %2812 = vmatprep.subr.bf16.mxu0 0
        %2813 = vmatpush1.bf16.msra.mxu0 %v2796
        %2814 = vmatprep.subr.bf16.mxu0 0
        %2815 = vmatpush1.bf16.msra.mxu0 %v2797
        %2816 = vmatprep.subr.bf16.mxu0 0
        %2817 = vmatpush1.bf16.msra.mxu0 %v2798
        %2818 = vmatprep.subr.bf16.mxu0 0
        %2819 = vmatpush1.bf16.msra.mxu0 %v2799
        %2820 = vmatprep.subr.bf16.mxu0 0
        %2821 = vmatpush1.bf16.msra.mxu0 %v2800
        %2822 = vmatprep.subr.bf16.mxu0 0
        %2823 = vmatpush1.bf16.msra.mxu0 %v2801
        %2824 = vmatprep.subr.bf16.mxu0 0
        %2825 = vmatpush1.bf16.msra.mxu0 %v2802
        %2826 = vmatprep.subr.bf16.mxu0 0
        %2827 = vmatpush1.bf16.msra.mxu0 %v2803
        %2828 = vmatprep.subr.bf16.mxu0 0
        %2829 = vmatpush1.bf16.msra.mxu0 0
        %2830 = vmatprep.subr.bf16.mxu0 0
        %2831 = vmatpush1.bf16.msra.mxu0 0
        %2832 = vmatprep.subr.bf16.mxu0 0
        %2833 = vmatpush1.bf16.msra.mxu0 0
        %2834 = vmatprep.subr.bf16.mxu0 0
        %2835 = vmatpush1.bf16.msra.mxu0 0
        %2836 = vmatprep.subr.bf16.mxu0 0
        %2837 = vmatpush1.bf16.msra.mxu0 0
        %2838 = vmatprep.subr.bf16.mxu0 0
        %2839 = vmatpush1.bf16.msra.mxu0 0
        %2840 = vmatprep.subr.bf16.mxu0 0
        %2841 = vmatpush1.bf16.msra.mxu0 0
        %2842 = vmatprep.subr.bf16.mxu0 0
        %2843 = vmatpush1.bf16.msra.mxu0 0
        %2844 = vmatprep.mubr.bf16.mxu0 0
        %2845 = vmatmul.mubr.bf16.gmra.mrb[0].mxu0 %v2740
        %v2846 = vpop.f32.mrb[0].mxu0
        %v2847 = vadd.f32 %v2762, %v2846
        %v2848 = vpop.f32.mrb[0].mxu0
        %v2849 = vpop.f32.mrb[0].mxu0
        %v2850 = vpop.f32.mrb[0].mxu0
        %2851 = vdwg.mxu0
        %v2852 = vpack.c.bf16 %v2847, %v2847
        %v2853 = vld [vmem:[#allocation25] sm:$0xf]
        %v2854 = vld [vmem:[#allocation25 + $0x4] sm:$0xf]
        %v2855 = vld [vmem:[#allocation25 + $0x8] sm:$0xf]
        %v2856 = vld [vmem:[#allocation25 + $0xc] sm:$0xf]
        %v2857 = vld [vmem:[#allocation25 + $0x10] sm:$0xf]
        %v2858 = vld [vmem:[#allocation25 + $0x14] sm:$0xf]
        %v2859 = vld [vmem:[#allocation25 + $0x18] sm:$0xf]
        %v2860 = vld [vmem:[#allocation25 + $0x1c] sm:$0xf]
        %v2861 = vld [vmem:[#allocation25 + $0x20] sm:$0xf]
        %v2862 = vld [vmem:[#allocation25 + $0x24] sm:$0xf]
        %v2863 = vld [vmem:[#allocation25 + $0x28] sm:$0xf]
        %v2864 = vld [vmem:[#allocation25 + $0x2c] sm:$0xf]
        %v2865 = vld [vmem:[#allocation25 + $0x30] sm:$0xf]
        %v2866 = vld [vmem:[#allocation25 + $0x34] sm:$0xf]
        %v2867 = vld [vmem:[#allocation25 + $0x38] sm:$0xf]
        %v2868 = vld [vmem:[#allocation25 + $0x3c] sm:$0xf]
        %v2869 = vld [vmem:[%s21] sm:$0x1]
        %v2871 = vlaneseq
        %v2872 = vshrl.u32 %v2871, 7
        %v2873 = vsub.s32 0, %v2872
        %v2874 = vrot.slane %v2869, %v2873
        %v2892 = vunpack.c.l.b16 %v2853
        %v2893 = vunpack.c.l.b16 %v2854
        %v2894 = vunpack.c.l.b16 %v2855
        %v2895 = vunpack.c.l.b16 %v2856
        %v2896 = vunpack.c.l.b16 %v2857
        %v2897 = vunpack.c.l.b16 %v2858
        %v2898 = vunpack.c.l.b16 %v2859
        %v2899 = vunpack.c.l.b16 %v2860
        %v2900 = vunpack.c.l.b16 %v2861
        %v2901 = vunpack.c.l.b16 %v2862
        %v2902 = vunpack.c.l.b16 %v2863
        %v2903 = vunpack.c.l.b16 %v2864
        %v2904 = vunpack.c.l.b16 %v2865
        %v2905 = vunpack.c.l.b16 %v2866
        %v2906 = vunpack.c.l.b16 %v2867
        %v2907 = vunpack.c.l.b16 %v2868
        %v2908 = vpack.c.b16 %v2893, %v2892
        %v2909 = vpack.c.b16 %v2895, %v2894
        %v2910 = vpack.c.b16 %v2897, %v2896
        %v2911 = vpack.c.b16 %v2899, %v2898
        %v2912 = vpack.c.b16 %v2901, %v2900
        %v2913 = vpack.c.b16 %v2903, %v2902
        %v2914 = vpack.c.b16 %v2905, %v2904
        %v2915 = vpack.c.b16 %v2907, %v2906
        %2924 = vmatprep.subr.bf16.mxu0 0
        %2925 = vmatpush1.bf16.msra.mxu0 %v2908
        %2926 = vmatprep.subr.bf16.mxu0 0
        %2927 = vmatpush1.bf16.msra.mxu0 %v2909
        %2928 = vmatprep.subr.bf16.mxu0 0
        %2929 = vmatpush1.bf16.msra.mxu0 %v2910
        %2930 = vmatprep.subr.bf16.mxu0 0
        %2931 = vmatpush1.bf16.msra.mxu0 %v2911
        %2932 = vmatprep.subr.bf16.mxu0 0
        %2933 = vmatpush1.bf16.msra.mxu0 %v2912
        %2934 = vmatprep.subr.bf16.mxu0 0
        %2935 = vmatpush1.bf16.msra.mxu0 %v2913
        %2936 = vmatprep.subr.bf16.mxu0 0
        %2937 = vmatpush1.bf16.msra.mxu0 %v2914
        %2938 = vmatprep.subr.bf16.mxu0 0
        %2939 = vmatpush1.bf16.msra.mxu0 %v2915
        %2940 = vmatprep.subr.bf16.mxu0 0
        %2941 = vmatpush1.bf16.msra.mxu0 0
        %2942 = vmatprep.subr.bf16.mxu0 0
        %2943 = vmatpush1.bf16.msra.mxu0 0
        %2944 = vmatprep.subr.bf16.mxu0 0
        %2945 = vmatpush1.bf16.msra.mxu0 0
        %2946 = vmatprep.subr.bf16.mxu0 0
        %2947 = vmatpush1.bf16.msra.mxu0 0
        %2948 = vmatprep.subr.bf16.mxu0 0
        %2949 = vmatpush1.bf16.msra.mxu0 0
        %2950 = vmatprep.subr.bf16.mxu0 0
        %2951 = vmatpush1.bf16.msra.mxu0 0
        %2952 = vmatprep.subr.bf16.mxu0 0
        %2953 = vmatpush1.bf16.msra.mxu0 0
        %2954 = vmatprep.subr.bf16.mxu0 0
        %2955 = vmatpush1.bf16.msra.mxu0 0
        %2956 = vmatprep.mubr.bf16.mxu0 0
        %2957 = vmatmul.mubr.bf16.gmra.mrb[0].mxu0 %v2852
        %v2958 = vpop.f32.mrb[0].mxu0
        %v2959 = vadd.f32 %v2874, %v2958
        %v2960 = vpop.f32.mrb[0].mxu0
        %v2961 = vpop.f32.mrb[0].mxu0
        %v2962 = vpop.f32.mrb[0].mxu0
        %2963 = vdwg.mxu0
        %v2964 = vadd.f32 %v2739, %v2959
        %2965 = vst [vmem:[%s915] sm:$0xff] %v2964
        %s2966 = sand.u32 %s528, 1
        %s2967 = scalar_lea.sflag [#allocation4], %s2966
        %s2968 = sand.u32 %s528, 1
        %s2969 = smul.addr %s2968, 8
        %s2970 = scalar_lea.vmem [#allocation26], %s2969
        // Predicated region
        $region169: #{tpu_custom_call.1} parent=107 // pred_check
          %p2971 = pneg %p538
        $region170: #{tpu_custom_call.1} parent=107 // pred_check_branch
          %2973 = sbr.rel (%p2971) target = $region172
        $region171: #{tpu_custom_call.1} parent=107 // pred_region
          %s2975 = ssub.s32 128, 128
          %2976 = vsyncadd %s2967, %s2975
          %s2977 = smul.addr %s48, 128
          %s2978 = scalar_lea.hbm %s22, %s2977
          %s2980 = sshll.u32 %s2970, 4
          %s2981 = int_to_ptr.vmem [resolvable:$true] %s2980
          %2983 = dma.vmem_to_hbm [thread:$0]  %s2981, 128, %s2978, %s2967
        $region172: #{tpu_custom_call.1} parent=107 // pred_fallthru
          _
      $region108: #{tpu_custom_call.1} parent=5 // pred_fallthru
        _
      %p2984 = scmp.le.s32.totalorder 2, %s43
      // Predicated region
      $region173: #{tpu_custom_call.1} parent=5 // pred_check
        %p2985 = pneg %p2984
      $region174: #{tpu_custom_call.1} parent=5 // pred_check_branch
        %2987 = sbr.rel (%p2985) target = $region176
      $region175: #{tpu_custom_call.1} parent=5 // pred_region
        %s2988 = ssub.s32 %s43, 2
        // Predicated region
        $region177: #{tpu_custom_call.1} parent=175 // pred_check
          %p2989 = pneg %p544
        $region178: #{tpu_custom_call.1} parent=175 // pred_check_branch
          %2991 = sbr.rel (%p2989) target = $region180
        $region179: #{tpu_custom_call.1} parent=175 // pred_region
          %s2992 = sand.u32 %s529, 1
          %s2993 = scalar_lea.sflag [#allocation4], %s2992
          %s2994 = sand.u32 %s529, 1
          %s2995 = smul.addr %s2994, 8
          %s2996 = scalar_lea.vmem [#allocation26], %s2995
          %2997 = dma.done %s2993, 128
        $region180: #{tpu_custom_call.1} parent=175 // pred_fallthru
          _
      $region176: #{tpu_custom_call.1} parent=5 // pred_fallthru
        _
    $region6: #{tpu_custom_call.1} parent=1 // loop_footer
      %s47 = sadd.s32 1, %s43
    $region7: #{tpu_custom_call.1} parent=1 // loop_footer_branch
      %42 = sbr.rel target = $region3
    $region8: #{tpu_custom_call.1} parent=1 // loop_exit
      _
    %2998 = vsyncpa [#allocation3], 1
    %s2999 = scalar_lea.sflag [#allocation3], 1
    %3000 = vsyncpa %s2999, 1
    %3001 = vsyncpa [#allocation6], 1
    %s3002 = scalar_lea.sflag [#allocation6], 1
    %3003 = vsyncpa %s3002, 1
    %3004 = vsyncpa [#allocation9], 1
    %3005 = vsyncpa [#allocation12], 1
    %3006 = vsyncpa [#allocation15], 1
    %3007 = vsyncpa [#allocation18], 1
    %3008 = vsyncpa [#allocation21], 1
    %3009 = vsyncpa [#allocation24], 1
    %3010 = vsyncpa [#allocation4], 1
    %s3011 = scalar_lea.sflag [#allocation4], 1
    %3012 = vsyncpa %s3011, 1

// kernel: tpu_custom_call.1
$region0: #{tpu_custom_call.1}
  #allocation0 [shape = 'u32[]', space=smem, size = 0x4, offset = 0x4, fixed_abs, tag = 'smem constant byte address 0x4 - core index']
  #allocation1 [shape = 'u32[144,128]{1,0:T(1,128)}', space=vmem, size = 0x12000, scoped, tag = 'internal scratch']
  %s0 = inlined_call_operand.hbm [shape: bf16[16,128], index: 0, kind: input, shape index: {}]
  %s1 = inlined_call_operand.hbm [shape: bf16[16,128], index: 1, kind: input, shape index: {}]
  %s2 = inlined_call_operand.hbm [shape: bf16[128,128], index: 2, kind: input, shape index: {}]
  %s3 = inlined_call_operand.hbm [shape: bf16[128,128], index: 3, kind: input, shape index: {}]
  %s4 = inlined_call_operand.hbm [shape: bf16[128,128], index: 4, kind: input, shape index: {}]
  %s5 = inlined_call_operand.vmem [shape: f32[1,128], index: 5, kind: input, shape index: {}]
  %s6 = inlined_call_operand.vmem [shape: f32[1,128], index: 6, kind: input, shape index: {}]
  %s7 = inlined_call_operand.vmem [shape: f32[1,128], index: 7, kind: input, shape index: {}]
  %s8 = inlined_call_operand.hbm [shape: bf16[128,128], index: 8, kind: input, shape index: {}]
  %s9 = inlined_call_operand.vmem [shape: f32[1,128], index: 9, kind: input, shape index: {}]
  %s10 = inlined_call_operand.hbm [shape: bf16[128,128], index: 10, kind: input, shape index: {}]
  %s11 = inlined_call_operand.hbm [shape: bf16[128,128], index: 11, kind: input, shape index: {}]
  %s12 = inlined_call_operand.hbm [shape: bf16[128,128], index: 12, kind: input, shape index: {}]
  %s13 = inlined_call_operand.hbm [shape: f32[1,128], index: 13, kind: input, shape index: {}]
  %s14 = inlined_call_operand.hbm [shape: f32[1,128], index: 14, kind: input, shape index: {}]
  %s15 = inlined_call_operand.hbm [shape: f32[1,128], index: 15, kind: input, shape index: {}]
  %s16 = inlined_call_operand.hbm [shape: bf16[128,128], index: 16, kind: input, shape index: {}]
  %s17 = inlined_call_operand.hbm [shape: f32[1,128], index: 17, kind: input, shape index: {}]
  %s18 = inlined_call_operand.vmem [shape: bf16[128,128], index: 18, kind: input, shape index: {}]
  %s19 = inlined_call_operand.vmem [shape: f32[1,128], index: 19, kind: input, shape index: {}]
  %s20 = inlined_call_operand.hbm [shape: bf16[128,128], index: 20, kind: input, shape index: {}]
  %s21 = inlined_call_operand.vmem [shape: f32[1,128], index: 21, kind: input, shape index: {}]
  %s22 = inlined_call_operand.hbm [shape: f32[16,128], index: 22, kind: output, shape index: {}]
  %s23 = sld [smem:[#allocation0]]
  $region181: #{tpu_custom_call.1} parent=0
    _
  %s25 = ssub.s32 1, %s23
  %s26 = scalar_select 0, %s25, %s23
  $region1: #{tpu_custom_call.1} parent=0
    #allocation2 [shape = 'u8[4096]{0}', space=vmem, size = 0x1000, scoped, tag = 'input window, operand 0']
    #allocation3 [shape = 's32[2]{0}', space=sflag, size = 0x8, scoped, tag = 'scoped memory for tpu_custom_call.1']
    #allocation4 [shape = 's32[2]{0}', space=sflag, size = 0x8, scoped, tag = 'scoped memory for tpu_custom_call.1']
    #allocation5 [shape = 'u8[4096]{0}', space=vmem, size = 0x1000, scoped, tag = 'input window, operand 1']
    #allocation6 [shape = 's32[2]{0}', space=sflag, size = 0x8, scoped, tag = 'scoped memory for tpu_custom_call.1']
    #allocation7 [shape = 'u8[32768]{0}', space=vmem, size = 0x8000, scoped, tag = 'input window, operand 2, single buffered']
    #allocation8 [shape = 'u8[32768]{0}', space=vmem, size = 0x8000, scoped, tag = 'input window, operand 3, single buffered']
    #allocation9 [shape = 's32[1]{0}', space=sflag, size = 0x4, scoped, tag = 'scoped memory for tpu_custom_call.1']
    #allocation10 [shape = 'u8[32768]{0}', space=vmem, size = 0x8000, scoped, tag = 'input window, operand 4, single buffered']
    #allocation11 [shape = 'u8[32768]{0}', space=vmem, size = 0x8000, scoped, tag = 'input window, operand 8, single buffered']
    #allocation12 [shape = 's32[1]{0}', space=sflag, size = 0x4, scoped, tag = 'scoped memory for tpu_custom_call.1']
    #allocation13 [shape = 'u8[32768]{0}', space=vmem, size = 0x8000, scoped, tag = 'input window, operand 10, single buffered']
    #allocation14 [shape = 'u8[32768]{0}', space=vmem, size = 0x8000, scoped, tag = 'input window, operand 11, single buffered']
    #allocation15 [shape = 's32[1]{0}', space=sflag, size = 0x4, scoped, tag = 'scoped memory for tpu_custom_call.1']
    #allocation16 [shape = 'u8[32768]{0}', space=vmem, size = 0x8000, scoped, tag = 'input window, operand 12, single buffered']
    #allocation17 [shape = 'u8[512]{0}', space=vmem, size = 0x400, scoped, tag = 'input window, operand 13, single buffered']
    #allocation18 [shape = 's32[1]{0}', space=sflag, size = 0x4, scoped, tag = 'scoped memory for tpu_custom_call.1']
    #allocation19 [shape = 'u8[512]{0}', space=vmem, size = 0x400, scoped, tag = 'input window, operand 14, single buffered']
    #allocation20 [shape = 'u8[512]{0}', space=vmem, size = 0x400, scoped, tag = 'input window, operand 15, single buffered']
    #allocation21 [shape = 's32[1]{0}', space=sflag, size = 0x4, scoped, tag = 'scoped memory for tpu_custom_call.1']
    #allocation22 [shape = 'u8[32768]{0}', space=vmem, size = 0x8000, scoped, tag = 'input window, operand 16, single buffered']
    #allocation23 [shape = 'u8[512]{0}', space=vmem, size = 0x400, scoped, tag = 'input window, operand 17, single buffered']
    #allocation24 [shape = 's32[1]{0}', space=sflag, size = 0x4, scoped, tag = 'scoped memory for tpu_custom_call.1']
    #allocation25 [shape = 'u8[32768]{0}', space=vmem, size = 0x8000, scoped, tag = 'input window, operand 20, single buffered']
    #allocation26 [shape = 'u8[8192]{0}', space=vmem, size = 0x2000, scoped, tag = 'output window, operand 0']
    %27 = vsyncpa [#allocation3], 0
    %s28 = scalar_lea.sflag [#allocation3], 1
    %29 = vsyncpa %s28, 0
    %30 = vsyncpa [#allocation6], 0
    %s31 = scalar_lea.sflag [#allocation6], 1
    %32 = vsyncpa %s31, 0
    %33 = vsyncpa [#allocation9], 0
    %34 = vsyncpa [#allocation12], 0
    %35 = vsyncpa [#allocation15], 0
    %36 = vsyncpa [#allocation18], 0
    %37 = vsyncpa [#allocation21], 0
    %38 = vsyncpa [#allocation24], 0
    %39 = vsyncpa [#allocation4], 0
    %s40 = scalar_lea.sflag [#allocation4], 1
    %41 = vsyncpa %s40, 0
    loop: start=0, step=1, limit=4
    $region2: #{tpu_custom_call.1} parent=1 // loop_pre_header
      _
    $region3: #{tpu_custom_call.1} parent=1 // loop_header
      %s43 = sphi 0, %s47
      %p44 = scmp.ge.s32.totalorder %s43, 4
      %s53 = sphi 0, %s55
      %s56 = sphi 0, %s53
      %s57 = sphi 0, %s56
      %s73 = sphi 0, %s57
      %s79 = sphi 0, %s81
      %s82 = sphi 0, %s79
      %s83 = sphi 0, %s82
      %s99 = sphi 0, %s83
      %s103 = sphi 0, %s103
      %s105 = sphi 0, %s103
      %s106 = sphi 0, %s105
      %s120 = sphi 0, %s106
      %s124 = sphi 0, %s124
      %s126 = sphi 0, %s124
      %s127 = sphi 0, %s126
      %s141 = sphi 0, %s127
      %s145 = sphi 0, %s145
      %s147 = sphi 0, %s145
      %s148 = sphi 0, %s147
      %s162 = sphi 0, %s148
      %s166 = sphi 0, %s166
      %s168 = sphi 0, %s166
      %s169 = sphi 0, %s168
      %s183 = sphi 0, %s169
      %s187 = sphi 0, %s187
      %s189 = sphi 0, %s187
      %s190 = sphi 0, %s189
      %s204 = sphi 0, %s190
      %s208 = sphi 0, %s208
      %s210 = sphi 0, %s208
      %s211 = sphi 0, %s210
      %s225 = sphi 0, %s211
      %s229 = sphi 0, %s229
      %s231 = sphi 0, %s229
      %s232 = sphi 0, %s231
      %s246 = sphi 0, %s232
      %s250 = sphi 0, %s250
      %s252 = sphi 0, %s250
      %s253 = sphi 0, %s252
      %s267 = sphi 0, %s253
      %s271 = sphi 0, %s271
      %s273 = sphi 0, %s271
      %s274 = sphi 0, %s273
      %s288 = sphi 0, %s274
      %s292 = sphi 0, %s292
      %s294 = sphi 0, %s292
      %s295 = sphi 0, %s294
      %s309 = sphi 0, %s295
      %s313 = sphi 0, %s313
      %s315 = sphi 0, %s313
      %s316 = sphi 0, %s315
      %s330 = sphi 0, %s316
      %s334 = sphi 0, %s334
      %s336 = sphi 0, %s334
      %s337 = sphi 0, %s336
      %s351 = sphi 0, %s337
      %s355 = sphi 0, %s355
      %s357 = sphi 0, %s355
      %s358 = sphi 0, %s357
      %s372 = sphi 0, %s358
      %s376 = sphi 0, %s376
      %s378 = sphi 0, %s376
      %s379 = sphi 0, %s378
      %s393 = sphi 0, %s379
      %s397 = sphi 0, %s397
      %s399 = sphi 0, %s397
      %s400 = sphi 0, %s399
      %s414 = sphi 0, %s400
      %s418 = sphi 0, %s418
      %s420 = sphi 0, %s418
      %s421 = sphi 0, %s420
      %s435 = sphi 0, %s421
      %s439 = sphi 0, %s439
      %s441 = sphi 0, %s439
      %s442 = sphi 0, %s441
      %s456 = sphi 0, %s442
      %s460 = sphi 0, %s460
      %s462 = sphi 0, %s460
      %s463 = sphi 0, %s462
      %s477 = sphi 0, %s463
      %s481 = sphi 0, %s481
      %s483 = sphi 0, %s481
      %s484 = sphi 0, %s483
      %s498 = sphi 0, %s484
      %s502 = sphi 0, %s502
      %s504 = sphi 0, %s502
      %s505 = sphi 0, %s504
      %s519 = sphi 0, %s505
      %s525 = sphi 0, %s527
      %s528 = sphi 0, %s525
      %s529 = sphi 0, %s528
      %s545 = sphi 0, %s529
    $region4: #{tpu_custom_call.1} parent=1 // loop_header_branch
      %46 = sbr.rel (%p44) target = $region8
    $region5: #{tpu_custom_call.1} parent=1 // loop_body
      %s48 = ssub.s32 %s43, 1
      %s49 = ssub.s32 %s43, 2
      %s50 = sadd.s32 %s43, 1
      %s51 = ssub.s32 %s43, %s50
      %p52 = scmp.eq.s32.totalorder %s51, 0
      %s54 = sadd.s32 %s53, 1
      %s55 = scalar_select %p52, %s53, %s54
      %p58 = pneg %p52
      %p59 = scmp.eq.s32.totalorder %s43, 1
      %p60 = por %p58, %p59
      %p61 = scmp.ne.s32.totalorder %s53, %s56
      %p62 = scmp.eq.s32.totalorder %s43, 0
      %p63 = por %p61, %p62
      %p64 = scmp.ne.s32.totalorder %s53, %s56
      %p65 = scmp.eq.s32.totalorder %s48, 1
      %p66 = por %p64, %p65
      %p67 = scmp.ne.s32.totalorder %s56, %s57
      %p68 = scmp.eq.s32.totalorder %s48, 0
      %p69 = por %p67, %p68
      %p70 = scmp.ne.s32.totalorder %s56, %s57
      %p71 = scmp.eq.s32.totalorder %s49, 1
      %p72 = por %p70, %p71
      %p74 = scmp.ne.s32.totalorder %s57, %s73
      %p75 = scmp.eq.s32.totalorder %s49, 0
      %p76 = por %p74, %p75
      %s77 = ssub.s32 %s43, %s50
      %p78 = scmp.eq.s32.totalorder %s77, 0
      %s80 = sadd.s32 %s79, 1
      %s81 = scalar_select %p78, %s79, %s80
      %p84 = pneg %p78
      %p85 = scmp.eq.s32.totalorder %s43, 1
      %p86 = por %p84, %p85
      %p87 = scmp.ne.s32.totalorder %s79, %s82
      %p88 = scmp.eq.s32.totalorder %s43, 0
      %p89 = por %p87, %p88
      %p90 = scmp.ne.s32.totalorder %s79, %s82
      %p91 = scmp.eq.s32.totalorder %s48, 1
      %p92 = por %p90, %p91
      %p93 = scmp.ne.s32.totalorder %s82, %s83
      %p94 = scmp.eq.s32.totalorder %s48, 0
      %p95 = por %p93, %p94
      %p96 = scmp.ne.s32.totalorder %s82, %s83
      %p97 = scmp.eq.s32.totalorder %s49, 1
      %p98 = por %p96, %p97
      %p100 = scmp.ne.s32.totalorder %s83, %s99
      %p101 = scmp.eq.s32.totalorder %s49, 0
      %p102 = por %p100, %p101
      %s104 = sadd.s32 %s103, 1
      %p107 = scmp.eq.s32.totalorder %s43, 1
      %p108 = scmp.ne.s32.totalorder %s103, %s105
      %p109 = scmp.eq.s32.totalorder %s43, 0
      %p110 = por %p108, %p109
      %p111 = scmp.ne.s32.totalorder %s103, %s105
      %p112 = scmp.eq.s32.totalorder %s48, 1
      %p113 = por %p111, %p112
      %p114 = scmp.ne.s32.totalorder %s105, %s106
      %p115 = scmp.eq.s32.totalorder %s48, 0
      %p116 = por %p114, %p115
      %p117 = scmp.ne.s32.totalorder %s105, %s106
      %p118 = scmp.eq.s32.totalorder %s49, 1
      %p119 = por %p117, %p118
      %p121 = scmp.ne.s32.totalorder %s106, %s120
      %p122 = scmp.eq.s32.totalorder %s49, 0
      %p123 = por %p121, %p122
      %s125 = sadd.s32 %s124, 1
      %p128 = scmp.eq.s32.totalorder %s43, 1
      %p129 = scmp.ne.s32.totalorder %s124, %s126
      %p130 = scmp.eq.s32.totalorder %s43, 0
      %p131 = por %p129, %p130
      %p132 = scmp.ne.s32.totalorder %s124, %s126
      %p133 = scmp.eq.s32.totalorder %s48, 1
      %p134 = por %p132, %p133
      %p135 = scmp.ne.s32.totalorder %s126, %s127
      %p136 = scmp.eq.s32.totalorder %s48, 0
      %p137 = por %p135, %p136
      %p138 = scmp.ne.s32.totalorder %s126, %s127
      %p139 = scmp.eq.s32.totalorder %s49, 1
      %p140 = por %p138, %p139
      %p142 = scmp.ne.s32.totalorder %s127, %s141
      %p143 = scmp.eq.s32.totalorder %s49, 0
      %p144 = por %p142, %p143
      %s146 = sadd.s32 %s145, 1
      %p149 = scmp.eq.s32.totalorder %s43, 1
      %p150 = scmp.ne.s32.totalorder %s145, %s147
      %p151 = scmp.eq.s32.totalorder %s43, 0
      %p152 = por %p150, %p151
      %p153 = scmp.ne.s32.totalorder %s145, %s147
      %p154 = scmp.eq.s32.totalorder %s48, 1
      %p155 = por %p153, %p154
      %p156 = scmp.ne.s32.totalorder %s147, %s148
      %p157 = scmp.eq.s32.totalorder %s48, 0
      %p158 = por %p156, %p157
      %p159 = scmp.ne.s32.totalorder %s147, %s148
      %p160 = scmp.eq.s32.totalorder %s49, 1
      %p161 = por %p159, %p160
      %p163 = scmp.ne.s32.totalorder %s148, %s162
      %p164 = scmp.eq.s32.totalorder %s49, 0
      %p165 = por %p163, %p164
      %s167 = sadd.s32 %s166, 1
      %p170 = scmp.eq.s32.totalorder %s43, 1
      %p171 = scmp.ne.s32.totalorder %s166, %s168
      %p172 = scmp.eq.s32.totalorder %s43, 0
      %p173 = por %p171, %p172
      %p174 = scmp.ne.s32.totalorder %s166, %s168
      %p175 = scmp.eq.s32.totalorder %s48, 1
      %p176 = por %p174, %p175
      %p177 = scmp.ne.s32.totalorder %s168, %s169
      %p178 = scmp.eq.s32.totalorder %s48, 0
      %p179 = por %p177, %p178
      %p180 = scmp.ne.s32.totalorder %s168, %s169
      %p181 = scmp.eq.s32.totalorder %s49, 1
      %p182 = por %p180, %p181
      %p184 = scmp.ne.s32.totalorder %s169, %s183
      %p185 = scmp.eq.s32.totalorder %s49, 0
      %p186 = por %p184, %p185
      %s188 = sadd.s32 %s187, 1
      %p191 = scmp.eq.s32.totalorder %s43, 1
      %p192 = scmp.ne.s32.totalorder %s187, %s189
      %p193 = scmp.eq.s32.totalorder %s43, 0
      %p194 = por %p192, %p193
      %p195 = scmp.ne.s32.totalorder %s187, %s189
      %p196 = scmp.eq.s32.totalorder %s48, 1
      %p197 = por %p195, %p196
      %p198 = scmp.ne.s32.totalorder %s189, %s190
      %p199 = scmp.eq.s32.totalorder %s48, 0
      %p200 = por %p198, %p199
      %p201 = scmp.ne.s32.totalorder %s189, %s190
      %p202 = scmp.eq.s32.totalorder %s49, 1
      %p203 = por %p201, %p202
      %p205 = scmp.ne.s32.totalorder %s190, %s204
      %p206 = scmp.eq.s32.totalorder %s49, 0
      %p207 = por %p205, %p206
      %s209 = sadd.s32 %s208, 1
      %p212 = scmp.eq.s32.totalorder %s43, 1
      %p213 = scmp.ne.s32.totalorder %s208, %s210
      %p214 = scmp.eq.s32.totalorder %s43, 0
      %p215 = por %p213, %p214
      %p216 = scmp.ne.s32.totalorder %s208, %s210
      %p217 = scmp.eq.s32.totalorder %s48, 1
      %p218 = por %p216, %p217
      %p219 = scmp.ne.s32.totalorder %s210, %s211
      %p220 = scmp.eq.s32.totalorder %s48, 0
      %p221 = por %p219, %p220
      %p222 = scmp.ne.s32.totalorder %s210, %s211
      %p223 = scmp.eq.s32.totalorder %s49, 1
      %p224 = por %p222, %p223
      %p226 = scmp.ne.s32.totalorder %s211, %s225
      %p227 = scmp.eq.s32.totalorder %s49, 0
      %p228 = por %p226, %p227
      %s230 = sadd.s32 %s229, 1
      %p233 = scmp.eq.s32.totalorder %s43, 1
      %p234 = scmp.ne.s32.totalorder %s229, %s231
      %p235 = scmp.eq.s32.totalorder %s43, 0
      %p236 = por %p234, %p235
      %p237 = scmp.ne.s32.totalorder %s229, %s231
      %p238 = scmp.eq.s32.totalorder %s48, 1
      %p239 = por %p237, %p238
      %p240 = scmp.ne.s32.totalorder %s231, %s232
      %p241 = scmp.eq.s32.totalorder %s48, 0
      %p242 = por %p240, %p241
      %p243 = scmp.ne.s32.totalorder %s231, %s232
      %p244 = scmp.eq.s32.totalorder %s49, 1
      %p245 = por %p243, %p244
      %p247 = scmp.ne.s32.totalorder %s232, %s246
      %p248 = scmp.eq.s32.totalorder %s49, 0
      %p249 = por %p247, %p248
      %s251 = sadd.s32 %s250, 1
      %p254 = scmp.eq.s32.totalorder %s43, 1
      %p255 = scmp.ne.s32.totalorder %s250, %s252
      %p256 = scmp.eq.s32.totalorder %s43, 0
      %p257 = por %p255, %p256
      %p258 = scmp.ne.s32.totalorder %s250, %s252
      %p259 = scmp.eq.s32.totalorder %s48, 1
      %p260 = por %p258, %p259
      %p261 = scmp.ne.s32.totalorder %s252, %s253
      %p262 = scmp.eq.s32.totalorder %s48, 0
      %p263 = por %p261, %p262
      %p264 = scmp.ne.s32.totalorder %s252, %s253
      %p265 = scmp.eq.s32.totalorder %s49, 1
      %p266 = por %p264, %p265
      %p268 = scmp.ne.s32.totalorder %s253, %s267
      %p269 = scmp.eq.s32.totalorder %s49, 0
      %p270 = por %p268, %p269
      %s272 = sadd.s32 %s271, 1
      %p275 = scmp.eq.s32.totalorder %s43, 1
      %p276 = scmp.ne.s32.totalorder %s271, %s273
      %p277 = scmp.eq.s32.totalorder %s43, 0
      %p278 = por %p276, %p277
      %p279 = scmp.ne.s32.totalorder %s271, %s273
      %p280 = scmp.eq.s32.totalorder %s48, 1
      %p281 = por %p279, %p280
      %p282 = scmp.ne.s32.totalorder %s273, %s274
      %p283 = scmp.eq.s32.totalorder %s48, 0
      %p284 = por %p282, %p283
      %p285 = scmp.ne.s32.totalorder %s273, %s274
      %p286 = scmp.eq.s32.totalorder %s49, 1
      %p287 = por %p285, %p286
      %p289 = scmp.ne.s32.totalorder %s274, %s288
      %p290 = scmp.eq.s32.totalorder %s49, 0
      %p291 = por %p289, %p290
      %s293 = sadd.s32 %s292, 1
      %p296 = scmp.eq.s32.totalorder %s43, 1
      %p297 = scmp.ne.s32.totalorder %s292, %s294
      %p298 = scmp.eq.s32.totalorder %s43, 0
      %p299 = por %p297, %p298
      %p300 = scmp.ne.s32.totalorder %s292, %s294
      %p301 = scmp.eq.s32.totalorder %s48, 1
      %p302 = por %p300, %p301
      %p303 = scmp.ne.s32.totalorder %s294, %s295
      %p304 = scmp.eq.s32.totalorder %s48, 0
      %p305 = por %p303, %p304
      %p306 = scmp.ne.s32.totalorder %s294, %s295
      %p307 = scmp.eq.s32.totalorder %s49, 1
      %p308 = por %p306, %p307
      %p310 = scmp.ne.s32.totalorder %s295, %s309
      %p311 = scmp.eq.s32.totalorder %s49, 0
      %p312 = por %p310, %p311
      %s314 = sadd.s32 %s313, 1
      %p317 = scmp.eq.s32.totalorder %s43, 1
      %p318 = scmp.ne.s32.totalorder %s313, %s315
      %p319 = scmp.eq.s32.totalorder %s43, 0
      %p320 = por %p318, %p319
      %p321 = scmp.ne.s32.totalorder %s313, %s315
      %p322 = scmp.eq.s32.totalorder %s48, 1
      %p323 = por %p321, %p322
      %p324 = scmp.ne.s32.totalorder %s315, %s316
      %p325 = scmp.eq.s32.totalorder %s48, 0
      %p326 = por %p324, %p325
      %p327 = scmp.ne.s32.totalorder %s315, %s316
      %p328 = scmp.eq.s32.totalorder %s49, 1
      %p329 = por %p327, %p328
      %p331 = scmp.ne.s32.totalorder %s316, %s330
      %p332 = scmp.eq.s32.totalorder %s49, 0
      %p333 = por %p331, %p332
      %s335 = sadd.s32 %s334, 1
      %p338 = scmp.eq.s32.totalorder %s43, 1
      %p339 = scmp.ne.s32.totalorder %s334, %s336
      %p340 = scmp.eq.s32.totalorder %s43, 0
      %p341 = por %p339, %p340
      %p342 = scmp.ne.s32.totalorder %s334, %s336
      %p343 = scmp.eq.s32.totalorder %s48, 1
      %p344 = por %p342, %p343
      %p345 = scmp.ne.s32.totalorder %s336, %s337
      %p346 = scmp.eq.s32.totalorder %s48, 0
      %p347 = por %p345, %p346
      %p348 = scmp.ne.s32.totalorder %s336, %s337
      %p349 = scmp.eq.s32.totalorder %s49, 1
      %p350 = por %p348, %p349
      %p352 = scmp.ne.s32.totalorder %s337, %s351
      %p353 = scmp.eq.s32.totalorder %s49, 0
      %p354 = por %p352, %p353
      %s356 = sadd.s32 %s355, 1
      %p359 = scmp.eq.s32.totalorder %s43, 1
      %p360 = scmp.ne.s32.totalorder %s355, %s357
      %p361 = scmp.eq.s32.totalorder %s43, 0
      %p362 = por %p360, %p361
      %p363 = scmp.ne.s32.totalorder %s355, %s357
      %p364 = scmp.eq.s32.totalorder %s48, 1
      %p365 = por %p363, %p364
      %p366 = scmp.ne.s32.totalorder %s357, %s358
      %p367 = scmp.eq.s32.totalorder %s48, 0
      %p368 = por %p366, %p367
      %p369 = scmp.ne.s32.totalorder %s357, %s358
      %p370 = scmp.eq.s32.totalorder %s49, 1
      %p371 = por %p369, %p370
      %p373 = scmp.ne.s32.totalorder %s358, %s372
      %p374 = scmp.eq.s32.totalorder %s49, 0
      %p375 = por %p373, %p374
      %s377 = sadd.s32 %s376, 1
      %p380 = scmp.eq.s32.totalorder %s43, 1
      %p381 = scmp.ne.s32.totalorder %s376, %s378
      %p382 = scmp.eq.s32.totalorder %s43, 0
      %p383 = por %p381, %p382
      %p384 = scmp.ne.s32.totalorder %s376, %s378
      %p385 = scmp.eq.s32.totalorder %s48, 1
      %p386 = por %p384, %p385
      %p387 = scmp.ne.s32.totalorder %s378, %s379
      %p388 = scmp.eq.s32.totalorder %s48, 0
      %p389 = por %p387, %p388
      %p390 = scmp.ne.s32.totalorder %s378, %s379
      %p391 = scmp.eq.s32.totalorder %s49, 1
      %p392 = por %p390, %p391
      %p394 = scmp.ne.s32.totalorder %s379, %s393
      %p395 = scmp.eq.s32.totalorder %s49, 0
      %p396 = por %p394, %p395
      %s398 = sadd.s32 %s397, 1
      %p401 = scmp.eq.s32.totalorder %s43, 1
      %p402 = scmp.ne.s32.totalorder %s397, %s399
      %p403 = scmp.eq.s32.totalorder %s43, 0
      %p404 = por %p402, %p403
      %p405 = scmp.ne.s32.totalorder %s397, %s399
      %p406 = scmp.eq.s32.totalorder %s48, 1
      %p407 = por %p405, %p406
      %p408 = scmp.ne.s32.totalorder %s399, %s400
      %p409 = scmp.eq.s32.totalorder %s48, 0
      %p410 = por %p408, %p409
      %p411 = scmp.ne.s32.totalorder %s399, %s400
      %p412 = scmp.eq.s32.totalorder %s49, 1
      %p413 = por %p411, %p412
      %p415 = scmp.ne.s32.totalorder %s400, %s414
      %p416 = scmp.eq.s32.totalorder %s49, 0
      %p417 = por %p415, %p416
      %s419 = sadd.s32 %s418, 1
      %p422 = scmp.eq.s32.totalorder %s43, 1
      %p423 = scmp.ne.s32.totalorder %s418, %s420
      %p424 = scmp.eq.s32.totalorder %s43, 0
      %p425 = por %p423, %p424
      %p426 = scmp.ne.s32.totalorder %s418, %s420
      %p427 = scmp.eq.s32.totalorder %s48, 1
      %p428 = por %p426, %p427
      %p429 = scmp.ne.s32.totalorder %s420, %s421
      %p430 = scmp.eq.s32.totalorder %s48, 0
      %p431 = por %p429, %p430
      %p432 = scmp.ne.s32.totalorder %s420, %s421
      %p433 = scmp.eq.s32.totalorder %s49, 1
      %p434 = por %p432, %p433
      %p436 = scmp.ne.s32.totalorder %s421, %s435
      %p437 = scmp.eq.s32.totalorder %s49, 0
      %p438 = por %p436, %p437
      %s440 = sadd.s32 %s439, 1
      %p443 = scmp.eq.s32.totalorder %s43, 1
      %p444 = scmp.ne.s32.totalorder %s439, %s441
      %p445 = scmp.eq.s32.totalorder %s43, 0
      %p446 = por %p444, %p445
      %p447 = scmp.ne.s32.totalorder %s439, %s441
      %p448 = scmp.eq.s32.totalorder %s48, 1
      %p449 = por %p447, %p448
      %p450 = scmp.ne.s32.totalorder %s441, %s442
      %p451 = scmp.eq.s32.totalorder %s48, 0
      %p452 = por %p450, %p451
      %p453 = scmp.ne.s32.totalorder %s441, %s442
      %p454 = scmp.eq.s32.totalorder %s49, 1
      %p455 = por %p453, %p454
      %p457 = scmp.ne.s32.totalorder %s442, %s456
      %p458 = scmp.eq.s32.totalorder %s49, 0
      %p459 = por %p457, %p458
      %s461 = sadd.s32 %s460, 1
      %p464 = scmp.eq.s32.totalorder %s43, 1
      %p465 = scmp.ne.s32.totalorder %s460, %s462
      %p466 = scmp.eq.s32.totalorder %s43, 0
      %p467 = por %p465, %p466
      %p468 = scmp.ne.s32.totalorder %s460, %s462
      %p469 = scmp.eq.s32.totalorder %s48, 1
      %p470 = por %p468, %p469
      %p471 = scmp.ne.s32.totalorder %s462, %s463
      %p472 = scmp.eq.s32.totalorder %s48, 0
      %p473 = por %p471, %p472
      %p474 = scmp.ne.s32.totalorder %s462, %s463
      %p475 = scmp.eq.s32.totalorder %s49, 1
      %p476 = por %p474, %p475
      %p478 = scmp.ne.s32.totalorder %s463, %s477
      %p479 = scmp.eq.s32.totalorder %s49, 0
      %p480 = por %p478, %p479
      %s482 = sadd.s32 %s481, 1
      %p485 = scmp.eq.s32.totalorder %s43, 1
      %p486 = scmp.ne.s32.totalorder %s481, %s483
      %p487 = scmp.eq.s32.totalorder %s43, 0
      %p488 = por %p486, %p487
      %p489 = scmp.ne.s32.totalorder %s481, %s483
      %p490 = scmp.eq.s32.totalorder %s48, 1
      %p491 = por %p489, %p490
      %p492 = scmp.ne.s32.totalorder %s483, %s484
      %p493 = scmp.eq.s32.totalorder %s48, 0
      %p494 = por %p492, %p493
      %p495 = scmp.ne.s32.totalorder %s483, %s484
      %p496 = scmp.eq.s32.totalorder %s49, 1
      %p497 = por %p495, %p496
      %p499 = scmp.ne.s32.totalorder %s484, %s498
      %p500 = scmp.eq.s32.totalorder %s49, 0
      %p501 = por %p499, %p500
      %s503 = sadd.s32 %s502, 1
      %p506 = scmp.eq.s32.totalorder %s43, 1
      %p507 = scmp.ne.s32.totalorder %s502, %s504
      %p508 = scmp.eq.s32.totalorder %s43, 0
      %p509 = por %p507, %p508
      %p510 = scmp.ne.s32.totalorder %s502, %s504
      %p511 = scmp.eq.s32.totalorder %s48, 1
      %p512 = por %p510, %p511
      %p513 = scmp.ne.s32.totalorder %s504, %s505
      %p514 = scmp.eq.s32.totalorder %s48, 0
      %p515 = por %p513, %p514
      %p516 = scmp.ne.s32.totalorder %s504, %s505
      %p517 = scmp.eq.s32.totalorder %s49, 1
      %p518 = por %p516, %p517
      %p520 = scmp.ne.s32.totalorder %s505, %s519
      %p521 = scmp.eq.s32.totalorder %s49, 0
      %p522 = por %p520, %p521
      %s523 = ssub.s32 %s43, %s50
      %p524 = scmp.eq.s32.totalorder %s523, 0
      %s526 = sadd.s32 %s525, 1
      %s527 = scalar_select %p524, %s525, %s526
      %p530 = pneg %p524
      %p531 = scmp.eq.s32.totalorder %s43, 1
      %p532 = por %p530, %p531
      %p533 = scmp.ne.s32.totalorder %s525, %s528
      %p534 = scmp.eq.s32.totalorder %s43, 0
      %p535 = por %p533, %p534
      %p536 = scmp.ne.s32.totalorder %s525, %s528
      %p537 = scmp.eq.s32.totalorder %s48, 1
      %p538 = por %p536, %p537
      %p539 = scmp.ne.s32.totalorder %s528, %s529
      %p540 = scmp.eq.s32.totalorder %s48, 0
      %p541 = por %p539, %p540
      %p542 = scmp.ne.s32.totalorder %s528, %s529
      %p543 = scmp.eq.s32.totalorder %s49, 1
      %p544 = por %p542, %p543
      %p546 = scmp.ne.s32.totalorder %s529, %s545
      %p547 = scmp.eq.s32.totalorder %s49, 0
      %p548 = por %p546, %p547
      %p549 = scmp.le.s32.totalorder 1, %s43
      %p550 = scmp.lt.s32.totalorder %s43, 3
      %p551 = pnand %p549, %p550
      %p552 = pneg %p551
      // Predicated region
      $region9: #{tpu_custom_call.1} parent=5 // pred_check
        _
      $region10: #{tpu_custom_call.1} parent=5 // pred_check_branch
        %554 = sbr.rel (%p551) target = $region12
      $region11: #{tpu_custom_call.1} parent=5 // pred_region
        %s555 = ssub.s32 %s43, 1
        // Predicated region
        $region13: #{tpu_custom_call.1} parent=11 // pred_check
          %p556 = pneg %p116
        $region14: #{tpu_custom_call.1} parent=11 // pred_check_branch
          %558 = sbr.rel (%p556) target = $region16
        $region15: #{tpu_custom_call.1} parent=11 // pred_region
          %s560 = ssub.s32 1024, 1024
          %561 = vsyncadd [#allocation6], %s560
          %s562 = sshll.u32 [#allocation7], 4
          %s563 = int_to_ptr.vmem [resolvable:$true] %s562
          %568 = dma.hbm_to_vmem [thread:$0]  %s2, 1024, %s563, [#allocation6], 64, 64, 4
        $region16: #{tpu_custom_call.1} parent=11 // pred_fallthru
          _
        // Predicated region
        $region17: #{tpu_custom_call.1} parent=11 // pred_check
          %p569 = pneg %p137
        $region18: #{tpu_custom_call.1} parent=11 // pred_check_branch
          %571 = sbr.rel (%p569) target = $region20
        $region19: #{tpu_custom_call.1} parent=11 // pred_region
          %s573 = ssub.s32 1024, 1024
          %574 = vsyncadd [#allocation9], %s573
          %s575 = sshll.u32 [#allocation8], 4
          %s576 = int_to_ptr.vmem [resolvable:$true] %s575
          %581 = dma.hbm_to_vmem [thread:$0]  %s3, 1024, %s576, [#allocation9], 64, 64, 4
        $region20: #{tpu_custom_call.1} parent=11 // pred_fallthru
          _
        // Predicated region
        $region21: #{tpu_custom_call.1} parent=11 // pred_check
          %p582 = pneg %p158
        $region22: #{tpu_custom_call.1} parent=11 // pred_check_branch
          %584 = sbr.rel (%p582) target = $region24
        $region23: #{tpu_custom_call.1} parent=11 // pred_region
          %s586 = ssub.s32 1024, 1024
          %587 = vsyncadd [#allocation9], %s586
          %s588 = sshll.u32 [#allocation10], 4
          %s589 = int_to_ptr.vmem [resolvable:$true] %s588
          %594 = dma.hbm_to_vmem [thread:$0]  %s4, 1024, %s589, [#allocation9], 64, 64, 4
        $region24: #{tpu_custom_call.1} parent=11 // pred_fallthru
          _
        // Predicated region
        $region25: #{tpu_custom_call.1} parent=11 // pred_check
          %p595 = pneg %p179
        $region26: #{tpu_custom_call.1} parent=11 // pred_check_branch
          %597 = sbr.rel (%p595) target = $region28
        $region27: #{tpu_custom_call.1} parent=11 // pred_region
          _
        $region28: #{tpu_custom_call.1} parent=11 // pred_fallthru
          _
        // Predicated region
        $region29: #{tpu_custom_call.1} parent=11 // pred_check
          %p598 = pneg %p200
        $region30: #{tpu_custom_call.1} parent=11 // pred_check_branch
          %600 = sbr.rel (%p598) target = $region32
        $region31: #{tpu_custom_call.1} parent=11 // pred_region
          _
        $region32: #{tpu_custom_call.1} parent=11 // pred_fallthru
          _
        // Predicated region
        $region33: #{tpu_custom_call.1} parent=11 // pred_check
          %p601 = pneg %p221
        $region34: #{tpu_custom_call.1} parent=11 // pred_check_branch
          %603 = sbr.rel (%p601) target = $region36
        $region35: #{tpu_custom_call.1} parent=11 // pred_region
          _
        $region36: #{tpu_custom_call.1} parent=11 // pred_fallthru
          _
        // Predicated region
        $region37: #{tpu_custom_call.1} parent=11 // pred_check
          %p604 = pneg %p242
        $region38: #{tpu_custom_call.1} parent=11 // pred_check_branch
          %606 = sbr.rel (%p604) target = $region40
        $region39: #{tpu_custom_call.1} parent=11 // pred_region
          %s608 = ssub.s32 1024, 1024
          %609 = vsyncadd [#allocation12], %s608
          %s610 = sshll.u32 [#allocation11], 4
          %s611 = int_to_ptr.vmem [resolvable:$true] %s610
          %616 = dma.hbm_to_vmem [thread:$0]  %s8, 1024, %s611, [#allocation12], 64, 64, 4
        $region40: #{tpu_custom_call.1} parent=11 // pred_fallthru
          _
        // Predicated region
        $region41: #{tpu_custom_call.1} parent=11 // pred_check
          %p617 = pneg %p263
        $region42: #{tpu_custom_call.1} parent=11 // pred_check_branch
          %619 = sbr.rel (%p617) target = $region44
        $region43: #{tpu_custom_call.1} parent=11 // pred_region
          _
        $region44: #{tpu_custom_call.1} parent=11 // pred_fallthru
          _
        // Predicated region
        $region45: #{tpu_custom_call.1} parent=11 // pred_check
          %p620 = pneg %p284
        $region46: #{tpu_custom_call.1} parent=11 // pred_check_branch
          %622 = sbr.rel (%p620) target = $region48
        $region47: #{tpu_custom_call.1} parent=11 // pred_region
          %s624 = ssub.s32 1024, 1024
          %625 = vsyncadd [#allocation12], %s624
          %s626 = sshll.u32 [#allocation13], 4
          %s627 = int_to_ptr.vmem [resolvable:$true] %s626
          %632 = dma.hbm_to_vmem [thread:$0]  %s10, 1024, %s627, [#allocation12], 64, 64, 4
        $region48: #{tpu_custom_call.1} parent=11 // pred_fallthru
          _
        // Predicated region
        $region49: #{tpu_custom_call.1} parent=11 // pred_check
          %p633 = pneg %p305
        $region50: #{tpu_custom_call.1} parent=11 // pred_check_branch
          %635 = sbr.rel (%p633) target = $region52
        $region51: #{tpu_custom_call.1} parent=11 // pred_region
          %s637 = ssub.s32 1024, 1024
          %638 = vsyncadd [#allocation15], %s637
          %s639 = sshll.u32 [#allocation14], 4
          %s640 = int_to_ptr.vmem [resolvable:$true] %s639
          %645 = dma.hbm_to_vmem [thread:$0]  %s11, 1024, %s640, [#allocation15], 64, 64, 4
        $region52: #{tpu_custom_call.1} parent=11 // pred_fallthru
          _
        // Predicated region
        $region53: #{tpu_custom_call.1} parent=11 // pred_check
          %p646 = pneg %p326
        $region54: #{tpu_custom_call.1} parent=11 // pred_check_branch
          %648 = sbr.rel (%p646) target = $region56
        $region55: #{tpu_custom_call.1} parent=11 // pred_region
          %s650 = ssub.s32 1024, 1024
          %651 = vsyncadd [#allocation15], %s650
          %s652 = sshll.u32 [#allocation16], 4
          %s653 = int_to_ptr.vmem [resolvable:$true] %s652
          %658 = dma.hbm_to_vmem [thread:$0]  %s12, 1024, %s653, [#allocation15], 64, 64, 4
        $region56: #{tpu_custom_call.1} parent=11 // pred_fallthru
          _
        // Predicated region
        $region57: #{tpu_custom_call.1} parent=11 // pred_check
          %p659 = pneg %p347
        $region58: #{tpu_custom_call.1} parent=11 // pred_check_branch
          %661 = sbr.rel (%p659) target = $region60
        $region59: #{tpu_custom_call.1} parent=11 // pred_region
          %s663 = ssub.s32 16, 16
          %664 = vsyncadd [#allocation18], %s663
          %s666 = sshll.u32 [#allocation17], 4
          %s667 = int_to_ptr.vmem [resolvable:$true] %s666
          %669 = dma.hbm_to_vmem [thread:$0]  %s13, 16, %s667, [#allocation18]
        $region60: #{tpu_custom_call.1} parent=11 // pred_fallthru
          _
        // Predicated region
        $region61: #{tpu_custom_call.1} parent=11 // pred_check
          %p670 = pneg %p368
        $region62: #{tpu_custom_call.1} parent=11 // pred_check_branch
          %672 = sbr.rel (%p670) target = $region64
        $region63: #{tpu_custom_call.1} parent=11 // pred_region
          %s674 = ssub.s32 16, 16
          %675 = vsyncadd [#allocation18], %s674
          %s677 = sshll.u32 [#allocation19], 4
          %s678 = int_to_ptr.vmem [resolvable:$true] %s677
          %680 = dma.hbm_to_vmem [thread:$0]  %s14, 16, %s678, [#allocation18]
        $region64: #{tpu_custom_call.1} parent=11 // pred_fallthru
          _
        // Predicated region
        $region65: #{tpu_custom_call.1} parent=11 // pred_check
          %p681 = pneg %p389
        $region66: #{tpu_custom_call.1} parent=11 // pred_check_branch
          %683 = sbr.rel (%p681) target = $region68
        $region67: #{tpu_custom_call.1} parent=11 // pred_region
          %s685 = ssub.s32 16, 16
          %686 = vsyncadd [#allocation21], %s685
          %s688 = sshll.u32 [#allocation20], 4
          %s689 = int_to_ptr.vmem [resolvable:$true] %s688
          %691 = dma.hbm_to_vmem [thread:$0]  %s15, 16, %s689, [#allocation21]
        $region68: #{tpu_custom_call.1} parent=11 // pred_fallthru
          _
        // Predicated region
        $region69: #{tpu_custom_call.1} parent=11 // pred_check
          %p692 = pneg %p410
        $region70: #{tpu_custom_call.1} parent=11 // pred_check_branch
          %694 = sbr.rel (%p692) target = $region72
        $region71: #{tpu_custom_call.1} parent=11 // pred_region
          %s696 = ssub.s32 1024, 1024
          %697 = vsyncadd [#allocation21], %s696
          %s698 = sshll.u32 [#allocation22], 4
          %s699 = int_to_ptr.vmem [resolvable:$true] %s698
          %704 = dma.hbm_to_vmem [thread:$0]  %s16, 1024, %s699, [#allocation21], 64, 64, 4
        $region72: #{tpu_custom_call.1} parent=11 // pred_fallthru
          _
        // Predicated region
        $region73: #{tpu_custom_call.1} parent=11 // pred_check
          %p705 = pneg %p431
        $region74: #{tpu_custom_call.1} parent=11 // pred_check_branch
          %707 = sbr.rel (%p705) target = $region76
        $region75: #{tpu_custom_call.1} parent=11 // pred_region
          %s709 = ssub.s32 16, 16
          %710 = vsyncadd [#allocation24], %s709
          %s712 = sshll.u32 [#allocation23], 4
          %s713 = int_to_ptr.vmem [resolvable:$true] %s712
          %715 = dma.hbm_to_vmem [thread:$0]  %s17, 16, %s713, [#allocation24]
        $region76: #{tpu_custom_call.1} parent=11 // pred_fallthru
          _
        // Predicated region
        $region77: #{tpu_custom_call.1} parent=11 // pred_check
          %p716 = pneg %p452
        $region78: #{tpu_custom_call.1} parent=11 // pred_check_branch
          %718 = sbr.rel (%p716) target = $region80
        $region79: #{tpu_custom_call.1} parent=11 // pred_region
          _
        $region80: #{tpu_custom_call.1} parent=11 // pred_fallthru
          _
        // Predicated region
        $region81: #{tpu_custom_call.1} parent=11 // pred_check
          %p719 = pneg %p473
        $region82: #{tpu_custom_call.1} parent=11 // pred_check_branch
          %721 = sbr.rel (%p719) target = $region84
        $region83: #{tpu_custom_call.1} parent=11 // pred_region
          _
        $region84: #{tpu_custom_call.1} parent=11 // pred_fallthru
          _
        // Predicated region
        $region85: #{tpu_custom_call.1} parent=11 // pred_check
          %p722 = pneg %p494
        $region86: #{tpu_custom_call.1} parent=11 // pred_check_branch
          %724 = sbr.rel (%p722) target = $region88
        $region87: #{tpu_custom_call.1} parent=11 // pred_region
          %s726 = ssub.s32 1024, 1024
          %727 = vsyncadd [#allocation24], %s726
          %s728 = sshll.u32 [#allocation25], 4
          %s729 = int_to_ptr.vmem [resolvable:$true] %s728
          %734 = dma.hbm_to_vmem [thread:$0]  %s20, 1024, %s729, [#allocation24], 64, 64, 4
        $region88: #{tpu_custom_call.1} parent=11 // pred_fallthru
          _
        // Predicated region
        $region89: #{tpu_custom_call.1} parent=11 // pred_check
          %p735 = pneg %p515
        $region90: #{tpu_custom_call.1} parent=11 // pred_check_branch
          %737 = sbr.rel (%p735) target = $region92
        $region91: #{tpu_custom_call.1} parent=11 // pred_region
          _
        $region92: #{tpu_custom_call.1} parent=11 // pred_fallthru
          _
      $region12: #{tpu_custom_call.1} parent=5 // pred_fallthru
        _
      %p738 = scmp.lt.s32.totalorder %s43, 2
      // Predicated region
      $region93: #{tpu_custom_call.1} parent=5 // pred_check
        %p739 = pneg %p738
      $region94: #{tpu_custom_call.1} parent=5 // pred_check_branch
        %741 = sbr.rel (%p739) target = $region96
      $region95: #{tpu_custom_call.1} parent=5 // pred_region
        // Predicated region
        $region97: #{tpu_custom_call.1} parent=95 // pred_check
          %p742 = pneg %p63
        $region98: #{tpu_custom_call.1} parent=95 // pred_check_branch
          %744 = sbr.rel (%p742) target = $region100
        $region99: #{tpu_custom_call.1} parent=95 // pred_region
          %s745 = sand.u32 %s53, 1
          %s746 = scalar_lea.sflag [#allocation3], %s745
          %s747 = sand.u32 %s53, 1
          %s748 = smul.addr %s747, 4
          %s749 = scalar_lea.vmem [#allocation2], %s748
          %s751 = ssub.s32 64, 64
          %752 = vsyncadd %s746, %s751
          %s753 = smul.addr %s43, 64
          %s754 = scalar_lea.hbm %s0, %s753
          %s756 = sshll.u32 %s749, 4
          %s757 = int_to_ptr.vmem [resolvable:$true] %s756
          %759 = dma.hbm_to_vmem [thread:$0]  %s754, 64, %s757, %s746
        $region100: #{tpu_custom_call.1} parent=95 // pred_fallthru
          _
        // Predicated region
        $region101: #{tpu_custom_call.1} parent=95 // pred_check
          %p760 = pneg %p89
        $region102: #{tpu_custom_call.1} parent=95 // pred_check_branch
          %762 = sbr.rel (%p760) target = $region104
        $region103: #{tpu_custom_call.1} parent=95 // pred_region
          %s763 = sand.u32 %s43, 1
          %s764 = scalar_lea.sflag [#allocation6], %s763
          %s765 = sand.u32 %s79, 1
          %s766 = smul.addr %s765, 4
          %s767 = scalar_lea.vmem [#allocation5], %s766
          %s769 = ssub.s32 64, 64
          %770 = vsyncadd %s764, %s769
          %s771 = smul.addr %s43, 64
          %s772 = scalar_lea.hbm %s1, %s771
          %s774 = sshll.u32 %s767, 4
          %s775 = int_to_ptr.vmem [resolvable:$true] %s774
          %777 = dma.hbm_to_vmem [thread:$0]  %s772, 64, %s775, %s764
        $region104: #{tpu_custom_call.1} parent=95 // pred_fallthru
          _
      $region96: #{tpu_custom_call.1} parent=5 // pred_fallthru
        _
      %p778 = scmp.le.s32.totalorder 1, %s43
      %p779 = scmp.lt.s32.totalorder %s43, 3
      %p780 = pnand %p778, %p779
      %p781 = pneg %p780
      // Predicated region
      $region105: #{tpu_custom_call.1} parent=5 // pred_check
        _
      $region106: #{tpu_custom_call.1} parent=5 // pred_check_branch
        %783 = sbr.rel (%p780) target = $region108
      $region107: #{tpu_custom_call.1} parent=5 // pred_region
        %s784 = ssub.s32 %s43, 1
        %s785 = sand.u32 %s56, 1
        %s786 = scalar_lea.sflag [#allocation3], %s785
        %s787 = sand.u32 %s56, 1
        %s788 = smul.addr %s787, 4
        %s789 = scalar_lea.vmem [#allocation2], %s788
        // Predicated region
        $region109: #{tpu_custom_call.1} parent=107 // pred_check
          %p790 = pneg %p69
        $region110: #{tpu_custom_call.1} parent=107 // pred_check_branch
          %792 = sbr.rel (%p790) target = $region112
        $region111: #{tpu_custom_call.1} parent=107 // pred_region
          %793 = dma.done %s786, 64
        $region112: #{tpu_custom_call.1} parent=107 // pred_fallthru
          _
        %s794 = sand.u32 %s48, 1
        %s795 = scalar_lea.sflag [#allocation6], %s794
        %s796 = sand.u32 %s82, 1
        %s797 = smul.addr %s796, 4
        %s798 = scalar_lea.vmem [#allocation5], %s797
        // Predicated region
        $region113: #{tpu_custom_call.1} parent=107 // pred_check
          %p799 = pneg %p95
        $region114: #{tpu_custom_call.1} parent=107 // pred_check_branch
          %801 = sbr.rel (%p799) target = $region116
        $region115: #{tpu_custom_call.1} parent=107 // pred_region
          %802 = dma.done %s795, 64
        $region116: #{tpu_custom_call.1} parent=107 // pred_fallthru
          _
        // Predicated region
        $region117: #{tpu_custom_call.1} parent=107 // pred_check
          %p803 = pneg %p116
        $region118: #{tpu_custom_call.1} parent=107 // pred_check_branch
          %805 = sbr.rel (%p803) target = $region120
        $region119: #{tpu_custom_call.1} parent=107 // pred_region
          %806 = dma.done [#allocation6], 1024
        $region120: #{tpu_custom_call.1} parent=107 // pred_fallthru
          _
        // Predicated region
        $region121: #{tpu_custom_call.1} parent=107 // pred_check
          %p807 = pneg %p137
        $region122: #{tpu_custom_call.1} parent=107 // pred_check_branch
          %809 = sbr.rel (%p807) target = $region124
        $region123: #{tpu_custom_call.1} parent=107 // pred_region
          %810 = dma.done [#allocation9], 1024
        $region124: #{tpu_custom_call.1} parent=107 // pred_fallthru
          _
        // Predicated region
        $region125: #{tpu_custom_call.1} parent=107 // pred_check
          %p811 = pneg %p158
        $region126: #{tpu_custom_call.1} parent=107 // pred_check_branch
          %813 = sbr.rel (%p811) target = $region128
        $region127: #{tpu_custom_call.1} parent=107 // pred_region
          %814 = dma.done [#allocation9], 1024
        $region128: #{tpu_custom_call.1} parent=107 // pred_fallthru
          _
        // Predicated region
        $region129: #{tpu_custom_call.1} parent=107 // pred_check
          %p815 = pneg %p242
        $region130: #{tpu_custom_call.1} parent=107 // pred_check_branch
          %817 = sbr.rel (%p815) target = $region132
        $region131: #{tpu_custom_call.1} parent=107 // pred_region
          %818 = dma.done [#allocation12], 1024
        $region132: #{tpu_custom_call.1} parent=107 // pred_fallthru
          _
        // Predicated region
        $region133: #{tpu_custom_call.1} parent=107 // pred_check
          %p819 = pneg %p284
        $region134: #{tpu_custom_call.1} parent=107 // pred_check_branch
          %821 = sbr.rel (%p819) target = $region136
        $region135: #{tpu_custom_call.1} parent=107 // pred_region
          %822 = dma.done [#allocation12], 1024
        $region136: #{tpu_custom_call.1} parent=107 // pred_fallthru
          _
        // Predicated region
        $region137: #{tpu_custom_call.1} parent=107 // pred_check
          %p823 = pneg %p305
        $region138: #{tpu_custom_call.1} parent=107 // pred_check_branch
          %825 = sbr.rel (%p823) target = $region140
        $region139: #{tpu_custom_call.1} parent=107 // pred_region
          %826 = dma.done [#allocation15], 1024
        $region140: #{tpu_custom_call.1} parent=107 // pred_fallthru
          _
        // Predicated region
        $region141: #{tpu_custom_call.1} parent=107 // pred_check
          %p827 = pneg %p326
        $region142: #{tpu_custom_call.1} parent=107 // pred_check_branch
          %829 = sbr.rel (%p827) target = $region144
        $region143: #{tpu_custom_call.1} parent=107 // pred_region
          %830 = dma.done [#allocation15], 1024
        $region144: #{tpu_custom_call.1} parent=107 // pred_fallthru
          _
        // Predicated region
        $region145: #{tpu_custom_call.1} parent=107 // pred_check
          %p831 = pneg %p347
        $region146: #{tpu_custom_call.1} parent=107 // pred_check_branch
          %833 = sbr.rel (%p831) target = $region148
        $region147: #{tpu_custom_call.1} parent=107 // pred_region
          %834 = dma.done [#allocation18], 16
        $region148: #{tpu_custom_call.1} parent=107 // pred_fallthru
          _
        // Predicated region
        $region149: #{tpu_custom_call.1} parent=107 // pred_check
          %p835 = pneg %p368
        $region150: #{tpu_custom_call.1} parent=107 // pred_check_branch
          %837 = sbr.rel (%p835) target = $region152
        $region151: #{tpu_custom_call.1} parent=107 // pred_region
          %838 = dma.done [#allocation18], 16
        $region152: #{tpu_custom_call.1} parent=107 // pred_fallthru
          _
        // Predicated region
        $region153: #{tpu_custom_call.1} parent=107 // pred_check
          %p839 = pneg %p389
        $region154: #{tpu_custom_call.1} parent=107 // pred_check_branch
          %841 = sbr.rel (%p839) target = $region156
        $region155: #{tpu_custom_call.1} parent=107 // pred_region
          %842 = dma.done [#allocation21], 16
        $region156: #{tpu_custom_call.1} parent=107 // pred_fallthru
          _
        // Predicated region
        $region157: #{tpu_custom_call.1} parent=107 // pred_check
          %p843 = pneg %p410
        $region158: #{tpu_custom_call.1} parent=107 // pred_check_branch
          %845 = sbr.rel (%p843) target = $region160
        $region159: #{tpu_custom_call.1} parent=107 // pred_region
          %846 = dma.done [#allocation21], 1024
        $region160: #{tpu_custom_call.1} parent=107 // pred_fallthru
          _
        // Predicated region
        $region161: #{tpu_custom_call.1} parent=107 // pred_check
          %p847 = pneg %p431
        $region162: #{tpu_custom_call.1} parent=107 // pred_check_branch
          %849 = sbr.rel (%p847) target = $region164
        $region163: #{tpu_custom_call.1} parent=107 // pred_region
          %850 = dma.done [#allocation24], 16
        $region164: #{tpu_custom_call.1} parent=107 // pred_fallthru
          _
        // Predicated region
        $region165: #{tpu_custom_call.1} parent=107 // pred_check
          %p851 = pneg %p494
        $region166: #{tpu_custom_call.1} parent=107 // pred_check_branch
          %853 = sbr.rel (%p851) target = $region168
        $region167: #{tpu_custom_call.1} parent=107 // pred_region
          %854 = dma.done [#allocation24], 1024
        $region168: #{tpu_custom_call.1} parent=107 // pred_fallthru
          _
        %s855 = sand.u32 %s56, 1
        %s856 = scalar_lea.sflag [#allocation3], %s855
        %s857 = sand.u32 %s56, 1
        %s858 = smul.addr %s857, 4
        %s859 = scalar_lea.vmem [#allocation2], %s858
        %p860 = pneg %p69
        %p861 = pneg %p66
        %s862 = sand.u32 %s48, 1
        %s863 = scalar_lea.sflag [#allocation6], %s862
        %s864 = sand.u32 %s82, 1
        %s865 = smul.addr %s864, 4
        %s866 = scalar_lea.vmem [#allocation5], %s865
        %p867 = pneg %p95
        %p868 = pneg %p92
        %p869 = pneg %p116
        %p870 = pneg %p113
        %p871 = pneg %p137
        %p872 = pneg %p134
        %p873 = pneg %p158
        %p874 = pneg %p155
        %p875 = pneg %p179
        %p876 = pneg %p176
        %p877 = pneg %p200
        %p878 = pneg %p197
        %p879 = pneg %p221
        %p880 = pneg %p218
        %p881 = pneg %p242
        %p882 = pneg %p239
        %p883 = pneg %p263
        %p884 = pneg %p260
        %p885 = pneg %p284
        %p886 = pneg %p281
        %p887 = pneg %p305
        %p888 = pneg %p302
        %p889 = pneg %p326
        %p890 = pneg %p323
        %p891 = pneg %p347
        %p892 = pneg %p344
        %p893 = pneg %p368
        %p894 = pneg %p365
        %p895 = pneg %p389
        %p896 = pneg %p386
        %p897 = pneg %p410
        %p898 = pneg %p407
        %p899 = pneg %p431
        %p900 = pneg %p428
        %p901 = pneg %p452
        %p902 = pneg %p449
        %p903 = pneg %p473
        %p904 = pneg %p470
        %p905 = pneg %p494
        %p906 = pneg %p491
        %p907 = pneg %p515
        %p908 = pneg %p512
        %p909 = pneg %p541
        %p910 = pneg %p538
        %s911 = sand.u32 %s528, 1
        %s912 = scalar_lea.sflag [#allocation4], %s911
        %s913 = sand.u32 %s528, 1
        %s914 = smul.addr %s913, 8
        %s915 = scalar_lea.vmem [#allocation26], %s914
        %v917 = vld [vmem:[%s789] sm:$0xf]
        %v918 = vunpack.c.l.bf16 %v917
        %v919 = vld [vmem:[%s798] sm:$0xf]
        %v920 = vld [vmem:[#allocation7] sm:$0xf]
        %v921 = vld [vmem:[#allocation7 + $0x4] sm:$0xf]
        %v922 = vld [vmem:[#allocation7 + $0x8] sm:$0xf]
        %v923 = vld [vmem:[#allocation7 + $0xc] sm:$0xf]
        %v924 = vld [vmem:[#allocation7 + $0x10] sm:$0xf]
        %v925 = vld [vmem:[#allocation7 + $0x14] sm:$0xf]
        %v926 = vld [vmem:[#allocation7 + $0x18] sm:$0xf]
        %v927 = vld [vmem:[#allocation7 + $0x1c] sm:$0xf]
        %v928 = vld [vmem:[#allocation7 + $0x20] sm:$0xf]
        %v929 = vld [vmem:[#allocation7 + $0x24] sm:$0xf]
        %v930 = vld [vmem:[#allocation7 + $0x28] sm:$0xf]
        %v931 = vld [vmem:[#allocation7 + $0x2c] sm:$0xf]
        %v932 = vld [vmem:[#allocation7 + $0x30] sm:$0xf]
        %v933 = vld [vmem:[#allocation7 + $0x34] sm:$0xf]
        %v934 = vld [vmem:[#allocation7 + $0x38] sm:$0xf]
        %v935 = vld [vmem:[#allocation7 + $0x3c] sm:$0xf]
        %v936 = vld [vmem:[#allocation8] sm:$0xf]
        %v937 = vld [vmem:[#allocation8 + $0x4] sm:$0xf]
        %v938 = vld [vmem:[#allocation8 + $0x8] sm:$0xf]
        %v939 = vld [vmem:[#allocation8 + $0xc] sm:$0xf]
        %v940 = vld [vmem:[#allocation8 + $0x10] sm:$0xf]
        %v941 = vld [vmem:[#allocation8 + $0x14] sm:$0xf]
        %v942 = vld [vmem:[#allocation8 + $0x18] sm:$0xf]
        %v943 = vld [vmem:[#allocation8 + $0x1c] sm:$0xf]
        %v944 = vld [vmem:[#allocation8 + $0x20] sm:$0xf]
        %v945 = vld [vmem:[#allocation8 + $0x24] sm:$0xf]
        %v946 = vld [vmem:[#allocation8 + $0x28] sm:$0xf]
        %v947 = vld [vmem:[#allocation8 + $0x2c] sm:$0xf]
        %v948 = vld [vmem:[#allocation8 + $0x30] sm:$0xf]
        %v949 = vld [vmem:[#allocation8 + $0x34] sm:$0xf]
        %v950 = vld [vmem:[#allocation8 + $0x38] sm:$0xf]
        %v951 = vld [vmem:[#allocation8 + $0x3c] sm:$0xf]
        %v952 = vld [vmem:[#allocation10] sm:$0xf]
        %v953 = vld [vmem:[#allocation10 + $0x4] sm:$0xf]
        %v954 = vld [vmem:[#allocation10 + $0x8] sm:$0xf]
        %v955 = vld [vmem:[#allocation10 + $0xc] sm:$0xf]
        %v956 = vld [vmem:[#allocation10 + $0x10] sm:$0xf]
        %v957 = vld [vmem:[#allocation10 + $0x14] sm:$0xf]
        %v958 = vld [vmem:[#allocation10 + $0x18] sm:$0xf]
        %v959 = vld [vmem:[#allocation10 + $0x1c] sm:$0xf]
        %v960 = vld [vmem:[#allocation10 + $0x20] sm:$0xf]
        %v961 = vld [vmem:[#allocation10 + $0x24] sm:$0xf]
        %v962 = vld [vmem:[#allocation10 + $0x28] sm:$0xf]
        %v963 = vld [vmem:[#allocation10 + $0x2c] sm:$0xf]
        %v964 = vld [vmem:[#allocation10 + $0x30] sm:$0xf]
        %v965 = vld [vmem:[#allocation10 + $0x34] sm:$0xf]
        %v966 = vld [vmem:[#allocation10 + $0x38] sm:$0xf]
        %v967 = vld [vmem:[#allocation10 + $0x3c] sm:$0xf]
        %v968 = vld [vmem:[%s5] sm:$0x1]
        %v969 = vld [vmem:[%s6] sm:$0x1]
        %v970 = vld [vmem:[%s7] sm:$0x1]
        %v971 = vld [vmem:[#allocation11] sm:$0xf]
        %v972 = vld [vmem:[#allocation11 + $0x4] sm:$0xf]
        %v973 = vld [vmem:[#allocation11 + $0x8] sm:$0xf]
        %v974 = vld [vmem:[#allocation11 + $0xc] sm:$0xf]
        %v975 = vld [vmem:[#allocation11 + $0x10] sm:$0xf]
        %v976 = vld [vmem:[#allocation11 + $0x14] sm:$0xf]
        %v977 = vld [vmem:[#allocation11 + $0x18] sm:$0xf]
        %v978 = vld [vmem:[#allocation11 + $0x1c] sm:$0xf]
        %v979 = vld [vmem:[#allocation11 + $0x20] sm:$0xf]
        %v980 = vld [vmem:[#allocation11 + $0x24] sm:$0xf]
        %v981 = vld [vmem:[#allocation11 + $0x28] sm:$0xf]
        %v982 = vld [vmem:[#allocation11 + $0x2c] sm:$0xf]
        %v983 = vld [vmem:[#allocation11 + $0x30] sm:$0xf]
        %v984 = vld [vmem:[#allocation11 + $0x34] sm:$0xf]
        %v985 = vld [vmem:[#allocation11 + $0x38] sm:$0xf]
        %v986 = vld [vmem:[#allocation11 + $0x3c] sm:$0xf]
        %v987 = vld [vmem:[%s9] sm:$0x1]
        %v989 = vlaneseq
        %v990 = vshrl.u32 %v989, 7
        %v991 = vsub.s32 0, %v990
        %v992 = vrot.slane %v968, %v991
        %v1010 = vunpack.c.l.b16 %v920
        %v1011 = vunpack.c.l.b16 %v921
        %v1012 = vunpack.c.l.b16 %v922
        %v1013 = vunpack.c.l.b16 %v923
        %v1014 = vunpack.c.l.b16 %v924
        %v1015 = vunpack.c.l.b16 %v925
        %v1016 = vunpack.c.l.b16 %v926
        %v1017 = vunpack.c.l.b16 %v927
        %v1018 = vunpack.c.l.b16 %v928
        %v1019 = vunpack.c.l.b16 %v929
        %v1020 = vunpack.c.l.b16 %v930
        %v1021 = vunpack.c.l.b16 %v931
        %v1022 = vunpack.c.l.b16 %v932
        %v1023 = vunpack.c.l.b16 %v933
        %v1024 = vunpack.c.l.b16 %v934
        %v1025 = vunpack.c.l.b16 %v935
        %v1026 = vpack.c.b16 %v1011, %v1010
        %v1027 = vpack.c.b16 %v1013, %v1012
        %v1028 = vpack.c.b16 %v1015, %v1014
        %v1029 = vpack.c.b16 %v1017, %v1016
        %v1030 = vpack.c.b16 %v1019, %v1018
        %v1031 = vpack.c.b16 %v1021, %v1020
        %v1032 = vpack.c.b16 %v1023, %v1022
        %v1033 = vpack.c.b16 %v1025, %v1024
        %1042 = vmatprep.subr.bf16.mxu0 0
        %1043 = vmatpush1.bf16.msra.mxu0 %v1026
        %1044 = vmatprep.subr.bf16.mxu0 0
        %1045 = vmatpush1.bf16.msra.mxu0 %v1027
        %1046 = vmatprep.subr.bf16.mxu0 0
        %1047 = vmatpush1.bf16.msra.mxu0 %v1028
        %1048 = vmatprep.subr.bf16.mxu0 0
        %1049 = vmatpush1.bf16.msra.mxu0 %v1029
        %1050 = vmatprep.subr.bf16.mxu0 0
        %1051 = vmatpush1.bf16.msra.mxu0 %v1030
        %1052 = vmatprep.subr.bf16.mxu0 0
        %1053 = vmatpush1.bf16.msra.mxu0 %v1031
        %1054 = vmatprep.subr.bf16.mxu0 0
        %1055 = vmatpush1.bf16.msra.mxu0 %v1032
        %1056 = vmatprep.subr.bf16.mxu0 0
        %1057 = vmatpush1.bf16.msra.mxu0 %v1033
        %1058 = vmatprep.subr.bf16.mxu0 0
        %1059 = vmatpush1.bf16.msra.mxu0 0
        %1060 = vmatprep.subr.bf16.mxu0 0
        %1061 = vmatpush1.bf16.msra.mxu0 0
        %1062 = vmatprep.subr.bf16.mxu0 0
        %1063 = vmatpush1.bf16.msra.mxu0 0
        %1064 = vmatprep.subr.bf16.mxu0 0
        %1065 = vmatpush1.bf16.msra.mxu0 0
        %1066 = vmatprep.subr.bf16.mxu0 0
        %1067 = vmatpush1.bf16.msra.mxu0 0
        %1068 = vmatprep.subr.bf16.mxu0 0
        %1069 = vmatpush1.bf16.msra.mxu0 0
        %1070 = vmatprep.subr.bf16.mxu0 0
        %1071 = vmatpush1.bf16.msra.mxu0 0
        %1072 = vmatprep.subr.bf16.mxu0 0
        %1073 = vmatpush1.bf16.msra.mxu0 0
        %1074 = vmatprep.mubr.bf16.mxu0 0
        %1075 = vmatmul.mubr.bf16.gmra.mrb[0].mxu0 %v917
        %v1076 = vpop.f32.mrb[0].mxu0
        %v1077 = vadd.f32 %v992, %v1076
        %v1078 = vpop.f32.mrb[0].mxu0
        %v1079 = vpop.f32.mrb[0].mxu0
        %v1080 = vpop.f32.mrb[0].mxu0
        %1081 = vdwg.mxu0
        %v1082 = vmul.f32 %v1077, 0.35355338
        %v1084 = vlaneseq
        %v1085 = vshrl.u32 %v1084, 7
        %v1086 = vsub.s32 0, %v1085
        %v1087 = vrot.slane %v969, %v1086
        %v1105 = vunpack.c.l.b16 %v936
        %v1106 = vunpack.c.l.b16 %v937
        %v1107 = vunpack.c.l.b16 %v938
        %v1108 = vunpack.c.l.b16 %v939
        %v1109 = vunpack.c.l.b16 %v940
        %v1110 = vunpack.c.l.b16 %v941
        %v1111 = vunpack.c.l.b16 %v942
        %v1112 = vunpack.c.l.b16 %v943
        %v1113 = vunpack.c.l.b16 %v944
        %v1114 = vunpack.c.l.b16 %v945
        %v1115 = vunpack.c.l.b16 %v946
        %v1116 = vunpack.c.l.b16 %v947
        %v1117 = vunpack.c.l.b16 %v948
        %v1118 = vunpack.c.l.b16 %v949
        %v1119 = vunpack.c.l.b16 %v950
        %v1120 = vunpack.c.l.b16 %v951
        %v1121 = vpack.c.b16 %v1106, %v1105
        %v1122 = vpack.c.b16 %v1108, %v1107
        %v1123 = vpack.c.b16 %v1110, %v1109
        %v1124 = vpack.c.b16 %v1112, %v1111
        %v1125 = vpack.c.b16 %v1114, %v1113
        %v1126 = vpack.c.b16 %v1116, %v1115
        %v1127 = vpack.c.b16 %v1118, %v1117
        %v1128 = vpack.c.b16 %v1120, %v1119
        %1137 = vmatprep.subr.bf16.mxu0 0
        %1138 = vmatpush1.bf16.msra.mxu0 %v1121
        %1139 = vmatprep.subr.bf16.mxu0 0
        %1140 = vmatpush1.bf16.msra.mxu0 %v1122
        %1141 = vmatprep.subr.bf16.mxu0 0
        %1142 = vmatpush1.bf16.msra.mxu0 %v1123
        %1143 = vmatprep.subr.bf16.mxu0 0
        %1144 = vmatpush1.bf16.msra.mxu0 %v1124
        %1145 = vmatprep.subr.bf16.mxu0 0
        %1146 = vmatpush1.bf16.msra.mxu0 %v1125
        %1147 = vmatprep.subr.bf16.mxu0 0
        %1148 = vmatpush1.bf16.msra.mxu0 %v1126
        %1149 = vmatprep.subr.bf16.mxu0 0
        %1150 = vmatpush1.bf16.msra.mxu0 %v1127
        %1151 = vmatprep.subr.bf16.mxu0 0
        %1152 = vmatpush1.bf16.msra.mxu0 %v1128
        %1153 = vmatprep.subr.bf16.mxu0 0
        %1154 = vmatpush1.bf16.msra.mxu0 0
        %1155 = vmatprep.subr.bf16.mxu0 0
        %1156 = vmatpush1.bf16.msra.mxu0 0
        %1157 = vmatprep.subr.bf16.mxu0 0
        %1158 = vmatpush1.bf16.msra.mxu0 0
        %1159 = vmatprep.subr.bf16.mxu0 0
        %1160 = vmatpush1.bf16.msra.mxu0 0
        %1161 = vmatprep.subr.bf16.mxu0 0
        %1162 = vmatpush1.bf16.msra.mxu0 0
        %1163 = vmatprep.subr.bf16.mxu0 0
        %1164 = vmatpush1.bf16.msra.mxu0 0
        %1165 = vmatprep.subr.bf16.mxu0 0
        %1166 = vmatpush1.bf16.msra.mxu0 0
        %1167 = vmatprep.subr.bf16.mxu0 0
        %1168 = vmatpush1.bf16.msra.mxu0 0
        %1169 = vmatprep.mubr.bf16.mxu0 0
        %1170 = vmatmul.mubr.bf16.gmra.mrb[0].mxu0 %v917
        %v1171 = vpop.f32.mrb[0].mxu0
        %v1172 = vadd.f32 %v1087, %v1171
        %v1173 = vpop.f32.mrb[0].mxu0
        %v1174 = vpop.f32.mrb[0].mxu0
        %v1175 = vpop.f32.mrb[0].mxu0
        %1176 = vdwg.mxu0
        %v1178 = vlaneseq
        %v1179 = vshrl.u32 %v1178, 7
        %v1180 = vsub.s32 0, %v1179
        %v1181 = vrot.slane %v970, %v1180
        %v1199 = vunpack.c.l.b16 %v952
        %v1200 = vunpack.c.l.b16 %v953
        %v1201 = vunpack.c.l.b16 %v954
        %v1202 = vunpack.c.l.b16 %v955
        %v1203 = vunpack.c.l.b16 %v956
        %v1204 = vunpack.c.l.b16 %v957
        %v1205 = vunpack.c.l.b16 %v958
        %v1206 = vunpack.c.l.b16 %v959
        %v1207 = vunpack.c.l.b16 %v960
        %v1208 = vunpack.c.l.b16 %v961
        %v1209 = vunpack.c.l.b16 %v962
        %v1210 = vunpack.c.l.b16 %v963
        %v1211 = vunpack.c.l.b16 %v964
        %v1212 = vunpack.c.l.b16 %v965
        %v1213 = vunpack.c.l.b16 %v966
        %v1214 = vunpack.c.l.b16 %v967
        %v1215 = vpack.c.b16 %v1200, %v1199
        %v1216 = vpack.c.b16 %v1202, %v1201
        %v1217 = vpack.c.b16 %v1204, %v1203
        %v1218 = vpack.c.b16 %v1206, %v1205
        %v1219 = vpack.c.b16 %v1208, %v1207
        %v1220 = vpack.c.b16 %v1210, %v1209
        %v1221 = vpack.c.b16 %v1212, %v1211
        %v1222 = vpack.c.b16 %v1214, %v1213
        %1231 = vmatprep.subr.bf16.mxu0 0
        %1232 = vmatpush1.bf16.msra.mxu0 %v1215
        %1233 = vmatprep.subr.bf16.mxu0 0
        %1234 = vmatpush1.bf16.msra.mxu0 %v1216
        %1235 = vmatprep.subr.bf16.mxu0 0
        %1236 = vmatpush1.bf16.msra.mxu0 %v1217
        %1237 = vmatprep.subr.bf16.mxu0 0
        %1238 = vmatpush1.bf16.msra.mxu0 %v1218
        %1239 = vmatprep.subr.bf16.mxu0 0
        %1240 = vmatpush1.bf16.msra.mxu0 %v1219
        %1241 = vmatprep.subr.bf16.mxu0 0
        %1242 = vmatpush1.bf16.msra.mxu0 %v1220
        %1243 = vmatprep.subr.bf16.mxu0 0
        %1244 = vmatpush1.bf16.msra.mxu0 %v1221
        %1245 = vmatprep.subr.bf16.mxu0 0
        %1246 = vmatpush1.bf16.msra.mxu0 %v1222
        %1247 = vmatprep.subr.bf16.mxu0 0
        %1248 = vmatpush1.bf16.msra.mxu0 0
        %1249 = vmatprep.subr.bf16.mxu0 0
        %1250 = vmatpush1.bf16.msra.mxu0 0
        %1251 = vmatprep.subr.bf16.mxu0 0
        %1252 = vmatpush1.bf16.msra.mxu0 0
        %1253 = vmatprep.subr.bf16.mxu0 0
        %1254 = vmatpush1.bf16.msra.mxu0 0
        %1255 = vmatprep.subr.bf16.mxu0 0
        %1256 = vmatpush1.bf16.msra.mxu0 0
        %1257 = vmatprep.subr.bf16.mxu0 0
        %1258 = vmatpush1.bf16.msra.mxu0 0
        %1259 = vmatprep.subr.bf16.mxu0 0
        %1260 = vmatpush1.bf16.msra.mxu0 0
        %1261 = vmatprep.subr.bf16.mxu0 0
        %1262 = vmatpush1.bf16.msra.mxu0 0
        %1263 = vmatprep.mubr.bf16.mxu0 0
        %1264 = vmatmul.mubr.bf16.gmra.mrb[0].mxu0 %v917
        %v1265 = vpop.f32.mrb[0].mxu0
        %v1266 = vadd.f32 %v1181, %v1265
        %v1267 = vpop.f32.mrb[0].mxu0
        %v1268 = vpop.f32.mrb[0].mxu0
        %v1269 = vpop.f32.mrb[0].mxu0
        %1270 = vdwg.mxu0
        %v1271 = vpack.c.bf16 %v1082, %v1082
        %v1272 = vpack.c.bf16 %v1172, %v1172
        %v1273 = vpack.c.bf16 %v1266, %v1266
        %vm1274 = vcmask 261120
        %v1276 = vsel %vm1274, %v1271, 0
        %v1279 = vsel %vm1274, %v1272, 0
        %1281 = vmatprep.subr.bf16.mxu0 0
        %1282 = vmatpush1.bf16.xpose.msra.mxu0 %v1279
        %1283 = vmatprep.subr.bf16.mxu0 0
        %1284 = vmatpush1.bf16.xpose.msra.mxu0 0
        %1285 = vmatprep.subr.bf16.mxu0 0
        %1286 = vmatpush1.bf16.xpose.msra.mxu0 0
        %1287 = vmatprep.subr.bf16.mxu0 0
        %1288 = vmatpush1.bf16.xpose.msra.mxu0 0
        %1289 = vmatprep.subr.bf16.mxu0 0
        %1290 = vmatpush1.bf16.xpose.msra.mxu0 0
        %1291 = vmatprep.subr.bf16.mxu0 0
        %1292 = vmatpush1.bf16.xpose.msra.mxu0 0
        %1293 = vmatprep.subr.bf16.mxu0 0
        %1294 = vmatpush1.bf16.xpose.msra.mxu0 0
        %1295 = vmatprep.subr.bf16.mxu0 0
        %1296 = vmatpush1.bf16.xpose.msra.mxu0 0
        %1297 = vmatprep.subr.bf16.mxu0 0
        %1298 = vmatpush1.bf16.xpose.msra.mxu0 0
        %1299 = vmatprep.subr.bf16.mxu0 0
        %1300 = vmatpush1.bf16.xpose.msra.mxu0 0
        %1301 = vmatprep.subr.bf16.mxu0 0
        %1302 = vmatpush1.bf16.xpose.msra.mxu0 0
        %1303 = vmatprep.subr.bf16.mxu0 0
        %1304 = vmatpush1.bf16.xpose.msra.mxu0 0
        %1305 = vmatprep.subr.bf16.mxu0 0
        %1306 = vmatpush1.bf16.xpose.msra.mxu0 0
        %1307 = vmatprep.subr.bf16.mxu0 0
        %1308 = vmatpush1.bf16.xpose.msra.mxu0 0
        %1309 = vmatprep.subr.bf16.mxu0 0
        %1310 = vmatpush1.bf16.xpose.msra.mxu0 0
        %1311 = vmatprep.subr.bf16.mxu0 0
        %1312 = vmatpush1.bf16.xpose.msra.mxu0 0
        %1313 = vmatprep.mubr.bf16.mxu0 0
        %1314 = vmatmul.mubr.bf16.gmra.mrb[0].mxu0 %v1276
        %v1315 = vpop.f32.mrb[0].mxu0
        %v1316 = vadd.f32 0.0, %v1315
        %v1317 = vpop.f32.mrb[0].mxu0
        %v1318 = vpop.f32.mrb[0].mxu0
        %v1319 = vpop.f32.mrb[0].mxu0
        %1320 = vdwg.mxu0
        %vm1321 = vcmask 64512
        %v1322 = vsel %vm1321, %v1316, -inf
        %1323 = vmax.xlane.f32.xlu0 %v1322
        %v1324 = vpop.xlane.xlu0 %1323
        %v1325 = vsub.f32 %v1316, %v1324
        %v1326 = vmul.f32 %v1325, 1.442695
        %v1327 = vpow.pop %v1326
        %v1328 = vsel %vm1321, %v1327, 0.0
        %1329 = vadd.xlane.f32.xlu0 %v1328
        %v1330 = vpop.xlane.xlu0 %1329
        %v1331 = vrcp.pop %v1330
        %v1332 = vmul.f32 %v1327, %v1331
        %v1333 = vpack.c.bf16 %v1332, %v1332
        %v1335 = vsel %vm1321, %v1333, 0
        %vm1337 = vcmask 1043456
        %v1339 = vsel %vm1337, %v1273, 0
        %1341 = vmatprep.subr.bf16.mxu0 0
        %1342 = vmatpush1.bf16.msra.mxu0 %v1339
        %1343 = vmatprep.subr.bf16.mxu0 0
        %1344 = vmatpush1.bf16.msra.mxu0 0
        %1345 = vmatprep.subr.bf16.mxu0 0
        %1346 = vmatpush1.bf16.msra.mxu0 0
        %1347 = vmatprep.subr.bf16.mxu0 0
        %1348 = vmatpush1.bf16.msra.mxu0 0
        %1349 = vmatprep.subr.bf16.mxu0 0
        %1350 = vmatpush1.bf16.msra.mxu0 0
        %1351 = vmatprep.subr.bf16.mxu0 0
        %1352 = vmatpush1.bf16.msra.mxu0 0
        %1353 = vmatprep.subr.bf16.mxu0 0
        %1354 = vmatpush1.bf16.msra.mxu0 0
        %1355 = vmatprep.subr.bf16.mxu0 0
        %1356 = vmatpush1.bf16.msra.mxu0 0
        %1357 = vmatprep.subr.bf16.mxu0 0
        %1358 = vmatpush1.bf16.msra.mxu0 0
        %1359 = vmatprep.subr.bf16.mxu0 0
        %1360 = vmatpush1.bf16.msra.mxu0 0
        %1361 = vmatprep.subr.bf16.mxu0 0
        %1362 = vmatpush1.bf16.msra.mxu0 0
        %1363 = vmatprep.subr.bf16.mxu0 0
        %1364 = vmatpush1.bf16.msra.mxu0 0
        %1365 = vmatprep.subr.bf16.mxu0 0
        %1366 = vmatpush1.bf16.msra.mxu0 0
        %1367 = vmatprep.subr.bf16.mxu0 0
        %1368 = vmatpush1.bf16.msra.mxu0 0
        %1369 = vmatprep.subr.bf16.mxu0 0
        %1370 = vmatpush1.bf16.msra.mxu0 0
        %1371 = vmatprep.subr.bf16.mxu0 0
        %1372 = vmatpush1.bf16.msra.mxu0 0
        %1373 = vmatprep.mubr.bf16.mxu0 0
        %1374 = vmatmul.mubr.bf16.gmra.mrb[0].mxu0 %v1335
        %v1375 = vpop.f32.mrb[0].mxu0
        %v1376 = vadd.f32 0.0, %v1375
        %v1377 = vpop.f32.mrb[0].mxu0
        %v1378 = vpop.f32.mrb[0].mxu0
        %v1379 = vpop.f32.mrb[0].mxu0
        %1380 = vdwg.mxu0
        %v1381 = vpack.c.bf16 %v1376, %v1376
        %1383 = vrot.lane.b32.xlu0 %v1271, 96
        %v1384 = vpop.permute.xlu0 %1383
        %1386 = vrot.lane.b32.xlu0 %v1272, 96
        %v1387 = vpop.permute.xlu0 %1386
        %v1389 = vsel %vm1274, %v1384, 0
        %v1392 = vsel %vm1274, %v1387, 0
        %1394 = vmatprep.subr.bf16.mxu0 0
        %1395 = vmatpush1.bf16.xpose.msra.mxu0 %v1392
        %1396 = vmatprep.subr.bf16.mxu0 0
        %1397 = vmatpush1.bf16.xpose.msra.mxu0 0
        %1398 = vmatprep.subr.bf16.mxu0 0
        %1399 = vmatpush1.bf16.xpose.msra.mxu0 0
        %1400 = vmatprep.subr.bf16.mxu0 0
        %1401 = vmatpush1.bf16.xpose.msra.mxu0 0
        %1402 = vmatprep.subr.bf16.mxu0 0
        %1403 = vmatpush1.bf16.xpose.msra.mxu0 0
        %1404 = vmatprep.subr.bf16.mxu0 0
        %1405 = vmatpush1.bf16.xpose.msra.mxu0 0
        %1406 = vmatprep.subr.bf16.mxu0 0
        %1407 = vmatpush1.bf16.xpose.msra.mxu0 0
        %1408 = vmatprep.subr.bf16.mxu0 0
        %1409 = vmatpush1.bf16.xpose.msra.mxu0 0
        %1410 = vmatprep.subr.bf16.mxu0 0
        %1411 = vmatpush1.bf16.xpose.msra.mxu0 0
        %1412 = vmatprep.subr.bf16.mxu0 0
        %1413 = vmatpush1.bf16.xpose.msra.mxu0 0
        %1414 = vmatprep.subr.bf16.mxu0 0
        %1415 = vmatpush1.bf16.xpose.msra.mxu0 0
        %1416 = vmatprep.subr.bf16.mxu0 0
        %1417 = vmatpush1.bf16.xpose.msra.mxu0 0
        %1418 = vmatprep.subr.bf16.mxu0 0
        %1419 = vmatpush1.bf16.xpose.msra.mxu0 0
        %1420 = vmatprep.subr.bf16.mxu0 0
        %1421 = vmatpush1.bf16.xpose.msra.mxu0 0
        %1422 = vmatprep.subr.bf16.mxu0 0
        %1423 = vmatpush1.bf16.xpose.msra.mxu0 0
        %1424 = vmatprep.subr.bf16.mxu0 0
        %1425 = vmatpush1.bf16.xpose.msra.mxu0 0
        %1426 = vmatprep.mubr.bf16.mxu0 0
        %1427 = vmatmul.mubr.bf16.gmra.mrb[0].mxu0 %v1389
        %v1428 = vpop.f32.mrb[0].mxu0
        %v1429 = vadd.f32 0.0, %v1428
        %v1430 = vpop.f32.mrb[0].mxu0
        %v1431 = vpop.f32.mrb[0].mxu0
        %v1432 = vpop.f32.mrb[0].mxu0
        %1433 = vdwg.mxu0
        %v1434 = vsel %vm1321, %v1429, -inf
        %1435 = vmax.xlane.f32.xlu0 %v1434
        %v1436 = vpop.xlane.xlu0 %1435
        %v1437 = vsub.f32 %v1429, %v1436
        %v1438 = vmul.f32 %v1437, 1.442695
        %v1439 = vpow.pop %v1438
        %v1440 = vsel %vm1321, %v1439, 0.0
        %1441 = vadd.xlane.f32.xlu0 %v1440
        %v1442 = vpop.xlane.xlu0 %1441
        %v1443 = vrcp.pop %v1442
        %v1444 = vmul.f32 %v1439, %v1443
        %v1445 = vpack.c.bf16 %v1444, %v1444
        %1447 = vrot.lane.b32.xlu0 %v1273, 96
        %v1448 = vpop.permute.xlu0 %1447
        %v1450 = vsel %vm1321, %v1445, 0
        %v1453 = vsel %vm1337, %v1448, 0
        %1455 = vmatprep.subr.bf16.mxu0 0
        %1456 = vmatpush1.bf16.msra.mxu0 %v1453
        %1457 = vmatprep.subr.bf16.mxu0 0
        %1458 = vmatpush1.bf16.msra.mxu0 0
        %1459 = vmatprep.subr.bf16.mxu0 0
        %1460 = vmatpush1.bf16.msra.mxu0 0
        %1461 = vmatprep.subr.bf16.mxu0 0
        %1462 = vmatpush1.bf16.msra.mxu0 0
        %1463 = vmatprep.subr.bf16.mxu0 0
        %1464 = vmatpush1.bf16.msra.mxu0 0
        %1465 = vmatprep.subr.bf16.mxu0 0
        %1466 = vmatpush1.bf16.msra.mxu0 0
        %1467 = vmatprep.subr.bf16.mxu0 0
        %1468 = vmatpush1.bf16.msra.mxu0 0
        %1469 = vmatprep.subr.bf16.mxu0 0
        %1470 = vmatpush1.bf16.msra.mxu0 0
        %1471 = vmatprep.subr.bf16.mxu0 0
        %1472 = vmatpush1.bf16.msra.mxu0 0
        %1473 = vmatprep.subr.bf16.mxu0 0
        %1474 = vmatpush1.bf16.msra.mxu0 0
        %1475 = vmatprep.subr.bf16.mxu0 0
        %1476 = vmatpush1.bf16.msra.mxu0 0
        %1477 = vmatprep.subr.bf16.mxu0 0
        %1478 = vmatpush1.bf16.msra.mxu0 0
        %1479 = vmatprep.subr.bf16.mxu0 0
        %1480 = vmatpush1.bf16.msra.mxu0 0
        %1481 = vmatprep.subr.bf16.mxu0 0
        %1482 = vmatpush1.bf16.msra.mxu0 0
        %1483 = vmatprep.subr.bf16.mxu0 0
        %1484 = vmatpush1.bf16.msra.mxu0 0
        %1485 = vmatprep.subr.bf16.mxu0 0
        %1486 = vmatpush1.bf16.msra.mxu0 0
        %1487 = vmatprep.mubr.bf16.mxu0 0
        %1488 = vmatmul.mubr.bf16.gmra.mrb[0].mxu0 %v1450
        %v1489 = vpop.f32.mrb[0].mxu0
        %v1490 = vadd.f32 0.0, %v1489
        %v1491 = vpop.f32.mrb[0].mxu0
        %v1492 = vpop.f32.mrb[0].mxu0
        %v1493 = vpop.f32.mrb[0].mxu0
        %1494 = vdwg.mxu0
        %v1495 = vpack.c.bf16 %v1490, %v1490
        %1496 = vrot.lane.b32.xlu0 %v1271, 64
        %v1497 = vpop.permute.xlu0 %1496
        %1498 = vrot.lane.b32.xlu0 %v1272, 64
        %v1499 = vpop.permute.xlu0 %1498
        %v1501 = vsel %vm1274, %v1497, 0
        %v1504 = vsel %vm1274, %v1499, 0
        %1506 = vmatprep.subr.bf16.mxu0 0
        %1507 = vmatpush1.bf16.xpose.msra.mxu0 %v1504
        %1508 = vmatprep.subr.bf16.mxu0 0
        %1509 = vmatpush1.bf16.xpose.msra.mxu0 0
        %1510 = vmatprep.subr.bf16.mxu0 0
        %1511 = vmatpush1.bf16.xpose.msra.mxu0 0
        %1512 = vmatprep.subr.bf16.mxu0 0
        %1513 = vmatpush1.bf16.xpose.msra.mxu0 0
        %1514 = vmatprep.subr.bf16.mxu0 0
        %1515 = vmatpush1.bf16.xpose.msra.mxu0 0
        %1516 = vmatprep.subr.bf16.mxu0 0
        %1517 = vmatpush1.bf16.xpose.msra.mxu0 0
        %1518 = vmatprep.subr.bf16.mxu0 0
        %1519 = vmatpush1.bf16.xpose.msra.mxu0 0
        %1520 = vmatprep.subr.bf16.mxu0 0
        %1521 = vmatpush1.bf16.xpose.msra.mxu0 0
        %1522 = vmatprep.subr.bf16.mxu0 0
        %1523 = vmatpush1.bf16.xpose.msra.mxu0 0
        %1524 = vmatprep.subr.bf16.mxu0 0
        %1525 = vmatpush1.bf16.xpose.msra.mxu0 0
        %1526 = vmatprep.subr.bf16.mxu0 0
        %1527 = vmatpush1.bf16.xpose.msra.mxu0 0
        %1528 = vmatprep.subr.bf16.mxu0 0
        %1529 = vmatpush1.bf16.xpose.msra.mxu0 0
        %1530 = vmatprep.subr.bf16.mxu0 0
        %1531 = vmatpush1.bf16.xpose.msra.mxu0 0
        %1532 = vmatprep.subr.bf16.mxu0 0
        %1533 = vmatpush1.bf16.xpose.msra.mxu0 0
        %1534 = vmatprep.subr.bf16.mxu0 0
        %1535 = vmatpush1.bf16.xpose.msra.mxu0 0
        %1536 = vmatprep.subr.bf16.mxu0 0
        %1537 = vmatpush1.bf16.xpose.msra.mxu0 0
        %1538 = vmatprep.mubr.bf16.mxu0 0
        %1539 = vmatmul.mubr.bf16.gmra.mrb[0].mxu0 %v1501
        %v1540 = vpop.f32.mrb[0].mxu0
        %v1541 = vadd.f32 0.0, %v1540
        %v1542 = vpop.f32.mrb[0].mxu0
        %v1543 = vpop.f32.mrb[0].mxu0
        %v1544 = vpop.f32.mrb[0].mxu0
        %1545 = vdwg.mxu0
        %v1546 = vsel %vm1321, %v1541, -inf
        %1547 = vmax.xlane.f32.xlu0 %v1546
        %v1548 = vpop.xlane.xlu0 %1547
        %v1549 = vsub.f32 %v1541, %v1548
        %v1550 = vmul.f32 %v1549, 1.442695
        %v1551 = vpow.pop %v1550
        %v1552 = vsel %vm1321, %v1551, 0.0
        %1553 = vadd.xlane.f32.xlu0 %v1552
        %v1554 = vpop.xlane.xlu0 %1553
        %v1555 = vrcp.pop %v1554
        %v1556 = vmul.f32 %v1551, %v1555
        %v1557 = vpack.c.bf16 %v1556, %v1556
        %1558 = vrot.lane.b32.xlu0 %v1273, 64
        %v1559 = vpop.permute.xlu0 %1558
        %v1561 = vsel %vm1321, %v1557, 0
        %v1564 = vsel %vm1337, %v1559, 0
        %1566 = vmatprep.subr.bf16.mxu0 0
        %1567 = vmatpush1.bf16.msra.mxu0 %v1564
        %1568 = vmatprep.subr.bf16.mxu0 0
        %1569 = vmatpush1.bf16.msra.mxu0 0
        %1570 = vmatprep.subr.bf16.mxu0 0
        %1571 = vmatpush1.bf16.msra.mxu0 0
        %1572 = vmatprep.subr.bf16.mxu0 0
        %1573 = vmatpush1.bf16.msra.mxu0 0
        %1574 = vmatprep.subr.bf16.mxu0 0
        %1575 = vmatpush1.bf16.msra.mxu0 0
        %1576 = vmatprep.subr.bf16.mxu0 0
        %1577 = vmatpush1.bf16.msra.mxu0 0
        %1578 = vmatprep.subr.bf16.mxu0 0
        %1579 = vmatpush1.bf16.msra.mxu0 0
        %1580 = vmatprep.subr.bf16.mxu0 0
        %1581 = vmatpush1.bf16.msra.mxu0 0
        %1582 = vmatprep.subr.bf16.mxu0 0
        %1583 = vmatpush1.bf16.msra.mxu0 0
        %1584 = vmatprep.subr.bf16.mxu0 0
        %1585 = vmatpush1.bf16.msra.mxu0 0
        %1586 = vmatprep.subr.bf16.mxu0 0
        %1587 = vmatpush1.bf16.msra.mxu0 0
        %1588 = vmatprep.subr.bf16.mxu0 0
        %1589 = vmatpush1.bf16.msra.mxu0 0
        %1590 = vmatprep.subr.bf16.mxu0 0
        %1591 = vmatpush1.bf16.msra.mxu0 0
        %1592 = vmatprep.subr.bf16.mxu0 0
        %1593 = vmatpush1.bf16.msra.mxu0 0
        %1594 = vmatprep.subr.bf16.mxu0 0
        %1595 = vmatpush1.bf16.msra.mxu0 0
        %1596 = vmatprep.subr.bf16.mxu0 0
        %1597 = vmatpush1.bf16.msra.mxu0 0
        %1598 = vmatprep.mubr.bf16.mxu0 0
        %1599 = vmatmul.mubr.bf16.gmra.mrb[0].mxu0 %v1561
        %v1600 = vpop.f32.mrb[0].mxu0
        %v1601 = vadd.f32 0.0, %v1600
        %v1602 = vpop.f32.mrb[0].mxu0
        %v1603 = vpop.f32.mrb[0].mxu0
        %v1604 = vpop.f32.mrb[0].mxu0
        %1605 = vdwg.mxu0
        %v1606 = vpack.c.bf16 %v1601, %v1601
        %1607 = vrot.lane.b32.xlu0 %v1271, 32
        %v1608 = vpop.permute.xlu0 %1607
        %1609 = vrot.lane.b32.xlu0 %v1272, 32
        %v1610 = vpop.permute.xlu0 %1609
        %v1612 = vsel %vm1274, %v1608, 0
        %v1615 = vsel %vm1274, %v1610, 0
        %1617 = vmatprep.subr.bf16.mxu0 0
        %1618 = vmatpush1.bf16.xpose.msra.mxu0 %v1615
        %1619 = vmatprep.subr.bf16.mxu0 0
        %1620 = vmatpush1.bf16.xpose.msra.mxu0 0
        %1621 = vmatprep.subr.bf16.mxu0 0
        %1622 = vmatpush1.bf16.xpose.msra.mxu0 0
        %1623 = vmatprep.subr.bf16.mxu0 0
        %1624 = vmatpush1.bf16.xpose.msra.mxu0 0
        %1625 = vmatprep.subr.bf16.mxu0 0
        %1626 = vmatpush1.bf16.xpose.msra.mxu0 0
        %1627 = vmatprep.subr.bf16.mxu0 0
        %1628 = vmatpush1.bf16.xpose.msra.mxu0 0
        %1629 = vmatprep.subr.bf16.mxu0 0
        %1630 = vmatpush1.bf16.xpose.msra.mxu0 0
        %1631 = vmatprep.subr.bf16.mxu0 0
        %1632 = vmatpush1.bf16.xpose.msra.mxu0 0
        %1633 = vmatprep.subr.bf16.mxu0 0
        %1634 = vmatpush1.bf16.xpose.msra.mxu0 0
        %1635 = vmatprep.subr.bf16.mxu0 0
        %1636 = vmatpush1.bf16.xpose.msra.mxu0 0
        %1637 = vmatprep.subr.bf16.mxu0 0
        %1638 = vmatpush1.bf16.xpose.msra.mxu0 0
        %1639 = vmatprep.subr.bf16.mxu0 0
        %1640 = vmatpush1.bf16.xpose.msra.mxu0 0
        %1641 = vmatprep.subr.bf16.mxu0 0
        %1642 = vmatpush1.bf16.xpose.msra.mxu0 0
        %1643 = vmatprep.subr.bf16.mxu0 0
        %1644 = vmatpush1.bf16.xpose.msra.mxu0 0
        %1645 = vmatprep.subr.bf16.mxu0 0
        %1646 = vmatpush1.bf16.xpose.msra.mxu0 0
        %1647 = vmatprep.subr.bf16.mxu0 0
        %1648 = vmatpush1.bf16.xpose.msra.mxu0 0
        %1649 = vmatprep.mubr.bf16.mxu0 0
        %1650 = vmatmul.mubr.bf16.gmra.mrb[0].mxu0 %v1612
        %v1651 = vpop.f32.mrb[0].mxu0
        %v1652 = vadd.f32 0.0, %v1651
        %v1653 = vpop.f32.mrb[0].mxu0
        %v1654 = vpop.f32.mrb[0].mxu0
        %v1655 = vpop.f32.mrb[0].mxu0
        %1656 = vdwg.mxu0
        %v1657 = vsel %vm1321, %v1652, -inf
        %1658 = vmax.xlane.f32.xlu0 %v1657
        %v1659 = vpop.xlane.xlu0 %1658
        %v1660 = vsub.f32 %v1652, %v1659
        %v1661 = vmul.f32 %v1660, 1.442695
        %v1662 = vpow.pop %v1661
        %v1663 = vsel %vm1321, %v1662, 0.0
        %1664 = vadd.xlane.f32.xlu0 %v1663
        %v1665 = vpop.xlane.xlu0 %1664
        %v1666 = vrcp.pop %v1665
        %v1667 = vmul.f32 %v1662, %v1666
        %v1668 = vpack.c.bf16 %v1667, %v1667
        %1669 = vrot.lane.b32.xlu0 %v1273, 32
        %v1670 = vpop.permute.xlu0 %1669
        %v1672 = vsel %vm1321, %v1668, 0
        %v1675 = vsel %vm1337, %v1670, 0
        %1677 = vmatprep.subr.bf16.mxu0 0
        %1678 = vmatpush1.bf16.msra.mxu0 %v1675
        %1679 = vmatprep.subr.bf16.mxu0 0
        %1680 = vmatpush1.bf16.msra.mxu0 0
        %1681 = vmatprep.subr.bf16.mxu0 0
        %1682 = vmatpush1.bf16.msra.mxu0 0
        %1683 = vmatprep.subr.bf16.mxu0 0
        %1684 = vmatpush1.bf16.msra.mxu0 0
        %1685 = vmatprep.subr.bf16.mxu0 0
        %1686 = vmatpush1.bf16.msra.mxu0 0
        %1687 = vmatprep.subr.bf16.mxu0 0
        %1688 = vmatpush1.bf16.msra.mxu0 0
        %1689 = vmatprep.subr.bf16.mxu0 0
        %1690 = vmatpush1.bf16.msra.mxu0 0
        %1691 = vmatprep.subr.bf16.mxu0 0
        %1692 = vmatpush1.bf16.msra.mxu0 0
        %1693 = vmatprep.subr.bf16.mxu0 0
        %1694 = vmatpush1.bf16.msra.mxu0 0
        %1695 = vmatprep.subr.bf16.mxu0 0
        %1696 = vmatpush1.bf16.msra.mxu0 0
        %1697 = vmatprep.subr.bf16.mxu0 0
        %1698 = vmatpush1.bf16.msra.mxu0 0
        %1699 = vmatprep.subr.bf16.mxu0 0
        %1700 = vmatpush1.bf16.msra.mxu0 0
        %1701 = vmatprep.subr.bf16.mxu0 0
        %1702 = vmatpush1.bf16.msra.mxu0 0
        %1703 = vmatprep.subr.bf16.mxu0 0
        %1704 = vmatpush1.bf16.msra.mxu0 0
        %1705 = vmatprep.subr.bf16.mxu0 0
        %1706 = vmatpush1.bf16.msra.mxu0 0
        %1707 = vmatprep.subr.bf16.mxu0 0
        %1708 = vmatpush1.bf16.msra.mxu0 0
        %1709 = vmatprep.mubr.bf16.mxu0 0
        %1710 = vmatmul.mubr.bf16.gmra.mrb[0].mxu0 %v1672
        %v1711 = vpop.f32.mrb[0].mxu0
        %v1712 = vadd.f32 0.0, %v1711
        %v1713 = vpop.f32.mrb[0].mxu0
        %v1714 = vpop.f32.mrb[0].mxu0
        %v1715 = vpop.f32.mrb[0].mxu0
        %1716 = vdwg.mxu0
        %v1717 = vpack.c.bf16 %v1712, %v1712
        %1719 = vrot.lane.b32.xlu0 %v1495, 32
        %v1720 = vpop.permute.xlu0 %1719
        %1722 = vrot.lane.b32.xlu0 %v1606, 64
        %v1723 = vpop.permute.xlu0 %1722
        %1725 = vrot.lane.b32.xlu0 %v1717, 96
        %v1726 = vpop.permute.xlu0 %1725
        %v1729 = vsel %vm1274, %v1381, %v1720
        %vm1730 = vcmask 523264
        %v1732 = vsel %vm1730, %v1729, %v1723
        %vm1733 = vcmask 785408
        %v1735 = vsel %vm1733, %v1732, %v1726
        %v1738 = vlaneseq
        %v1739 = vshrl.u32 %v1738, 7
        %v1740 = vsub.s32 0, %v1739
        %v1741 = vrot.slane %v987, %v1740
        %v1759 = vunpack.c.l.b16 %v971
        %v1760 = vunpack.c.l.b16 %v972
        %v1761 = vunpack.c.l.b16 %v973
        %v1762 = vunpack.c.l.b16 %v974
        %v1763 = vunpack.c.l.b16 %v975
        %v1764 = vunpack.c.l.b16 %v976
        %v1765 = vunpack.c.l.b16 %v977
        %v1766 = vunpack.c.l.b16 %v978
        %v1767 = vunpack.c.l.b16 %v979
        %v1768 = vunpack.c.l.b16 %v980
        %v1769 = vunpack.c.l.b16 %v981
        %v1770 = vunpack.c.l.b16 %v982
        %v1771 = vunpack.c.l.b16 %v983
        %v1772 = vunpack.c.l.b16 %v984
        %v1773 = vunpack.c.l.b16 %v985
        %v1774 = vunpack.c.l.b16 %v986
        %v1775 = vpack.c.b16 %v1760, %v1759
        %v1776 = vpack.c.b16 %v1762, %v1761
        %v1777 = vpack.c.b16 %v1764, %v1763
        %v1778 = vpack.c.b16 %v1766, %v1765
        %v1779 = vpack.c.b16 %v1768, %v1767
        %v1780 = vpack.c.b16 %v1770, %v1769
        %v1781 = vpack.c.b16 %v1772, %v1771
        %v1782 = vpack.c.b16 %v1774, %v1773
        %1791 = vmatprep.subr.bf16.mxu0 0
        %1792 = vmatpush1.bf16.msra.mxu0 %v1775
        %1793 = vmatprep.subr.bf16.mxu0 0
        %1794 = vmatpush1.bf16.msra.mxu0 %v1776
        %1795 = vmatprep.subr.bf16.mxu0 0
        %1796 = vmatpush1.bf16.msra.mxu0 %v1777
        %1797 = vmatprep.subr.bf16.mxu0 0
        %1798 = vmatpush1.bf16.msra.mxu0 %v1778
        %1799 = vmatprep.subr.bf16.mxu0 0
        %1800 = vmatpush1.bf16.msra.mxu0 %v1779
        %1801 = vmatprep.subr.bf16.mxu0 0
        %1802 = vmatpush1.bf16.msra.mxu0 %v1780
        %1803 = vmatprep.subr.bf16.mxu0 0
        %1804 = vmatpush1.bf16.msra.mxu0 %v1781
        %1805 = vmatprep.subr.bf16.mxu0 0
        %1806 = vmatpush1.bf16.msra.mxu0 %v1782
        %1807 = vmatprep.subr.bf16.mxu0 0
        %1808 = vmatpush1.bf16.msra.mxu0 0
        %1809 = vmatprep.subr.bf16.mxu0 0
        %1810 = vmatpush1.bf16.msra.mxu0 0
        %1811 = vmatprep.subr.bf16.mxu0 0
        %1812 = vmatpush1.bf16.msra.mxu0 0
        %1813 = vmatprep.subr.bf16.mxu0 0
        %1814 = vmatpush1.bf16.msra.mxu0 0
        %1815 = vmatprep.subr.bf16.mxu0 0
        %1816 = vmatpush1.bf16.msra.mxu0 0
        %1817 = vmatprep.subr.bf16.mxu0 0
        %1818 = vmatpush1.bf16.msra.mxu0 0
        %1819 = vmatprep.subr.bf16.mxu0 0
        %1820 = vmatpush1.bf16.msra.mxu0 0
        %1821 = vmatprep.subr.bf16.mxu0 0
        %1822 = vmatpush1.bf16.msra.mxu0 0
        %1823 = vmatprep.mubr.bf16.mxu0 0
        %1824 = vmatmul.mubr.bf16.gmra.mrb[0].mxu0 %v1735
        %v1825 = vpop.f32.mrb[0].mxu0
        %v1826 = vadd.f32 %v1741, %v1825
        %v1827 = vpop.f32.mrb[0].mxu0
        %v1828 = vpop.f32.mrb[0].mxu0
        %v1829 = vpop.f32.mrb[0].mxu0
        %1830 = vdwg.mxu0
        %v1831 = vadd.f32 %v918, %v1826
        %v1832 = vpack.c.bf16 %v1831, %v1831
        %v1833 = vld [vmem:[#allocation13] sm:$0xf]
        %v1834 = vld [vmem:[#allocation13 + $0x4] sm:$0xf]
        %v1835 = vld [vmem:[#allocation13 + $0x8] sm:$0xf]
        %v1836 = vld [vmem:[#allocation13 + $0xc] sm:$0xf]
        %v1837 = vld [vmem:[#allocation13 + $0x10] sm:$0xf]
        %v1838 = vld [vmem:[#allocation13 + $0x14] sm:$0xf]
        %v1839 = vld [vmem:[#allocation13 + $0x18] sm:$0xf]
        %v1840 = vld [vmem:[#allocation13 + $0x1c] sm:$0xf]
        %v1841 = vld [vmem:[#allocation13 + $0x20] sm:$0xf]
        %v1842 = vld [vmem:[#allocation13 + $0x24] sm:$0xf]
        %v1843 = vld [vmem:[#allocation13 + $0x28] sm:$0xf]
        %v1844 = vld [vmem:[#allocation13 + $0x2c] sm:$0xf]
        %v1845 = vld [vmem:[#allocation13 + $0x30] sm:$0xf]
        %v1846 = vld [vmem:[#allocation13 + $0x34] sm:$0xf]
        %v1847 = vld [vmem:[#allocation13 + $0x38] sm:$0xf]
        %v1848 = vld [vmem:[#allocation13 + $0x3c] sm:$0xf]
        %v1849 = vld [vmem:[#allocation14] sm:$0xf]
        %v1850 = vld [vmem:[#allocation14 + $0x4] sm:$0xf]
        %v1851 = vld [vmem:[#allocation14 + $0x8] sm:$0xf]
        %v1852 = vld [vmem:[#allocation14 + $0xc] sm:$0xf]
        %v1853 = vld [vmem:[#allocation14 + $0x10] sm:$0xf]
        %v1854 = vld [vmem:[#allocation14 + $0x14] sm:$0xf]
        %v1855 = vld [vmem:[#allocation14 + $0x18] sm:$0xf]
        %v1856 = vld [vmem:[#allocation14 + $0x1c] sm:$0xf]
        %v1857 = vld [vmem:[#allocation14 + $0x20] sm:$0xf]
        %v1858 = vld [vmem:[#allocation14 + $0x24] sm:$0xf]
        %v1859 = vld [vmem:[#allocation14 + $0x28] sm:$0xf]
        %v1860 = vld [vmem:[#allocation14 + $0x2c] sm:$0xf]
        %v1861 = vld [vmem:[#allocation14 + $0x30] sm:$0xf]
        %v1862 = vld [vmem:[#allocation14 + $0x34] sm:$0xf]
        %v1863 = vld [vmem:[#allocation14 + $0x38] sm:$0xf]
        %v1864 = vld [vmem:[#allocation14 + $0x3c] sm:$0xf]
        %v1865 = vld [vmem:[#allocation16] sm:$0xf]
        %v1866 = vld [vmem:[#allocation16 + $0x4] sm:$0xf]
        %v1867 = vld [vmem:[#allocation16 + $0x8] sm:$0xf]
        %v1868 = vld [vmem:[#allocation16 + $0xc] sm:$0xf]
        %v1869 = vld [vmem:[#allocation16 + $0x10] sm:$0xf]
        %v1870 = vld [vmem:[#allocation16 + $0x14] sm:$0xf]
        %v1871 = vld [vmem:[#allocation16 + $0x18] sm:$0xf]
        %v1872 = vld [vmem:[#allocation16 + $0x1c] sm:$0xf]
        %v1873 = vld [vmem:[#allocation16 + $0x20] sm:$0xf]
        %v1874 = vld [vmem:[#allocation16 + $0x24] sm:$0xf]
        %v1875 = vld [vmem:[#allocation16 + $0x28] sm:$0xf]
        %v1876 = vld [vmem:[#allocation16 + $0x2c] sm:$0xf]
        %v1877 = vld [vmem:[#allocation16 + $0x30] sm:$0xf]
        %v1878 = vld [vmem:[#allocation16 + $0x34] sm:$0xf]
        %v1879 = vld [vmem:[#allocation16 + $0x38] sm:$0xf]
        %v1880 = vld [vmem:[#allocation16 + $0x3c] sm:$0xf]
        %v1881 = vld [vmem:[#allocation17] sm:$0x1]
        %v1882 = vld [vmem:[#allocation19] sm:$0x1]
        %v1883 = vld [vmem:[#allocation20] sm:$0x1]
        %v1884 = vld [vmem:[#allocation22] sm:$0xf]
        %v1885 = vld [vmem:[#allocation22 + $0x4] sm:$0xf]
        %v1886 = vld [vmem:[#allocation22 + $0x8] sm:$0xf]
        %v1887 = vld [vmem:[#allocation22 + $0xc] sm:$0xf]
        %v1888 = vld [vmem:[#allocation22 + $0x10] sm:$0xf]
        %v1889 = vld [vmem:[#allocation22 + $0x14] sm:$0xf]
        %v1890 = vld [vmem:[#allocation22 + $0x18] sm:$0xf]
        %v1891 = vld [vmem:[#allocation22 + $0x1c] sm:$0xf]
        %v1892 = vld [vmem:[#allocation22 + $0x20] sm:$0xf]
        %v1893 = vld [vmem:[#allocation22 + $0x24] sm:$0xf]
        %v1894 = vld [vmem:[#allocation22 + $0x28] sm:$0xf]
        %v1895 = vld [vmem:[#allocation22 + $0x2c] sm:$0xf]
        %v1896 = vld [vmem:[#allocation22 + $0x30] sm:$0xf]
        %v1897 = vld [vmem:[#allocation22 + $0x34] sm:$0xf]
        %v1898 = vld [vmem:[#allocation22 + $0x38] sm:$0xf]
        %v1899 = vld [vmem:[#allocation22 + $0x3c] sm:$0xf]
        %v1900 = vld [vmem:[#allocation23] sm:$0x1]
        %v1902 = vlaneseq
        %v1903 = vshrl.u32 %v1902, 7
        %v1904 = vsub.s32 0, %v1903
        %v1905 = vrot.slane %v1881, %v1904
        %v1923 = vunpack.c.l.b16 %v1833
        %v1924 = vunpack.c.l.b16 %v1834
        %v1925 = vunpack.c.l.b16 %v1835
        %v1926 = vunpack.c.l.b16 %v1836
        %v1927 = vunpack.c.l.b16 %v1837
        %v1928 = vunpack.c.l.b16 %v1838
        %v1929 = vunpack.c.l.b16 %v1839
        %v1930 = vunpack.c.l.b16 %v1840
        %v1931 = vunpack.c.l.b16 %v1841
        %v1932 = vunpack.c.l.b16 %v1842
        %v1933 = vunpack.c.l.b16 %v1843
        %v1934 = vunpack.c.l.b16 %v1844
        %v1935 = vunpack.c.l.b16 %v1845
        %v1936 = vunpack.c.l.b16 %v1846
        %v1937 = vunpack.c.l.b16 %v1847
        %v1938 = vunpack.c.l.b16 %v1848
        %v1939 = vpack.c.b16 %v1924, %v1923
        %v1940 = vpack.c.b16 %v1926, %v1925
        %v1941 = vpack.c.b16 %v1928, %v1927
        %v1942 = vpack.c.b16 %v1930, %v1929
        %v1943 = vpack.c.b16 %v1932, %v1931
        %v1944 = vpack.c.b16 %v1934, %v1933
        %v1945 = vpack.c.b16 %v1936, %v1935
        %v1946 = vpack.c.b16 %v1938, %v1937
        %1955 = vmatprep.subr.bf16.mxu0 0
        %1956 = vmatpush1.bf16.msra.mxu0 %v1939
        %1957 = vmatprep.subr.bf16.mxu0 0
        %1958 = vmatpush1.bf16.msra.mxu0 %v1940
        %1959 = vmatprep.subr.bf16.mxu0 0
        %1960 = vmatpush1.bf16.msra.mxu0 %v1941
        %1961 = vmatprep.subr.bf16.mxu0 0
        %1962 = vmatpush1.bf16.msra.mxu0 %v1942
        %1963 = vmatprep.subr.bf16.mxu0 0
        %1964 = vmatpush1.bf16.msra.mxu0 %v1943
        %1965 = vmatprep.subr.bf16.mxu0 0
        %1966 = vmatpush1.bf16.msra.mxu0 %v1944
        %1967 = vmatprep.subr.bf16.mxu0 0
        %1968 = vmatpush1.bf16.msra.mxu0 %v1945
        %1969 = vmatprep.subr.bf16.mxu0 0
        %1970 = vmatpush1.bf16.msra.mxu0 %v1946
        %1971 = vmatprep.subr.bf16.mxu0 0
        %1972 = vmatpush1.bf16.msra.mxu0 0
        %1973 = vmatprep.subr.bf16.mxu0 0
        %1974 = vmatpush1.bf16.msra.mxu0 0
        %1975 = vmatprep.subr.bf16.mxu0 0
        %1976 = vmatpush1.bf16.msra.mxu0 0
        %1977 = vmatprep.subr.bf16.mxu0 0
        %1978 = vmatpush1.bf16.msra.mxu0 0
        %1979 = vmatprep.subr.bf16.mxu0 0
        %1980 = vmatpush1.bf16.msra.mxu0 0
        %1981 = vmatprep.subr.bf16.mxu0 0
        %1982 = vmatpush1.bf16.msra.mxu0 0
        %1983 = vmatprep.subr.bf16.mxu0 0
        %1984 = vmatpush1.bf16.msra.mxu0 0
        %1985 = vmatprep.subr.bf16.mxu0 0
        %1986 = vmatpush1.bf16.msra.mxu0 0
        %1987 = vmatprep.mubr.bf16.mxu0 0
        %1988 = vmatmul.mubr.bf16.gmra.mrb[0].mxu0 %v1832
        %v1989 = vpop.f32.mrb[0].mxu0
        %v1990 = vadd.f32 %v1905, %v1989
        %v1991 = vpop.f32.mrb[0].mxu0
        %v1992 = vpop.f32.mrb[0].mxu0
        %v1993 = vpop.f32.mrb[0].mxu0
        %1994 = vdwg.mxu0
        %v1995 = vmul.f32 %v1990, 0.35355338
        %v1997 = vlaneseq
        %v1998 = vshrl.u32 %v1997, 7
        %v1999 = vsub.s32 0, %v1998
        %v2000 = vrot.slane %v1882, %v1999
        %v2018 = vunpack.c.l.b16 %v1849
        %v2019 = vunpack.c.l.b16 %v1850
        %v2020 = vunpack.c.l.b16 %v1851
        %v2021 = vunpack.c.l.b16 %v1852
        %v2022 = vunpack.c.l.b16 %v1853
        %v2023 = vunpack.c.l.b16 %v1854
        %v2024 = vunpack.c.l.b16 %v1855
        %v2025 = vunpack.c.l.b16 %v1856
        %v2026 = vunpack.c.l.b16 %v1857
        %v2027 = vunpack.c.l.b16 %v1858
        %v2028 = vunpack.c.l.b16 %v1859
        %v2029 = vunpack.c.l.b16 %v1860
        %v2030 = vunpack.c.l.b16 %v1861
        %v2031 = vunpack.c.l.b16 %v1862
        %v2032 = vunpack.c.l.b16 %v1863
        %v2033 = vunpack.c.l.b16 %v1864
        %v2034 = vpack.c.b16 %v2019, %v2018
        %v2035 = vpack.c.b16 %v2021, %v2020
        %v2036 = vpack.c.b16 %v2023, %v2022
        %v2037 = vpack.c.b16 %v2025, %v2024
        %v2038 = vpack.c.b16 %v2027, %v2026
        %v2039 = vpack.c.b16 %v2029, %v2028
        %v2040 = vpack.c.b16 %v2031, %v2030
        %v2041 = vpack.c.b16 %v2033, %v2032
        %2050 = vmatprep.subr.bf16.mxu0 0
        %2051 = vmatpush1.bf16.msra.mxu0 %v2034
        %2052 = vmatprep.subr.bf16.mxu0 0
        %2053 = vmatpush1.bf16.msra.mxu0 %v2035
        %2054 = vmatprep.subr.bf16.mxu0 0
        %2055 = vmatpush1.bf16.msra.mxu0 %v2036
        %2056 = vmatprep.subr.bf16.mxu0 0
        %2057 = vmatpush1.bf16.msra.mxu0 %v2037
        %2058 = vmatprep.subr.bf16.mxu0 0
        %2059 = vmatpush1.bf16.msra.mxu0 %v2038
        %2060 = vmatprep.subr.bf16.mxu0 0
        %2061 = vmatpush1.bf16.msra.mxu0 %v2039
        %2062 = vmatprep.subr.bf16.mxu0 0
        %2063 = vmatpush1.bf16.msra.mxu0 %v2040
        %2064 = vmatprep.subr.bf16.mxu0 0
        %2065 = vmatpush1.bf16.msra.mxu0 %v2041
        %2066 = vmatprep.subr.bf16.mxu0 0
        %2067 = vmatpush1.bf16.msra.mxu0 0
        %2068 = vmatprep.subr.bf16.mxu0 0
        %2069 = vmatpush1.bf16.msra.mxu0 0
        %2070 = vmatprep.subr.bf16.mxu0 0
        %2071 = vmatpush1.bf16.msra.mxu0 0
        %2072 = vmatprep.subr.bf16.mxu0 0
        %2073 = vmatpush1.bf16.msra.mxu0 0
        %2074 = vmatprep.subr.bf16.mxu0 0
        %2075 = vmatpush1.bf16.msra.mxu0 0
        %2076 = vmatprep.subr.bf16.mxu0 0
        %2077 = vmatpush1.bf16.msra.mxu0 0
        %2078 = vmatprep.subr.bf16.mxu0 0
        %2079 = vmatpush1.bf16.msra.mxu0 0
        %2080 = vmatprep.subr.bf16.mxu0 0
        %2081 = vmatpush1.bf16.msra.mxu0 0
        %2082 = vmatprep.mubr.bf16.mxu0 0
        %2083 = vmatmul.mubr.bf16.gmra.mrb[0].mxu0 %v919
        %v2084 = vpop.f32.mrb[0].mxu0
        %v2085 = vadd.f32 %v2000, %v2084
        %v2086 = vpop.f32.mrb[0].mxu0
        %v2087 = vpop.f32.mrb[0].mxu0
        %v2088 = vpop.f32.mrb[0].mxu0
        %2089 = vdwg.mxu0
        %v2091 = vlaneseq
        %v2092 = vshrl.u32 %v2091, 7
        %v2093 = vsub.s32 0, %v2092
        %v2094 = vrot.slane %v1883, %v2093
        %v2112 = vunpack.c.l.b16 %v1865
        %v2113 = vunpack.c.l.b16 %v1866
        %v2114 = vunpack.c.l.b16 %v1867
        %v2115 = vunpack.c.l.b16 %v1868
        %v2116 = vunpack.c.l.b16 %v1869
        %v2117 = vunpack.c.l.b16 %v1870
        %v2118 = vunpack.c.l.b16 %v1871
        %v2119 = vunpack.c.l.b16 %v1872
        %v2120 = vunpack.c.l.b16 %v1873
        %v2121 = vunpack.c.l.b16 %v1874
        %v2122 = vunpack.c.l.b16 %v1875
        %v2123 = vunpack.c.l.b16 %v1876
        %v2124 = vunpack.c.l.b16 %v1877
        %v2125 = vunpack.c.l.b16 %v1878
        %v2126 = vunpack.c.l.b16 %v1879
        %v2127 = vunpack.c.l.b16 %v1880
        %v2128 = vpack.c.b16 %v2113, %v2112
        %v2129 = vpack.c.b16 %v2115, %v2114
        %v2130 = vpack.c.b16 %v2117, %v2116
        %v2131 = vpack.c.b16 %v2119, %v2118
        %v2132 = vpack.c.b16 %v2121, %v2120
        %v2133 = vpack.c.b16 %v2123, %v2122
        %v2134 = vpack.c.b16 %v2125, %v2124
        %v2135 = vpack.c.b16 %v2127, %v2126
        %2144 = vmatprep.subr.bf16.mxu0 0
        %2145 = vmatpush1.bf16.msra.mxu0 %v2128
        %2146 = vmatprep.subr.bf16.mxu0 0
        %2147 = vmatpush1.bf16.msra.mxu0 %v2129
        %2148 = vmatprep.subr.bf16.mxu0 0
        %2149 = vmatpush1.bf16.msra.mxu0 %v2130
        %2150 = vmatprep.subr.bf16.mxu0 0
        %2151 = vmatpush1.bf16.msra.mxu0 %v2131
        %2152 = vmatprep.subr.bf16.mxu0 0
        %2153 = vmatpush1.bf16.msra.mxu0 %v2132
        %2154 = vmatprep.subr.bf16.mxu0 0
        %2155 = vmatpush1.bf16.msra.mxu0 %v2133
        %2156 = vmatprep.subr.bf16.mxu0 0
        %2157 = vmatpush1.bf16.msra.mxu0 %v2134
        %2158 = vmatprep.subr.bf16.mxu0 0
        %2159 = vmatpush1.bf16.msra.mxu0 %v2135
        %2160 = vmatprep.subr.bf16.mxu0 0
        %2161 = vmatpush1.bf16.msra.mxu0 0
        %2162 = vmatprep.subr.bf16.mxu0 0
        %2163 = vmatpush1.bf16.msra.mxu0 0
        %2164 = vmatprep.subr.bf16.mxu0 0
        %2165 = vmatpush1.bf16.msra.mxu0 0
        %2166 = vmatprep.subr.bf16.mxu0 0
        %2167 = vmatpush1.bf16.msra.mxu0 0
        %2168 = vmatprep.subr.bf16.mxu0 0
        %2169 = vmatpush1.bf16.msra.mxu0 0
        %2170 = vmatprep.subr.bf16.mxu0 0
        %2171 = vmatpush1.bf16.msra.mxu0 0
        %2172 = vmatprep.subr.bf16.mxu0 0
        %2173 = vmatpush1.bf16.msra.mxu0 0
        %2174 = vmatprep.subr.bf16.mxu0 0
        %2175 = vmatpush1.bf16.msra.mxu0 0
        %2176 = vmatprep.mubr.bf16.mxu0 0
        %2177 = vmatmul.mubr.bf16.gmra.mrb[0].mxu0 %v919
        %v2178 = vpop.f32.mrb[0].mxu0
        %v2179 = vadd.f32 %v2094, %v2178
        %v2180 = vpop.f32.mrb[0].mxu0
        %v2181 = vpop.f32.mrb[0].mxu0
        %v2182 = vpop.f32.mrb[0].mxu0
        %2183 = vdwg.mxu0
        %v2184 = vpack.c.bf16 %v1995, %v1995
        %v2185 = vpack.c.bf16 %v2085, %v2085
        %v2186 = vpack.c.bf16 %v2179, %v2179
        %v2188 = vsel %vm1274, %v2184, 0
        %v2191 = vsel %vm1274, %v2185, 0
        %2193 = vmatprep.subr.bf16.mxu0 0
        %2194 = vmatpush1.bf16.xpose.msra.mxu0 %v2191
        %2195 = vmatprep.subr.bf16.mxu0 0
        %2196 = vmatpush1.bf16.xpose.msra.mxu0 0
        %2197 = vmatprep.subr.bf16.mxu0 0
        %2198 = vmatpush1.bf16.xpose.msra.mxu0 0
        %2199 = vmatprep.subr.bf16.mxu0 0
        %2200 = vmatpush1.bf16.xpose.msra.mxu0 0
        %2201 = vmatprep.subr.bf16.mxu0 0
        %2202 = vmatpush1.bf16.xpose.msra.mxu0 0
        %2203 = vmatprep.subr.bf16.mxu0 0
        %2204 = vmatpush1.bf16.xpose.msra.mxu0 0
        %2205 = vmatprep.subr.bf16.mxu0 0
        %2206 = vmatpush1.bf16.xpose.msra.mxu0 0
        %2207 = vmatprep.subr.bf16.mxu0 0
        %2208 = vmatpush1.bf16.xpose.msra.mxu0 0
        %2209 = vmatprep.subr.bf16.mxu0 0
        %2210 = vmatpush1.bf16.xpose.msra.mxu0 0
        %2211 = vmatprep.subr.bf16.mxu0 0
        %2212 = vmatpush1.bf16.xpose.msra.mxu0 0
        %2213 = vmatprep.subr.bf16.mxu0 0
        %2214 = vmatpush1.bf16.xpose.msra.mxu0 0
        %2215 = vmatprep.subr.bf16.mxu0 0
        %2216 = vmatpush1.bf16.xpose.msra.mxu0 0
        %2217 = vmatprep.subr.bf16.mxu0 0
        %2218 = vmatpush1.bf16.xpose.msra.mxu0 0
        %2219 = vmatprep.subr.bf16.mxu0 0
        %2220 = vmatpush1.bf16.xpose.msra.mxu0 0
        %2221 = vmatprep.subr.bf16.mxu0 0
        %2222 = vmatpush1.bf16.xpose.msra.mxu0 0
        %2223 = vmatprep.subr.bf16.mxu0 0
        %2224 = vmatpush1.bf16.xpose.msra.mxu0 0
        %2225 = vmatprep.mubr.bf16.mxu0 0
        %2226 = vmatmul.mubr.bf16.gmra.mrb[0].mxu0 %v2188
        %v2227 = vpop.f32.mrb[0].mxu0
        %v2228 = vadd.f32 0.0, %v2227
        %v2229 = vpop.f32.mrb[0].mxu0
        %v2230 = vpop.f32.mrb[0].mxu0
        %v2231 = vpop.f32.mrb[0].mxu0
        %2232 = vdwg.mxu0
        %v2233 = vsel %vm1321, %v2228, -inf
        %2234 = vmax.xlane.f32.xlu0 %v2233
        %v2235 = vpop.xlane.xlu0 %2234
        %v2236 = vsub.f32 %v2228, %v2235
        %v2237 = vmul.f32 %v2236, 1.442695
        %v2238 = vpow.pop %v2237
        %v2239 = vsel %vm1321, %v2238, 0.0
        %2240 = vadd.xlane.f32.xlu0 %v2239
        %v2241 = vpop.xlane.xlu0 %2240
        %v2242 = vrcp.pop %v2241
        %v2243 = vmul.f32 %v2238, %v2242
        %v2244 = vpack.c.bf16 %v2243, %v2243
        %v2246 = vsel %vm1321, %v2244, 0
        %v2249 = vsel %vm1337, %v2186, 0
        %2251 = vmatprep.subr.bf16.mxu0 0
        %2252 = vmatpush1.bf16.msra.mxu0 %v2249
        %2253 = vmatprep.subr.bf16.mxu0 0
        %2254 = vmatpush1.bf16.msra.mxu0 0
        %2255 = vmatprep.subr.bf16.mxu0 0
        %2256 = vmatpush1.bf16.msra.mxu0 0
        %2257 = vmatprep.subr.bf16.mxu0 0
        %2258 = vmatpush1.bf16.msra.mxu0 0
        %2259 = vmatprep.subr.bf16.mxu0 0
        %2260 = vmatpush1.bf16.msra.mxu0 0
        %2261 = vmatprep.subr.bf16.mxu0 0
        %2262 = vmatpush1.bf16.msra.mxu0 0
        %2263 = vmatprep.subr.bf16.mxu0 0
        %2264 = vmatpush1.bf16.msra.mxu0 0
        %2265 = vmatprep.subr.bf16.mxu0 0
        %2266 = vmatpush1.bf16.msra.mxu0 0
        %2267 = vmatprep.subr.bf16.mxu0 0
        %2268 = vmatpush1.bf16.msra.mxu0 0
        %2269 = vmatprep.subr.bf16.mxu0 0
        %2270 = vmatpush1.bf16.msra.mxu0 0
        %2271 = vmatprep.subr.bf16.mxu0 0
        %2272 = vmatpush1.bf16.msra.mxu0 0
        %2273 = vmatprep.subr.bf16.mxu0 0
        %2274 = vmatpush1.bf16.msra.mxu0 0
        %2275 = vmatprep.subr.bf16.mxu0 0
        %2276 = vmatpush1.bf16.msra.mxu0 0
        %2277 = vmatprep.subr.bf16.mxu0 0
        %2278 = vmatpush1.bf16.msra.mxu0 0
        %2279 = vmatprep.subr.bf16.mxu0 0
        %2280 = vmatpush1.bf16.msra.mxu0 0
        %2281 = vmatprep.subr.bf16.mxu0 0
        %2282 = vmatpush1.bf16.msra.mxu0 0
        %2283 = vmatprep.mubr.bf16.mxu0 0
        %2284 = vmatmul.mubr.bf16.gmra.mrb[0].mxu0 %v2246
        %v2285 = vpop.f32.mrb[0].mxu0
        %v2286 = vadd.f32 0.0, %v2285
        %v2287 = vpop.f32.mrb[0].mxu0
        %v2288 = vpop.f32.mrb[0].mxu0
        %v2289 = vpop.f32.mrb[0].mxu0
        %2290 = vdwg.mxu0
        %v2291 = vpack.c.bf16 %v2286, %v2286
        %2293 = vrot.lane.b32.xlu0 %v2184, 96
        %v2294 = vpop.permute.xlu0 %2293
        %2296 = vrot.lane.b32.xlu0 %v2185, 96
        %v2297 = vpop.permute.xlu0 %2296
        %v2299 = vsel %vm1274, %v2294, 0
        %v2302 = vsel %vm1274, %v2297, 0
        %2304 = vmatprep.subr.bf16.mxu0 0
        %2305 = vmatpush1.bf16.xpose.msra.mxu0 %v2302
        %2306 = vmatprep.subr.bf16.mxu0 0
        %2307 = vmatpush1.bf16.xpose.msra.mxu0 0
        %2308 = vmatprep.subr.bf16.mxu0 0
        %2309 = vmatpush1.bf16.xpose.msra.mxu0 0
        %2310 = vmatprep.subr.bf16.mxu0 0
        %2311 = vmatpush1.bf16.xpose.msra.mxu0 0
        %2312 = vmatprep.subr.bf16.mxu0 0
        %2313 = vmatpush1.bf16.xpose.msra.mxu0 0
        %2314 = vmatprep.subr.bf16.mxu0 0
        %2315 = vmatpush1.bf16.xpose.msra.mxu0 0
        %2316 = vmatprep.subr.bf16.mxu0 0
        %2317 = vmatpush1.bf16.xpose.msra.mxu0 0
        %2318 = vmatprep.subr.bf16.mxu0 0
        %2319 = vmatpush1.bf16.xpose.msra.mxu0 0
        %2320 = vmatprep.subr.bf16.mxu0 0
        %2321 = vmatpush1.bf16.xpose.msra.mxu0 0
        %2322 = vmatprep.subr.bf16.mxu0 0
        %2323 = vmatpush1.bf16.xpose.msra.mxu0 0
        %2324 = vmatprep.subr.bf16.mxu0 0
        %2325 = vmatpush1.bf16.xpose.msra.mxu0 0
        %2326 = vmatprep.subr.bf16.mxu0 0
        %2327 = vmatpush1.bf16.xpose.msra.mxu0 0
        %2328 = vmatprep.subr.bf16.mxu0 0
        %2329 = vmatpush1.bf16.xpose.msra.mxu0 0
        %2330 = vmatprep.subr.bf16.mxu0 0
        %2331 = vmatpush1.bf16.xpose.msra.mxu0 0
        %2332 = vmatprep.subr.bf16.mxu0 0
        %2333 = vmatpush1.bf16.xpose.msra.mxu0 0
        %2334 = vmatprep.subr.bf16.mxu0 0
        %2335 = vmatpush1.bf16.xpose.msra.mxu0 0
        %2336 = vmatprep.mubr.bf16.mxu0 0
        %2337 = vmatmul.mubr.bf16.gmra.mrb[0].mxu0 %v2299
        %v2338 = vpop.f32.mrb[0].mxu0
        %v2339 = vadd.f32 0.0, %v2338
        %v2340 = vpop.f32.mrb[0].mxu0
        %v2341 = vpop.f32.mrb[0].mxu0
        %v2342 = vpop.f32.mrb[0].mxu0
        %2343 = vdwg.mxu0
        %v2344 = vsel %vm1321, %v2339, -inf
        %2345 = vmax.xlane.f32.xlu0 %v2344
        %v2346 = vpop.xlane.xlu0 %2345
        %v2347 = vsub.f32 %v2339, %v2346
        %v2348 = vmul.f32 %v2347, 1.442695
        %v2349 = vpow.pop %v2348
        %v2350 = vsel %vm1321, %v2349, 0.0
        %2351 = vadd.xlane.f32.xlu0 %v2350
        %v2352 = vpop.xlane.xlu0 %2351
        %v2353 = vrcp.pop %v2352
        %v2354 = vmul.f32 %v2349, %v2353
        %v2355 = vpack.c.bf16 %v2354, %v2354
        %2357 = vrot.lane.b32.xlu0 %v2186, 96
        %v2358 = vpop.permute.xlu0 %2357
        %v2360 = vsel %vm1321, %v2355, 0
        %v2363 = vsel %vm1337, %v2358, 0
        %2365 = vmatprep.subr.bf16.mxu0 0
        %2366 = vmatpush1.bf16.msra.mxu0 %v2363
        %2367 = vmatprep.subr.bf16.mxu0 0
        %2368 = vmatpush1.bf16.msra.mxu0 0
        %2369 = vmatprep.subr.bf16.mxu0 0
        %2370 = vmatpush1.bf16.msra.mxu0 0
        %2371 = vmatprep.subr.bf16.mxu0 0
        %2372 = vmatpush1.bf16.msra.mxu0 0
        %2373 = vmatprep.subr.bf16.mxu0 0
        %2374 = vmatpush1.bf16.msra.mxu0 0
        %2375 = vmatprep.subr.bf16.mxu0 0
        %2376 = vmatpush1.bf16.msra.mxu0 0
        %2377 = vmatprep.subr.bf16.mxu0 0
        %2378 = vmatpush1.bf16.msra.mxu0 0
        %2379 = vmatprep.subr.bf16.mxu0 0
        %2380 = vmatpush1.bf16.msra.mxu0 0
        %2381 = vmatprep.subr.bf16.mxu0 0
        %2382 = vmatpush1.bf16.msra.mxu0 0
        %2383 = vmatprep.subr.bf16.mxu0 0
        %2384 = vmatpush1.bf16.msra.mxu0 0
        %2385 = vmatprep.subr.bf16.mxu0 0
        %2386 = vmatpush1.bf16.msra.mxu0 0
        %2387 = vmatprep.subr.bf16.mxu0 0
        %2388 = vmatpush1.bf16.msra.mxu0 0
        %2389 = vmatprep.subr.bf16.mxu0 0
        %2390 = vmatpush1.bf16.msra.mxu0 0
        %2391 = vmatprep.subr.bf16.mxu0 0
        %2392 = vmatpush1.bf16.msra.mxu0 0
        %2393 = vmatprep.subr.bf16.mxu0 0
        %2394 = vmatpush1.bf16.msra.mxu0 0
        %2395 = vmatprep.subr.bf16.mxu0 0
        %2396 = vmatpush1.bf16.msra.mxu0 0
        %2397 = vmatprep.mubr.bf16.mxu0 0
        %2398 = vmatmul.mubr.bf16.gmra.mrb[0].mxu0 %v2360
        %v2399 = vpop.f32.mrb[0].mxu0
        %v2400 = vadd.f32 0.0, %v2399
        %v2401 = vpop.f32.mrb[0].mxu0
        %v2402 = vpop.f32.mrb[0].mxu0
        %v2403 = vpop.f32.mrb[0].mxu0
        %2404 = vdwg.mxu0
        %v2405 = vpack.c.bf16 %v2400, %v2400
        %2406 = vrot.lane.b32.xlu0 %v2184, 64
        %v2407 = vpop.permute.xlu0 %2406
        %2408 = vrot.lane.b32.xlu0 %v2185, 64
        %v2409 = vpop.permute.xlu0 %2408
        %v2411 = vsel %vm1274, %v2407, 0
        %v2414 = vsel %vm1274, %v2409, 0
        %2416 = vmatprep.subr.bf16.mxu0 0
        %2417 = vmatpush1.bf16.xpose.msra.mxu0 %v2414
        %2418 = vmatprep.subr.bf16.mxu0 0
        %2419 = vmatpush1.bf16.xpose.msra.mxu0 0
        %2420 = vmatprep.subr.bf16.mxu0 0
        %2421 = vmatpush1.bf16.xpose.msra.mxu0 0
        %2422 = vmatprep.subr.bf16.mxu0 0
        %2423 = vmatpush1.bf16.xpose.msra.mxu0 0
        %2424 = vmatprep.subr.bf16.mxu0 0
        %2425 = vmatpush1.bf16.xpose.msra.mxu0 0
        %2426 = vmatprep.subr.bf16.mxu0 0
        %2427 = vmatpush1.bf16.xpose.msra.mxu0 0
        %2428 = vmatprep.subr.bf16.mxu0 0
        %2429 = vmatpush1.bf16.xpose.msra.mxu0 0
        %2430 = vmatprep.subr.bf16.mxu0 0
        %2431 = vmatpush1.bf16.xpose.msra.mxu0 0
        %2432 = vmatprep.subr.bf16.mxu0 0
        %2433 = vmatpush1.bf16.xpose.msra.mxu0 0
        %2434 = vmatprep.subr.bf16.mxu0 0
        %2435 = vmatpush1.bf16.xpose.msra.mxu0 0
        %2436 = vmatprep.subr.bf16.mxu0 0
        %2437 = vmatpush1.bf16.xpose.msra.mxu0 0
        %2438 = vmatprep.subr.bf16.mxu0 0
        %2439 = vmatpush1.bf16.xpose.msra.mxu0 0
        %2440 = vmatprep.subr.bf16.mxu0 0
        %2441 = vmatpush1.bf16.xpose.msra.mxu0 0
        %2442 = vmatprep.subr.bf16.mxu0 0
        %2443 = vmatpush1.bf16.xpose.msra.mxu0 0
        %2444 = vmatprep.subr.bf16.mxu0 0
        %2445 = vmatpush1.bf16.xpose.msra.mxu0 0
        %2446 = vmatprep.subr.bf16.mxu0 0
        %2447 = vmatpush1.bf16.xpose.msra.mxu0 0
        %2448 = vmatprep.mubr.bf16.mxu0 0
        %2449 = vmatmul.mubr.bf16.gmra.mrb[0].mxu0 %v2411
        %v2450 = vpop.f32.mrb[0].mxu0
        %v2451 = vadd.f32 0.0, %v2450
        %v2452 = vpop.f32.mrb[0].mxu0
        %v2453 = vpop.f32.mrb[0].mxu0
        %v2454 = vpop.f32.mrb[0].mxu0
        %2455 = vdwg.mxu0
        %v2456 = vsel %vm1321, %v2451, -inf
        %2457 = vmax.xlane.f32.xlu0 %v2456
        %v2458 = vpop.xlane.xlu0 %2457
        %v2459 = vsub.f32 %v2451, %v2458
        %v2460 = vmul.f32 %v2459, 1.442695
        %v2461 = vpow.pop %v2460
        %v2462 = vsel %vm1321, %v2461, 0.0
        %2463 = vadd.xlane.f32.xlu0 %v2462
        %v2464 = vpop.xlane.xlu0 %2463
        %v2465 = vrcp.pop %v2464
        %v2466 = vmul.f32 %v2461, %v2465
        %v2467 = vpack.c.bf16 %v2466, %v2466
        %2468 = vrot.lane.b32.xlu0 %v2186, 64
        %v2469 = vpop.permute.xlu0 %2468
        %v2471 = vsel %vm1321, %v2467, 0
        %v2474 = vsel %vm1337, %v2469, 0
        %2476 = vmatprep.subr.bf16.mxu0 0
        %2477 = vmatpush1.bf16.msra.mxu0 %v2474
        %2478 = vmatprep.subr.bf16.mxu0 0
        %2479 = vmatpush1.bf16.msra.mxu0 0
        %2480 = vmatprep.subr.bf16.mxu0 0
        %2481 = vmatpush1.bf16.msra.mxu0 0
        %2482 = vmatprep.subr.bf16.mxu0 0
        %2483 = vmatpush1.bf16.msra.mxu0 0
        %2484 = vmatprep.subr.bf16.mxu0 0
        %2485 = vmatpush1.bf16.msra.mxu0 0
        %2486 = vmatprep.subr.bf16.mxu0 0
        %2487 = vmatpush1.bf16.msra.mxu0 0
        %2488 = vmatprep.subr.bf16.mxu0 0
        %2489 = vmatpush1.bf16.msra.mxu0 0
        %2490 = vmatprep.subr.bf16.mxu0 0
        %2491 = vmatpush1.bf16.msra.mxu0 0
        %2492 = vmatprep.subr.bf16.mxu0 0
        %2493 = vmatpush1.bf16.msra.mxu0 0
        %2494 = vmatprep.subr.bf16.mxu0 0
        %2495 = vmatpush1.bf16.msra.mxu0 0
        %2496 = vmatprep.subr.bf16.mxu0 0
        %2497 = vmatpush1.bf16.msra.mxu0 0
        %2498 = vmatprep.subr.bf16.mxu0 0
        %2499 = vmatpush1.bf16.msra.mxu0 0
        %2500 = vmatprep.subr.bf16.mxu0 0
        %2501 = vmatpush1.bf16.msra.mxu0 0
        %2502 = vmatprep.subr.bf16.mxu0 0
        %2503 = vmatpush1.bf16.msra.mxu0 0
        %2504 = vmatprep.subr.bf16.mxu0 0
        %2505 = vmatpush1.bf16.msra.mxu0 0
        %2506 = vmatprep.subr.bf16.mxu0 0
        %2507 = vmatpush1.bf16.msra.mxu0 0
        %2508 = vmatprep.mubr.bf16.mxu0 0
        %2509 = vmatmul.mubr.bf16.gmra.mrb[0].mxu0 %v2471
        %v2510 = vpop.f32.mrb[0].mxu0
        %v2511 = vadd.f32 0.0, %v2510
        %v2512 = vpop.f32.mrb[0].mxu0
        %v2513 = vpop.f32.mrb[0].mxu0
        %v2514 = vpop.f32.mrb[0].mxu0
        %2515 = vdwg.mxu0
        %v2516 = vpack.c.bf16 %v2511, %v2511
        %2517 = vrot.lane.b32.xlu0 %v2184, 32
        %v2518 = vpop.permute.xlu0 %2517
        %2519 = vrot.lane.b32.xlu0 %v2185, 32
        %v2520 = vpop.permute.xlu0 %2519
        %v2522 = vsel %vm1274, %v2518, 0
        %v2525 = vsel %vm1274, %v2520, 0
        %2527 = vmatprep.subr.bf16.mxu0 0
        %2528 = vmatpush1.bf16.xpose.msra.mxu0 %v2525
        %2529 = vmatprep.subr.bf16.mxu0 0
        %2530 = vmatpush1.bf16.xpose.msra.mxu0 0
        %2531 = vmatprep.subr.bf16.mxu0 0
        %2532 = vmatpush1.bf16.xpose.msra.mxu0 0
        %2533 = vmatprep.subr.bf16.mxu0 0
        %2534 = vmatpush1.bf16.xpose.msra.mxu0 0
        %2535 = vmatprep.subr.bf16.mxu0 0
        %2536 = vmatpush1.bf16.xpose.msra.mxu0 0
        %2537 = vmatprep.subr.bf16.mxu0 0
        %2538 = vmatpush1.bf16.xpose.msra.mxu0 0
        %2539 = vmatprep.subr.bf16.mxu0 0
        %2540 = vmatpush1.bf16.xpose.msra.mxu0 0
        %2541 = vmatprep.subr.bf16.mxu0 0
        %2542 = vmatpush1.bf16.xpose.msra.mxu0 0
        %2543 = vmatprep.subr.bf16.mxu0 0
        %2544 = vmatpush1.bf16.xpose.msra.mxu0 0
        %2545 = vmatprep.subr.bf16.mxu0 0
        %2546 = vmatpush1.bf16.xpose.msra.mxu0 0
        %2547 = vmatprep.subr.bf16.mxu0 0
        %2548 = vmatpush1.bf16.xpose.msra.mxu0 0
        %2549 = vmatprep.subr.bf16.mxu0 0
        %2550 = vmatpush1.bf16.xpose.msra.mxu0 0
        %2551 = vmatprep.subr.bf16.mxu0 0
        %2552 = vmatpush1.bf16.xpose.msra.mxu0 0
        %2553 = vmatprep.subr.bf16.mxu0 0
        %2554 = vmatpush1.bf16.xpose.msra.mxu0 0
        %2555 = vmatprep.subr.bf16.mxu0 0
        %2556 = vmatpush1.bf16.xpose.msra.mxu0 0
        %2557 = vmatprep.subr.bf16.mxu0 0
        %2558 = vmatpush1.bf16.xpose.msra.mxu0 0
        %2559 = vmatprep.mubr.bf16.mxu0 0
        %2560 = vmatmul.mubr.bf16.gmra.mrb[0].mxu0 %v2522
        %v2561 = vpop.f32.mrb[0].mxu0
        %v2562 = vadd.f32 0.0, %v2561
        %v2563 = vpop.f32.mrb[0].mxu0
        %v2564 = vpop.f32.mrb[0].mxu0
        %v2565 = vpop.f32.mrb[0].mxu0
        %2566 = vdwg.mxu0
        %v2567 = vsel %vm1321, %v2562, -inf
        %2568 = vmax.xlane.f32.xlu0 %v2567
        %v2569 = vpop.xlane.xlu0 %2568
        %v2570 = vsub.f32 %v2562, %v2569
        %v2571 = vmul.f32 %v2570, 1.442695
        %v2572 = vpow.pop %v2571
        %v2573 = vsel %vm1321, %v2572, 0.0
        %2574 = vadd.xlane.f32.xlu0 %v2573
        %v2575 = vpop.xlane.xlu0 %2574
        %v2576 = vrcp.pop %v2575
        %v2577 = vmul.f32 %v2572, %v2576
        %v2578 = vpack.c.bf16 %v2577, %v2577
        %2579 = vrot.lane.b32.xlu0 %v2186, 32
        %v2580 = vpop.permute.xlu0 %2579
        %v2582 = vsel %vm1321, %v2578, 0
        %v2585 = vsel %vm1337, %v2580, 0
        %2587 = vmatprep.subr.bf16.mxu0 0
        %2588 = vmatpush1.bf16.msra.mxu0 %v2585
        %2589 = vmatprep.subr.bf16.mxu0 0
        %2590 = vmatpush1.bf16.msra.mxu0 0
        %2591 = vmatprep.subr.bf16.mxu0 0
        %2592 = vmatpush1.bf16.msra.mxu0 0
        %2593 = vmatprep.subr.bf16.mxu0 0
        %2594 = vmatpush1.bf16.msra.mxu0 0
        %2595 = vmatprep.subr.bf16.mxu0 0
        %2596 = vmatpush1.bf16.msra.mxu0 0
        %2597 = vmatprep.subr.bf16.mxu0 0
        %2598 = vmatpush1.bf16.msra.mxu0 0
        %2599 = vmatprep.subr.bf16.mxu0 0
        %2600 = vmatpush1.bf16.msra.mxu0 0
        %2601 = vmatprep.subr.bf16.mxu0 0
        %2602 = vmatpush1.bf16.msra.mxu0 0
        %2603 = vmatprep.subr.bf16.mxu0 0
        %2604 = vmatpush1.bf16.msra.mxu0 0
        %2605 = vmatprep.subr.bf16.mxu0 0
        %2606 = vmatpush1.bf16.msra.mxu0 0
        %2607 = vmatprep.subr.bf16.mxu0 0
        %2608 = vmatpush1.bf16.msra.mxu0 0
        %2609 = vmatprep.subr.bf16.mxu0 0
        %2610 = vmatpush1.bf16.msra.mxu0 0
        %2611 = vmatprep.subr.bf16.mxu0 0
        %2612 = vmatpush1.bf16.msra.mxu0 0
        %2613 = vmatprep.subr.bf16.mxu0 0
        %2614 = vmatpush1.bf16.msra.mxu0 0
        %2615 = vmatprep.subr.bf16.mxu0 0
        %2616 = vmatpush1.bf16.msra.mxu0 0
        %2617 = vmatprep.subr.bf16.mxu0 0
        %2618 = vmatpush1.bf16.msra.mxu0 0
        %2619 = vmatprep.mubr.bf16.mxu0 0
        %2620 = vmatmul.mubr.bf16.gmra.mrb[0].mxu0 %v2582
        %v2621 = vpop.f32.mrb[0].mxu0
        %v2622 = vadd.f32 0.0, %v2621
        %v2623 = vpop.f32.mrb[0].mxu0
        %v2624 = vpop.f32.mrb[0].mxu0
        %v2625 = vpop.f32.mrb[0].mxu0
        %2626 = vdwg.mxu0
        %v2627 = vpack.c.bf16 %v2622, %v2622
        %2629 = vrot.lane.b32.xlu0 %v2405, 32
        %v2630 = vpop.permute.xlu0 %2629
        %2632 = vrot.lane.b32.xlu0 %v2516, 64
        %v2633 = vpop.permute.xlu0 %2632
        %2635 = vrot.lane.b32.xlu0 %v2627, 96
        %v2636 = vpop.permute.xlu0 %2635
        %v2639 = vsel %vm1274, %v2291, %v2630
        %v2641 = vsel %vm1730, %v2639, %v2633
        %v2643 = vsel %vm1733, %v2641, %v2636
        %v2646 = vlaneseq
        %v2647 = vshrl.u32 %v2646, 7
        %v2648 = vsub.s32 0, %v2647
        %v2649 = vrot.slane %v1900, %v2648
        %v2667 = vunpack.c.l.b16 %v1884
        %v2668 = vunpack.c.l.b16 %v1885
        %v2669 = vunpack.c.l.b16 %v1886
        %v2670 = vunpack.c.l.b16 %v1887
        %v2671 = vunpack.c.l.b16 %v1888
        %v2672 = vunpack.c.l.b16 %v1889
        %v2673 = vunpack.c.l.b16 %v1890
        %v2674 = vunpack.c.l.b16 %v1891
        %v2675 = vunpack.c.l.b16 %v1892
        %v2676 = vunpack.c.l.b16 %v1893
        %v2677 = vunpack.c.l.b16 %v1894
        %v2678 = vunpack.c.l.b16 %v1895
        %v2679 = vunpack.c.l.b16 %v1896
        %v2680 = vunpack.c.l.b16 %v1897
        %v2681 = vunpack.c.l.b16 %v1898
        %v2682 = vunpack.c.l.b16 %v1899
        %v2683 = vpack.c.b16 %v2668, %v2667
        %v2684 = vpack.c.b16 %v2670, %v2669
        %v2685 = vpack.c.b16 %v2672, %v2671
        %v2686 = vpack.c.b16 %v2674, %v2673
        %v2687 = vpack.c.b16 %v2676, %v2675
        %v2688 = vpack.c.b16 %v2678, %v2677
        %v2689 = vpack.c.b16 %v2680, %v2679
        %v2690 = vpack.c.b16 %v2682, %v2681
        %2699 = vmatprep.subr.bf16.mxu0 0
        %2700 = vmatpush1.bf16.msra.mxu0 %v2683
        %2701 = vmatprep.subr.bf16.mxu0 0
        %2702 = vmatpush1.bf16.msra.mxu0 %v2684
        %2703 = vmatprep.subr.bf16.mxu0 0
        %2704 = vmatpush1.bf16.msra.mxu0 %v2685
        %2705 = vmatprep.subr.bf16.mxu0 0
        %2706 = vmatpush1.bf16.msra.mxu0 %v2686
        %2707 = vmatprep.subr.bf16.mxu0 0
        %2708 = vmatpush1.bf16.msra.mxu0 %v2687
        %2709 = vmatprep.subr.bf16.mxu0 0
        %2710 = vmatpush1.bf16.msra.mxu0 %v2688
        %2711 = vmatprep.subr.bf16.mxu0 0
        %2712 = vmatpush1.bf16.msra.mxu0 %v2689
        %2713 = vmatprep.subr.bf16.mxu0 0
        %2714 = vmatpush1.bf16.msra.mxu0 %v2690
        %2715 = vmatprep.subr.bf16.mxu0 0
        %2716 = vmatpush1.bf16.msra.mxu0 0
        %2717 = vmatprep.subr.bf16.mxu0 0
        %2718 = vmatpush1.bf16.msra.mxu0 0
        %2719 = vmatprep.subr.bf16.mxu0 0
        %2720 = vmatpush1.bf16.msra.mxu0 0
        %2721 = vmatprep.subr.bf16.mxu0 0
        %2722 = vmatpush1.bf16.msra.mxu0 0
        %2723 = vmatprep.subr.bf16.mxu0 0
        %2724 = vmatpush1.bf16.msra.mxu0 0
        %2725 = vmatprep.subr.bf16.mxu0 0
        %2726 = vmatpush1.bf16.msra.mxu0 0
        %2727 = vmatprep.subr.bf16.mxu0 0
        %2728 = vmatpush1.bf16.msra.mxu0 0
        %2729 = vmatprep.subr.bf16.mxu0 0
        %2730 = vmatpush1.bf16.msra.mxu0 0
        %2731 = vmatprep.mubr.bf16.mxu0 0
        %2732 = vmatmul.mubr.bf16.gmra.mrb[0].mxu0 %v2643
        %v2733 = vpop.f32.mrb[0].mxu0
        %v2734 = vadd.f32 %v2649, %v2733
        %v2735 = vpop.f32.mrb[0].mxu0
        %v2736 = vpop.f32.mrb[0].mxu0
        %v2737 = vpop.f32.mrb[0].mxu0
        %2738 = vdwg.mxu0
        %v2739 = vadd.f32 %v1831, %v2734
        %v2740 = vpack.c.bf16 %v2739, %v2739
        %v2741 = vld [vmem:[%s18] sm:$0xf]
        %v2742 = vld [vmem:[%s18 + $0x4] sm:$0xf]
        %v2743 = vld [vmem:[%s18 + $0x8] sm:$0xf]
        %v2744 = vld [vmem:[%s18 + $0xc] sm:$0xf]
        %v2745 = vld [vmem:[%s18 + $0x10] sm:$0xf]
        %v2746 = vld [vmem:[%s18 + $0x14] sm:$0xf]
        %v2747 = vld [vmem:[%s18 + $0x18] sm:$0xf]
        %v2748 = vld [vmem:[%s18 + $0x1c] sm:$0xf]
        %v2749 = vld [vmem:[%s18 + $0x20] sm:$0xf]
        %v2750 = vld [vmem:[%s18 + $0x24] sm:$0xf]
        %v2751 = vld [vmem:[%s18 + $0x28] sm:$0xf]
        %v2752 = vld [vmem:[%s18 + $0x2c] sm:$0xf]
        %v2753 = vld [vmem:[%s18 + $0x30] sm:$0xf]
        %v2754 = vld [vmem:[%s18 + $0x34] sm:$0xf]
        %v2755 = vld [vmem:[%s18 + $0x38] sm:$0xf]
        %v2756 = vld [vmem:[%s18 + $0x3c] sm:$0xf]
        %v2757 = vld [vmem:[%s19] sm:$0x1]
        %v2759 = vlaneseq
        %v2760 = vshrl.u32 %v2759, 7
        %v2761 = vsub.s32 0, %v2760
        %v2762 = vrot.slane %v2757, %v2761
        %v2780 = vunpack.c.l.b16 %v2741
        %v2781 = vunpack.c.l.b16 %v2742
        %v2782 = vunpack.c.l.b16 %v2743
        %v2783 = vunpack.c.l.b16 %v2744
        %v2784 = vunpack.c.l.b16 %v2745
        %v2785 = vunpack.c.l.b16 %v2746
        %v2786 = vunpack.c.l.b16 %v2747
        %v2787 = vunpack.c.l.b16 %v2748
        %v2788 = vunpack.c.l.b16 %v2749
        %v2789 = vunpack.c.l.b16 %v2750
        %v2790 = vunpack.c.l.b16 %v2751
        %v2791 = vunpack.c.l.b16 %v2752
        %v2792 = vunpack.c.l.b16 %v2753
        %v2793 = vunpack.c.l.b16 %v2754
        %v2794 = vunpack.c.l.b16 %v2755
        %v2795 = vunpack.c.l.b16 %v2756
        %v2796 = vpack.c.b16 %v2781, %v2780
        %v2797 = vpack.c.b16 %v2783, %v2782
        %v2798 = vpack.c.b16 %v2785, %v2784
        %v2799 = vpack.c.b16 %v2787, %v2786
        %v2800 = vpack.c.b16 %v2789, %v2788
        %v2801 = vpack.c.b16 %v2791, %v2790
        %v2802 = vpack.c.b16 %v2793, %v2792
        %v2803 = vpack.c.b16 %v2795, %v2794
        %2812 = vmatprep.subr.bf16.mxu0 0
        %2813 = vmatpush1.bf16.msra.mxu0 %v2796
        %2814 = vmatprep.subr.bf16.mxu0 0
        %2815 = vmatpush1.bf16.msra.mxu0 %v2797
        %2816 = vmatprep.subr.bf16.mxu0 0
        %2817 = vmatpush1.bf16.msra.mxu0 %v2798
        %2818 = vmatprep.subr.bf16.mxu0 0
        %2819 = vmatpush1.bf16.msra.mxu0 %v2799
        %2820 = vmatprep.subr.bf16.mxu0 0
        %2821 = vmatpush1.bf16.msra.mxu0 %v2800
        %2822 = vmatprep.subr.bf16.mxu0 0
        %2823 = vmatpush1.bf16.msra.mxu0 %v2801
        %2824 = vmatprep.subr.bf16.mxu0 0
        %2825 = vmatpush1.bf16.msra.mxu0 %v2802
        %2826 = vmatprep.subr.bf16.mxu0 0
        %2827 = vmatpush1.bf16.msra.mxu0 %v2803
        %2828 = vmatprep.subr.bf16.mxu0 0
        %2829 = vmatpush1.bf16.msra.mxu0 0
        %2830 = vmatprep.subr.bf16.mxu0 0
        %2831 = vmatpush1.bf16.msra.mxu0 0
        %2832 = vmatprep.subr.bf16.mxu0 0
        %2833 = vmatpush1.bf16.msra.mxu0 0
        %2834 = vmatprep.subr.bf16.mxu0 0
        %2835 = vmatpush1.bf16.msra.mxu0 0
        %2836 = vmatprep.subr.bf16.mxu0 0
        %2837 = vmatpush1.bf16.msra.mxu0 0
        %2838 = vmatprep.subr.bf16.mxu0 0
        %2839 = vmatpush1.bf16.msra.mxu0 0
        %2840 = vmatprep.subr.bf16.mxu0 0
        %2841 = vmatpush1.bf16.msra.mxu0 0
        %2842 = vmatprep.subr.bf16.mxu0 0
        %2843 = vmatpush1.bf16.msra.mxu0 0
        %2844 = vmatprep.mubr.bf16.mxu0 0
        %2845 = vmatmul.mubr.bf16.gmra.mrb[0].mxu0 %v2740
        %v2846 = vpop.f32.mrb[0].mxu0
        %v2847 = vadd.f32 %v2762, %v2846
        %v2848 = vpop.f32.mrb[0].mxu0
        %v2849 = vpop.f32.mrb[0].mxu0
        %v2850 = vpop.f32.mrb[0].mxu0
        %2851 = vdwg.mxu0
        %v2852 = vpack.c.bf16 %v2847, %v2847
        %v2853 = vld [vmem:[#allocation25] sm:$0xf]
        %v2854 = vld [vmem:[#allocation25 + $0x4] sm:$0xf]
        %v2855 = vld [vmem:[#allocation25 + $0x8] sm:$0xf]
        %v2856 = vld [vmem:[#allocation25 + $0xc] sm:$0xf]
        %v2857 = vld [vmem:[#allocation25 + $0x10] sm:$0xf]
        %v2858 = vld [vmem:[#allocation25 + $0x14] sm:$0xf]
        %v2859 = vld [vmem:[#allocation25 + $0x18] sm:$0xf]
        %v2860 = vld [vmem:[#allocation25 + $0x1c] sm:$0xf]
        %v2861 = vld [vmem:[#allocation25 + $0x20] sm:$0xf]
        %v2862 = vld [vmem:[#allocation25 + $0x24] sm:$0xf]
        %v2863 = vld [vmem:[#allocation25 + $0x28] sm:$0xf]
        %v2864 = vld [vmem:[#allocation25 + $0x2c] sm:$0xf]
        %v2865 = vld [vmem:[#allocation25 + $0x30] sm:$0xf]
        %v2866 = vld [vmem:[#allocation25 + $0x34] sm:$0xf]
        %v2867 = vld [vmem:[#allocation25 + $0x38] sm:$0xf]
        %v2868 = vld [vmem:[#allocation25 + $0x3c] sm:$0xf]
        %v2869 = vld [vmem:[%s21] sm:$0x1]
        %v2871 = vlaneseq
        %v2872 = vshrl.u32 %v2871, 7
        %v2873 = vsub.s32 0, %v2872
        %v2874 = vrot.slane %v2869, %v2873
        %v2892 = vunpack.c.l.b16 %v2853
        %v2893 = vunpack.c.l.b16 %v2854
        %v2894 = vunpack.c.l.b16 %v2855
        %v2895 = vunpack.c.l.b16 %v2856
        %v2896 = vunpack.c.l.b16 %v2857
        %v2897 = vunpack.c.l.b16 %v2858
        %v2898 = vunpack.c.l.b16 %v2859
        %v2899 = vunpack.c.l.b16 %v2860
        %v2900 = vunpack.c.l.b16 %v2861
        %v2901 = vunpack.c.l.b16 %v2862
        %v2902 = vunpack.c.l.b16 %v2863
        %v2903 = vunpack.c.l.b16 %v2864
        %v2904 = vunpack.c.l.b16 %v2865
        %v2905 = vunpack.c.l.b16 %v2866
        %v2906 = vunpack.c.l.b16 %v2867
        %v2907 = vunpack.c.l.b16 %v2868
        %v2908 = vpack.c.b16 %v2893, %v2892
        %v2909 = vpack.c.b16 %v2895, %v2894
        %v2910 = vpack.c.b16 %v2897, %v2896
        %v2911 = vpack.c.b16 %v2899, %v2898
        %v2912 = vpack.c.b16 %v2901, %v2900
        %v2913 = vpack.c.b16 %v2903, %v2902
        %v2914 = vpack.c.b16 %v2905, %v2904
        %v2915 = vpack.c.b16 %v2907, %v2906
        %2924 = vmatprep.subr.bf16.mxu0 0
        %2925 = vmatpush1.bf16.msra.mxu0 %v2908
        %2926 = vmatprep.subr.bf16.mxu0 0
        %2927 = vmatpush1.bf16.msra.mxu0 %v2909
        %2928 = vmatprep.subr.bf16.mxu0 0
        %2929 = vmatpush1.bf16.msra.mxu0 %v2910
        %2930 = vmatprep.subr.bf16.mxu0 0
        %2931 = vmatpush1.bf16.msra.mxu0 %v2911
        %2932 = vmatprep.subr.bf16.mxu0 0
        %2933 = vmatpush1.bf16.msra.mxu0 %v2912
        %2934 = vmatprep.subr.bf16.mxu0 0
        %2935 = vmatpush1.bf16.msra.mxu0 %v2913
        %2936 = vmatprep.subr.bf16.mxu0 0
        %2937 = vmatpush1.bf16.msra.mxu0 %v2914
        %2938 = vmatprep.subr.bf16.mxu0 0
        %2939 = vmatpush1.bf16.msra.mxu0 %v2915
        %2940 = vmatprep.subr.bf16.mxu0 0
        %2941 = vmatpush1.bf16.msra.mxu0 0
        %2942 = vmatprep.subr.bf16.mxu0 0
        %2943 = vmatpush1.bf16.msra.mxu0 0
        %2944 = vmatprep.subr.bf16.mxu0 0
        %2945 = vmatpush1.bf16.msra.mxu0 0
        %2946 = vmatprep.subr.bf16.mxu0 0
        %2947 = vmatpush1.bf16.msra.mxu0 0
        %2948 = vmatprep.subr.bf16.mxu0 0
        %2949 = vmatpush1.bf16.msra.mxu0 0
        %2950 = vmatprep.subr.bf16.mxu0 0
        %2951 = vmatpush1.bf16.msra.mxu0 0
        %2952 = vmatprep.subr.bf16.mxu0 0
        %2953 = vmatpush1.bf16.msra.mxu0 0
        %2954 = vmatprep.subr.bf16.mxu0 0
        %2955 = vmatpush1.bf16.msra.mxu0 0
        %2956 = vmatprep.mubr.bf16.mxu0 0
        %2957 = vmatmul.mubr.bf16.gmra.mrb[0].mxu0 %v2852
        %v2958 = vpop.f32.mrb[0].mxu0
        %v2959 = vadd.f32 %v2874, %v2958
        %v2960 = vpop.f32.mrb[0].mxu0
        %v2961 = vpop.f32.mrb[0].mxu0
        %v2962 = vpop.f32.mrb[0].mxu0
        %2963 = vdwg.mxu0
        %v2964 = vadd.f32 %v2739, %v2959
        %2965 = vst [vmem:[%s915] sm:$0xff] %v2964
        %s2966 = sand.u32 %s528, 1
        %s2967 = scalar_lea.sflag [#allocation4], %s2966
        %s2968 = sand.u32 %s528, 1
        %s2969 = smul.addr %s2968, 8
        %s2970 = scalar_lea.vmem [#allocation26], %s2969
        // Predicated region
        $region169: #{tpu_custom_call.1} parent=107 // pred_check
          %p2971 = pneg %p538
        $region170: #{tpu_custom_call.1} parent=107 // pred_check_branch
          %2973 = sbr.rel (%p2971) target = $region172
        $region171: #{tpu_custom_call.1} parent=107 // pred_region
          %s2975 = ssub.s32 128, 128
          %2976 = vsyncadd %s2967, %s2975
          %s2977 = smul.addr %s48, 128
          %s2978 = scalar_lea.hbm %s22, %s2977
          %s2980 = sshll.u32 %s2970, 4
          %s2981 = int_to_ptr.vmem [resolvable:$true] %s2980
          %2983 = dma.vmem_to_hbm [thread:$0]  %s2981, 128, %s2978, %s2967
        $region172: #{tpu_custom_call.1} parent=107 // pred_fallthru
          _
      $region108: #{tpu_custom_call.1} parent=5 // pred_fallthru
        _
      %p2984 = scmp.le.s32.totalorder 2, %s43
      // Predicated region
      $region173: #{tpu_custom_call.1} parent=5 // pred_check
        %p2985 = pneg %p2984
      $region174: #{tpu_custom_call.1} parent=5 // pred_check_branch
        %2987 = sbr.rel (%p2985) target = $region176
      $region175: #{tpu_custom_call.1} parent=5 // pred_region
        %s2988 = ssub.s32 %s43, 2
        // Predicated region
        $region177: #{tpu_custom_call.1} parent=175 // pred_check
          %p2989 = pneg %p544
        $region178: #{tpu_custom_call.1} parent=175 // pred_check_branch
          %2991 = sbr.rel (%p2989) target = $region180
        $region179: #{tpu_custom_call.1} parent=175 // pred_region
          %s2992 = sand.u32 %s529, 1
          %s2993 = scalar_lea.sflag [#allocation4], %s2992
          %s2994 = sand.u32 %s529, 1
          %s2995 = smul.addr %s2994, 8
          %s2996 = scalar_lea.vmem [#allocation26], %s2995
          %2997 = dma.done %s2993, 128
        $region180: #{tpu_custom_call.1} parent=175 // pred_fallthru
          _
      $region176: #{tpu_custom_call.1} parent=5 // pred_fallthru
        _
    $region6: #{tpu_custom_call.1} parent=1 // loop_footer
      %s47 = sadd.s32 1, %s43
    $region7: #{tpu_custom_call.1} parent=1 // loop_footer_branch
      %42 = sbr.rel target = $region3
    $region8: #{tpu_custom_call.1} parent=1 // loop_exit
      _
    %2998 = vsyncpa [#allocation3], 1
    %s2999 = scalar_lea.sflag [#allocation3], 1
    %3000 = vsyncpa %s2999, 1
    %3001 = vsyncpa [#allocation6], 1
    %s3002 = scalar_lea.sflag [#allocation6], 1
    %3003 = vsyncpa %s3002, 1
    %3004 = vsyncpa [#allocation9], 1
    %3005 = vsyncpa [#allocation12], 1
    %3006 = vsyncpa [#allocation15], 1
    %3007 = vsyncpa [#allocation18], 1
    %3008 = vsyncpa [#allocation21], 1
    %3009 = vsyncpa [#allocation24], 1
    %3010 = vsyncpa [#allocation4], 1
    %s3011 = scalar_lea.sflag [#allocation4], 1
    %3012 = vsyncpa %s3011, 1

</llo_original>
